<compile_context>
chip_gen: v6e
topology: v6e:2x2x1
jax: 0.10.0
libtpu: 0.0.40
codegen_flags: <defaults>
</compile_context>

<pallas_src>
import functools

import jax
import jax.numpy as jnp
from jax.experimental import pallas as pl
from jax.experimental.pallas import tpu as pltpu


def _round_up(x, m):
    return ((x + m - 1) // m) * m


def _layernorm(z, gamma, beta, eps):
    mu = jnp.mean(z, axis=-1, keepdims=True)
    zc = z - mu
    var = jnp.mean(zc * zc, axis=-1, keepdims=True)
    return zc * jax.lax.rsqrt(var + eps) * gamma + beta


# --------------------------- Fused encoder kernel -----------------------------
def _encoder_kernel(x_ref, wqkv_ref, bqkv_ref, wo_ref, bo_ref,
                    ln1_g_ref, ln1_b_ref, w1_ref, b1_ref, w2_ref, b2_ref,
                    ln2_g_ref, ln2_b_ref, o_ref,
                    *, num_heads, head_dim, head_pad, eps):
    f32 = jnp.float32
    cdt = wqkv_ref.dtype                       # compute dtype (bf16 by default)
    L, E = x_ref.shape
    H, dp = num_heads, head_pad
    scale = 1.0 / (head_dim ** 0.5)            # scale uses the TRUE head dim

    x_f32 = x_ref[...].astype(f32)             # residual kept exact in f32
    x_c = x_f32.astype(cdt)

    # Fused, head-padded QKV projection: [L, 3*H*dp]; every head slot starts at
    # a 128-lane-aligned column (padded columns are exactly zero).
    qkv = jnp.dot(x_c, wqkv_ref[...], preferred_element_type=f32)
    qkv = (qkv + bqkv_ref[...]).astype(cdt)

    # Per-head attention.  The concat + output projection is folded into
    # accumulating [L, dp] @ [dp, E] matmuls (no relayout, no concat).
    # NOTE (v7x VMEM budget): score matrices scale as H*L^2*4B; at large L
    # re-derive tiling against the 64 MiB VMEM / 32 MiB scoped default.
    attn = jnp.zeros((L, E), f32)
    for h in range(H):                          # static unrolled, aligned slices
        q = qkv[:, h * dp:(h + 1) * dp]
        k = qkv[:, (H + h) * dp:(H + h + 1) * dp]
        v = qkv[:, (2 * H + h) * dp:(2 * H + h + 1) * dp]
        s = jax.lax.dot_general(q, k, (((1,), (1,)), ((), ())),
                                preferred_element_type=f32) * scale
        m = jnp.max(s, axis=-1, keepdims=True)
        p = jnp.exp(s - m)                      # unnormalised probabilities
        denom = jnp.sum(p, axis=-1, keepdims=True)
        ctx = jnp.dot(p.astype(cdt), v, preferred_element_type=f32)
        ctx = ctx * pl.reciprocal(denom, approx=True)   # EUP post-matmul scale
        attn = attn + jnp.dot(ctx.astype(cdt),
                              wo_ref[h * dp:(h + 1) * dp, :],
                              preferred_element_type=f32)
    attn = attn + bo_ref[...]

    # Residual + LayerNorm 1.
    h1 = _layernorm(x_f32 + attn, ln1_g_ref[...], ln1_b_ref[...], eps)

    # FFN (Linear -> ReLU -> Linear), weights VMEM-resident.
    f = jnp.dot(h1.astype(cdt), w1_ref[...], preferred_element_type=f32)
    f = jnp.maximum(f + b1_ref[...], 0.0)
    f2 = jnp.dot(f.astype(cdt), w2_ref[...], preferred_element_type=f32)
    f2 = f2 + b2_ref[...]

    # Residual + LayerNorm 2.
    o_ref[...] = _layernorm(h1 + f2, ln2_g_ref[...], ln2_b_ref[...],
                            eps).astype(o_ref.dtype)


# ------------------------ One-time parameter packing --------------------------
def prepare_params(params, *, emb_dim, num_heads, compute_dtype=jnp.bfloat16):
    """Pack PyTorch-layout weights into head-aligned, MXU-ready layouts (once)."""
    E, H = emb_dim, num_heads
    dh = E // H
    dp = _round_up(dh, 128)                     # 96 -> 128 lane-aligned head slot

    in_w = params["in_proj_w"].astype(jnp.float32)     # [3E, E]
    in_b = params["in_proj_b"].astype(jnp.float32)     # [3E]

    def pack_w(w):                              # [E, E] -> [E, H*dp], head-padded
        w = w.reshape(H, dh, E)
        w = jnp.pad(w, ((0, 0), (0, dp - dh), (0, 0)))
        return w.reshape(H * dp, E).T

    def pack_b(b):                              # [E] -> [1, H*dp], head-padded
        b = b.reshape(H, dh)
        b = jnp.pad(b, ((0, 0), (0, dp - dh)))
        return b.reshape(1, H * dp)

    wqkv = jnp.concatenate(
        [pack_w(in_w[:E]), pack_w(in_w[E:2 * E]), pack_w(in_w[2 * E:])], axis=1)
    bqkv = jnp.concatenate(
        [pack_b(in_b[:E]), pack_b(in_b[E:2 * E]), pack_b(in_b[2 * E:])], axis=1)

    wo = params["out_proj_w"].astype(jnp.float32).T.reshape(H, dh, E)
    wo = jnp.pad(wo, ((0, 0), (0, dp - dh), (0, 0))).reshape(H * dp, E)

    hidden_dim = params["ffn_w1"].shape[0]
    packed = {
        "wqkv": wqkv.astype(compute_dtype),
        "bqkv": bqkv,                                           # f32 (added to f32 acc)
        "wo": wo.astype(compute_dtype),
        "bo": params["out_proj_b"].reshape(1, E).astype(jnp.float32),
        "ln1_g": params["ln1_g"].reshape(1, E).astype(jnp.float32),
        "ln1_b": params["ln1_b"].reshape(1, E).astype(jnp.float32),
        "w1": params["ffn_w1"].astype(jnp.float32).T.astype(compute_dtype),
        "b1": params["ffn_b1"].reshape(1, hidden_dim).astype(jnp.float32),
        "w2": params["ffn_w2"].astype(jnp.float32).T.astype(compute_dtype),
        "b2": params["ffn_b2"].reshape(1, E).astype(jnp.float32),
        "ln2_g": params["ln2_g"].reshape(1, E).astype(jnp.float32),
        "ln2_b": params["ln2_b"].reshape(1, E).astype(jnp.float32),
    }
    meta = dict(emb_dim=E, num_heads=H, head_dim=dh, head_pad=dp,
                hidden_dim=hidden_dim)
    return packed, meta


# ------------------------------- Hot-path forward ------------------------------
def transformer_encoder_forward(x, packed, meta, *, eps=1e-5):
    """x: [B, L, E] -> [B, L, E] (eval-mode PyTorch TransformerEncoder.forward)."""
    B, L, E = x.shape
    assert E == meta["emb_dim"]
    assert L % 8 == 0, "sequence length must be a multiple of 8 (sublane tiling)"
    assert E % 128 == 0 and meta["hidden_dim"] % 128 == 0
    H, dh, dp = meta["num_heads"], meta["head_dim"], meta["head_pad"]
    Hid = meta["hidden_dim"]
    x2d = x.reshape(B * L, E)                   # free reshape, no transpose

    const = lambda b: (0, 0)
    resident = lambda shape: pl.BlockSpec(shape, const)   # VMEM-resident operand

    out = pl.pallas_call(
        functools.partial(_encoder_kernel, num_heads=H, head_dim=dh,
                          head_pad=dp, eps=eps),
        out_shape=jax.ShapeDtypeStruct((B * L, E), x.dtype),
        grid_spec=pltpu.PrefetchScalarGridSpec(
            num_scalar_prefetch=0,
            grid=(B,),                                   # >= 2 parallel steps on v7x
            in_specs=[
                pl.BlockSpec((L, E), lambda b: (b, 0)),  # streamed activation block
                resident((E, 3 * H * dp)),               # packed QKV weight
                resident((1, 3 * H * dp)),               # packed QKV bias
                resident((H * dp, E)),                   # packed out-proj weight
                resident((1, E)),                        # out-proj bias
                resident((1, E)), resident((1, E)),      # LN1 gamma / beta
                resident((E, Hid)), resident((1, Hid)),  # FFN w1 / b1
                resident((Hid, E)), resident((1, E)),    # FFN w2 / b2
                resident((1, E)), resident((1, E)),      # LN2 gamma / beta
            ],
            out_specs=pl.BlockSpec((L, E), lambda b: (b, 0)),
        ),
        compiler_params=pltpu.CompilerParams(
            dimension_semantics=("parallel",),
            vmem_limit_bytes=48 * 1024 * 1024),
    )(x2d, packed["wqkv"], packed["bqkv"], packed["wo"], packed["bo"],
      packed["ln1_g"], packed["ln1_b"], packed["w1"], packed["b1"],
      packed["w2"], packed["b2"], packed["ln2_g"], packed["ln2_b"])
    return out.reshape(B, L, E)


# ------------------------------- Pure-JAX reference ----------------------------
def _reference_forward(x, p, *, num_heads=4, eps=1e-5):
    B, L, E = x.shape
    dh = E // num_heads
    qkv = x @ p["in_proj_w"].T + p["in_proj_b"]
    q, k, v = jnp.split(qkv, 3, axis=-1)

    def heads(t):
        return t.reshape(B, L, num_heads, dh).transpose(0, 2, 1, 3)

    q, k, v = heads(q), heads(k), heads(v)
    s = jnp.einsum("bhqd,bhkd->bhqk", q, k) / jnp.sqrt(jnp.float32(dh))
    a = jax.nn.softmax(s, axis=-1)
    o = jnp.einsum("bhqk,bhkd->bhqd", a, v)
    o = o.transpose(0, 2, 1, 3).reshape(B, L, E)
    attn_out = o @ p["out_proj_w"].T + p["out_proj_b"]

    def ln(z, g, b):
        mu = z.mean(-1, keepdims=True)
        var = ((z - mu) ** 2).mean(-1, keepdims=True)
        return (z - mu) / jnp.sqrt(var + eps) * g + b

    h1 = ln(x + attn_out, p["ln1_g"], p["ln1_b"])
    f = jnp.maximum(h1 @ p["ffn_w1"].T + p["ffn_b1"], 0.0)
    f = f @ p["ffn_w2"].T + p["ffn_b2"]
    return ln(h1 + f, p["ln2_g"], p["ln2_b"])


if __name__ == "__main__":
    emb_dim, num_heads, hidden_dim = 384, 4, 512
    B, L = 2, 64

    key = jax.random.PRNGKey(0)
    keys = jax.random.split(key, 9)

    def u(k, shape, fan_in):
        bound = 1.0 / (fan_in ** 0.5)
        return jax.random.uniform(k, shape, jnp.float32, -bound, bound)

    params = {
        "in_proj_w": u(keys[0], (3 * emb_dim, emb_dim), emb_dim),
        "in_proj_b": u(keys[1], (3 * emb_dim,), emb_dim),
        "out_proj_w": u(keys[2], (emb_dim, emb_dim), emb_dim),
        "out_proj_b": u(keys[3], (emb_dim,), emb_dim),
        "ffn_w1": u(keys[4], (hidden_dim, emb_dim), emb_dim),
        "ffn_b1": u(keys[5], (hidden_dim,), emb_dim),
        "ffn_w2": u(keys[6], (emb_dim, hidden_dim), hidden_dim),
        "ffn_b2": u(keys[7], (emb_dim,), hidden_dim),
        "ln1_g": jnp.ones((emb_dim,), jnp.float32),
        "ln1_b": jnp.zeros((emb_dim,), jnp.float32),
        "ln2_g": jnp.ones((emb_dim,), jnp.float32),
        "ln2_b": jnp.zeros((emb_dim,), jnp.float32),
    }
    x = jax.random.normal(keys[8], (B, L, emb_dim), dtype=jnp.float32)

    # One-time weight packing (head-aligned padding, transposes, bf16 cast).
    packed, meta = prepare_params(params, emb_dim=emb_dim, num_heads=num_heads)

    fwd = jax.jit(functools.partial(transformer_encoder_forward, meta=meta))
    out = fwd(x, packed)
    jax.block_until_ready(out)

    ref = _reference_forward(x, params, num_heads=num_heads)
    assert out.shape == (B, L, emb_dim), out.shape
    max_err = float(jnp.max(jnp.abs(out - ref)))
    # bf16 MXU operands with f32 accumulation -> relaxed (bf16-level) tolerance.
    assert jnp.allclose(out, ref, atol=2e-2, rtol=2e-2), max_err

    print("KERNEL_OK")
</pallas_src>

<mosaic_0001>
module attributes {stable_mosaic.version = 11 : i64} {
  func.func @_encoder_kernel(%arg0: i32, %arg1: memref<64x384xf32, #tpu.memory_space<vmem>>, %arg2: memref<384x1536xbf16, #tpu.memory_space<vmem>>, %arg3: memref<1x1536xf32, #tpu.memory_space<vmem>>, %arg4: memref<512x384xbf16, #tpu.memory_space<vmem>>, %arg5: memref<1x384xf32, #tpu.memory_space<vmem>>, %arg6: memref<1x384xf32, #tpu.memory_space<vmem>>, %arg7: memref<1x384xf32, #tpu.memory_space<vmem>>, %arg8: memref<384x512xbf16, #tpu.memory_space<vmem>>, %arg9: memref<1x512xf32, #tpu.memory_space<vmem>>, %arg10: memref<512x384xbf16, #tpu.memory_space<vmem>>, %arg11: memref<1x384xf32, #tpu.memory_space<vmem>>, %arg12: memref<1x384xf32, #tpu.memory_space<vmem>>, %arg13: memref<1x384xf32, #tpu.memory_space<vmem>>, %arg14: memref<64x384xf32, #tpu.memory_space<vmem>>) attributes {dimension_semantics = [#tpu.dimension_semantics<parallel>], iteration_bounds = array<i64: 2>, scalar_prefetch = 0 : i64, scratch_operands = 0 : i64, tpu.core_type = #tpu.core_type<tc>, window_params = [{transform_indices = @transform_0, window_bounds = array<i64: 64, 384>}, {pipeline_mode = #tpu.pipeline_mode<synchronous>, transform_indices = @transform_1, window_bounds = array<i64: 384, 1536>}, {pipeline_mode = #tpu.pipeline_mode<synchronous>, transform_indices = @transform_2, window_bounds = array<i64: 1, 1536>}, {pipeline_mode = #tpu.pipeline_mode<synchronous>, transform_indices = @transform_3, window_bounds = array<i64: 512, 384>}, {pipeline_mode = #tpu.pipeline_mode<synchronous>, transform_indices = @transform_4, window_bounds = array<i64: 1, 384>}, {pipeline_mode = #tpu.pipeline_mode<synchronous>, transform_indices = @transform_5, window_bounds = array<i64: 1, 384>}, {pipeline_mode = #tpu.pipeline_mode<synchronous>, transform_indices = @transform_6, window_bounds = array<i64: 1, 384>}, {pipeline_mode = #tpu.pipeline_mode<synchronous>, transform_indices = @transform_7, window_bounds = array<i64: 384, 512>}, {pipeline_mode = #tpu.pipeline_mode<synchronous>, transform_indices = @transform_8, window_bounds = array<i64: 1, 512>}, {pipeline_mode = #tpu.pipeline_mode<synchronous>, transform_indices = @transform_9, window_bounds = array<i64: 512, 384>}, {pipeline_mode = #tpu.pipeline_mode<synchronous>, transform_indices = @transform_10, window_bounds = array<i64: 1, 384>}, {pipeline_mode = #tpu.pipeline_mode<synchronous>, transform_indices = @transform_11, window_bounds = array<i64: 1, 384>}, {pipeline_mode = #tpu.pipeline_mode<synchronous>, transform_indices = @transform_12, window_bounds = array<i64: 1, 384>}, {transform_indices = @transform_13, window_bounds = array<i64: 64, 384>}]} {
    %c0 = arith.constant 0 : index
    %c0_0 = arith.constant 0 : index
    %0 = vector.load %arg1[%c0, %c0_0] : memref<64x384xf32, #tpu.memory_space<vmem>>, vector<64x384xf32>
    %1 = arith.truncf %0 : vector<64x384xf32> to vector<64x384xbf16>
    %c0_1 = arith.constant 0 : index
    %c0_2 = arith.constant 0 : index
    %2 = vector.load %arg2[%c0_1, %c0_2] : memref<384x1536xbf16, #tpu.memory_space<vmem>>, vector<384x1536xbf16>
    %cst = arith.constant dense<0.000000e+00> : vector<64x1536xf32>
    %3 = tpu.matmul %1, %2, %cst {dimension_numbers = #tpu.dot_dimension_numbers<[1], [0], [0], [1], [0, 0, 1, 1], [], []>} : vector<64x384xbf16>, vector<384x1536xbf16>, vector<64x1536xf32> -> vector<64x1536xf32>
    %c0_3 = arith.constant 0 : index
    %c0_4 = arith.constant 0 : index
    %4 = vector.load %arg3[%c0_3, %c0_4] : memref<1x1536xf32, #tpu.memory_space<vmem>>, vector<1x1536xf32>
    %5 = vector.broadcast %4 : vector<1x1536xf32> to vector<64x1536xf32>
    %6 = arith.addf %3, %5 : vector<64x1536xf32>
    %7 = arith.truncf %6 : vector<64x1536xf32> to vector<64x1536xbf16>
    %cst_5 = arith.constant 0.000000e+00 : f32
    %8 = vector.broadcast %cst_5 : f32 to vector<64x384xf32>
    %9 = vector.extract_strided_slice %7 {offsets = [0, 0], sizes = [64, 128], strides = [1, 1]} : vector<64x1536xbf16> to vector<64x128xbf16>
    %10 = vector.extract_strided_slice %7 {offsets = [0, 512], sizes = [64, 128], strides = [1, 1]} : vector<64x1536xbf16> to vector<64x128xbf16>
    %11 = vector.extract_strided_slice %7 {offsets = [0, 1024], sizes = [64, 128], strides = [1, 1]} : vector<64x1536xbf16> to vector<64x128xbf16>
    %cst_6 = arith.constant dense<0.000000e+00> : vector<64x64xf32>
    %12 = tpu.matmul %9, %10, %cst_6 {dimension_numbers = #tpu.dot_dimension_numbers<[1], [1], [0], [0], [0, 0, 1, 0], [], []>} : vector<64x128xbf16>, vector<64x128xbf16>, vector<64x64xf32> -> vector<64x64xf32>
    %cst_7 = arith.constant 0.102062076 : f32
    %13 = vector.broadcast %cst_7 : f32 to vector<64x64xf32>
    %14 = arith.mulf %12, %13 : vector<64x64xf32>
    %cst_8 = arith.constant dense<0xFF800000> : vector<64xf32>
    %15 = vector.multi_reduction <maximumf>, %14, %cst_8 [1] : vector<64x64xf32> to vector<64xf32>
    %16 = vector.shape_cast %15 : vector<64xf32> to vector<64x1xf32>
    %17 = vector.broadcast %16 : vector<64x1xf32> to vector<64x64xf32>
    %18 = arith.subf %14, %17 : vector<64x64xf32>
    %19 = math.exp %18 : vector<64x64xf32>
    %cst_9 = arith.constant dense<0.000000e+00> : vector<64xf32>
    %20 = vector.multi_reduction <add>, %19, %cst_9 [1] : vector<64x64xf32> to vector<64xf32>
    %21 = vector.shape_cast %20 : vector<64xf32> to vector<64x1xf32>
    %22 = arith.truncf %19 : vector<64x64xf32> to vector<64x64xbf16>
    %cst_10 = arith.constant dense<0.000000e+00> : vector<64x128xf32>
    %23 = tpu.matmul %22, %11, %cst_10 {dimension_numbers = #tpu.dot_dimension_numbers<[1], [0], [0], [1], [0, 0, 1, 1], [], []>} : vector<64x64xbf16>, vector<64x128xbf16>, vector<64x128xf32> -> vector<64x128xf32>
    %24 = tpu.reciprocal %21 {approx = true} : vector<64x1xf32> -> vector<64x1xf32>
    %25 = vector.broadcast %24 : vector<64x1xf32> to vector<64x128xf32>
    %26 = arith.mulf %23, %25 : vector<64x128xf32>
    %27 = arith.truncf %26 : vector<64x128xf32> to vector<64x128xbf16>
    %c0_11 = arith.constant 0 : index
    %c0_12 = arith.constant 0 : index
    %28 = vector.load %arg4[%c0_11, %c0_12] : memref<512x384xbf16, #tpu.memory_space<vmem>>, vector<128x384xbf16>
    %cst_13 = arith.constant dense<0.000000e+00> : vector<64x384xf32>
    %29 = tpu.matmul %27, %28, %cst_13 {dimension_numbers = #tpu.dot_dimension_numbers<[1], [0], [0], [1], [0, 0, 1, 1], [], []>} : vector<64x128xbf16>, vector<128x384xbf16>, vector<64x384xf32> -> vector<64x384xf32>
    %30 = arith.addf %8, %29 : vector<64x384xf32>
    %31 = vector.extract_strided_slice %7 {offsets = [0, 128], sizes = [64, 128], strides = [1, 1]} : vector<64x1536xbf16> to vector<64x128xbf16>
    %32 = vector.extract_strided_slice %7 {offsets = [0, 640], sizes = [64, 128], strides = [1, 1]} : vector<64x1536xbf16> to vector<64x128xbf16>
    %33 = vector.extract_strided_slice %7 {offsets = [0, 1152], sizes = [64, 128], strides = [1, 1]} : vector<64x1536xbf16> to vector<64x128xbf16>
    %cst_14 = arith.constant dense<0.000000e+00> : vector<64x64xf32>
    %34 = tpu.matmul %31, %32, %cst_14 {dimension_numbers = #tpu.dot_dimension_numbers<[1], [1], [0], [0], [0, 0, 1, 0], [], []>} : vector<64x128xbf16>, vector<64x128xbf16>, vector<64x64xf32> -> vector<64x64xf32>
    %cst_15 = arith.constant 0.102062076 : f32
    %35 = vector.broadcast %cst_15 : f32 to vector<64x64xf32>
    %36 = arith.mulf %34, %35 : vector<64x64xf32>
    %cst_16 = arith.constant dense<0xFF800000> : vector<64xf32>
    %37 = vector.multi_reduction <maximumf>, %36, %cst_16 [1] : vector<64x64xf32> to vector<64xf32>
    %38 = vector.shape_cast %37 : vector<64xf32> to vector<64x1xf32>
    %39 = vector.broadcast %38 : vector<64x1xf32> to vector<64x64xf32>
    %40 = arith.subf %36, %39 : vector<64x64xf32>
    %41 = math.exp %40 : vector<64x64xf32>
    %cst_17 = arith.constant dense<0.000000e+00> : vector<64xf32>
    %42 = vector.multi_reduction <add>, %41, %cst_17 [1] : vector<64x64xf32> to vector<64xf32>
    %43 = vector.shape_cast %42 : vector<64xf32> to vector<64x1xf32>
    %44 = arith.truncf %41 : vector<64x64xf32> to vector<64x64xbf16>
    %cst_18 = arith.constant dense<0.000000e+00> : vector<64x128xf32>
    %45 = tpu.matmul %44, %33, %cst_18 {dimension_numbers = #tpu.dot_dimension_numbers<[1], [0], [0], [1], [0, 0, 1, 1], [], []>} : vector<64x64xbf16>, vector<64x128xbf16>, vector<64x128xf32> -> vector<64x128xf32>
    %46 = tpu.reciprocal %43 {approx = true} : vector<64x1xf32> -> vector<64x1xf32>
    %47 = vector.broadcast %46 : vector<64x1xf32> to vector<64x128xf32>
    %48 = arith.mulf %45, %47 : vector<64x128xf32>
    %49 = arith.truncf %48 : vector<64x128xf32> to vector<64x128xbf16>
    %c128 = arith.constant 128 : index
    %c0_19 = arith.constant 0 : index
    %50 = vector.load %arg4[%c128, %c0_19] : memref<512x384xbf16, #tpu.memory_space<vmem>>, vector<128x384xbf16>
    %cst_20 = arith.constant dense<0.000000e+00> : vector<64x384xf32>
    %51 = tpu.matmul %49, %50, %cst_20 {dimension_numbers = #tpu.dot_dimension_numbers<[1], [0], [0], [1], [0, 0, 1, 1], [], []>} : vector<64x128xbf16>, vector<128x384xbf16>, vector<64x384xf32> -> vector<64x384xf32>
    %52 = arith.addf %30, %51 : vector<64x384xf32>
    %53 = vector.extract_strided_slice %7 {offsets = [0, 256], sizes = [64, 128], strides = [1, 1]} : vector<64x1536xbf16> to vector<64x128xbf16>
    %54 = vector.extract_strided_slice %7 {offsets = [0, 768], sizes = [64, 128], strides = [1, 1]} : vector<64x1536xbf16> to vector<64x128xbf16>
    %55 = vector.extract_strided_slice %7 {offsets = [0, 1280], sizes = [64, 128], strides = [1, 1]} : vector<64x1536xbf16> to vector<64x128xbf16>
    %cst_21 = arith.constant dense<0.000000e+00> : vector<64x64xf32>
    %56 = tpu.matmul %53, %54, %cst_21 {dimension_numbers = #tpu.dot_dimension_numbers<[1], [1], [0], [0], [0, 0, 1, 0], [], []>} : vector<64x128xbf16>, vector<64x128xbf16>, vector<64x64xf32> -> vector<64x64xf32>
    %cst_22 = arith.constant 0.102062076 : f32
    %57 = vector.broadcast %cst_22 : f32 to vector<64x64xf32>
    %58 = arith.mulf %56, %57 : vector<64x64xf32>
    %cst_23 = arith.constant dense<0xFF800000> : vector<64xf32>
    %59 = vector.multi_reduction <maximumf>, %58, %cst_23 [1] : vector<64x64xf32> to vector<64xf32>
    %60 = vector.shape_cast %59 : vector<64xf32> to vector<64x1xf32>
    %61 = vector.broadcast %60 : vector<64x1xf32> to vector<64x64xf32>
    %62 = arith.subf %58, %61 : vector<64x64xf32>
    %63 = math.exp %62 : vector<64x64xf32>
    %cst_24 = arith.constant dense<0.000000e+00> : vector<64xf32>
    %64 = vector.multi_reduction <add>, %63, %cst_24 [1] : vector<64x64xf32> to vector<64xf32>
    %65 = vector.shape_cast %64 : vector<64xf32> to vector<64x1xf32>
    %66 = arith.truncf %63 : vector<64x64xf32> to vector<64x64xbf16>
    %cst_25 = arith.constant dense<0.000000e+00> : vector<64x128xf32>
    %67 = tpu.matmul %66, %55, %cst_25 {dimension_numbers = #tpu.dot_dimension_numbers<[1], [0], [0], [1], [0, 0, 1, 1], [], []>} : vector<64x64xbf16>, vector<64x128xbf16>, vector<64x128xf32> -> vector<64x128xf32>
    %68 = tpu.reciprocal %65 {approx = true} : vector<64x1xf32> -> vector<64x1xf32>
    %69 = vector.broadcast %68 : vector<64x1xf32> to vector<64x128xf32>
    %70 = arith.mulf %67, %69 : vector<64x128xf32>
    %71 = arith.truncf %70 : vector<64x128xf32> to vector<64x128xbf16>
    %c256 = arith.constant 256 : index
    %c0_26 = arith.constant 0 : index
    %72 = vector.load %arg4[%c256, %c0_26] : memref<512x384xbf16, #tpu.memory_space<vmem>>, vector<128x384xbf16>
    %cst_27 = arith.constant dense<0.000000e+00> : vector<64x384xf32>
    %73 = tpu.matmul %71, %72, %cst_27 {dimension_numbers = #tpu.dot_dimension_numbers<[1], [0], [0], [1], [0, 0, 1, 1], [], []>} : vector<64x128xbf16>, vector<128x384xbf16>, vector<64x384xf32> -> vector<64x384xf32>
    %74 = arith.addf %52, %73 : vector<64x384xf32>
    %75 = vector.extract_strided_slice %7 {offsets = [0, 384], sizes = [64, 128], strides = [1, 1]} : vector<64x1536xbf16> to vector<64x128xbf16>
    %76 = vector.extract_strided_slice %7 {offsets = [0, 896], sizes = [64, 128], strides = [1, 1]} : vector<64x1536xbf16> to vector<64x128xbf16>
    %77 = vector.extract_strided_slice %7 {offsets = [0, 1408], sizes = [64, 128], strides = [1, 1]} : vector<64x1536xbf16> to vector<64x128xbf16>
    %cst_28 = arith.constant dense<0.000000e+00> : vector<64x64xf32>
    %78 = tpu.matmul %75, %76, %cst_28 {dimension_numbers = #tpu.dot_dimension_numbers<[1], [1], [0], [0], [0, 0, 1, 0], [], []>} : vector<64x128xbf16>, vector<64x128xbf16>, vector<64x64xf32> -> vector<64x64xf32>
    %cst_29 = arith.constant 0.102062076 : f32
    %79 = vector.broadcast %cst_29 : f32 to vector<64x64xf32>
    %80 = arith.mulf %78, %79 : vector<64x64xf32>
    %cst_30 = arith.constant dense<0xFF800000> : vector<64xf32>
    %81 = vector.multi_reduction <maximumf>, %80, %cst_30 [1] : vector<64x64xf32> to vector<64xf32>
    %82 = vector.shape_cast %81 : vector<64xf32> to vector<64x1xf32>
    %83 = vector.broadcast %82 : vector<64x1xf32> to vector<64x64xf32>
    %84 = arith.subf %80, %83 : vector<64x64xf32>
    %85 = math.exp %84 : vector<64x64xf32>
    %cst_31 = arith.constant dense<0.000000e+00> : vector<64xf32>
    %86 = vector.multi_reduction <add>, %85, %cst_31 [1] : vector<64x64xf32> to vector<64xf32>
    %87 = vector.shape_cast %86 : vector<64xf32> to vector<64x1xf32>
    %88 = arith.truncf %85 : vector<64x64xf32> to vector<64x64xbf16>
    %cst_32 = arith.constant dense<0.000000e+00> : vector<64x128xf32>
    %89 = tpu.matmul %88, %77, %cst_32 {dimension_numbers = #tpu.dot_dimension_numbers<[1], [0], [0], [1], [0, 0, 1, 1], [], []>} : vector<64x64xbf16>, vector<64x128xbf16>, vector<64x128xf32> -> vector<64x128xf32>
    %90 = tpu.reciprocal %87 {approx = true} : vector<64x1xf32> -> vector<64x1xf32>
    %91 = vector.broadcast %90 : vector<64x1xf32> to vector<64x128xf32>
    %92 = arith.mulf %89, %91 : vector<64x128xf32>
    %93 = arith.truncf %92 : vector<64x128xf32> to vector<64x128xbf16>
    %c384 = arith.constant 384 : index
    %c0_33 = arith.constant 0 : index
    %94 = vector.load %arg4[%c384, %c0_33] : memref<512x384xbf16, #tpu.memory_space<vmem>>, vector<128x384xbf16>
    %cst_34 = arith.constant dense<0.000000e+00> : vector<64x384xf32>
    %95 = tpu.matmul %93, %94, %cst_34 {dimension_numbers = #tpu.dot_dimension_numbers<[1], [0], [0], [1], [0, 0, 1, 1], [], []>} : vector<64x128xbf16>, vector<128x384xbf16>, vector<64x384xf32> -> vector<64x384xf32>
    %96 = arith.addf %74, %95 : vector<64x384xf32>
    %c0_35 = arith.constant 0 : index
    %c0_36 = arith.constant 0 : index
    %97 = vector.load %arg5[%c0_35, %c0_36] : memref<1x384xf32, #tpu.memory_space<vmem>>, vector<1x384xf32>
    %98 = vector.broadcast %97 : vector<1x384xf32> to vector<64x384xf32>
    %99 = arith.addf %96, %98 : vector<64x384xf32>
    %100 = arith.addf %0, %99 : vector<64x384xf32>
    %c0_37 = arith.constant 0 : index
    %c0_38 = arith.constant 0 : index
    %101 = vector.load %arg6[%c0_37, %c0_38] : memref<1x384xf32, #tpu.memory_space<vmem>>, vector<1x384xf32>
    %c0_39 = arith.constant 0 : index
    %c0_40 = arith.constant 0 : index
    %102 = vector.load %arg7[%c0_39, %c0_40] : memref<1x384xf32, #tpu.memory_space<vmem>>, vector<1x384xf32>
    %cst_41 = arith.constant dense<0.000000e+00> : vector<64xf32>
    %103 = vector.multi_reduction <add>, %100, %cst_41 [1] : vector<64x384xf32> to vector<64xf32>
    %104 = vector.shape_cast %103 : vector<64xf32> to vector<64x1xf32>
    %cst_42 = arith.constant 3.840000e+02 : f32
    %105 = vector.broadcast %cst_42 : f32 to vector<64x1xf32>
    %106 = arith.divf %104, %105 : vector<64x1xf32>
    %107 = vector.broadcast %106 : vector<64x1xf32> to vector<64x384xf32>
    %108 = arith.subf %100, %107 : vector<64x384xf32>
    %109 = arith.mulf %108, %108 : vector<64x384xf32>
    %cst_43 = arith.constant dense<0.000000e+00> : vector<64xf32>
    %110 = vector.multi_reduction <add>, %109, %cst_43 [1] : vector<64x384xf32> to vector<64xf32>
    %111 = vector.shape_cast %110 : vector<64xf32> to vector<64x1xf32>
    %cst_44 = arith.constant 3.840000e+02 : f32
    %112 = vector.broadcast %cst_44 : f32 to vector<64x1xf32>
    %113 = arith.divf %111, %112 : vector<64x1xf32>
    %cst_45 = arith.constant 9.99999974E-6 : f32
    %114 = vector.broadcast %cst_45 : f32 to vector<64x1xf32>
    %115 = arith.addf %113, %114 : vector<64x1xf32>
    %116 = math.rsqrt %115 : vector<64x1xf32>
    %117 = vector.broadcast %116 : vector<64x1xf32> to vector<64x384xf32>
    %118 = arith.mulf %108, %117 : vector<64x384xf32>
    %119 = vector.broadcast %101 : vector<1x384xf32> to vector<64x384xf32>
    %120 = arith.mulf %118, %119 : vector<64x384xf32>
    %121 = vector.broadcast %102 : vector<1x384xf32> to vector<64x384xf32>
    %122 = arith.addf %120, %121 : vector<64x384xf32>
    %123 = arith.truncf %122 : vector<64x384xf32> to vector<64x384xbf16>
    %c0_46 = arith.constant 0 : index
    %c0_47 = arith.constant 0 : index
    %124 = vector.load %arg8[%c0_46, %c0_47] : memref<384x512xbf16, #tpu.memory_space<vmem>>, vector<384x512xbf16>
    %cst_48 = arith.constant dense<0.000000e+00> : vector<64x512xf32>
    %125 = tpu.matmul %123, %124, %cst_48 {dimension_numbers = #tpu.dot_dimension_numbers<[1], [0], [0], [1], [0, 0, 1, 1], [], []>} : vector<64x384xbf16>, vector<384x512xbf16>, vector<64x512xf32> -> vector<64x512xf32>
    %c0_49 = arith.constant 0 : index
    %c0_50 = arith.constant 0 : index
    %126 = vector.load %arg9[%c0_49, %c0_50] : memref<1x512xf32, #tpu.memory_space<vmem>>, vector<1x512xf32>
    %127 = vector.broadcast %126 : vector<1x512xf32> to vector<64x512xf32>
    %128 = arith.addf %125, %127 : vector<64x512xf32>
    %cst_51 = arith.constant 0.000000e+00 : f32
    %129 = vector.broadcast %cst_51 : f32 to vector<64x512xf32>
    %130 = arith.maximumf %128, %129 : vector<64x512xf32>
    %131 = arith.truncf %130 : vector<64x512xf32> to vector<64x512xbf16>
    %c0_52 = arith.constant 0 : index
    %c0_53 = arith.constant 0 : index
    %132 = vector.load %arg10[%c0_52, %c0_53] : memref<512x384xbf16, #tpu.memory_space<vmem>>, vector<512x384xbf16>
    %cst_54 = arith.constant dense<0.000000e+00> : vector<64x384xf32>
    %133 = tpu.matmul %131, %132, %cst_54 {dimension_numbers = #tpu.dot_dimension_numbers<[1], [0], [0], [1], [0, 0, 1, 1], [], []>} : vector<64x512xbf16>, vector<512x384xbf16>, vector<64x384xf32> -> vector<64x384xf32>
    %c0_55 = arith.constant 0 : index
    %c0_56 = arith.constant 0 : index
    %134 = vector.load %arg11[%c0_55, %c0_56] : memref<1x384xf32, #tpu.memory_space<vmem>>, vector<1x384xf32>
    %135 = vector.broadcast %134 : vector<1x384xf32> to vector<64x384xf32>
    %136 = arith.addf %133, %135 : vector<64x384xf32>
    %137 = arith.addf %122, %136 : vector<64x384xf32>
    %c0_57 = arith.constant 0 : index
    %c0_58 = arith.constant 0 : index
    %138 = vector.load %arg12[%c0_57, %c0_58] : memref<1x384xf32, #tpu.memory_space<vmem>>, vector<1x384xf32>
    %c0_59 = arith.constant 0 : index
    %c0_60 = arith.constant 0 : index
    %139 = vector.load %arg13[%c0_59, %c0_60] : memref<1x384xf32, #tpu.memory_space<vmem>>, vector<1x384xf32>
    %cst_61 = arith.constant dense<0.000000e+00> : vector<64xf32>
    %140 = vector.multi_reduction <add>, %137, %cst_61 [1] : vector<64x384xf32> to vector<64xf32>
    %141 = vector.shape_cast %140 : vector<64xf32> to vector<64x1xf32>
    %cst_62 = arith.constant 3.840000e+02 : f32
    %142 = vector.broadcast %cst_62 : f32 to vector<64x1xf32>
    %143 = arith.divf %141, %142 : vector<64x1xf32>
    %144 = vector.broadcast %143 : vector<64x1xf32> to vector<64x384xf32>
    %145 = arith.subf %137, %144 : vector<64x384xf32>
    %146 = arith.mulf %145, %145 : vector<64x384xf32>
    %cst_63 = arith.constant dense<0.000000e+00> : vector<64xf32>
    %147 = vector.multi_reduction <add>, %146, %cst_63 [1] : vector<64x384xf32> to vector<64xf32>
    %148 = vector.shape_cast %147 : vector<64xf32> to vector<64x1xf32>
    %cst_64 = arith.constant 3.840000e+02 : f32
    %149 = vector.broadcast %cst_64 : f32 to vector<64x1xf32>
    %150 = arith.divf %148, %149 : vector<64x1xf32>
    %cst_65 = arith.constant 9.99999974E-6 : f32
    %151 = vector.broadcast %cst_65 : f32 to vector<64x1xf32>
    %152 = arith.addf %150, %151 : vector<64x1xf32>
    %153 = math.rsqrt %152 : vector<64x1xf32>
    %154 = vector.broadcast %153 : vector<64x1xf32> to vector<64x384xf32>
    %155 = arith.mulf %145, %154 : vector<64x384xf32>
    %156 = vector.broadcast %138 : vector<1x384xf32> to vector<64x384xf32>
    %157 = arith.mulf %155, %156 : vector<64x384xf32>
    %158 = vector.broadcast %139 : vector<1x384xf32> to vector<64x384xf32>
    %159 = arith.addf %157, %158 : vector<64x384xf32>
    %c0_66 = arith.constant 0 : index
    %c0_67 = arith.constant 0 : index
    %160 = vector.load %arg14[%c0_66, %c0_67] : memref<64x384xf32, #tpu.memory_space<vmem>>, vector<64x384xf32>
    tpu.vector_store %arg14[%c0_66, %c0_67], %159 {strides = array<i32>} : memref<64x384xf32, #tpu.memory_space<vmem>>, vector<64x384xf32>,
    return
  }
  func.func @transform_0(%arg0: i32) -> (i32, i32) {
    %c0_i32 = arith.constant 0 : i32
    %c0_i32_0 = arith.constant 0 : i32
    return %arg0, %c0_i32 : i32, i32
  }
  func.func @transform_1(%arg0: i32) -> (i32, i32) {
    %c0_i32 = arith.constant 0 : i32
    %c0_i32_0 = arith.constant 0 : i32
    %c0_i32_1 = arith.constant 0 : i32
    return %c0_i32, %c0_i32_0 : i32, i32
  }
  func.func @transform_2(%arg0: i32) -> (i32, i32) {
    %c0_i32 = arith.constant 0 : i32
    %c0_i32_0 = arith.constant 0 : i32
    %c0_i32_1 = arith.constant 0 : i32
    return %c0_i32, %c0_i32_0 : i32, i32
  }
  func.func @transform_3(%arg0: i32) -> (i32, i32) {
    %c0_i32 = arith.constant 0 : i32
    %c0_i32_0 = arith.constant 0 : i32
    %c0_i32_1 = arith.constant 0 : i32
    return %c0_i32, %c0_i32_0 : i32, i32
  }
  func.func @transform_4(%arg0: i32) -> (i32, i32) {
    %c0_i32 = arith.constant 0 : i32
    %c0_i32_0 = arith.constant 0 : i32
    %c0_i32_1 = arith.constant 0 : i32
    return %c0_i32, %c0_i32_0 : i32, i32
  }
  func.func @transform_5(%arg0: i32) -> (i32, i32) {
    %c0_i32 = arith.constant 0 : i32
    %c0_i32_0 = arith.constant 0 : i32
    %c0_i32_1 = arith.constant 0 : i32
    return %c0_i32, %c0_i32_0 : i32, i32
  }
  func.func @transform_6(%arg0: i32) -> (i32, i32) {
    %c0_i32 = arith.constant 0 : i32
    %c0_i32_0 = arith.constant 0 : i32
    %c0_i32_1 = arith.constant 0 : i32
    return %c0_i32, %c0_i32_0 : i32, i32
  }
  func.func @transform_7(%arg0: i32) -> (i32, i32) {
    %c0_i32 = arith.constant 0 : i32
    %c0_i32_0 = arith.constant 0 : i32
    %c0_i32_1 = arith.constant 0 : i32
    return %c0_i32, %c0_i32_0 : i32, i32
  }
  func.func @transform_8(%arg0: i32) -> (i32, i32) {
    %c0_i32 = arith.constant 0 : i32
    %c0_i32_0 = arith.constant 0 : i32
    %c0_i32_1 = arith.constant 0 : i32
    return %c0_i32, %c0_i32_0 : i32, i32
  }
  func.func @transform_9(%arg0: i32) -> (i32, i32) {
    %c0_i32 = arith.constant 0 : i32
    %c0_i32_0 = arith.constant 0 : i32
    %c0_i32_1 = arith.constant 0 : i32
    return %c0_i32, %c0_i32_0 : i32, i32
  }
  func.func @transform_10(%arg0: i32) -> (i32, i32) {
    %c0_i32 = arith.constant 0 : i32
    %c0_i32_0 = arith.constant 0 : i32
    %c0_i32_1 = arith.constant 0 : i32
    return %c0_i32, %c0_i32_0 : i32, i32
  }
  func.func @transform_11(%arg0: i32) -> (i32, i32) {
    %c0_i32 = arith.constant 0 : i32
    %c0_i32_0 = arith.constant 0 : i32
    %c0_i32_1 = arith.constant 0 : i32
    return %c0_i32, %c0_i32_0 : i32, i32
  }
  func.func @transform_12(%arg0: i32) -> (i32, i32) {
    %c0_i32 = arith.constant 0 : i32
    %c0_i32_0 = arith.constant 0 : i32
    %c0_i32_1 = arith.constant 0 : i32
    return %c0_i32, %c0_i32_0 : i32, i32
  }
  func.func @transform_13(%arg0: i32) -> (i32, i32) {
    %c0_i32 = arith.constant 0 : i32
    %c0_i32_0 = arith.constant 0 : i32
    return %arg0, %c0_i32 : i32, i32
  }
}

</mosaic_0001>

<llo_original>
// kernel: transformer_encoder_forward.1
$region0: #{transformer_encoder_forward.1}
  #allocation0 [shape = 'u32[]', space=smem, size = 0x4, offset = 0x4, fixed_abs, tag = 'smem constant byte address 0x4 - core index']
  #allocation1 [shape = 'u32[144,128]{1,0:T(1,128)}', space=vmem, size = 0x12000, scoped, tag = 'internal scratch']
  %s0 = inlined_call_operand.hbm [shape: f32[128,384], index: 0, kind: input, shape index: {}]
  %s1 = inlined_call_operand.hbm [shape: bf16[384,1536], index: 1, kind: input, shape index: {}]
  %s2 = inlined_call_operand.hbm [shape: f32[1,1536], index: 2, kind: input, shape index: {}]
  %s3 = inlined_call_operand.hbm [shape: bf16[512,384], index: 3, kind: input, shape index: {}]
  %s4 = inlined_call_operand.hbm [shape: f32[1,384], index: 4, kind: input, shape index: {}]
  %s5 = inlined_call_operand.hbm [shape: f32[1,384], index: 5, kind: input, shape index: {}]
  %s6 = inlined_call_operand.hbm [shape: f32[1,384], index: 6, kind: input, shape index: {}]
  %s7 = inlined_call_operand.hbm [shape: bf16[384,512], index: 7, kind: input, shape index: {}]
  %s8 = inlined_call_operand.hbm [shape: f32[1,512], index: 8, kind: input, shape index: {}]
  %s9 = inlined_call_operand.hbm [shape: bf16[512,384], index: 9, kind: input, shape index: {}]
  %s10 = inlined_call_operand.hbm [shape: f32[1,384], index: 10, kind: input, shape index: {}]
  %s11 = inlined_call_operand.hbm [shape: f32[1,384], index: 11, kind: input, shape index: {}]
  %s12 = inlined_call_operand.hbm [shape: f32[1,384], index: 12, kind: input, shape index: {}]
  %s13 = inlined_call_operand.hbm [shape: f32[128,384], index: 13, kind: output, shape index: {}]
  %s14 = sld [smem:[#allocation0]]
  $region137: #{transformer_encoder_forward.1} parent=0
    _
  %s16 = ssub.s32 1, %s14
  %s17 = scalar_select 0, %s16, %s14
  $region1: #{transformer_encoder_forward.1} parent=0
    #allocation2 [shape = 'u8[196608]{0}', space=vmem, size = 0x30000, scoped, tag = 'input window, operand 0']
    #allocation3 [shape = 's32[2]{0}', space=sflag, size = 0x8, scoped, tag = 'scoped memory for transformer_encoder_forward.1']
    #allocation4 [shape = 's32[2]{0}', space=sflag, size = 0x8, scoped, tag = 'scoped memory for transformer_encoder_forward.1']
    #allocation5 [shape = 'u8[1179648]{0}', space=vmem, size = 0x120000, scoped, tag = 'input window, operand 1, single buffered']
    #allocation6 [shape = 's32[1]{0}', space=sflag, size = 0x4, scoped, tag = 'scoped memory for transformer_encoder_forward.1']
    #allocation7 [shape = 'u8[6144]{0}', space=vmem, size = 0x1800, scoped, tag = 'input window, operand 2, single buffered']
    #allocation8 [shape = 'u8[393216]{0}', space=vmem, size = 0x60000, scoped, tag = 'input window, operand 3, single buffered']
    #allocation9 [shape = 's32[1]{0}', space=sflag, size = 0x4, scoped, tag = 'scoped memory for transformer_encoder_forward.1']
    #allocation10 [shape = 'u8[1536]{0}', space=vmem, size = 0x800, scoped, tag = 'input window, operand 4, single buffered']
    #allocation11 [shape = 'u8[1536]{0}', space=vmem, size = 0x800, scoped, tag = 'input window, operand 5, single buffered']
    #allocation12 [shape = 's32[1]{0}', space=sflag, size = 0x4, scoped, tag = 'scoped memory for transformer_encoder_forward.1']
    #allocation13 [shape = 'u8[1536]{0}', space=vmem, size = 0x800, scoped, tag = 'input window, operand 6, single buffered']
    #allocation14 [shape = 'u8[393216]{0}', space=vmem, size = 0x60000, scoped, tag = 'input window, operand 7, single buffered']
    #allocation15 [shape = 's32[1]{0}', space=sflag, size = 0x4, scoped, tag = 'scoped memory for transformer_encoder_forward.1']
    #allocation16 [shape = 'u8[2048]{0}', space=vmem, size = 0x800, scoped, tag = 'input window, operand 8, single buffered']
    #allocation17 [shape = 'u8[393216]{0}', space=vmem, size = 0x60000, scoped, tag = 'input window, operand 9, single buffered']
    #allocation18 [shape = 's32[1]{0}', space=sflag, size = 0x4, scoped, tag = 'scoped memory for transformer_encoder_forward.1']
    #allocation19 [shape = 'u8[1536]{0}', space=vmem, size = 0x800, scoped, tag = 'input window, operand 10, single buffered']
    #allocation20 [shape = 'u8[1536]{0}', space=vmem, size = 0x800, scoped, tag = 'input window, operand 11, single buffered']
    #allocation21 [shape = 's32[1]{0}', space=sflag, size = 0x4, scoped, tag = 'scoped memory for transformer_encoder_forward.1']
    #allocation22 [shape = 'u8[1536]{0}', space=vmem, size = 0x800, scoped, tag = 'input window, operand 12, single buffered']
    #allocation23 [shape = 'u8[196608]{0}', space=vmem, size = 0x30000, scoped, tag = 'output window, operand 0']
    %18 = vsyncpa [#allocation3], 0
    %s19 = scalar_lea.sflag [#allocation3], 1
    %20 = vsyncpa %s19, 0
    %21 = vsyncpa [#allocation6], 0
    %22 = vsyncpa [#allocation9], 0
    %23 = vsyncpa [#allocation12], 0
    %24 = vsyncpa [#allocation15], 0
    %25 = vsyncpa [#allocation18], 0
    %26 = vsyncpa [#allocation21], 0
    %27 = vsyncpa [#allocation4], 0
    %s28 = scalar_lea.sflag [#allocation4], 1
    %29 = vsyncpa %s28, 0
    loop: start=0, step=1, limit=4
    $region2: #{transformer_encoder_forward.1} parent=1 // loop_pre_header
      _
    $region3: #{transformer_encoder_forward.1} parent=1 // loop_header
      %s31 = sphi 0, %s35
      %p32 = scmp.ge.s32.totalorder %s31, 4
      %s41 = sphi 0, %s43
      %s44 = sphi 0, %s41
      %s45 = sphi 0, %s44
      %s61 = sphi 0, %s45
      %s65 = sphi 0, %s65
      %s67 = sphi 0, %s65
      %s68 = sphi 0, %s67
      %s82 = sphi 0, %s68
      %s86 = sphi 0, %s86
      %s88 = sphi 0, %s86
      %s89 = sphi 0, %s88
      %s103 = sphi 0, %s89
      %s107 = sphi 0, %s107
      %s109 = sphi 0, %s107
      %s110 = sphi 0, %s109
      %s124 = sphi 0, %s110
      %s128 = sphi 0, %s128
      %s130 = sphi 0, %s128
      %s131 = sphi 0, %s130
      %s145 = sphi 0, %s131
      %s149 = sphi 0, %s149
      %s151 = sphi 0, %s149
      %s152 = sphi 0, %s151
      %s166 = sphi 0, %s152
      %s170 = sphi 0, %s170
      %s172 = sphi 0, %s170
      %s173 = sphi 0, %s172
      %s187 = sphi 0, %s173
      %s191 = sphi 0, %s191
      %s193 = sphi 0, %s191
      %s194 = sphi 0, %s193
      %s208 = sphi 0, %s194
      %s212 = sphi 0, %s212
      %s214 = sphi 0, %s212
      %s215 = sphi 0, %s214
      %s229 = sphi 0, %s215
      %s233 = sphi 0, %s233
      %s235 = sphi 0, %s233
      %s236 = sphi 0, %s235
      %s250 = sphi 0, %s236
      %s254 = sphi 0, %s254
      %s256 = sphi 0, %s254
      %s257 = sphi 0, %s256
      %s271 = sphi 0, %s257
      %s275 = sphi 0, %s275
      %s277 = sphi 0, %s275
      %s278 = sphi 0, %s277
      %s292 = sphi 0, %s278
      %s296 = sphi 0, %s296
      %s298 = sphi 0, %s296
      %s299 = sphi 0, %s298
      %s313 = sphi 0, %s299
      %s319 = sphi 0, %s321
      %s322 = sphi 0, %s319
      %s323 = sphi 0, %s322
      %s339 = sphi 0, %s323
    $region4: #{transformer_encoder_forward.1} parent=1 // loop_header_branch
      %34 = sbr.rel (%p32) target = $region8
    $region5: #{transformer_encoder_forward.1} parent=1 // loop_body
      %s36 = ssub.s32 %s31, 1
      %s37 = ssub.s32 %s31, 2
      %s38 = sadd.s32 %s31, 1
      %s39 = ssub.s32 %s31, %s38
      %p40 = scmp.eq.s32.totalorder %s39, 0
      %s42 = sadd.s32 %s41, 1
      %s43 = scalar_select %p40, %s41, %s42
      %p46 = pneg %p40
      %p47 = scmp.eq.s32.totalorder %s31, 1
      %p48 = por %p46, %p47
      %p49 = scmp.ne.s32.totalorder %s41, %s44
      %p50 = scmp.eq.s32.totalorder %s31, 0
      %p51 = por %p49, %p50
      %p52 = scmp.ne.s32.totalorder %s41, %s44
      %p53 = scmp.eq.s32.totalorder %s36, 1
      %p54 = por %p52, %p53
      %p55 = scmp.ne.s32.totalorder %s44, %s45
      %p56 = scmp.eq.s32.totalorder %s36, 0
      %p57 = por %p55, %p56
      %p58 = scmp.ne.s32.totalorder %s44, %s45
      %p59 = scmp.eq.s32.totalorder %s37, 1
      %p60 = por %p58, %p59
      %p62 = scmp.ne.s32.totalorder %s45, %s61
      %p63 = scmp.eq.s32.totalorder %s37, 0
      %p64 = por %p62, %p63
      %s66 = sadd.s32 %s65, 1
      %p69 = scmp.eq.s32.totalorder %s31, 1
      %p70 = scmp.ne.s32.totalorder %s65, %s67
      %p71 = scmp.eq.s32.totalorder %s31, 0
      %p72 = por %p70, %p71
      %p73 = scmp.ne.s32.totalorder %s65, %s67
      %p74 = scmp.eq.s32.totalorder %s36, 1
      %p75 = por %p73, %p74
      %p76 = scmp.ne.s32.totalorder %s67, %s68
      %p77 = scmp.eq.s32.totalorder %s36, 0
      %p78 = por %p76, %p77
      %p79 = scmp.ne.s32.totalorder %s67, %s68
      %p80 = scmp.eq.s32.totalorder %s37, 1
      %p81 = por %p79, %p80
      %p83 = scmp.ne.s32.totalorder %s68, %s82
      %p84 = scmp.eq.s32.totalorder %s37, 0
      %p85 = por %p83, %p84
      %s87 = sadd.s32 %s86, 1
      %p90 = scmp.eq.s32.totalorder %s31, 1
      %p91 = scmp.ne.s32.totalorder %s86, %s88
      %p92 = scmp.eq.s32.totalorder %s31, 0
      %p93 = por %p91, %p92
      %p94 = scmp.ne.s32.totalorder %s86, %s88
      %p95 = scmp.eq.s32.totalorder %s36, 1
      %p96 = por %p94, %p95
      %p97 = scmp.ne.s32.totalorder %s88, %s89
      %p98 = scmp.eq.s32.totalorder %s36, 0
      %p99 = por %p97, %p98
      %p100 = scmp.ne.s32.totalorder %s88, %s89
      %p101 = scmp.eq.s32.totalorder %s37, 1
      %p102 = por %p100, %p101
      %p104 = scmp.ne.s32.totalorder %s89, %s103
      %p105 = scmp.eq.s32.totalorder %s37, 0
      %p106 = por %p104, %p105
      %s108 = sadd.s32 %s107, 1
      %p111 = scmp.eq.s32.totalorder %s31, 1
      %p112 = scmp.ne.s32.totalorder %s107, %s109
      %p113 = scmp.eq.s32.totalorder %s31, 0
      %p114 = por %p112, %p113
      %p115 = scmp.ne.s32.totalorder %s107, %s109
      %p116 = scmp.eq.s32.totalorder %s36, 1
      %p117 = por %p115, %p116
      %p118 = scmp.ne.s32.totalorder %s109, %s110
      %p119 = scmp.eq.s32.totalorder %s36, 0
      %p120 = por %p118, %p119
      %p121 = scmp.ne.s32.totalorder %s109, %s110
      %p122 = scmp.eq.s32.totalorder %s37, 1
      %p123 = por %p121, %p122
      %p125 = scmp.ne.s32.totalorder %s110, %s124
      %p126 = scmp.eq.s32.totalorder %s37, 0
      %p127 = por %p125, %p126
      %s129 = sadd.s32 %s128, 1
      %p132 = scmp.eq.s32.totalorder %s31, 1
      %p133 = scmp.ne.s32.totalorder %s128, %s130
      %p134 = scmp.eq.s32.totalorder %s31, 0
      %p135 = por %p133, %p134
      %p136 = scmp.ne.s32.totalorder %s128, %s130
      %p137 = scmp.eq.s32.totalorder %s36, 1
      %p138 = por %p136, %p137
      %p139 = scmp.ne.s32.totalorder %s130, %s131
      %p140 = scmp.eq.s32.totalorder %s36, 0
      %p141 = por %p139, %p140
      %p142 = scmp.ne.s32.totalorder %s130, %s131
      %p143 = scmp.eq.s32.totalorder %s37, 1
      %p144 = por %p142, %p143
      %p146 = scmp.ne.s32.totalorder %s131, %s145
      %p147 = scmp.eq.s32.totalorder %s37, 0
      %p148 = por %p146, %p147
      %s150 = sadd.s32 %s149, 1
      %p153 = scmp.eq.s32.totalorder %s31, 1
      %p154 = scmp.ne.s32.totalorder %s149, %s151
      %p155 = scmp.eq.s32.totalorder %s31, 0
      %p156 = por %p154, %p155
      %p157 = scmp.ne.s32.totalorder %s149, %s151
      %p158 = scmp.eq.s32.totalorder %s36, 1
      %p159 = por %p157, %p158
      %p160 = scmp.ne.s32.totalorder %s151, %s152
      %p161 = scmp.eq.s32.totalorder %s36, 0
      %p162 = por %p160, %p161
      %p163 = scmp.ne.s32.totalorder %s151, %s152
      %p164 = scmp.eq.s32.totalorder %s37, 1
      %p165 = por %p163, %p164
      %p167 = scmp.ne.s32.totalorder %s152, %s166
      %p168 = scmp.eq.s32.totalorder %s37, 0
      %p169 = por %p167, %p168
      %s171 = sadd.s32 %s170, 1
      %p174 = scmp.eq.s32.totalorder %s31, 1
      %p175 = scmp.ne.s32.totalorder %s170, %s172
      %p176 = scmp.eq.s32.totalorder %s31, 0
      %p177 = por %p175, %p176
      %p178 = scmp.ne.s32.totalorder %s170, %s172
      %p179 = scmp.eq.s32.totalorder %s36, 1
      %p180 = por %p178, %p179
      %p181 = scmp.ne.s32.totalorder %s172, %s173
      %p182 = scmp.eq.s32.totalorder %s36, 0
      %p183 = por %p181, %p182
      %p184 = scmp.ne.s32.totalorder %s172, %s173
      %p185 = scmp.eq.s32.totalorder %s37, 1
      %p186 = por %p184, %p185
      %p188 = scmp.ne.s32.totalorder %s173, %s187
      %p189 = scmp.eq.s32.totalorder %s37, 0
      %p190 = por %p188, %p189
      %s192 = sadd.s32 %s191, 1
      %p195 = scmp.eq.s32.totalorder %s31, 1
      %p196 = scmp.ne.s32.totalorder %s191, %s193
      %p197 = scmp.eq.s32.totalorder %s31, 0
      %p198 = por %p196, %p197
      %p199 = scmp.ne.s32.totalorder %s191, %s193
      %p200 = scmp.eq.s32.totalorder %s36, 1
      %p201 = por %p199, %p200
      %p202 = scmp.ne.s32.totalorder %s193, %s194
      %p203 = scmp.eq.s32.totalorder %s36, 0
      %p204 = por %p202, %p203
      %p205 = scmp.ne.s32.totalorder %s193, %s194
      %p206 = scmp.eq.s32.totalorder %s37, 1
      %p207 = por %p205, %p206
      %p209 = scmp.ne.s32.totalorder %s194, %s208
      %p210 = scmp.eq.s32.totalorder %s37, 0
      %p211 = por %p209, %p210
      %s213 = sadd.s32 %s212, 1
      %p216 = scmp.eq.s32.totalorder %s31, 1
      %p217 = scmp.ne.s32.totalorder %s212, %s214
      %p218 = scmp.eq.s32.totalorder %s31, 0
      %p219 = por %p217, %p218
      %p220 = scmp.ne.s32.totalorder %s212, %s214
      %p221 = scmp.eq.s32.totalorder %s36, 1
      %p222 = por %p220, %p221
      %p223 = scmp.ne.s32.totalorder %s214, %s215
      %p224 = scmp.eq.s32.totalorder %s36, 0
      %p225 = por %p223, %p224
      %p226 = scmp.ne.s32.totalorder %s214, %s215
      %p227 = scmp.eq.s32.totalorder %s37, 1
      %p228 = por %p226, %p227
      %p230 = scmp.ne.s32.totalorder %s215, %s229
      %p231 = scmp.eq.s32.totalorder %s37, 0
      %p232 = por %p230, %p231
      %s234 = sadd.s32 %s233, 1
      %p237 = scmp.eq.s32.totalorder %s31, 1
      %p238 = scmp.ne.s32.totalorder %s233, %s235
      %p239 = scmp.eq.s32.totalorder %s31, 0
      %p240 = por %p238, %p239
      %p241 = scmp.ne.s32.totalorder %s233, %s235
      %p242 = scmp.eq.s32.totalorder %s36, 1
      %p243 = por %p241, %p242
      %p244 = scmp.ne.s32.totalorder %s235, %s236
      %p245 = scmp.eq.s32.totalorder %s36, 0
      %p246 = por %p244, %p245
      %p247 = scmp.ne.s32.totalorder %s235, %s236
      %p248 = scmp.eq.s32.totalorder %s37, 1
      %p249 = por %p247, %p248
      %p251 = scmp.ne.s32.totalorder %s236, %s250
      %p252 = scmp.eq.s32.totalorder %s37, 0
      %p253 = por %p251, %p252
      %s255 = sadd.s32 %s254, 1
      %p258 = scmp.eq.s32.totalorder %s31, 1
      %p259 = scmp.ne.s32.totalorder %s254, %s256
      %p260 = scmp.eq.s32.totalorder %s31, 0
      %p261 = por %p259, %p260
      %p262 = scmp.ne.s32.totalorder %s254, %s256
      %p263 = scmp.eq.s32.totalorder %s36, 1
      %p264 = por %p262, %p263
      %p265 = scmp.ne.s32.totalorder %s256, %s257
      %p266 = scmp.eq.s32.totalorder %s36, 0
      %p267 = por %p265, %p266
      %p268 = scmp.ne.s32.totalorder %s256, %s257
      %p269 = scmp.eq.s32.totalorder %s37, 1
      %p270 = por %p268, %p269
      %p272 = scmp.ne.s32.totalorder %s257, %s271
      %p273 = scmp.eq.s32.totalorder %s37, 0
      %p274 = por %p272, %p273
      %s276 = sadd.s32 %s275, 1
      %p279 = scmp.eq.s32.totalorder %s31, 1
      %p280 = scmp.ne.s32.totalorder %s275, %s277
      %p281 = scmp.eq.s32.totalorder %s31, 0
      %p282 = por %p280, %p281
      %p283 = scmp.ne.s32.totalorder %s275, %s277
      %p284 = scmp.eq.s32.totalorder %s36, 1
      %p285 = por %p283, %p284
      %p286 = scmp.ne.s32.totalorder %s277, %s278
      %p287 = scmp.eq.s32.totalorder %s36, 0
      %p288 = por %p286, %p287
      %p289 = scmp.ne.s32.totalorder %s277, %s278
      %p290 = scmp.eq.s32.totalorder %s37, 1
      %p291 = por %p289, %p290
      %p293 = scmp.ne.s32.totalorder %s278, %s292
      %p294 = scmp.eq.s32.totalorder %s37, 0
      %p295 = por %p293, %p294
      %s297 = sadd.s32 %s296, 1
      %p300 = scmp.eq.s32.totalorder %s31, 1
      %p301 = scmp.ne.s32.totalorder %s296, %s298
      %p302 = scmp.eq.s32.totalorder %s31, 0
      %p303 = por %p301, %p302
      %p304 = scmp.ne.s32.totalorder %s296, %s298
      %p305 = scmp.eq.s32.totalorder %s36, 1
      %p306 = por %p304, %p305
      %p307 = scmp.ne.s32.totalorder %s298, %s299
      %p308 = scmp.eq.s32.totalorder %s36, 0
      %p309 = por %p307, %p308
      %p310 = scmp.ne.s32.totalorder %s298, %s299
      %p311 = scmp.eq.s32.totalorder %s37, 1
      %p312 = por %p310, %p311
      %p314 = scmp.ne.s32.totalorder %s299, %s313
      %p315 = scmp.eq.s32.totalorder %s37, 0
      %p316 = por %p314, %p315
      %s317 = ssub.s32 %s31, %s38
      %p318 = scmp.eq.s32.totalorder %s317, 0
      %s320 = sadd.s32 %s319, 1
      %s321 = scalar_select %p318, %s319, %s320
      %p324 = pneg %p318
      %p325 = scmp.eq.s32.totalorder %s31, 1
      %p326 = por %p324, %p325
      %p327 = scmp.ne.s32.totalorder %s319, %s322
      %p328 = scmp.eq.s32.totalorder %s31, 0
      %p329 = por %p327, %p328
      %p330 = scmp.ne.s32.totalorder %s319, %s322
      %p331 = scmp.eq.s32.totalorder %s36, 1
      %p332 = por %p330, %p331
      %p333 = scmp.ne.s32.totalorder %s322, %s323
      %p334 = scmp.eq.s32.totalorder %s36, 0
      %p335 = por %p333, %p334
      %p336 = scmp.ne.s32.totalorder %s322, %s323
      %p337 = scmp.eq.s32.totalorder %s37, 1
      %p338 = por %p336, %p337
      %p340 = scmp.ne.s32.totalorder %s323, %s339
      %p341 = scmp.eq.s32.totalorder %s37, 0
      %p342 = por %p340, %p341
      %p343 = scmp.le.s32.totalorder 1, %s31
      %p344 = scmp.lt.s32.totalorder %s31, 3
      %p345 = pnand %p343, %p344
      %p346 = pneg %p345
      // Predicated region
      $region9: #{transformer_encoder_forward.1} parent=5 // pred_check
        _
      $region10: #{transformer_encoder_forward.1} parent=5 // pred_check_branch
        %348 = sbr.rel (%p345) target = $region12
      $region11: #{transformer_encoder_forward.1} parent=5 // pred_region
        %s349 = ssub.s32 %s31, 1
        // Predicated region
        $region13: #{transformer_encoder_forward.1} parent=11 // pred_check
          %p350 = pneg %p78
        $region14: #{transformer_encoder_forward.1} parent=11 // pred_check_branch
          %352 = sbr.rel (%p350) target = $region16
        $region15: #{transformer_encoder_forward.1} parent=11 // pred_region
          %s354 = ssub.s32 36864, 36864
          %355 = vsyncadd [#allocation6], %s354
          %s356 = sshll.u32 [#allocation5], 4
          %s357 = int_to_ptr.vmem [resolvable:$true] %s356
          %362 = dma.hbm_to_vmem [thread:$0]  %s1, 36864, %s357, [#allocation6], 768, 768, 48
        $region16: #{transformer_encoder_forward.1} parent=11 // pred_fallthru
          _
        // Predicated region
        $region17: #{transformer_encoder_forward.1} parent=11 // pred_check
          %p363 = pneg %p99
        $region18: #{transformer_encoder_forward.1} parent=11 // pred_check_branch
          %365 = sbr.rel (%p363) target = $region20
        $region19: #{transformer_encoder_forward.1} parent=11 // pred_region
          %s367 = ssub.s32 192, 192
          %368 = vsyncadd [#allocation6], %s367
          %s370 = sshll.u32 [#allocation7], 4
          %s371 = int_to_ptr.vmem [resolvable:$true] %s370
          %373 = dma.hbm_to_vmem [thread:$0]  %s2, 192, %s371, [#allocation6]
        $region20: #{transformer_encoder_forward.1} parent=11 // pred_fallthru
          _
        // Predicated region
        $region21: #{transformer_encoder_forward.1} parent=11 // pred_check
          %p374 = pneg %p120
        $region22: #{transformer_encoder_forward.1} parent=11 // pred_check_branch
          %376 = sbr.rel (%p374) target = $region24
        $region23: #{transformer_encoder_forward.1} parent=11 // pred_region
          %s378 = ssub.s32 12288, 12288
          %379 = vsyncadd [#allocation9], %s378
          %s380 = sshll.u32 [#allocation8], 4
          %s381 = int_to_ptr.vmem [resolvable:$true] %s380
          %386 = dma.hbm_to_vmem [thread:$0]  %s3, 12288, %s381, [#allocation9], 192, 192, 12
        $region24: #{transformer_encoder_forward.1} parent=11 // pred_fallthru
          _
        // Predicated region
        $region25: #{transformer_encoder_forward.1} parent=11 // pred_check
          %p387 = pneg %p141
        $region26: #{transformer_encoder_forward.1} parent=11 // pred_check_branch
          %389 = sbr.rel (%p387) target = $region28
        $region27: #{transformer_encoder_forward.1} parent=11 // pred_region
          %s391 = ssub.s32 48, 48
          %392 = vsyncadd [#allocation9], %s391
          %s394 = sshll.u32 [#allocation10], 4
          %s395 = int_to_ptr.vmem [resolvable:$true] %s394
          %397 = dma.hbm_to_vmem [thread:$0]  %s4, 48, %s395, [#allocation9]
        $region28: #{transformer_encoder_forward.1} parent=11 // pred_fallthru
          _
        // Predicated region
        $region29: #{transformer_encoder_forward.1} parent=11 // pred_check
          %p398 = pneg %p162
        $region30: #{transformer_encoder_forward.1} parent=11 // pred_check_branch
          %400 = sbr.rel (%p398) target = $region32
        $region31: #{transformer_encoder_forward.1} parent=11 // pred_region
          %s402 = ssub.s32 48, 48
          %403 = vsyncadd [#allocation12], %s402
          %s405 = sshll.u32 [#allocation11], 4
          %s406 = int_to_ptr.vmem [resolvable:$true] %s405
          %408 = dma.hbm_to_vmem [thread:$0]  %s5, 48, %s406, [#allocation12]
        $region32: #{transformer_encoder_forward.1} parent=11 // pred_fallthru
          _
        // Predicated region
        $region33: #{transformer_encoder_forward.1} parent=11 // pred_check
          %p409 = pneg %p183
        $region34: #{transformer_encoder_forward.1} parent=11 // pred_check_branch
          %411 = sbr.rel (%p409) target = $region36
        $region35: #{transformer_encoder_forward.1} parent=11 // pred_region
          %s413 = ssub.s32 48, 48
          %414 = vsyncadd [#allocation12], %s413
          %s416 = sshll.u32 [#allocation13], 4
          %s417 = int_to_ptr.vmem [resolvable:$true] %s416
          %419 = dma.hbm_to_vmem [thread:$0]  %s6, 48, %s417, [#allocation12]
        $region36: #{transformer_encoder_forward.1} parent=11 // pred_fallthru
          _
        // Predicated region
        $region37: #{transformer_encoder_forward.1} parent=11 // pred_check
          %p420 = pneg %p204
        $region38: #{transformer_encoder_forward.1} parent=11 // pred_check_branch
          %422 = sbr.rel (%p420) target = $region40
        $region39: #{transformer_encoder_forward.1} parent=11 // pred_region
          %s424 = ssub.s32 12288, 12288
          %425 = vsyncadd [#allocation15], %s424
          %s426 = sshll.u32 [#allocation14], 4
          %s427 = int_to_ptr.vmem [resolvable:$true] %s426
          %432 = dma.hbm_to_vmem [thread:$0]  %s7, 12288, %s427, [#allocation15], 256, 256, 16
        $region40: #{transformer_encoder_forward.1} parent=11 // pred_fallthru
          _
        // Predicated region
        $region41: #{transformer_encoder_forward.1} parent=11 // pred_check
          %p433 = pneg %p225
        $region42: #{transformer_encoder_forward.1} parent=11 // pred_check_branch
          %435 = sbr.rel (%p433) target = $region44
        $region43: #{transformer_encoder_forward.1} parent=11 // pred_region
          %s437 = ssub.s32 64, 64
          %438 = vsyncadd [#allocation15], %s437
          %s440 = sshll.u32 [#allocation16], 4
          %s441 = int_to_ptr.vmem [resolvable:$true] %s440
          %443 = dma.hbm_to_vmem [thread:$0]  %s8, 64, %s441, [#allocation15]
        $region44: #{transformer_encoder_forward.1} parent=11 // pred_fallthru
          _
        // Predicated region
        $region45: #{transformer_encoder_forward.1} parent=11 // pred_check
          %p444 = pneg %p246
        $region46: #{transformer_encoder_forward.1} parent=11 // pred_check_branch
          %446 = sbr.rel (%p444) target = $region48
        $region47: #{transformer_encoder_forward.1} parent=11 // pred_region
          %s448 = ssub.s32 12288, 12288
          %449 = vsyncadd [#allocation18], %s448
          %s450 = sshll.u32 [#allocation17], 4
          %s451 = int_to_ptr.vmem [resolvable:$true] %s450
          %456 = dma.hbm_to_vmem [thread:$0]  %s9, 12288, %s451, [#allocation18], 192, 192, 12
        $region48: #{transformer_encoder_forward.1} parent=11 // pred_fallthru
          _
        // Predicated region
        $region49: #{transformer_encoder_forward.1} parent=11 // pred_check
          %p457 = pneg %p267
        $region50: #{transformer_encoder_forward.1} parent=11 // pred_check_branch
          %459 = sbr.rel (%p457) target = $region52
        $region51: #{transformer_encoder_forward.1} parent=11 // pred_region
          %s461 = ssub.s32 48, 48
          %462 = vsyncadd [#allocation18], %s461
          %s464 = sshll.u32 [#allocation19], 4
          %s465 = int_to_ptr.vmem [resolvable:$true] %s464
          %467 = dma.hbm_to_vmem [thread:$0]  %s10, 48, %s465, [#allocation18]
        $region52: #{transformer_encoder_forward.1} parent=11 // pred_fallthru
          _
        // Predicated region
        $region53: #{transformer_encoder_forward.1} parent=11 // pred_check
          %p468 = pneg %p288
        $region54: #{transformer_encoder_forward.1} parent=11 // pred_check_branch
          %470 = sbr.rel (%p468) target = $region56
        $region55: #{transformer_encoder_forward.1} parent=11 // pred_region
          %s472 = ssub.s32 48, 48
          %473 = vsyncadd [#allocation21], %s472
          %s475 = sshll.u32 [#allocation20], 4
          %s476 = int_to_ptr.vmem [resolvable:$true] %s475
          %478 = dma.hbm_to_vmem [thread:$0]  %s11, 48, %s476, [#allocation21]
        $region56: #{transformer_encoder_forward.1} parent=11 // pred_fallthru
          _
        // Predicated region
        $region57: #{transformer_encoder_forward.1} parent=11 // pred_check
          %p479 = pneg %p309
        $region58: #{transformer_encoder_forward.1} parent=11 // pred_check_branch
          %481 = sbr.rel (%p479) target = $region60
        $region59: #{transformer_encoder_forward.1} parent=11 // pred_region
          %s483 = ssub.s32 48, 48
          %484 = vsyncadd [#allocation21], %s483
          %s486 = sshll.u32 [#allocation22], 4
          %s487 = int_to_ptr.vmem [resolvable:$true] %s486
          %489 = dma.hbm_to_vmem [thread:$0]  %s12, 48, %s487, [#allocation21]
        $region60: #{transformer_encoder_forward.1} parent=11 // pred_fallthru
          _
      $region12: #{transformer_encoder_forward.1} parent=5 // pred_fallthru
        _
      %p490 = scmp.lt.s32.totalorder %s31, 2
      // Predicated region
      $region61: #{transformer_encoder_forward.1} parent=5 // pred_check
        %p491 = pneg %p490
      $region62: #{transformer_encoder_forward.1} parent=5 // pred_check_branch
        %493 = sbr.rel (%p491) target = $region64
      $region63: #{transformer_encoder_forward.1} parent=5 // pred_region
        // Predicated region
        $region65: #{transformer_encoder_forward.1} parent=63 // pred_check
          %p494 = pneg %p51
        $region66: #{transformer_encoder_forward.1} parent=63 // pred_check_branch
          %496 = sbr.rel (%p494) target = $region68
        $region67: #{transformer_encoder_forward.1} parent=63 // pred_region
          %s497 = sand.u32 %s41, 1
          %s498 = scalar_lea.sflag [#allocation3], %s497
          %s499 = sand.u32 %s41, 1
          %s500 = smul.addr %s499, 192
          %s501 = scalar_lea.vmem [#allocation2], %s500
          %s502 = smul.u32 8, %s31
          %s504 = ssub.s32 3072, 3072
          %505 = vsyncadd %s498, %s504
          %s506 = smul.addr %s502, 3
          %s507 = smul.addr %s506, 128
          %s508 = scalar_lea.hbm %s0, %s507
          %s509 = sshll.u32 %s501, 4
          %s510 = int_to_ptr.vmem [resolvable:$true] %s509
          %515 = dma.hbm_to_vmem [thread:$0]  %s508, 3072, %s510, %s498, 384, 384, 24
        $region68: #{transformer_encoder_forward.1} parent=63 // pred_fallthru
          _
      $region64: #{transformer_encoder_forward.1} parent=5 // pred_fallthru
        _
      %p516 = scmp.le.s32.totalorder 1, %s31
      %p517 = scmp.lt.s32.totalorder %s31, 3
      %p518 = pnand %p516, %p517
      %p519 = pneg %p518
      // Predicated region
      $region69: #{transformer_encoder_forward.1} parent=5 // pred_check
        _
      $region70: #{transformer_encoder_forward.1} parent=5 // pred_check_branch
        %521 = sbr.rel (%p518) target = $region72
      $region71: #{transformer_encoder_forward.1} parent=5 // pred_region
        %s522 = ssub.s32 %s31, 1
        %s523 = sand.u32 %s44, 1
        %s524 = scalar_lea.sflag [#allocation3], %s523
        %s525 = sand.u32 %s44, 1
        %s526 = smul.addr %s525, 192
        %s527 = scalar_lea.vmem [#allocation2], %s526
        // Predicated region
        $region73: #{transformer_encoder_forward.1} parent=71 // pred_check
          %p528 = pneg %p57
        $region74: #{transformer_encoder_forward.1} parent=71 // pred_check_branch
          %530 = sbr.rel (%p528) target = $region76
        $region75: #{transformer_encoder_forward.1} parent=71 // pred_region
          %531 = dma.done %s524, 3072
        $region76: #{transformer_encoder_forward.1} parent=71 // pred_fallthru
          _
        // Predicated region
        $region77: #{transformer_encoder_forward.1} parent=71 // pred_check
          %p532 = pneg %p78
        $region78: #{transformer_encoder_forward.1} parent=71 // pred_check_branch
          %534 = sbr.rel (%p532) target = $region80
        $region79: #{transformer_encoder_forward.1} parent=71 // pred_region
          %535 = dma.done [#allocation6], 36864
        $region80: #{transformer_encoder_forward.1} parent=71 // pred_fallthru
          _
        // Predicated region
        $region81: #{transformer_encoder_forward.1} parent=71 // pred_check
          %p536 = pneg %p99
        $region82: #{transformer_encoder_forward.1} parent=71 // pred_check_branch
          %538 = sbr.rel (%p536) target = $region84
        $region83: #{transformer_encoder_forward.1} parent=71 // pred_region
          %539 = dma.done [#allocation6], 192
        $region84: #{transformer_encoder_forward.1} parent=71 // pred_fallthru
          _
        // Predicated region
        $region85: #{transformer_encoder_forward.1} parent=71 // pred_check
          %p540 = pneg %p120
        $region86: #{transformer_encoder_forward.1} parent=71 // pred_check_branch
          %542 = sbr.rel (%p540) target = $region88
        $region87: #{transformer_encoder_forward.1} parent=71 // pred_region
          %543 = dma.done [#allocation9], 12288
        $region88: #{transformer_encoder_forward.1} parent=71 // pred_fallthru
          _
        // Predicated region
        $region89: #{transformer_encoder_forward.1} parent=71 // pred_check
          %p544 = pneg %p141
        $region90: #{transformer_encoder_forward.1} parent=71 // pred_check_branch
          %546 = sbr.rel (%p544) target = $region92
        $region91: #{transformer_encoder_forward.1} parent=71 // pred_region
          %547 = dma.done [#allocation9], 48
        $region92: #{transformer_encoder_forward.1} parent=71 // pred_fallthru
          _
        // Predicated region
        $region93: #{transformer_encoder_forward.1} parent=71 // pred_check
          %p548 = pneg %p162
        $region94: #{transformer_encoder_forward.1} parent=71 // pred_check_branch
          %550 = sbr.rel (%p548) target = $region96
        $region95: #{transformer_encoder_forward.1} parent=71 // pred_region
          %551 = dma.done [#allocation12], 48
        $region96: #{transformer_encoder_forward.1} parent=71 // pred_fallthru
          _
        // Predicated region
        $region97: #{transformer_encoder_forward.1} parent=71 // pred_check
          %p552 = pneg %p183
        $region98: #{transformer_encoder_forward.1} parent=71 // pred_check_branch
          %554 = sbr.rel (%p552) target = $region100
        $region99: #{transformer_encoder_forward.1} parent=71 // pred_region
          %555 = dma.done [#allocation12], 48
        $region100: #{transformer_encoder_forward.1} parent=71 // pred_fallthru
          _
        // Predicated region
        $region101: #{transformer_encoder_forward.1} parent=71 // pred_check
          %p556 = pneg %p204
        $region102: #{transformer_encoder_forward.1} parent=71 // pred_check_branch
          %558 = sbr.rel (%p556) target = $region104
        $region103: #{transformer_encoder_forward.1} parent=71 // pred_region
          %559 = dma.done [#allocation15], 12288
        $region104: #{transformer_encoder_forward.1} parent=71 // pred_fallthru
          _
        // Predicated region
        $region105: #{transformer_encoder_forward.1} parent=71 // pred_check
          %p560 = pneg %p225
        $region106: #{transformer_encoder_forward.1} parent=71 // pred_check_branch
          %562 = sbr.rel (%p560) target = $region108
        $region107: #{transformer_encoder_forward.1} parent=71 // pred_region
          %563 = dma.done [#allocation15], 64
        $region108: #{transformer_encoder_forward.1} parent=71 // pred_fallthru
          _
        // Predicated region
        $region109: #{transformer_encoder_forward.1} parent=71 // pred_check
          %p564 = pneg %p246
        $region110: #{transformer_encoder_forward.1} parent=71 // pred_check_branch
          %566 = sbr.rel (%p564) target = $region112
        $region111: #{transformer_encoder_forward.1} parent=71 // pred_region
          %567 = dma.done [#allocation18], 12288
        $region112: #{transformer_encoder_forward.1} parent=71 // pred_fallthru
          _
        // Predicated region
        $region113: #{transformer_encoder_forward.1} parent=71 // pred_check
          %p568 = pneg %p267
        $region114: #{transformer_encoder_forward.1} parent=71 // pred_check_branch
          %570 = sbr.rel (%p568) target = $region116
        $region115: #{transformer_encoder_forward.1} parent=71 // pred_region
          %571 = dma.done [#allocation18], 48
        $region116: #{transformer_encoder_forward.1} parent=71 // pred_fallthru
          _
        // Predicated region
        $region117: #{transformer_encoder_forward.1} parent=71 // pred_check
          %p572 = pneg %p288
        $region118: #{transformer_encoder_forward.1} parent=71 // pred_check_branch
          %574 = sbr.rel (%p572) target = $region120
        $region119: #{transformer_encoder_forward.1} parent=71 // pred_region
          %575 = dma.done [#allocation21], 48
        $region120: #{transformer_encoder_forward.1} parent=71 // pred_fallthru
          _
        // Predicated region
        $region121: #{transformer_encoder_forward.1} parent=71 // pred_check
          %p576 = pneg %p309
        $region122: #{transformer_encoder_forward.1} parent=71 // pred_check_branch
          %578 = sbr.rel (%p576) target = $region124
        $region123: #{transformer_encoder_forward.1} parent=71 // pred_region
          %579 = dma.done [#allocation21], 48
        $region124: #{transformer_encoder_forward.1} parent=71 // pred_fallthru
          _
        %s580 = sand.u32 %s44, 1
        %s581 = scalar_lea.sflag [#allocation3], %s580
        %s582 = sand.u32 %s44, 1
        %s583 = smul.addr %s582, 192
        %s584 = scalar_lea.vmem [#allocation2], %s583
        %p585 = pneg %p57
        %p586 = pneg %p54
        %p587 = pneg %p78
        %p588 = pneg %p75
        %p589 = pneg %p99
        %p590 = pneg %p96
        %p591 = pneg %p120
        %p592 = pneg %p117
        %p593 = pneg %p141
        %p594 = pneg %p138
        %p595 = pneg %p162
        %p596 = pneg %p159
        %p597 = pneg %p183
        %p598 = pneg %p180
        %p599 = pneg %p204
        %p600 = pneg %p201
        %p601 = pneg %p225
        %p602 = pneg %p222
        %p603 = pneg %p246
        %p604 = pneg %p243
        %p605 = pneg %p267
        %p606 = pneg %p264
        %p607 = pneg %p288
        %p608 = pneg %p285
        %p609 = pneg %p309
        %p610 = pneg %p306
        %p611 = pneg %p335
        %p612 = pneg %p332
        %s613 = sand.u32 %s322, 1
        %s614 = scalar_lea.sflag [#allocation4], %s613
        %s615 = sand.u32 %s322, 1
        %s616 = smul.addr %s615, 192
        %s617 = scalar_lea.vmem [#allocation23], %s616
        %s618 = smul.u32 8, %s36
        %s619 = smul.u32 8, %s36
        %v621 = vld [vmem:[%s527] sm:$0xff]
        %v622 = vld [vmem:[%s527 + $0x8] sm:$0xff]
        %v623 = vld [vmem:[%s527 + $0x10] sm:$0xff]
        %v624 = vld [vmem:[%s527 + $0x18] sm:$0xff]
        %v625 = vld [vmem:[%s527 + $0x20] sm:$0xff]
        %v626 = vld [vmem:[%s527 + $0x28] sm:$0xff]
        %v627 = vld [vmem:[%s527 + $0x30] sm:$0xff]
        %v628 = vld [vmem:[%s527 + $0x38] sm:$0xff]
        %v629 = vld [vmem:[%s527 + $0x40] sm:$0xff]
        %v630 = vld [vmem:[%s527 + $0x48] sm:$0xff]
        %v631 = vld [vmem:[%s527 + $0x50] sm:$0xff]
        %v632 = vld [vmem:[%s527 + $0x58] sm:$0xff]
        %v633 = vld [vmem:[%s527 + $0x60] sm:$0xff]
        %v634 = vld [vmem:[%s527 + $0x68] sm:$0xff]
        %v635 = vld [vmem:[%s527 + $0x70] sm:$0xff]
        %v636 = vld [vmem:[%s527 + $0x78] sm:$0xff]
        %v637 = vld [vmem:[%s527 + $0x80] sm:$0xff]
        %v638 = vld [vmem:[%s527 + $0x88] sm:$0xff]
        %v639 = vld [vmem:[%s527 + $0x90] sm:$0xff]
        %v640 = vld [vmem:[%s527 + $0x98] sm:$0xff]
        %v641 = vld [vmem:[%s527 + $0xa0] sm:$0xff]
        %v642 = vld [vmem:[%s527 + $0xa8] sm:$0xff]
        %v643 = vld [vmem:[%s527 + $0xb0] sm:$0xff]
        %v644 = vld [vmem:[%s527 + $0xb8] sm:$0xff]
        %v645 = vpack.c.bf16 %v624, %v621
        %v646 = vpack.c.bf16 %v625, %v622
        %v647 = vpack.c.bf16 %v626, %v623
        %v648 = vpack.c.bf16 %v630, %v627
        %v649 = vpack.c.bf16 %v631, %v628
        %v650 = vpack.c.bf16 %v632, %v629
        %v651 = vpack.c.bf16 %v636, %v633
        %v652 = vpack.c.bf16 %v637, %v634
        %v653 = vpack.c.bf16 %v638, %v635
        %v654 = vpack.c.bf16 %v642, %v639
        %v655 = vpack.c.bf16 %v643, %v640
        %v656 = vpack.c.bf16 %v644, %v641
        %v657 = vld [vmem:[#allocation5] sm:$0xff]
        %v658 = vld [vmem:[#allocation5 + $0x8] sm:$0xff]
        %v659 = vld [vmem:[#allocation5 + $0x10] sm:$0xff]
        %v660 = vld [vmem:[#allocation5 + $0x18] sm:$0xff]
        %v661 = vld [vmem:[#allocation5 + $0x20] sm:$0xff]
        %v662 = vld [vmem:[#allocation5 + $0x28] sm:$0xff]
        %v663 = vld [vmem:[#allocation5 + $0x30] sm:$0xff]
        %v664 = vld [vmem:[#allocation5 + $0x38] sm:$0xff]
        %v665 = vld [vmem:[#allocation5 + $0x40] sm:$0xff]
        %v666 = vld [vmem:[#allocation5 + $0x48] sm:$0xff]
        %v667 = vld [vmem:[#allocation5 + $0x50] sm:$0xff]
        %v668 = vld [vmem:[#allocation5 + $0x58] sm:$0xff]
        %v669 = vld [vmem:[#allocation5 + $0x60] sm:$0xff]
        %v670 = vld [vmem:[#allocation5 + $0x68] sm:$0xff]
        %v671 = vld [vmem:[#allocation5 + $0x70] sm:$0xff]
        %v672 = vld [vmem:[#allocation5 + $0x78] sm:$0xff]
        %v673 = vld [vmem:[#allocation5 + $0x80] sm:$0xff]
        %v674 = vld [vmem:[#allocation5 + $0x88] sm:$0xff]
        %v675 = vld [vmem:[#allocation5 + $0x90] sm:$0xff]
        %v676 = vld [vmem:[#allocation5 + $0x98] sm:$0xff]
        %v677 = vld [vmem:[#allocation5 + $0xa0] sm:$0xff]
        %v678 = vld [vmem:[#allocation5 + $0xa8] sm:$0xff]
        %v679 = vld [vmem:[#allocation5 + $0xb0] sm:$0xff]
        %v680 = vld [vmem:[#allocation5 + $0xb8] sm:$0xff]
        %v681 = vld [vmem:[#allocation5 + $0xc0] sm:$0xff]
        %v682 = vld [vmem:[#allocation5 + $0xc8] sm:$0xff]
        %v683 = vld [vmem:[#allocation5 + $0xd0] sm:$0xff]
        %v684 = vld [vmem:[#allocation5 + $0xd8] sm:$0xff]
        %v685 = vld [vmem:[#allocation5 + $0xe0] sm:$0xff]
        %v686 = vld [vmem:[#allocation5 + $0xe8] sm:$0xff]
        %v687 = vld [vmem:[#allocation5 + $0xf0] sm:$0xff]
        %v688 = vld [vmem:[#allocation5 + $0xf8] sm:$0xff]
        %v689 = vld [vmem:[#allocation5 + $0x100] sm:$0xff]
        %v690 = vld [vmem:[#allocation5 + $0x108] sm:$0xff]
        %v691 = vld [vmem:[#allocation5 + $0x110] sm:$0xff]
        %v692 = vld [vmem:[#allocation5 + $0x118] sm:$0xff]
        %v693 = vld [vmem:[#allocation5 + $0x120] sm:$0xff]
        %v694 = vld [vmem:[#allocation5 + $0x128] sm:$0xff]
        %v695 = vld [vmem:[#allocation5 + $0x130] sm:$0xff]
        %v696 = vld [vmem:[#allocation5 + $0x138] sm:$0xff]
        %v697 = vld [vmem:[#allocation5 + $0x140] sm:$0xff]
        %v698 = vld [vmem:[#allocation5 + $0x148] sm:$0xff]
        %v699 = vld [vmem:[#allocation5 + $0x150] sm:$0xff]
        %v700 = vld [vmem:[#allocation5 + $0x158] sm:$0xff]
        %v701 = vld [vmem:[#allocation5 + $0x160] sm:$0xff]
        %v702 = vld [vmem:[#allocation5 + $0x168] sm:$0xff]
        %v703 = vld [vmem:[#allocation5 + $0x170] sm:$0xff]
        %v704 = vld [vmem:[#allocation5 + $0x178] sm:$0xff]
        %v705 = vld [vmem:[#allocation5 + $0x180] sm:$0xff]
        %v706 = vld [vmem:[#allocation5 + $0x188] sm:$0xff]
        %v707 = vld [vmem:[#allocation5 + $0x190] sm:$0xff]
        %v708 = vld [vmem:[#allocation5 + $0x198] sm:$0xff]
        %v709 = vld [vmem:[#allocation5 + $0x1a0] sm:$0xff]
        %v710 = vld [vmem:[#allocation5 + $0x1a8] sm:$0xff]
        %v711 = vld [vmem:[#allocation5 + $0x1b0] sm:$0xff]
        %v712 = vld [vmem:[#allocation5 + $0x1b8] sm:$0xff]
        %v713 = vld [vmem:[#allocation5 + $0x1c0] sm:$0xff]
        %v714 = vld [vmem:[#allocation5 + $0x1c8] sm:$0xff]
        %v715 = vld [vmem:[#allocation5 + $0x1d0] sm:$0xff]
        %v716 = vld [vmem:[#allocation5 + $0x1d8] sm:$0xff]
        %v717 = vld [vmem:[#allocation5 + $0x1e0] sm:$0xff]
        %v718 = vld [vmem:[#allocation5 + $0x1e8] sm:$0xff]
        %v719 = vld [vmem:[#allocation5 + $0x1f0] sm:$0xff]
        %v720 = vld [vmem:[#allocation5 + $0x1f8] sm:$0xff]
        %v721 = vld [vmem:[#allocation5 + $0x200] sm:$0xff]
        %v722 = vld [vmem:[#allocation5 + $0x208] sm:$0xff]
        %v723 = vld [vmem:[#allocation5 + $0x210] sm:$0xff]
        %v724 = vld [vmem:[#allocation5 + $0x218] sm:$0xff]
        %v725 = vld [vmem:[#allocation5 + $0x220] sm:$0xff]
        %v726 = vld [vmem:[#allocation5 + $0x228] sm:$0xff]
        %v727 = vld [vmem:[#allocation5 + $0x230] sm:$0xff]
        %v728 = vld [vmem:[#allocation5 + $0x238] sm:$0xff]
        %v729 = vld [vmem:[#allocation5 + $0x240] sm:$0xff]
        %v730 = vld [vmem:[#allocation5 + $0x248] sm:$0xff]
        %v731 = vld [vmem:[#allocation5 + $0x250] sm:$0xff]
        %v732 = vld [vmem:[#allocation5 + $0x258] sm:$0xff]
        %v733 = vld [vmem:[#allocation5 + $0x260] sm:$0xff]
        %v734 = vld [vmem:[#allocation5 + $0x268] sm:$0xff]
        %v735 = vld [vmem:[#allocation5 + $0x270] sm:$0xff]
        %v736 = vld [vmem:[#allocation5 + $0x278] sm:$0xff]
        %v737 = vld [vmem:[#allocation5 + $0x280] sm:$0xff]
        %v738 = vld [vmem:[#allocation5 + $0x288] sm:$0xff]
        %v739 = vld [vmem:[#allocation5 + $0x290] sm:$0xff]
        %v740 = vld [vmem:[#allocation5 + $0x298] sm:$0xff]
        %v741 = vld [vmem:[#allocation5 + $0x2a0] sm:$0xff]
        %v742 = vld [vmem:[#allocation5 + $0x2a8] sm:$0xff]
        %v743 = vld [vmem:[#allocation5 + $0x2b0] sm:$0xff]
        %v744 = vld [vmem:[#allocation5 + $0x2b8] sm:$0xff]
        %v745 = vld [vmem:[#allocation5 + $0x2c0] sm:$0xff]
        %v746 = vld [vmem:[#allocation5 + $0x2c8] sm:$0xff]
        %v747 = vld [vmem:[#allocation5 + $0x2d0] sm:$0xff]
        %v748 = vld [vmem:[#allocation5 + $0x2d8] sm:$0xff]
        %v749 = vld [vmem:[#allocation5 + $0x2e0] sm:$0xff]
        %v750 = vld [vmem:[#allocation5 + $0x2e8] sm:$0xff]
        %v751 = vld [vmem:[#allocation5 + $0x2f0] sm:$0xff]
        %v752 = vld [vmem:[#allocation5 + $0x2f8] sm:$0xff]
        %v753 = vld [vmem:[#allocation5 + $0x300] sm:$0xff]
        %v754 = vld [vmem:[#allocation5 + $0x308] sm:$0xff]
        %v755 = vld [vmem:[#allocation5 + $0x310] sm:$0xff]
        %v756 = vld [vmem:[#allocation5 + $0x318] sm:$0xff]
        %v757 = vld [vmem:[#allocation5 + $0x320] sm:$0xff]
        %v758 = vld [vmem:[#allocation5 + $0x328] sm:$0xff]
        %v759 = vld [vmem:[#allocation5 + $0x330] sm:$0xff]
        %v760 = vld [vmem:[#allocation5 + $0x338] sm:$0xff]
        %v761 = vld [vmem:[#allocation5 + $0x340] sm:$0xff]
        %v762 = vld [vmem:[#allocation5 + $0x348] sm:$0xff]
        %v763 = vld [vmem:[#allocation5 + $0x350] sm:$0xff]
        %v764 = vld [vmem:[#allocation5 + $0x358] sm:$0xff]
        %v765 = vld [vmem:[#allocation5 + $0x360] sm:$0xff]
        %v766 = vld [vmem:[#allocation5 + $0x368] sm:$0xff]
        %v767 = vld [vmem:[#allocation5 + $0x370] sm:$0xff]
        %v768 = vld [vmem:[#allocation5 + $0x378] sm:$0xff]
        %v769 = vld [vmem:[#allocation5 + $0x380] sm:$0xff]
        %v770 = vld [vmem:[#allocation5 + $0x388] sm:$0xff]
        %v771 = vld [vmem:[#allocation5 + $0x390] sm:$0xff]
        %v772 = vld [vmem:[#allocation5 + $0x398] sm:$0xff]
        %v773 = vld [vmem:[#allocation5 + $0x3a0] sm:$0xff]
        %v774 = vld [vmem:[#allocation5 + $0x3a8] sm:$0xff]
        %v775 = vld [vmem:[#allocation5 + $0x3b0] sm:$0xff]
        %v776 = vld [vmem:[#allocation5 + $0x3b8] sm:$0xff]
        %v777 = vld [vmem:[#allocation5 + $0x3c0] sm:$0xff]
        %v778 = vld [vmem:[#allocation5 + $0x3c8] sm:$0xff]
        %v779 = vld [vmem:[#allocation5 + $0x3d0] sm:$0xff]
        %v780 = vld [vmem:[#allocation5 + $0x3d8] sm:$0xff]
        %v781 = vld [vmem:[#allocation5 + $0x3e0] sm:$0xff]
        %v782 = vld [vmem:[#allocation5 + $0x3e8] sm:$0xff]
        %v783 = vld [vmem:[#allocation5 + $0x3f0] sm:$0xff]
        %v784 = vld [vmem:[#allocation5 + $0x3f8] sm:$0xff]
        %v785 = vld [vmem:[#allocation5 + $0x400] sm:$0xff]
        %v786 = vld [vmem:[#allocation5 + $0x408] sm:$0xff]
        %v787 = vld [vmem:[#allocation5 + $0x410] sm:$0xff]
        %v788 = vld [vmem:[#allocation5 + $0x418] sm:$0xff]
        %v789 = vld [vmem:[#allocation5 + $0x420] sm:$0xff]
        %v790 = vld [vmem:[#allocation5 + $0x428] sm:$0xff]
        %v791 = vld [vmem:[#allocation5 + $0x430] sm:$0xff]
        %v792 = vld [vmem:[#allocation5 + $0x438] sm:$0xff]
        %v793 = vld [vmem:[#allocation5 + $0x440] sm:$0xff]
        %v794 = vld [vmem:[#allocation5 + $0x448] sm:$0xff]
        %v795 = vld [vmem:[#allocation5 + $0x450] sm:$0xff]
        %v796 = vld [vmem:[#allocation5 + $0x458] sm:$0xff]
        %v797 = vld [vmem:[#allocation5 + $0x460] sm:$0xff]
        %v798 = vld [vmem:[#allocation5 + $0x468] sm:$0xff]
        %v799 = vld [vmem:[#allocation5 + $0x470] sm:$0xff]
        %v800 = vld [vmem:[#allocation5 + $0x478] sm:$0xff]
        %v801 = vld [vmem:[#allocation5 + $0x480] sm:$0xff]
        %v802 = vld [vmem:[#allocation5 + $0x488] sm:$0xff]
        %v803 = vld [vmem:[#allocation5 + $0x490] sm:$0xff]
        %v804 = vld [vmem:[#allocation5 + $0x498] sm:$0xff]
        %v805 = vld [vmem:[#allocation5 + $0x4a0] sm:$0xff]
        %v806 = vld [vmem:[#allocation5 + $0x4a8] sm:$0xff]
        %v807 = vld [vmem:[#allocation5 + $0x4b0] sm:$0xff]
        %v808 = vld [vmem:[#allocation5 + $0x4b8] sm:$0xff]
        %v809 = vld [vmem:[#allocation5 + $0x4c0] sm:$0xff]
        %v810 = vld [vmem:[#allocation5 + $0x4c8] sm:$0xff]
        %v811 = vld [vmem:[#allocation5 + $0x4d0] sm:$0xff]
        %v812 = vld [vmem:[#allocation5 + $0x4d8] sm:$0xff]
        %v813 = vld [vmem:[#allocation5 + $0x4e0] sm:$0xff]
        %v814 = vld [vmem:[#allocation5 + $0x4e8] sm:$0xff]
        %v815 = vld [vmem:[#allocation5 + $0x4f0] sm:$0xff]
        %v816 = vld [vmem:[#allocation5 + $0x4f8] sm:$0xff]
        %v817 = vld [vmem:[#allocation5 + $0x500] sm:$0xff]
        %v818 = vld [vmem:[#allocation5 + $0x508] sm:$0xff]
        %v819 = vld [vmem:[#allocation5 + $0x510] sm:$0xff]
        %v820 = vld [vmem:[#allocation5 + $0x518] sm:$0xff]
        %v821 = vld [vmem:[#allocation5 + $0x520] sm:$0xff]
        %v822 = vld [vmem:[#allocation5 + $0x528] sm:$0xff]
        %v823 = vld [vmem:[#allocation5 + $0x530] sm:$0xff]
        %v824 = vld [vmem:[#allocation5 + $0x538] sm:$0xff]
        %v825 = vld [vmem:[#allocation5 + $0x540] sm:$0xff]
        %v826 = vld [vmem:[#allocation5 + $0x548] sm:$0xff]
        %v827 = vld [vmem:[#allocation5 + $0x550] sm:$0xff]
        %v828 = vld [vmem:[#allocation5 + $0x558] sm:$0xff]
        %v829 = vld [vmem:[#allocation5 + $0x560] sm:$0xff]
        %v830 = vld [vmem:[#allocation5 + $0x568] sm:$0xff]
        %v831 = vld [vmem:[#allocation5 + $0x570] sm:$0xff]
        %v832 = vld [vmem:[#allocation5 + $0x578] sm:$0xff]
        %v833 = vld [vmem:[#allocation5 + $0x580] sm:$0xff]
        %v834 = vld [vmem:[#allocation5 + $0x588] sm:$0xff]
        %v835 = vld [vmem:[#allocation5 + $0x590] sm:$0xff]
        %v836 = vld [vmem:[#allocation5 + $0x598] sm:$0xff]
        %v837 = vld [vmem:[#allocation5 + $0x5a0] sm:$0xff]
        %v838 = vld [vmem:[#allocation5 + $0x5a8] sm:$0xff]
        %v839 = vld [vmem:[#allocation5 + $0x5b0] sm:$0xff]
        %v840 = vld [vmem:[#allocation5 + $0x5b8] sm:$0xff]
        %v841 = vld [vmem:[#allocation5 + $0x5c0] sm:$0xff]
        %v842 = vld [vmem:[#allocation5 + $0x5c8] sm:$0xff]
        %v843 = vld [vmem:[#allocation5 + $0x5d0] sm:$0xff]
        %v844 = vld [vmem:[#allocation5 + $0x5d8] sm:$0xff]
        %v845 = vld [vmem:[#allocation5 + $0x5e0] sm:$0xff]
        %v846 = vld [vmem:[#allocation5 + $0x5e8] sm:$0xff]
        %v847 = vld [vmem:[#allocation5 + $0x5f0] sm:$0xff]
        %v848 = vld [vmem:[#allocation5 + $0x5f8] sm:$0xff]
        %v849 = vld [vmem:[#allocation5 + $0x600] sm:$0xff]
        %v850 = vld [vmem:[#allocation5 + $0x608] sm:$0xff]
        %v851 = vld [vmem:[#allocation5 + $0x610] sm:$0xff]
        %v852 = vld [vmem:[#allocation5 + $0x618] sm:$0xff]
        %v853 = vld [vmem:[#allocation5 + $0x620] sm:$0xff]
        %v854 = vld [vmem:[#allocation5 + $0x628] sm:$0xff]
        %v855 = vld [vmem:[#allocation5 + $0x630] sm:$0xff]
        %v856 = vld [vmem:[#allocation5 + $0x638] sm:$0xff]
        %v857 = vld [vmem:[#allocation5 + $0x640] sm:$0xff]
        %v858 = vld [vmem:[#allocation5 + $0x648] sm:$0xff]
        %v859 = vld [vmem:[#allocation5 + $0x650] sm:$0xff]
        %v860 = vld [vmem:[#allocation5 + $0x658] sm:$0xff]
        %v861 = vld [vmem:[#allocation5 + $0x660] sm:$0xff]
        %v862 = vld [vmem:[#allocation5 + $0x668] sm:$0xff]
        %v863 = vld [vmem:[#allocation5 + $0x670] sm:$0xff]
        %v864 = vld [vmem:[#allocation5 + $0x678] sm:$0xff]
        %v865 = vld [vmem:[#allocation5 + $0x680] sm:$0xff]
        %v866 = vld [vmem:[#allocation5 + $0x688] sm:$0xff]
        %v867 = vld [vmem:[#allocation5 + $0x690] sm:$0xff]
        %v868 = vld [vmem:[#allocation5 + $0x698] sm:$0xff]
        %v869 = vld [vmem:[#allocation5 + $0x6a0] sm:$0xff]
        %v870 = vld [vmem:[#allocation5 + $0x6a8] sm:$0xff]
        %v871 = vld [vmem:[#allocation5 + $0x6b0] sm:$0xff]
        %v872 = vld [vmem:[#allocation5 + $0x6b8] sm:$0xff]
        %v873 = vld [vmem:[#allocation5 + $0x6c0] sm:$0xff]
        %v874 = vld [vmem:[#allocation5 + $0x6c8] sm:$0xff]
        %v875 = vld [vmem:[#allocation5 + $0x6d0] sm:$0xff]
        %v876 = vld [vmem:[#allocation5 + $0x6d8] sm:$0xff]
        %v877 = vld [vmem:[#allocation5 + $0x6e0] sm:$0xff]
        %v878 = vld [vmem:[#allocation5 + $0x6e8] sm:$0xff]
        %v879 = vld [vmem:[#allocation5 + $0x6f0] sm:$0xff]
        %v880 = vld [vmem:[#allocation5 + $0x6f8] sm:$0xff]
        %v881 = vld [vmem:[#allocation5 + $0x700] sm:$0xff]
        %v882 = vld [vmem:[#allocation5 + $0x708] sm:$0xff]
        %v883 = vld [vmem:[#allocation5 + $0x710] sm:$0xff]
        %v884 = vld [vmem:[#allocation5 + $0x718] sm:$0xff]
        %v885 = vld [vmem:[#allocation5 + $0x720] sm:$0xff]
        %v886 = vld [vmem:[#allocation5 + $0x728] sm:$0xff]
        %v887 = vld [vmem:[#allocation5 + $0x730] sm:$0xff]
        %v888 = vld [vmem:[#allocation5 + $0x738] sm:$0xff]
        %v889 = vld [vmem:[#allocation5 + $0x740] sm:$0xff]
        %v890 = vld [vmem:[#allocation5 + $0x748] sm:$0xff]
        %v891 = vld [vmem:[#allocation5 + $0x750] sm:$0xff]
        %v892 = vld [vmem:[#allocation5 + $0x758] sm:$0xff]
        %v893 = vld [vmem:[#allocation5 + $0x760] sm:$0xff]
        %v894 = vld [vmem:[#allocation5 + $0x768] sm:$0xff]
        %v895 = vld [vmem:[#allocation5 + $0x770] sm:$0xff]
        %v896 = vld [vmem:[#allocation5 + $0x778] sm:$0xff]
        %v897 = vld [vmem:[#allocation5 + $0x780] sm:$0xff]
        %v898 = vld [vmem:[#allocation5 + $0x788] sm:$0xff]
        %v899 = vld [vmem:[#allocation5 + $0x790] sm:$0xff]
        %v900 = vld [vmem:[#allocation5 + $0x798] sm:$0xff]
        %v901 = vld [vmem:[#allocation5 + $0x7a0] sm:$0xff]
        %v902 = vld [vmem:[#allocation5 + $0x7a8] sm:$0xff]
        %v903 = vld [vmem:[#allocation5 + $0x7b0] sm:$0xff]
        %v904 = vld [vmem:[#allocation5 + $0x7b8] sm:$0xff]
        %v905 = vld [vmem:[#allocation5 + $0x7c0] sm:$0xff]
        %v906 = vld [vmem:[#allocation5 + $0x7c8] sm:$0xff]
        %v907 = vld [vmem:[#allocation5 + $0x7d0] sm:$0xff]
        %v908 = vld [vmem:[#allocation5 + $0x7d8] sm:$0xff]
        %v909 = vld [vmem:[#allocation5 + $0x7e0] sm:$0xff]
        %v910 = vld [vmem:[#allocation5 + $0x7e8] sm:$0xff]
        %v911 = vld [vmem:[#allocation5 + $0x7f0] sm:$0xff]
        %v912 = vld [vmem:[#allocation5 + $0x7f8] sm:$0xff]
        %v913 = vld [vmem:[#allocation5 + $0x800] sm:$0xff]
        %v914 = vld [vmem:[#allocation5 + $0x808] sm:$0xff]
        %v915 = vld [vmem:[#allocation5 + $0x810] sm:$0xff]
        %v916 = vld [vmem:[#allocation5 + $0x818] sm:$0xff]
        %v917 = vld [vmem:[#allocation5 + $0x820] sm:$0xff]
        %v918 = vld [vmem:[#allocation5 + $0x828] sm:$0xff]
        %v919 = vld [vmem:[#allocation5 + $0x830] sm:$0xff]
        %v920 = vld [vmem:[#allocation5 + $0x838] sm:$0xff]
        %v921 = vld [vmem:[#allocation5 + $0x840] sm:$0xff]
        %v922 = vld [vmem:[#allocation5 + $0x848] sm:$0xff]
        %v923 = vld [vmem:[#allocation5 + $0x850] sm:$0xff]
        %v924 = vld [vmem:[#allocation5 + $0x858] sm:$0xff]
        %v925 = vld [vmem:[#allocation5 + $0x860] sm:$0xff]
        %v926 = vld [vmem:[#allocation5 + $0x868] sm:$0xff]
        %v927 = vld [vmem:[#allocation5 + $0x870] sm:$0xff]
        %v928 = vld [vmem:[#allocation5 + $0x878] sm:$0xff]
        %v929 = vld [vmem:[#allocation5 + $0x880] sm:$0xff]
        %v930 = vld [vmem:[#allocation5 + $0x888] sm:$0xff]
        %v931 = vld [vmem:[#allocation5 + $0x890] sm:$0xff]
        %v932 = vld [vmem:[#allocation5 + $0x898] sm:$0xff]
        %v933 = vld [vmem:[#allocation5 + $0x8a0] sm:$0xff]
        %v934 = vld [vmem:[#allocation5 + $0x8a8] sm:$0xff]
        %v935 = vld [vmem:[#allocation5 + $0x8b0] sm:$0xff]
        %v936 = vld [vmem:[#allocation5 + $0x8b8] sm:$0xff]
        %v937 = vld [vmem:[#allocation5 + $0x8c0] sm:$0xff]
        %v938 = vld [vmem:[#allocation5 + $0x8c8] sm:$0xff]
        %v939 = vld [vmem:[#allocation5 + $0x8d0] sm:$0xff]
        %v940 = vld [vmem:[#allocation5 + $0x8d8] sm:$0xff]
        %v941 = vld [vmem:[#allocation5 + $0x8e0] sm:$0xff]
        %v942 = vld [vmem:[#allocation5 + $0x8e8] sm:$0xff]
        %v943 = vld [vmem:[#allocation5 + $0x8f0] sm:$0xff]
        %v944 = vld [vmem:[#allocation5 + $0x8f8] sm:$0xff]
        %v945 = vld [vmem:[#allocation7] sm:$0xff]
        %v946 = vld [vmem:[#allocation7 + $0x8] sm:$0xf]
        %v949 = vlaneseq
        %v950 = vshrl.u32 %v949, 7
        %v951 = vsub.s32 0, %v950
        %v952 = vrot.slane %v945, %v951
        %v953 = vlaneseq
        %v954 = vshrl.u32 %v953, 7
        %v955 = vsub.s32 1, %v954
        %v956 = vrot.slane %v945, %v955
        %v957 = vlaneseq
        %v958 = vshrl.u32 %v957, 7
        %v959 = vsub.s32 2, %v958
        %v960 = vrot.slane %v945, %v959
        %v961 = vlaneseq
        %v962 = vshrl.u32 %v961, 7
        %v963 = vsub.s32 3, %v962
        %v964 = vrot.slane %v945, %v963
        %v965 = vlaneseq
        %v966 = vshrl.u32 %v965, 7
        %v967 = vsub.s32 4, %v966
        %v968 = vrot.slane %v945, %v967
        %v969 = vlaneseq
        %v970 = vshrl.u32 %v969, 7
        %v971 = vsub.s32 5, %v970
        %v972 = vrot.slane %v945, %v971
        %v973 = vlaneseq
        %v974 = vshrl.u32 %v973, 7
        %v975 = vsub.s32 6, %v974
        %v976 = vrot.slane %v945, %v975
        %v977 = vlaneseq
        %v978 = vshrl.u32 %v977, 7
        %v979 = vsub.s32 7, %v978
        %v980 = vrot.slane %v945, %v979
        %v981 = vlaneseq
        %v982 = vshrl.u32 %v981, 7
        %v983 = vsub.s32 0, %v982
        %v984 = vrot.slane %v946, %v983
        %v985 = vlaneseq
        %v986 = vshrl.u32 %v985, 7
        %v987 = vsub.s32 1, %v986
        %v988 = vrot.slane %v946, %v987
        %v989 = vlaneseq
        %v990 = vshrl.u32 %v989, 7
        %v991 = vsub.s32 2, %v990
        %v992 = vrot.slane %v946, %v991
        %v993 = vlaneseq
        %v994 = vshrl.u32 %v993, 7
        %v995 = vsub.s32 3, %v994
        %v996 = vrot.slane %v946, %v995
        %v1297 = vunpack.c.l.b16 %v657
        %v1298 = vunpack.c.h.b16 %v657
        %v1299 = vunpack.c.l.b16 %v658
        %v1300 = vunpack.c.h.b16 %v658
        %v1301 = vunpack.c.l.b16 %v659
        %v1302 = vunpack.c.h.b16 %v659
        %v1303 = vunpack.c.l.b16 %v660
        %v1304 = vunpack.c.h.b16 %v660
        %v1305 = vunpack.c.l.b16 %v661
        %v1306 = vunpack.c.h.b16 %v661
        %v1307 = vunpack.c.l.b16 %v662
        %v1308 = vunpack.c.h.b16 %v662
        %v1309 = vunpack.c.l.b16 %v663
        %v1310 = vunpack.c.h.b16 %v663
        %v1311 = vunpack.c.l.b16 %v664
        %v1312 = vunpack.c.h.b16 %v664
        %v1313 = vunpack.c.l.b16 %v665
        %v1314 = vunpack.c.h.b16 %v665
        %v1315 = vunpack.c.l.b16 %v666
        %v1316 = vunpack.c.h.b16 %v666
        %v1317 = vunpack.c.l.b16 %v667
        %v1318 = vunpack.c.h.b16 %v667
        %v1319 = vunpack.c.l.b16 %v668
        %v1320 = vunpack.c.h.b16 %v668
        %v1321 = vunpack.c.l.b16 %v669
        %v1322 = vunpack.c.h.b16 %v669
        %v1323 = vunpack.c.l.b16 %v670
        %v1324 = vunpack.c.h.b16 %v670
        %v1325 = vunpack.c.l.b16 %v671
        %v1326 = vunpack.c.h.b16 %v671
        %v1327 = vunpack.c.l.b16 %v672
        %v1328 = vunpack.c.h.b16 %v672
        %v1329 = vunpack.c.l.b16 %v673
        %v1330 = vunpack.c.h.b16 %v673
        %v1331 = vunpack.c.l.b16 %v674
        %v1332 = vunpack.c.h.b16 %v674
        %v1333 = vunpack.c.l.b16 %v675
        %v1334 = vunpack.c.h.b16 %v675
        %v1335 = vunpack.c.l.b16 %v676
        %v1336 = vunpack.c.h.b16 %v676
        %v1337 = vunpack.c.l.b16 %v677
        %v1338 = vunpack.c.h.b16 %v677
        %v1339 = vunpack.c.l.b16 %v678
        %v1340 = vunpack.c.h.b16 %v678
        %v1341 = vunpack.c.l.b16 %v679
        %v1342 = vunpack.c.h.b16 %v679
        %v1343 = vunpack.c.l.b16 %v680
        %v1344 = vunpack.c.h.b16 %v680
        %v1345 = vunpack.c.l.b16 %v681
        %v1346 = vunpack.c.h.b16 %v681
        %v1347 = vunpack.c.l.b16 %v682
        %v1348 = vunpack.c.h.b16 %v682
        %v1349 = vunpack.c.l.b16 %v683
        %v1350 = vunpack.c.h.b16 %v683
        %v1351 = vunpack.c.l.b16 %v684
        %v1352 = vunpack.c.h.b16 %v684
        %v1353 = vunpack.c.l.b16 %v685
        %v1354 = vunpack.c.h.b16 %v685
        %v1355 = vunpack.c.l.b16 %v686
        %v1356 = vunpack.c.h.b16 %v686
        %v1357 = vunpack.c.l.b16 %v687
        %v1358 = vunpack.c.h.b16 %v687
        %v1359 = vunpack.c.l.b16 %v688
        %v1360 = vunpack.c.h.b16 %v688
        %v1361 = vunpack.c.l.b16 %v689
        %v1362 = vunpack.c.h.b16 %v689
        %v1363 = vunpack.c.l.b16 %v690
        %v1364 = vunpack.c.h.b16 %v690
        %v1365 = vunpack.c.l.b16 %v691
        %v1366 = vunpack.c.h.b16 %v691
        %v1367 = vunpack.c.l.b16 %v692
        %v1368 = vunpack.c.h.b16 %v692
        %v1369 = vunpack.c.l.b16 %v693
        %v1370 = vunpack.c.h.b16 %v693
        %v1371 = vunpack.c.l.b16 %v694
        %v1372 = vunpack.c.h.b16 %v694
        %v1373 = vunpack.c.l.b16 %v695
        %v1374 = vunpack.c.h.b16 %v695
        %v1375 = vunpack.c.l.b16 %v696
        %v1376 = vunpack.c.h.b16 %v696
        %v1377 = vunpack.c.l.b16 %v697
        %v1378 = vunpack.c.h.b16 %v697
        %v1379 = vunpack.c.l.b16 %v698
        %v1380 = vunpack.c.h.b16 %v698
        %v1381 = vunpack.c.l.b16 %v699
        %v1382 = vunpack.c.h.b16 %v699
        %v1383 = vunpack.c.l.b16 %v700
        %v1384 = vunpack.c.h.b16 %v700
        %v1385 = vunpack.c.l.b16 %v701
        %v1386 = vunpack.c.h.b16 %v701
        %v1387 = vunpack.c.l.b16 %v702
        %v1388 = vunpack.c.h.b16 %v702
        %v1389 = vunpack.c.l.b16 %v703
        %v1390 = vunpack.c.h.b16 %v703
        %v1391 = vunpack.c.l.b16 %v704
        %v1392 = vunpack.c.h.b16 %v704
        %v1393 = vunpack.c.l.b16 %v705
        %v1394 = vunpack.c.h.b16 %v705
        %v1395 = vunpack.c.l.b16 %v706
        %v1396 = vunpack.c.h.b16 %v706
        %v1397 = vunpack.c.l.b16 %v707
        %v1398 = vunpack.c.h.b16 %v707
        %v1399 = vunpack.c.l.b16 %v708
        %v1400 = vunpack.c.h.b16 %v708
        %v1401 = vunpack.c.l.b16 %v709
        %v1402 = vunpack.c.h.b16 %v709
        %v1403 = vunpack.c.l.b16 %v710
        %v1404 = vunpack.c.h.b16 %v710
        %v1405 = vunpack.c.l.b16 %v711
        %v1406 = vunpack.c.h.b16 %v711
        %v1407 = vunpack.c.l.b16 %v712
        %v1408 = vunpack.c.h.b16 %v712
        %v1409 = vunpack.c.l.b16 %v713
        %v1410 = vunpack.c.h.b16 %v713
        %v1411 = vunpack.c.l.b16 %v714
        %v1412 = vunpack.c.h.b16 %v714
        %v1413 = vunpack.c.l.b16 %v715
        %v1414 = vunpack.c.h.b16 %v715
        %v1415 = vunpack.c.l.b16 %v716
        %v1416 = vunpack.c.h.b16 %v716
        %v1417 = vunpack.c.l.b16 %v717
        %v1418 = vunpack.c.h.b16 %v717
        %v1419 = vunpack.c.l.b16 %v718
        %v1420 = vunpack.c.h.b16 %v718
        %v1421 = vunpack.c.l.b16 %v719
        %v1422 = vunpack.c.h.b16 %v719
        %v1423 = vunpack.c.l.b16 %v720
        %v1424 = vunpack.c.h.b16 %v720
        %v1425 = vunpack.c.l.b16 %v721
        %v1426 = vunpack.c.h.b16 %v721
        %v1427 = vunpack.c.l.b16 %v722
        %v1428 = vunpack.c.h.b16 %v722
        %v1429 = vunpack.c.l.b16 %v723
        %v1430 = vunpack.c.h.b16 %v723
        %v1431 = vunpack.c.l.b16 %v724
        %v1432 = vunpack.c.h.b16 %v724
        %v1433 = vunpack.c.l.b16 %v725
        %v1434 = vunpack.c.h.b16 %v725
        %v1435 = vunpack.c.l.b16 %v726
        %v1436 = vunpack.c.h.b16 %v726
        %v1437 = vunpack.c.l.b16 %v727
        %v1438 = vunpack.c.h.b16 %v727
        %v1439 = vunpack.c.l.b16 %v728
        %v1440 = vunpack.c.h.b16 %v728
        %v1441 = vunpack.c.l.b16 %v729
        %v1442 = vunpack.c.h.b16 %v729
        %v1443 = vunpack.c.l.b16 %v730
        %v1444 = vunpack.c.h.b16 %v730
        %v1445 = vunpack.c.l.b16 %v731
        %v1446 = vunpack.c.h.b16 %v731
        %v1447 = vunpack.c.l.b16 %v732
        %v1448 = vunpack.c.h.b16 %v732
        %v1449 = vunpack.c.l.b16 %v733
        %v1450 = vunpack.c.h.b16 %v733
        %v1451 = vunpack.c.l.b16 %v734
        %v1452 = vunpack.c.h.b16 %v734
        %v1453 = vunpack.c.l.b16 %v735
        %v1454 = vunpack.c.h.b16 %v735
        %v1455 = vunpack.c.l.b16 %v736
        %v1456 = vunpack.c.h.b16 %v736
        %v1457 = vunpack.c.l.b16 %v737
        %v1458 = vunpack.c.h.b16 %v737
        %v1459 = vunpack.c.l.b16 %v738
        %v1460 = vunpack.c.h.b16 %v738
        %v1461 = vunpack.c.l.b16 %v739
        %v1462 = vunpack.c.h.b16 %v739
        %v1463 = vunpack.c.l.b16 %v740
        %v1464 = vunpack.c.h.b16 %v740
        %v1465 = vunpack.c.l.b16 %v741
        %v1466 = vunpack.c.h.b16 %v741
        %v1467 = vunpack.c.l.b16 %v742
        %v1468 = vunpack.c.h.b16 %v742
        %v1469 = vunpack.c.l.b16 %v743
        %v1470 = vunpack.c.h.b16 %v743
        %v1471 = vunpack.c.l.b16 %v744
        %v1472 = vunpack.c.h.b16 %v744
        %v1473 = vunpack.c.l.b16 %v745
        %v1474 = vunpack.c.h.b16 %v745
        %v1475 = vunpack.c.l.b16 %v746
        %v1476 = vunpack.c.h.b16 %v746
        %v1477 = vunpack.c.l.b16 %v747
        %v1478 = vunpack.c.h.b16 %v747
        %v1479 = vunpack.c.l.b16 %v748
        %v1480 = vunpack.c.h.b16 %v748
        %v1481 = vunpack.c.l.b16 %v749
        %v1482 = vunpack.c.h.b16 %v749
        %v1483 = vunpack.c.l.b16 %v750
        %v1484 = vunpack.c.h.b16 %v750
        %v1485 = vunpack.c.l.b16 %v751
        %v1486 = vunpack.c.h.b16 %v751
        %v1487 = vunpack.c.l.b16 %v752
        %v1488 = vunpack.c.h.b16 %v752
        %v1489 = vunpack.c.l.b16 %v753
        %v1490 = vunpack.c.h.b16 %v753
        %v1491 = vunpack.c.l.b16 %v754
        %v1492 = vunpack.c.h.b16 %v754
        %v1493 = vunpack.c.l.b16 %v755
        %v1494 = vunpack.c.h.b16 %v755
        %v1495 = vunpack.c.l.b16 %v756
        %v1496 = vunpack.c.h.b16 %v756
        %v1497 = vunpack.c.l.b16 %v757
        %v1498 = vunpack.c.h.b16 %v757
        %v1499 = vunpack.c.l.b16 %v758
        %v1500 = vunpack.c.h.b16 %v758
        %v1501 = vunpack.c.l.b16 %v759
        %v1502 = vunpack.c.h.b16 %v759
        %v1503 = vunpack.c.l.b16 %v760
        %v1504 = vunpack.c.h.b16 %v760
        %v1505 = vunpack.c.l.b16 %v761
        %v1506 = vunpack.c.h.b16 %v761
        %v1507 = vunpack.c.l.b16 %v762
        %v1508 = vunpack.c.h.b16 %v762
        %v1509 = vunpack.c.l.b16 %v763
        %v1510 = vunpack.c.h.b16 %v763
        %v1511 = vunpack.c.l.b16 %v764
        %v1512 = vunpack.c.h.b16 %v764
        %v1513 = vunpack.c.l.b16 %v765
        %v1514 = vunpack.c.h.b16 %v765
        %v1515 = vunpack.c.l.b16 %v766
        %v1516 = vunpack.c.h.b16 %v766
        %v1517 = vunpack.c.l.b16 %v767
        %v1518 = vunpack.c.h.b16 %v767
        %v1519 = vunpack.c.l.b16 %v768
        %v1520 = vunpack.c.h.b16 %v768
        %v1521 = vunpack.c.l.b16 %v769
        %v1522 = vunpack.c.h.b16 %v769
        %v1523 = vunpack.c.l.b16 %v770
        %v1524 = vunpack.c.h.b16 %v770
        %v1525 = vunpack.c.l.b16 %v771
        %v1526 = vunpack.c.h.b16 %v771
        %v1527 = vunpack.c.l.b16 %v772
        %v1528 = vunpack.c.h.b16 %v772
        %v1529 = vunpack.c.l.b16 %v773
        %v1530 = vunpack.c.h.b16 %v773
        %v1531 = vunpack.c.l.b16 %v774
        %v1532 = vunpack.c.h.b16 %v774
        %v1533 = vunpack.c.l.b16 %v775
        %v1534 = vunpack.c.h.b16 %v775
        %v1535 = vunpack.c.l.b16 %v776
        %v1536 = vunpack.c.h.b16 %v776
        %v1537 = vunpack.c.l.b16 %v777
        %v1538 = vunpack.c.h.b16 %v777
        %v1539 = vunpack.c.l.b16 %v778
        %v1540 = vunpack.c.h.b16 %v778
        %v1541 = vunpack.c.l.b16 %v779
        %v1542 = vunpack.c.h.b16 %v779
        %v1543 = vunpack.c.l.b16 %v780
        %v1544 = vunpack.c.h.b16 %v780
        %v1545 = vunpack.c.l.b16 %v781
        %v1546 = vunpack.c.h.b16 %v781
        %v1547 = vunpack.c.l.b16 %v782
        %v1548 = vunpack.c.h.b16 %v782
        %v1549 = vunpack.c.l.b16 %v783
        %v1550 = vunpack.c.h.b16 %v783
        %v1551 = vunpack.c.l.b16 %v784
        %v1552 = vunpack.c.h.b16 %v784
        %v1553 = vunpack.c.l.b16 %v785
        %v1554 = vunpack.c.h.b16 %v785
        %v1555 = vunpack.c.l.b16 %v786
        %v1556 = vunpack.c.h.b16 %v786
        %v1557 = vunpack.c.l.b16 %v787
        %v1558 = vunpack.c.h.b16 %v787
        %v1559 = vunpack.c.l.b16 %v788
        %v1560 = vunpack.c.h.b16 %v788
        %v1561 = vunpack.c.l.b16 %v789
        %v1562 = vunpack.c.h.b16 %v789
        %v1563 = vunpack.c.l.b16 %v790
        %v1564 = vunpack.c.h.b16 %v790
        %v1565 = vunpack.c.l.b16 %v791
        %v1566 = vunpack.c.h.b16 %v791
        %v1567 = vunpack.c.l.b16 %v792
        %v1568 = vunpack.c.h.b16 %v792
        %v1569 = vunpack.c.l.b16 %v793
        %v1570 = vunpack.c.h.b16 %v793
        %v1571 = vunpack.c.l.b16 %v794
        %v1572 = vunpack.c.h.b16 %v794
        %v1573 = vunpack.c.l.b16 %v795
        %v1574 = vunpack.c.h.b16 %v795
        %v1575 = vunpack.c.l.b16 %v796
        %v1576 = vunpack.c.h.b16 %v796
        %v1577 = vunpack.c.l.b16 %v797
        %v1578 = vunpack.c.h.b16 %v797
        %v1579 = vunpack.c.l.b16 %v798
        %v1580 = vunpack.c.h.b16 %v798
        %v1581 = vunpack.c.l.b16 %v799
        %v1582 = vunpack.c.h.b16 %v799
        %v1583 = vunpack.c.l.b16 %v800
        %v1584 = vunpack.c.h.b16 %v800
        %v1585 = vunpack.c.l.b16 %v801
        %v1586 = vunpack.c.h.b16 %v801
        %v1587 = vunpack.c.l.b16 %v802
        %v1588 = vunpack.c.h.b16 %v802
        %v1589 = vunpack.c.l.b16 %v803
        %v1590 = vunpack.c.h.b16 %v803
        %v1591 = vunpack.c.l.b16 %v804
        %v1592 = vunpack.c.h.b16 %v804
        %v1593 = vunpack.c.l.b16 %v805
        %v1594 = vunpack.c.h.b16 %v805
        %v1595 = vunpack.c.l.b16 %v806
        %v1596 = vunpack.c.h.b16 %v806
        %v1597 = vunpack.c.l.b16 %v807
        %v1598 = vunpack.c.h.b16 %v807
        %v1599 = vunpack.c.l.b16 %v808
        %v1600 = vunpack.c.h.b16 %v808
        %v1601 = vunpack.c.l.b16 %v809
        %v1602 = vunpack.c.h.b16 %v809
        %v1603 = vunpack.c.l.b16 %v810
        %v1604 = vunpack.c.h.b16 %v810
        %v1605 = vunpack.c.l.b16 %v811
        %v1606 = vunpack.c.h.b16 %v811
        %v1607 = vunpack.c.l.b16 %v812
        %v1608 = vunpack.c.h.b16 %v812
        %v1609 = vunpack.c.l.b16 %v813
        %v1610 = vunpack.c.h.b16 %v813
        %v1611 = vunpack.c.l.b16 %v814
        %v1612 = vunpack.c.h.b16 %v814
        %v1613 = vunpack.c.l.b16 %v815
        %v1614 = vunpack.c.h.b16 %v815
        %v1615 = vunpack.c.l.b16 %v816
        %v1616 = vunpack.c.h.b16 %v816
        %v1617 = vunpack.c.l.b16 %v817
        %v1618 = vunpack.c.h.b16 %v817
        %v1619 = vunpack.c.l.b16 %v818
        %v1620 = vunpack.c.h.b16 %v818
        %v1621 = vunpack.c.l.b16 %v819
        %v1622 = vunpack.c.h.b16 %v819
        %v1623 = vunpack.c.l.b16 %v820
        %v1624 = vunpack.c.h.b16 %v820
        %v1625 = vunpack.c.l.b16 %v821
        %v1626 = vunpack.c.h.b16 %v821
        %v1627 = vunpack.c.l.b16 %v822
        %v1628 = vunpack.c.h.b16 %v822
        %v1629 = vunpack.c.l.b16 %v823
        %v1630 = vunpack.c.h.b16 %v823
        %v1631 = vunpack.c.l.b16 %v824
        %v1632 = vunpack.c.h.b16 %v824
        %v1633 = vunpack.c.l.b16 %v825
        %v1634 = vunpack.c.h.b16 %v825
        %v1635 = vunpack.c.l.b16 %v826
        %v1636 = vunpack.c.h.b16 %v826
        %v1637 = vunpack.c.l.b16 %v827
        %v1638 = vunpack.c.h.b16 %v827
        %v1639 = vunpack.c.l.b16 %v828
        %v1640 = vunpack.c.h.b16 %v828
        %v1641 = vunpack.c.l.b16 %v829
        %v1642 = vunpack.c.h.b16 %v829
        %v1643 = vunpack.c.l.b16 %v830
        %v1644 = vunpack.c.h.b16 %v830
        %v1645 = vunpack.c.l.b16 %v831
        %v1646 = vunpack.c.h.b16 %v831
        %v1647 = vunpack.c.l.b16 %v832
        %v1648 = vunpack.c.h.b16 %v832
        %v1649 = vunpack.c.l.b16 %v833
        %v1650 = vunpack.c.h.b16 %v833
        %v1651 = vunpack.c.l.b16 %v834
        %v1652 = vunpack.c.h.b16 %v834
        %v1653 = vunpack.c.l.b16 %v835
        %v1654 = vunpack.c.h.b16 %v835
        %v1655 = vunpack.c.l.b16 %v836
        %v1656 = vunpack.c.h.b16 %v836
        %v1657 = vunpack.c.l.b16 %v837
        %v1658 = vunpack.c.h.b16 %v837
        %v1659 = vunpack.c.l.b16 %v838
        %v1660 = vunpack.c.h.b16 %v838
        %v1661 = vunpack.c.l.b16 %v839
        %v1662 = vunpack.c.h.b16 %v839
        %v1663 = vunpack.c.l.b16 %v840
        %v1664 = vunpack.c.h.b16 %v840
        %v1665 = vunpack.c.l.b16 %v841
        %v1666 = vunpack.c.h.b16 %v841
        %v1667 = vunpack.c.l.b16 %v842
        %v1668 = vunpack.c.h.b16 %v842
        %v1669 = vunpack.c.l.b16 %v843
        %v1670 = vunpack.c.h.b16 %v843
        %v1671 = vunpack.c.l.b16 %v844
        %v1672 = vunpack.c.h.b16 %v844
        %v1673 = vunpack.c.l.b16 %v845
        %v1674 = vunpack.c.h.b16 %v845
        %v1675 = vunpack.c.l.b16 %v846
        %v1676 = vunpack.c.h.b16 %v846
        %v1677 = vunpack.c.l.b16 %v847
        %v1678 = vunpack.c.h.b16 %v847
        %v1679 = vunpack.c.l.b16 %v848
        %v1680 = vunpack.c.h.b16 %v848
        %v1681 = vunpack.c.l.b16 %v849
        %v1682 = vunpack.c.h.b16 %v849
        %v1683 = vunpack.c.l.b16 %v850
        %v1684 = vunpack.c.h.b16 %v850
        %v1685 = vunpack.c.l.b16 %v851
        %v1686 = vunpack.c.h.b16 %v851
        %v1687 = vunpack.c.l.b16 %v852
        %v1688 = vunpack.c.h.b16 %v852
        %v1689 = vunpack.c.l.b16 %v853
        %v1690 = vunpack.c.h.b16 %v853
        %v1691 = vunpack.c.l.b16 %v854
        %v1692 = vunpack.c.h.b16 %v854
        %v1693 = vunpack.c.l.b16 %v855
        %v1694 = vunpack.c.h.b16 %v855
        %v1695 = vunpack.c.l.b16 %v856
        %v1696 = vunpack.c.h.b16 %v856
        %v1697 = vunpack.c.l.b16 %v857
        %v1698 = vunpack.c.h.b16 %v857
        %v1699 = vunpack.c.l.b16 %v858
        %v1700 = vunpack.c.h.b16 %v858
        %v1701 = vunpack.c.l.b16 %v859
        %v1702 = vunpack.c.h.b16 %v859
        %v1703 = vunpack.c.l.b16 %v860
        %v1704 = vunpack.c.h.b16 %v860
        %v1705 = vunpack.c.l.b16 %v861
        %v1706 = vunpack.c.h.b16 %v861
        %v1707 = vunpack.c.l.b16 %v862
        %v1708 = vunpack.c.h.b16 %v862
        %v1709 = vunpack.c.l.b16 %v863
        %v1710 = vunpack.c.h.b16 %v863
        %v1711 = vunpack.c.l.b16 %v864
        %v1712 = vunpack.c.h.b16 %v864
        %v1713 = vunpack.c.l.b16 %v865
        %v1714 = vunpack.c.h.b16 %v865
        %v1715 = vunpack.c.l.b16 %v866
        %v1716 = vunpack.c.h.b16 %v866
        %v1717 = vunpack.c.l.b16 %v867
        %v1718 = vunpack.c.h.b16 %v867
        %v1719 = vunpack.c.l.b16 %v868
        %v1720 = vunpack.c.h.b16 %v868
        %v1721 = vunpack.c.l.b16 %v869
        %v1722 = vunpack.c.h.b16 %v869
        %v1723 = vunpack.c.l.b16 %v870
        %v1724 = vunpack.c.h.b16 %v870
        %v1725 = vunpack.c.l.b16 %v871
        %v1726 = vunpack.c.h.b16 %v871
        %v1727 = vunpack.c.l.b16 %v872
        %v1728 = vunpack.c.h.b16 %v872
        %v1729 = vunpack.c.l.b16 %v873
        %v1730 = vunpack.c.h.b16 %v873
        %v1731 = vunpack.c.l.b16 %v874
        %v1732 = vunpack.c.h.b16 %v874
        %v1733 = vunpack.c.l.b16 %v875
        %v1734 = vunpack.c.h.b16 %v875
        %v1735 = vunpack.c.l.b16 %v876
        %v1736 = vunpack.c.h.b16 %v876
        %v1737 = vunpack.c.l.b16 %v877
        %v1738 = vunpack.c.h.b16 %v877
        %v1739 = vunpack.c.l.b16 %v878
        %v1740 = vunpack.c.h.b16 %v878
        %v1741 = vunpack.c.l.b16 %v879
        %v1742 = vunpack.c.h.b16 %v879
        %v1743 = vunpack.c.l.b16 %v880
        %v1744 = vunpack.c.h.b16 %v880
        %v1745 = vunpack.c.l.b16 %v881
        %v1746 = vunpack.c.h.b16 %v881
        %v1747 = vunpack.c.l.b16 %v882
        %v1748 = vunpack.c.h.b16 %v882
        %v1749 = vunpack.c.l.b16 %v883
        %v1750 = vunpack.c.h.b16 %v883
        %v1751 = vunpack.c.l.b16 %v884
        %v1752 = vunpack.c.h.b16 %v884
        %v1753 = vunpack.c.l.b16 %v885
        %v1754 = vunpack.c.h.b16 %v885
        %v1755 = vunpack.c.l.b16 %v886
        %v1756 = vunpack.c.h.b16 %v886
        %v1757 = vunpack.c.l.b16 %v887
        %v1758 = vunpack.c.h.b16 %v887
        %v1759 = vunpack.c.l.b16 %v888
        %v1760 = vunpack.c.h.b16 %v888
        %v1761 = vunpack.c.l.b16 %v889
        %v1762 = vunpack.c.h.b16 %v889
        %v1763 = vunpack.c.l.b16 %v890
        %v1764 = vunpack.c.h.b16 %v890
        %v1765 = vunpack.c.l.b16 %v891
        %v1766 = vunpack.c.h.b16 %v891
        %v1767 = vunpack.c.l.b16 %v892
        %v1768 = vunpack.c.h.b16 %v892
        %v1769 = vunpack.c.l.b16 %v893
        %v1770 = vunpack.c.h.b16 %v893
        %v1771 = vunpack.c.l.b16 %v894
        %v1772 = vunpack.c.h.b16 %v894
        %v1773 = vunpack.c.l.b16 %v895
        %v1774 = vunpack.c.h.b16 %v895
        %v1775 = vunpack.c.l.b16 %v896
        %v1776 = vunpack.c.h.b16 %v896
        %v1777 = vunpack.c.l.b16 %v897
        %v1778 = vunpack.c.h.b16 %v897
        %v1779 = vunpack.c.l.b16 %v898
        %v1780 = vunpack.c.h.b16 %v898
        %v1781 = vunpack.c.l.b16 %v899
        %v1782 = vunpack.c.h.b16 %v899
        %v1783 = vunpack.c.l.b16 %v900
        %v1784 = vunpack.c.h.b16 %v900
        %v1785 = vunpack.c.l.b16 %v901
        %v1786 = vunpack.c.h.b16 %v901
        %v1787 = vunpack.c.l.b16 %v902
        %v1788 = vunpack.c.h.b16 %v902
        %v1789 = vunpack.c.l.b16 %v903
        %v1790 = vunpack.c.h.b16 %v903
        %v1791 = vunpack.c.l.b16 %v904
        %v1792 = vunpack.c.h.b16 %v904
        %v1793 = vunpack.c.l.b16 %v905
        %v1794 = vunpack.c.h.b16 %v905
        %v1795 = vunpack.c.l.b16 %v906
        %v1796 = vunpack.c.h.b16 %v906
        %v1797 = vunpack.c.l.b16 %v907
        %v1798 = vunpack.c.h.b16 %v907
        %v1799 = vunpack.c.l.b16 %v908
        %v1800 = vunpack.c.h.b16 %v908
        %v1801 = vunpack.c.l.b16 %v909
        %v1802 = vunpack.c.h.b16 %v909
        %v1803 = vunpack.c.l.b16 %v910
        %v1804 = vunpack.c.h.b16 %v910
        %v1805 = vunpack.c.l.b16 %v911
        %v1806 = vunpack.c.h.b16 %v911
        %v1807 = vunpack.c.l.b16 %v912
        %v1808 = vunpack.c.h.b16 %v912
        %v1809 = vunpack.c.l.b16 %v913
        %v1810 = vunpack.c.h.b16 %v913
        %v1811 = vunpack.c.l.b16 %v914
        %v1812 = vunpack.c.h.b16 %v914
        %v1813 = vunpack.c.l.b16 %v915
        %v1814 = vunpack.c.h.b16 %v915
        %v1815 = vunpack.c.l.b16 %v916
        %v1816 = vunpack.c.h.b16 %v916
        %v1817 = vunpack.c.l.b16 %v917
        %v1818 = vunpack.c.h.b16 %v917
        %v1819 = vunpack.c.l.b16 %v918
        %v1820 = vunpack.c.h.b16 %v918
        %v1821 = vunpack.c.l.b16 %v919
        %v1822 = vunpack.c.h.b16 %v919
        %v1823 = vunpack.c.l.b16 %v920
        %v1824 = vunpack.c.h.b16 %v920
        %v1825 = vunpack.c.l.b16 %v921
        %v1826 = vunpack.c.h.b16 %v921
        %v1827 = vunpack.c.l.b16 %v922
        %v1828 = vunpack.c.h.b16 %v922
        %v1829 = vunpack.c.l.b16 %v923
        %v1830 = vunpack.c.h.b16 %v923
        %v1831 = vunpack.c.l.b16 %v924
        %v1832 = vunpack.c.h.b16 %v924
        %v1833 = vunpack.c.l.b16 %v925
        %v1834 = vunpack.c.h.b16 %v925
        %v1835 = vunpack.c.l.b16 %v926
        %v1836 = vunpack.c.h.b16 %v926
        %v1837 = vunpack.c.l.b16 %v927
        %v1838 = vunpack.c.h.b16 %v927
        %v1839 = vunpack.c.l.b16 %v928
        %v1840 = vunpack.c.h.b16 %v928
        %v1841 = vunpack.c.l.b16 %v929
        %v1842 = vunpack.c.h.b16 %v929
        %v1843 = vunpack.c.l.b16 %v930
        %v1844 = vunpack.c.h.b16 %v930
        %v1845 = vunpack.c.l.b16 %v931
        %v1846 = vunpack.c.h.b16 %v931
        %v1847 = vunpack.c.l.b16 %v932
        %v1848 = vunpack.c.h.b16 %v932
        %v1849 = vunpack.c.l.b16 %v933
        %v1850 = vunpack.c.h.b16 %v933
        %v1851 = vunpack.c.l.b16 %v934
        %v1852 = vunpack.c.h.b16 %v934
        %v1853 = vunpack.c.l.b16 %v935
        %v1854 = vunpack.c.h.b16 %v935
        %v1855 = vunpack.c.l.b16 %v936
        %v1856 = vunpack.c.h.b16 %v936
        %v1857 = vunpack.c.l.b16 %v937
        %v1858 = vunpack.c.h.b16 %v937
        %v1859 = vunpack.c.l.b16 %v938
        %v1860 = vunpack.c.h.b16 %v938
        %v1861 = vunpack.c.l.b16 %v939
        %v1862 = vunpack.c.h.b16 %v939
        %v1863 = vunpack.c.l.b16 %v940
        %v1864 = vunpack.c.h.b16 %v940
        %v1865 = vunpack.c.l.b16 %v941
        %v1866 = vunpack.c.h.b16 %v941
        %v1867 = vunpack.c.l.b16 %v942
        %v1868 = vunpack.c.h.b16 %v942
        %v1869 = vunpack.c.l.b16 %v943
        %v1870 = vunpack.c.h.b16 %v943
        %v1871 = vunpack.c.l.b16 %v944
        %v1872 = vunpack.c.h.b16 %v944
        %v1873 = vpack.c.b16 %v1309, %v1297
        %v1874 = vpack.c.b16 %v1310, %v1298
        %v1875 = vpack.c.b16 %v1311, %v1299
        %v1876 = vpack.c.b16 %v1312, %v1300
        %v1877 = vpack.c.b16 %v1313, %v1301
        %v1878 = vpack.c.b16 %v1314, %v1302
        %v1879 = vpack.c.b16 %v1315, %v1303
        %v1880 = vpack.c.b16 %v1316, %v1304
        %v1881 = vpack.c.b16 %v1317, %v1305
        %v1882 = vpack.c.b16 %v1318, %v1306
        %v1883 = vpack.c.b16 %v1319, %v1307
        %v1884 = vpack.c.b16 %v1320, %v1308
        %v1885 = vpack.c.b16 %v1333, %v1321
        %v1886 = vpack.c.b16 %v1334, %v1322
        %v1887 = vpack.c.b16 %v1335, %v1323
        %v1888 = vpack.c.b16 %v1336, %v1324
        %v1889 = vpack.c.b16 %v1337, %v1325
        %v1890 = vpack.c.b16 %v1338, %v1326
        %v1891 = vpack.c.b16 %v1339, %v1327
        %v1892 = vpack.c.b16 %v1340, %v1328
        %v1893 = vpack.c.b16 %v1341, %v1329
        %v1894 = vpack.c.b16 %v1342, %v1330
        %v1895 = vpack.c.b16 %v1343, %v1331
        %v1896 = vpack.c.b16 %v1344, %v1332
        %v1897 = vpack.c.b16 %v1357, %v1345
        %v1898 = vpack.c.b16 %v1358, %v1346
        %v1899 = vpack.c.b16 %v1359, %v1347
        %v1900 = vpack.c.b16 %v1360, %v1348
        %v1901 = vpack.c.b16 %v1361, %v1349
        %v1902 = vpack.c.b16 %v1362, %v1350
        %v1903 = vpack.c.b16 %v1363, %v1351
        %v1904 = vpack.c.b16 %v1364, %v1352
        %v1905 = vpack.c.b16 %v1365, %v1353
        %v1906 = vpack.c.b16 %v1366, %v1354
        %v1907 = vpack.c.b16 %v1367, %v1355
        %v1908 = vpack.c.b16 %v1368, %v1356
        %v1909 = vpack.c.b16 %v1381, %v1369
        %v1910 = vpack.c.b16 %v1382, %v1370
        %v1911 = vpack.c.b16 %v1383, %v1371
        %v1912 = vpack.c.b16 %v1384, %v1372
        %v1913 = vpack.c.b16 %v1385, %v1373
        %v1914 = vpack.c.b16 %v1386, %v1374
        %v1915 = vpack.c.b16 %v1387, %v1375
        %v1916 = vpack.c.b16 %v1388, %v1376
        %v1917 = vpack.c.b16 %v1389, %v1377
        %v1918 = vpack.c.b16 %v1390, %v1378
        %v1919 = vpack.c.b16 %v1391, %v1379
        %v1920 = vpack.c.b16 %v1392, %v1380
        %v1921 = vpack.c.b16 %v1405, %v1393
        %v1922 = vpack.c.b16 %v1406, %v1394
        %v1923 = vpack.c.b16 %v1407, %v1395
        %v1924 = vpack.c.b16 %v1408, %v1396
        %v1925 = vpack.c.b16 %v1409, %v1397
        %v1926 = vpack.c.b16 %v1410, %v1398
        %v1927 = vpack.c.b16 %v1411, %v1399
        %v1928 = vpack.c.b16 %v1412, %v1400
        %v1929 = vpack.c.b16 %v1413, %v1401
        %v1930 = vpack.c.b16 %v1414, %v1402
        %v1931 = vpack.c.b16 %v1415, %v1403
        %v1932 = vpack.c.b16 %v1416, %v1404
        %v1933 = vpack.c.b16 %v1429, %v1417
        %v1934 = vpack.c.b16 %v1430, %v1418
        %v1935 = vpack.c.b16 %v1431, %v1419
        %v1936 = vpack.c.b16 %v1432, %v1420
        %v1937 = vpack.c.b16 %v1433, %v1421
        %v1938 = vpack.c.b16 %v1434, %v1422
        %v1939 = vpack.c.b16 %v1435, %v1423
        %v1940 = vpack.c.b16 %v1436, %v1424
        %v1941 = vpack.c.b16 %v1437, %v1425
        %v1942 = vpack.c.b16 %v1438, %v1426
        %v1943 = vpack.c.b16 %v1439, %v1427
        %v1944 = vpack.c.b16 %v1440, %v1428
        %v1945 = vpack.c.b16 %v1453, %v1441
        %v1946 = vpack.c.b16 %v1454, %v1442
        %v1947 = vpack.c.b16 %v1455, %v1443
        %v1948 = vpack.c.b16 %v1456, %v1444
        %v1949 = vpack.c.b16 %v1457, %v1445
        %v1950 = vpack.c.b16 %v1458, %v1446
        %v1951 = vpack.c.b16 %v1459, %v1447
        %v1952 = vpack.c.b16 %v1460, %v1448
        %v1953 = vpack.c.b16 %v1461, %v1449
        %v1954 = vpack.c.b16 %v1462, %v1450
        %v1955 = vpack.c.b16 %v1463, %v1451
        %v1956 = vpack.c.b16 %v1464, %v1452
        %v1957 = vpack.c.b16 %v1477, %v1465
        %v1958 = vpack.c.b16 %v1478, %v1466
        %v1959 = vpack.c.b16 %v1479, %v1467
        %v1960 = vpack.c.b16 %v1480, %v1468
        %v1961 = vpack.c.b16 %v1481, %v1469
        %v1962 = vpack.c.b16 %v1482, %v1470
        %v1963 = vpack.c.b16 %v1483, %v1471
        %v1964 = vpack.c.b16 %v1484, %v1472
        %v1965 = vpack.c.b16 %v1485, %v1473
        %v1966 = vpack.c.b16 %v1486, %v1474
        %v1967 = vpack.c.b16 %v1487, %v1475
        %v1968 = vpack.c.b16 %v1488, %v1476
        %v1969 = vpack.c.b16 %v1501, %v1489
        %v1970 = vpack.c.b16 %v1502, %v1490
        %v1971 = vpack.c.b16 %v1503, %v1491
        %v1972 = vpack.c.b16 %v1504, %v1492
        %v1973 = vpack.c.b16 %v1505, %v1493
        %v1974 = vpack.c.b16 %v1506, %v1494
        %v1975 = vpack.c.b16 %v1507, %v1495
        %v1976 = vpack.c.b16 %v1508, %v1496
        %v1977 = vpack.c.b16 %v1509, %v1497
        %v1978 = vpack.c.b16 %v1510, %v1498
        %v1979 = vpack.c.b16 %v1511, %v1499
        %v1980 = vpack.c.b16 %v1512, %v1500
        %v1981 = vpack.c.b16 %v1525, %v1513
        %v1982 = vpack.c.b16 %v1526, %v1514
        %v1983 = vpack.c.b16 %v1527, %v1515
        %v1984 = vpack.c.b16 %v1528, %v1516
        %v1985 = vpack.c.b16 %v1529, %v1517
        %v1986 = vpack.c.b16 %v1530, %v1518
        %v1987 = vpack.c.b16 %v1531, %v1519
        %v1988 = vpack.c.b16 %v1532, %v1520
        %v1989 = vpack.c.b16 %v1533, %v1521
        %v1990 = vpack.c.b16 %v1534, %v1522
        %v1991 = vpack.c.b16 %v1535, %v1523
        %v1992 = vpack.c.b16 %v1536, %v1524
        %v1993 = vpack.c.b16 %v1549, %v1537
        %v1994 = vpack.c.b16 %v1550, %v1538
        %v1995 = vpack.c.b16 %v1551, %v1539
        %v1996 = vpack.c.b16 %v1552, %v1540
        %v1997 = vpack.c.b16 %v1553, %v1541
        %v1998 = vpack.c.b16 %v1554, %v1542
        %v1999 = vpack.c.b16 %v1555, %v1543
        %v2000 = vpack.c.b16 %v1556, %v1544
        %v2001 = vpack.c.b16 %v1557, %v1545
        %v2002 = vpack.c.b16 %v1558, %v1546
        %v2003 = vpack.c.b16 %v1559, %v1547
        %v2004 = vpack.c.b16 %v1560, %v1548
        %v2005 = vpack.c.b16 %v1573, %v1561
        %v2006 = vpack.c.b16 %v1574, %v1562
        %v2007 = vpack.c.b16 %v1575, %v1563
        %v2008 = vpack.c.b16 %v1576, %v1564
        %v2009 = vpack.c.b16 %v1577, %v1565
        %v2010 = vpack.c.b16 %v1578, %v1566
        %v2011 = vpack.c.b16 %v1579, %v1567
        %v2012 = vpack.c.b16 %v1580, %v1568
        %v2013 = vpack.c.b16 %v1581, %v1569
        %v2014 = vpack.c.b16 %v1582, %v1570
        %v2015 = vpack.c.b16 %v1583, %v1571
        %v2016 = vpack.c.b16 %v1584, %v1572
        %v2017 = vpack.c.b16 %v1597, %v1585
        %v2018 = vpack.c.b16 %v1598, %v1586
        %v2019 = vpack.c.b16 %v1599, %v1587
        %v2020 = vpack.c.b16 %v1600, %v1588
        %v2021 = vpack.c.b16 %v1601, %v1589
        %v2022 = vpack.c.b16 %v1602, %v1590
        %v2023 = vpack.c.b16 %v1603, %v1591
        %v2024 = vpack.c.b16 %v1604, %v1592
        %v2025 = vpack.c.b16 %v1605, %v1593
        %v2026 = vpack.c.b16 %v1606, %v1594
        %v2027 = vpack.c.b16 %v1607, %v1595
        %v2028 = vpack.c.b16 %v1608, %v1596
        %v2029 = vpack.c.b16 %v1621, %v1609
        %v2030 = vpack.c.b16 %v1622, %v1610
        %v2031 = vpack.c.b16 %v1623, %v1611
        %v2032 = vpack.c.b16 %v1624, %v1612
        %v2033 = vpack.c.b16 %v1625, %v1613
        %v2034 = vpack.c.b16 %v1626, %v1614
        %v2035 = vpack.c.b16 %v1627, %v1615
        %v2036 = vpack.c.b16 %v1628, %v1616
        %v2037 = vpack.c.b16 %v1629, %v1617
        %v2038 = vpack.c.b16 %v1630, %v1618
        %v2039 = vpack.c.b16 %v1631, %v1619
        %v2040 = vpack.c.b16 %v1632, %v1620
        %v2041 = vpack.c.b16 %v1645, %v1633
        %v2042 = vpack.c.b16 %v1646, %v1634
        %v2043 = vpack.c.b16 %v1647, %v1635
        %v2044 = vpack.c.b16 %v1648, %v1636
        %v2045 = vpack.c.b16 %v1649, %v1637
        %v2046 = vpack.c.b16 %v1650, %v1638
        %v2047 = vpack.c.b16 %v1651, %v1639
        %v2048 = vpack.c.b16 %v1652, %v1640
        %v2049 = vpack.c.b16 %v1653, %v1641
        %v2050 = vpack.c.b16 %v1654, %v1642
        %v2051 = vpack.c.b16 %v1655, %v1643
        %v2052 = vpack.c.b16 %v1656, %v1644
        %v2053 = vpack.c.b16 %v1669, %v1657
        %v2054 = vpack.c.b16 %v1670, %v1658
        %v2055 = vpack.c.b16 %v1671, %v1659
        %v2056 = vpack.c.b16 %v1672, %v1660
        %v2057 = vpack.c.b16 %v1673, %v1661
        %v2058 = vpack.c.b16 %v1674, %v1662
        %v2059 = vpack.c.b16 %v1675, %v1663
        %v2060 = vpack.c.b16 %v1676, %v1664
        %v2061 = vpack.c.b16 %v1677, %v1665
        %v2062 = vpack.c.b16 %v1678, %v1666
        %v2063 = vpack.c.b16 %v1679, %v1667
        %v2064 = vpack.c.b16 %v1680, %v1668
        %v2065 = vpack.c.b16 %v1693, %v1681
        %v2066 = vpack.c.b16 %v1694, %v1682
        %v2067 = vpack.c.b16 %v1695, %v1683
        %v2068 = vpack.c.b16 %v1696, %v1684
        %v2069 = vpack.c.b16 %v1697, %v1685
        %v2070 = vpack.c.b16 %v1698, %v1686
        %v2071 = vpack.c.b16 %v1699, %v1687
        %v2072 = vpack.c.b16 %v1700, %v1688
        %v2073 = vpack.c.b16 %v1701, %v1689
        %v2074 = vpack.c.b16 %v1702, %v1690
        %v2075 = vpack.c.b16 %v1703, %v1691
        %v2076 = vpack.c.b16 %v1704, %v1692
        %v2077 = vpack.c.b16 %v1717, %v1705
        %v2078 = vpack.c.b16 %v1718, %v1706
        %v2079 = vpack.c.b16 %v1719, %v1707
        %v2080 = vpack.c.b16 %v1720, %v1708
        %v2081 = vpack.c.b16 %v1721, %v1709
        %v2082 = vpack.c.b16 %v1722, %v1710
        %v2083 = vpack.c.b16 %v1723, %v1711
        %v2084 = vpack.c.b16 %v1724, %v1712
        %v2085 = vpack.c.b16 %v1725, %v1713
        %v2086 = vpack.c.b16 %v1726, %v1714
        %v2087 = vpack.c.b16 %v1727, %v1715
        %v2088 = vpack.c.b16 %v1728, %v1716
        %v2089 = vpack.c.b16 %v1741, %v1729
        %v2090 = vpack.c.b16 %v1742, %v1730
        %v2091 = vpack.c.b16 %v1743, %v1731
        %v2092 = vpack.c.b16 %v1744, %v1732
        %v2093 = vpack.c.b16 %v1745, %v1733
        %v2094 = vpack.c.b16 %v1746, %v1734
        %v2095 = vpack.c.b16 %v1747, %v1735
        %v2096 = vpack.c.b16 %v1748, %v1736
        %v2097 = vpack.c.b16 %v1749, %v1737
        %v2098 = vpack.c.b16 %v1750, %v1738
        %v2099 = vpack.c.b16 %v1751, %v1739
        %v2100 = vpack.c.b16 %v1752, %v1740
        %v2101 = vpack.c.b16 %v1765, %v1753
        %v2102 = vpack.c.b16 %v1766, %v1754
        %v2103 = vpack.c.b16 %v1767, %v1755
        %v2104 = vpack.c.b16 %v1768, %v1756
        %v2105 = vpack.c.b16 %v1769, %v1757
        %v2106 = vpack.c.b16 %v1770, %v1758
        %v2107 = vpack.c.b16 %v1771, %v1759
        %v2108 = vpack.c.b16 %v1772, %v1760
        %v2109 = vpack.c.b16 %v1773, %v1761
        %v2110 = vpack.c.b16 %v1774, %v1762
        %v2111 = vpack.c.b16 %v1775, %v1763
        %v2112 = vpack.c.b16 %v1776, %v1764
        %v2113 = vpack.c.b16 %v1789, %v1777
        %v2114 = vpack.c.b16 %v1790, %v1778
        %v2115 = vpack.c.b16 %v1791, %v1779
        %v2116 = vpack.c.b16 %v1792, %v1780
        %v2117 = vpack.c.b16 %v1793, %v1781
        %v2118 = vpack.c.b16 %v1794, %v1782
        %v2119 = vpack.c.b16 %v1795, %v1783
        %v2120 = vpack.c.b16 %v1796, %v1784
        %v2121 = vpack.c.b16 %v1797, %v1785
        %v2122 = vpack.c.b16 %v1798, %v1786
        %v2123 = vpack.c.b16 %v1799, %v1787
        %v2124 = vpack.c.b16 %v1800, %v1788
        %v2125 = vpack.c.b16 %v1813, %v1801
        %v2126 = vpack.c.b16 %v1814, %v1802
        %v2127 = vpack.c.b16 %v1815, %v1803
        %v2128 = vpack.c.b16 %v1816, %v1804
        %v2129 = vpack.c.b16 %v1817, %v1805
        %v2130 = vpack.c.b16 %v1818, %v1806
        %v2131 = vpack.c.b16 %v1819, %v1807
        %v2132 = vpack.c.b16 %v1820, %v1808
        %v2133 = vpack.c.b16 %v1821, %v1809
        %v2134 = vpack.c.b16 %v1822, %v1810
        %v2135 = vpack.c.b16 %v1823, %v1811
        %v2136 = vpack.c.b16 %v1824, %v1812
        %v2137 = vpack.c.b16 %v1837, %v1825
        %v2138 = vpack.c.b16 %v1838, %v1826
        %v2139 = vpack.c.b16 %v1839, %v1827
        %v2140 = vpack.c.b16 %v1840, %v1828
        %v2141 = vpack.c.b16 %v1841, %v1829
        %v2142 = vpack.c.b16 %v1842, %v1830
        %v2143 = vpack.c.b16 %v1843, %v1831
        %v2144 = vpack.c.b16 %v1844, %v1832
        %v2145 = vpack.c.b16 %v1845, %v1833
        %v2146 = vpack.c.b16 %v1846, %v1834
        %v2147 = vpack.c.b16 %v1847, %v1835
        %v2148 = vpack.c.b16 %v1848, %v1836
        %v2149 = vpack.c.b16 %v1861, %v1849
        %v2150 = vpack.c.b16 %v1862, %v1850
        %v2151 = vpack.c.b16 %v1863, %v1851
        %v2152 = vpack.c.b16 %v1864, %v1852
        %v2153 = vpack.c.b16 %v1865, %v1853
        %v2154 = vpack.c.b16 %v1866, %v1854
        %v2155 = vpack.c.b16 %v1867, %v1855
        %v2156 = vpack.c.b16 %v1868, %v1856
        %v2157 = vpack.c.b16 %v1869, %v1857
        %v2158 = vpack.c.b16 %v1870, %v1858
        %v2159 = vpack.c.b16 %v1871, %v1859
        %v2160 = vpack.c.b16 %v1872, %v1860
        %2449 = vmatprep.subr.bf16.mxu0 %v1958
        %2450 = vmatpush1.bf16.msra.mxu0 %v1957
        %2451 = vmatprep.subr.bf16.mxu0 %v1946
        %2452 = vmatpush1.bf16.msra.mxu0 %v1945
        %2453 = vmatprep.subr.bf16.mxu0 %v1934
        %2454 = vmatpush1.bf16.msra.mxu0 %v1933
        %2455 = vmatprep.subr.bf16.mxu0 %v1922
        %2456 = vmatpush1.bf16.msra.mxu0 %v1921
        %2457 = vmatprep.subr.bf16.mxu0 %v1910
        %2458 = vmatpush1.bf16.msra.mxu0 %v1909
        %2459 = vmatprep.subr.bf16.mxu0 %v1898
        %2460 = vmatpush1.bf16.msra.mxu0 %v1897
        %2461 = vmatprep.subr.bf16.mxu0 %v1886
        %2462 = vmatpush1.bf16.msra.mxu0 %v1885
        %2463 = vmatprep.subr.bf16.mxu0 %v1874
        %2464 = vmatpush1.bf16.msra.mxu0 %v1873
        %2465 = vmatprep.subr.bf16.mxu0 %v2054
        %2466 = vmatpush2.bf16.msra.mxu0 %v2053
        %2467 = vmatprep.subr.bf16.mxu0 %v2042
        %2468 = vmatpush2.bf16.msra.mxu0 %v2041
        %2469 = vmatprep.subr.bf16.mxu0 %v2030
        %2470 = vmatpush2.bf16.msra.mxu0 %v2029
        %2471 = vmatprep.subr.bf16.mxu0 %v2018
        %2472 = vmatpush2.bf16.msra.mxu0 %v2017
        %2473 = vmatprep.subr.bf16.mxu0 %v2006
        %2474 = vmatpush2.bf16.msra.mxu0 %v2005
        %2475 = vmatprep.subr.bf16.mxu0 %v1994
        %2476 = vmatpush2.bf16.msra.mxu0 %v1993
        %2477 = vmatprep.subr.bf16.mxu0 %v1982
        %2478 = vmatpush2.bf16.msra.mxu0 %v1981
        %2479 = vmatprep.subr.bf16.mxu0 %v1970
        %2480 = vmatpush2.bf16.msra.mxu0 %v1969
        %2481 = vmatprep.mubr.bf16.mxu0 %v646
        %2482 = vmatmul.mubr.bf16.gmra.mxu0 %v645
        %v2483 = vpop.f32.mrf.mxu0
        %v2484 = vadd.f32 %v952, %v2483
        %v2485 = vpop.f32.mrf.mxu0
        %v2486 = vadd.f32 %v956, %v2485
        %v2487 = vpop.f32.mrf.mxu0
        %v2488 = vadd.f32 %v952, %v2487
        %v2489 = vpop.f32.mrf.mxu0
        %v2490 = vadd.f32 %v956, %v2489
        %2491 = vmatprep.mubr.bf16.mxu0 %v649
        %2492 = vmatmul.mubr.bf16.gmra.mxu0 %v648
        %v2493 = vpop.f32.mrf.mxu0
        %v2494 = vadd.f32 %v952, %v2493
        %v2495 = vpop.f32.mrf.mxu0
        %v2496 = vadd.f32 %v956, %v2495
        %v2497 = vpop.f32.mrf.mxu0
        %v2498 = vadd.f32 %v952, %v2497
        %v2499 = vpop.f32.mrf.mxu0
        %v2500 = vadd.f32 %v956, %v2499
        %2501 = vmatprep.mubr.bf16.mxu0 %v652
        %2502 = vmatmul.mubr.bf16.gmra.mxu0 %v651
        %v2503 = vpop.f32.mrf.mxu0
        %v2504 = vadd.f32 %v952, %v2503
        %v2505 = vpop.f32.mrf.mxu0
        %v2506 = vadd.f32 %v956, %v2505
        %v2507 = vpop.f32.mrf.mxu0
        %v2508 = vadd.f32 %v952, %v2507
        %v2509 = vpop.f32.mrf.mxu0
        %v2510 = vadd.f32 %v956, %v2509
        %2511 = vmatprep.mubr.bf16.mxu0 %v655
        %2512 = vmatmul.mubr.bf16.gmra.mxu0 %v654
        %v2513 = vpop.f32.mrf.mxu0
        %v2514 = vadd.f32 %v952, %v2513
        %v2515 = vpop.f32.mrf.mxu0
        %v2516 = vadd.f32 %v956, %v2515
        %v2517 = vpop.f32.mrf.mxu0
        %v2518 = vadd.f32 %v952, %v2517
        %v2519 = vpop.f32.mrf.mxu0
        %v2520 = vadd.f32 %v956, %v2519
        %2521 = vdwg.mxu0
        %2522 = vmatprep.subr.bf16.mxu0 %v2150
        %2523 = vmatpush1.bf16.msra.mxu0 %v2149
        %2524 = vmatprep.subr.bf16.mxu0 %v2138
        %2525 = vmatpush1.bf16.msra.mxu0 %v2137
        %2526 = vmatprep.subr.bf16.mxu0 %v2126
        %2527 = vmatpush1.bf16.msra.mxu0 %v2125
        %2528 = vmatprep.subr.bf16.mxu0 %v2114
        %2529 = vmatpush1.bf16.msra.mxu0 %v2113
        %2530 = vmatprep.subr.bf16.mxu0 %v2102
        %2531 = vmatpush1.bf16.msra.mxu0 %v2101
        %2532 = vmatprep.subr.bf16.mxu0 %v2090
        %2533 = vmatpush1.bf16.msra.mxu0 %v2089
        %2534 = vmatprep.subr.bf16.mxu0 %v2078
        %2535 = vmatpush1.bf16.msra.mxu0 %v2077
        %2536 = vmatprep.subr.bf16.mxu0 %v2066
        %2537 = vmatpush1.bf16.msra.mxu0 %v2065
        %2538 = vmatprep.subr.bf16.mxu0 0
        %2539 = vmatpush2.bf16.msra.mxu0 0
        %2540 = vmatprep.subr.bf16.mxu0 0
        %2541 = vmatpush2.bf16.msra.mxu0 0
        %2542 = vmatprep.subr.bf16.mxu0 0
        %2543 = vmatpush2.bf16.msra.mxu0 0
        %2544 = vmatprep.subr.bf16.mxu0 0
        %2545 = vmatpush2.bf16.msra.mxu0 0
        %2546 = vmatprep.subr.bf16.mxu0 0
        %2547 = vmatpush2.bf16.msra.mxu0 0
        %2548 = vmatprep.subr.bf16.mxu0 0
        %2549 = vmatpush2.bf16.msra.mxu0 0
        %2550 = vmatprep.subr.bf16.mxu0 0
        %2551 = vmatpush2.bf16.msra.mxu0 0
        %2552 = vmatprep.subr.bf16.mxu0 0
        %2553 = vmatpush2.bf16.msra.mxu0 0
        %2554 = vmatprep.mubr.bf16.mxu0 0
        %2555 = vmatmul.mubr.bf16.gmra.mxu0 %v647
        %v2556 = vpop.f32.mrf.mxu0
        %v2557 = vadd.f32 %v2484, %v2556
        %v2558 = vpop.f32.mrf.mxu0
        %v2559 = vadd.f32 %v2486, %v2558
        %v2560 = vpop.f32.mrf.mxu0
        %v2561 = vadd.f32 %v2488, %v2560
        %v2562 = vpop.f32.mrf.mxu0
        %v2563 = vadd.f32 %v2490, %v2562
        %2564 = vmatprep.mubr.bf16.mxu0 0
        %2565 = vmatmul.mubr.bf16.gmra.mxu0 %v650
        %v2566 = vpop.f32.mrf.mxu0
        %v2567 = vadd.f32 %v2494, %v2566
        %v2568 = vpop.f32.mrf.mxu0
        %v2569 = vadd.f32 %v2496, %v2568
        %v2570 = vpop.f32.mrf.mxu0
        %v2571 = vadd.f32 %v2498, %v2570
        %v2572 = vpop.f32.mrf.mxu0
        %v2573 = vadd.f32 %v2500, %v2572
        %2574 = vmatprep.mubr.bf16.mxu0 0
        %2575 = vmatmul.mubr.bf16.gmra.mxu0 %v653
        %v2576 = vpop.f32.mrf.mxu0
        %v2577 = vadd.f32 %v2504, %v2576
        %v2578 = vpop.f32.mrf.mxu0
        %v2579 = vadd.f32 %v2506, %v2578
        %v2580 = vpop.f32.mrf.mxu0
        %v2581 = vadd.f32 %v2508, %v2580
        %v2582 = vpop.f32.mrf.mxu0
        %v2583 = vadd.f32 %v2510, %v2582
        %2584 = vmatprep.mubr.bf16.mxu0 0
        %2585 = vmatmul.mubr.bf16.gmra.mxu0 %v656
        %v2586 = vpop.f32.mrf.mxu0
        %v2587 = vadd.f32 %v2514, %v2586
        %v2588 = vpop.f32.mrf.mxu0
        %v2589 = vadd.f32 %v2516, %v2588
        %v2590 = vpop.f32.mrf.mxu0
        %v2591 = vadd.f32 %v2518, %v2590
        %v2592 = vpop.f32.mrf.mxu0
        %v2593 = vadd.f32 %v2520, %v2592
        %2594 = vdwg.mxu0
        %2595 = vmatprep.subr.bf16.mxu0 %v1960
        %2596 = vmatpush1.bf16.msra.mxu0 %v1959
        %2597 = vmatprep.subr.bf16.mxu0 %v1948
        %2598 = vmatpush1.bf16.msra.mxu0 %v1947
        %2599 = vmatprep.subr.bf16.mxu0 %v1936
        %2600 = vmatpush1.bf16.msra.mxu0 %v1935
        %2601 = vmatprep.subr.bf16.mxu0 %v1924
        %2602 = vmatpush1.bf16.msra.mxu0 %v1923
        %2603 = vmatprep.subr.bf16.mxu0 %v1912
        %2604 = vmatpush1.bf16.msra.mxu0 %v1911
        %2605 = vmatprep.subr.bf16.mxu0 %v1900
        %2606 = vmatpush1.bf16.msra.mxu0 %v1899
        %2607 = vmatprep.subr.bf16.mxu0 %v1888
        %2608 = vmatpush1.bf16.msra.mxu0 %v1887
        %2609 = vmatprep.subr.bf16.mxu0 %v1876
        %2610 = vmatpush1.bf16.msra.mxu0 %v1875
        %2611 = vmatprep.subr.bf16.mxu0 %v2056
        %2612 = vmatpush2.bf16.msra.mxu0 %v2055
        %2613 = vmatprep.subr.bf16.mxu0 %v2044
        %2614 = vmatpush2.bf16.msra.mxu0 %v2043
        %2615 = vmatprep.subr.bf16.mxu0 %v2032
        %2616 = vmatpush2.bf16.msra.mxu0 %v2031
        %2617 = vmatprep.subr.bf16.mxu0 %v2020
        %2618 = vmatpush2.bf16.msra.mxu0 %v2019
        %2619 = vmatprep.subr.bf16.mxu0 %v2008
        %2620 = vmatpush2.bf16.msra.mxu0 %v2007
        %2621 = vmatprep.subr.bf16.mxu0 %v1996
        %2622 = vmatpush2.bf16.msra.mxu0 %v1995
        %2623 = vmatprep.subr.bf16.mxu0 %v1984
        %2624 = vmatpush2.bf16.msra.mxu0 %v1983
        %2625 = vmatprep.subr.bf16.mxu0 %v1972
        %2626 = vmatpush2.bf16.msra.mxu0 %v1971
        %2627 = vmatprep.mubr.bf16.mxu0 %v646
        %2628 = vmatmul.mubr.bf16.gmra.mxu0 %v645
        %v2629 = vpop.f32.mrf.mxu0
        %v2630 = vadd.f32 %v960, %v2629
        %v2631 = vpop.f32.mrf.mxu0
        %v2632 = vadd.f32 %v964, %v2631
        %v2633 = vpop.f32.mrf.mxu0
        %v2634 = vadd.f32 %v960, %v2633
        %v2635 = vpop.f32.mrf.mxu0
        %v2636 = vadd.f32 %v964, %v2635
        %2637 = vmatprep.mubr.bf16.mxu0 %v649
        %2638 = vmatmul.mubr.bf16.gmra.mxu0 %v648
        %v2639 = vpop.f32.mrf.mxu0
        %v2640 = vadd.f32 %v960, %v2639
        %v2641 = vpop.f32.mrf.mxu0
        %v2642 = vadd.f32 %v964, %v2641
        %v2643 = vpop.f32.mrf.mxu0
        %v2644 = vadd.f32 %v960, %v2643
        %v2645 = vpop.f32.mrf.mxu0
        %v2646 = vadd.f32 %v964, %v2645
        %2647 = vmatprep.mubr.bf16.mxu0 %v652
        %2648 = vmatmul.mubr.bf16.gmra.mxu0 %v651
        %v2649 = vpop.f32.mrf.mxu0
        %v2650 = vadd.f32 %v960, %v2649
        %v2651 = vpop.f32.mrf.mxu0
        %v2652 = vadd.f32 %v964, %v2651
        %v2653 = vpop.f32.mrf.mxu0
        %v2654 = vadd.f32 %v960, %v2653
        %v2655 = vpop.f32.mrf.mxu0
        %v2656 = vadd.f32 %v964, %v2655
        %2657 = vmatprep.mubr.bf16.mxu0 %v655
        %2658 = vmatmul.mubr.bf16.gmra.mxu0 %v654
        %v2659 = vpop.f32.mrf.mxu0
        %v2660 = vadd.f32 %v960, %v2659
        %v2661 = vpop.f32.mrf.mxu0
        %v2662 = vadd.f32 %v964, %v2661
        %v2663 = vpop.f32.mrf.mxu0
        %v2664 = vadd.f32 %v960, %v2663
        %v2665 = vpop.f32.mrf.mxu0
        %v2666 = vadd.f32 %v964, %v2665
        %2667 = vdwg.mxu0
        %2668 = vmatprep.subr.bf16.mxu0 %v2152
        %2669 = vmatpush1.bf16.msra.mxu0 %v2151
        %2670 = vmatprep.subr.bf16.mxu0 %v2140
        %2671 = vmatpush1.bf16.msra.mxu0 %v2139
        %2672 = vmatprep.subr.bf16.mxu0 %v2128
        %2673 = vmatpush1.bf16.msra.mxu0 %v2127
        %2674 = vmatprep.subr.bf16.mxu0 %v2116
        %2675 = vmatpush1.bf16.msra.mxu0 %v2115
        %2676 = vmatprep.subr.bf16.mxu0 %v2104
        %2677 = vmatpush1.bf16.msra.mxu0 %v2103
        %2678 = vmatprep.subr.bf16.mxu0 %v2092
        %2679 = vmatpush1.bf16.msra.mxu0 %v2091
        %2680 = vmatprep.subr.bf16.mxu0 %v2080
        %2681 = vmatpush1.bf16.msra.mxu0 %v2079
        %2682 = vmatprep.subr.bf16.mxu0 %v2068
        %2683 = vmatpush1.bf16.msra.mxu0 %v2067
        %2684 = vmatprep.subr.bf16.mxu0 0
        %2685 = vmatpush2.bf16.msra.mxu0 0
        %2686 = vmatprep.subr.bf16.mxu0 0
        %2687 = vmatpush2.bf16.msra.mxu0 0
        %2688 = vmatprep.subr.bf16.mxu0 0
        %2689 = vmatpush2.bf16.msra.mxu0 0
        %2690 = vmatprep.subr.bf16.mxu0 0
        %2691 = vmatpush2.bf16.msra.mxu0 0
        %2692 = vmatprep.subr.bf16.mxu0 0
        %2693 = vmatpush2.bf16.msra.mxu0 0
        %2694 = vmatprep.subr.bf16.mxu0 0
        %2695 = vmatpush2.bf16.msra.mxu0 0
        %2696 = vmatprep.subr.bf16.mxu0 0
        %2697 = vmatpush2.bf16.msra.mxu0 0
        %2698 = vmatprep.subr.bf16.mxu0 0
        %2699 = vmatpush2.bf16.msra.mxu0 0
        %2700 = vmatprep.mubr.bf16.mxu0 0
        %2701 = vmatmul.mubr.bf16.gmra.mxu0 %v647
        %v2702 = vpop.f32.mrf.mxu0
        %v2703 = vadd.f32 %v2630, %v2702
        %v2704 = vpop.f32.mrf.mxu0
        %v2705 = vadd.f32 %v2632, %v2704
        %v2706 = vpop.f32.mrf.mxu0
        %v2707 = vadd.f32 %v2634, %v2706
        %v2708 = vpop.f32.mrf.mxu0
        %v2709 = vadd.f32 %v2636, %v2708
        %2710 = vmatprep.mubr.bf16.mxu0 0
        %2711 = vmatmul.mubr.bf16.gmra.mxu0 %v650
        %v2712 = vpop.f32.mrf.mxu0
        %v2713 = vadd.f32 %v2640, %v2712
        %v2714 = vpop.f32.mrf.mxu0
        %v2715 = vadd.f32 %v2642, %v2714
        %v2716 = vpop.f32.mrf.mxu0
        %v2717 = vadd.f32 %v2644, %v2716
        %v2718 = vpop.f32.mrf.mxu0
        %v2719 = vadd.f32 %v2646, %v2718
        %2720 = vmatprep.mubr.bf16.mxu0 0
        %2721 = vmatmul.mubr.bf16.gmra.mxu0 %v653
        %v2722 = vpop.f32.mrf.mxu0
        %v2723 = vadd.f32 %v2650, %v2722
        %v2724 = vpop.f32.mrf.mxu0
        %v2725 = vadd.f32 %v2652, %v2724
        %v2726 = vpop.f32.mrf.mxu0
        %v2727 = vadd.f32 %v2654, %v2726
        %v2728 = vpop.f32.mrf.mxu0
        %v2729 = vadd.f32 %v2656, %v2728
        %2730 = vmatprep.mubr.bf16.mxu0 0
        %2731 = vmatmul.mubr.bf16.gmra.mxu0 %v656
        %v2732 = vpop.f32.mrf.mxu0
        %v2733 = vadd.f32 %v2660, %v2732
        %v2734 = vpop.f32.mrf.mxu0
        %v2735 = vadd.f32 %v2662, %v2734
        %v2736 = vpop.f32.mrf.mxu0
        %v2737 = vadd.f32 %v2664, %v2736
        %v2738 = vpop.f32.mrf.mxu0
        %v2739 = vadd.f32 %v2666, %v2738
        %2740 = vdwg.mxu0
        %2741 = vmatprep.subr.bf16.mxu0 %v1962
        %2742 = vmatpush1.bf16.msra.mxu0 %v1961
        %2743 = vmatprep.subr.bf16.mxu0 %v1950
        %2744 = vmatpush1.bf16.msra.mxu0 %v1949
        %2745 = vmatprep.subr.bf16.mxu0 %v1938
        %2746 = vmatpush1.bf16.msra.mxu0 %v1937
        %2747 = vmatprep.subr.bf16.mxu0 %v1926
        %2748 = vmatpush1.bf16.msra.mxu0 %v1925
        %2749 = vmatprep.subr.bf16.mxu0 %v1914
        %2750 = vmatpush1.bf16.msra.mxu0 %v1913
        %2751 = vmatprep.subr.bf16.mxu0 %v1902
        %2752 = vmatpush1.bf16.msra.mxu0 %v1901
        %2753 = vmatprep.subr.bf16.mxu0 %v1890
        %2754 = vmatpush1.bf16.msra.mxu0 %v1889
        %2755 = vmatprep.subr.bf16.mxu0 %v1878
        %2756 = vmatpush1.bf16.msra.mxu0 %v1877
        %2757 = vmatprep.subr.bf16.mxu0 %v2058
        %2758 = vmatpush2.bf16.msra.mxu0 %v2057
        %2759 = vmatprep.subr.bf16.mxu0 %v2046
        %2760 = vmatpush2.bf16.msra.mxu0 %v2045
        %2761 = vmatprep.subr.bf16.mxu0 %v2034
        %2762 = vmatpush2.bf16.msra.mxu0 %v2033
        %2763 = vmatprep.subr.bf16.mxu0 %v2022
        %2764 = vmatpush2.bf16.msra.mxu0 %v2021
        %2765 = vmatprep.subr.bf16.mxu0 %v2010
        %2766 = vmatpush2.bf16.msra.mxu0 %v2009
        %2767 = vmatprep.subr.bf16.mxu0 %v1998
        %2768 = vmatpush2.bf16.msra.mxu0 %v1997
        %2769 = vmatprep.subr.bf16.mxu0 %v1986
        %2770 = vmatpush2.bf16.msra.mxu0 %v1985
        %2771 = vmatprep.subr.bf16.mxu0 %v1974
        %2772 = vmatpush2.bf16.msra.mxu0 %v1973
        %2773 = vmatprep.mubr.bf16.mxu0 %v646
        %2774 = vmatmul.mubr.bf16.gmra.mxu0 %v645
        %v2775 = vpop.f32.mrf.mxu0
        %v2776 = vadd.f32 %v968, %v2775
        %v2777 = vpop.f32.mrf.mxu0
        %v2778 = vadd.f32 %v972, %v2777
        %v2779 = vpop.f32.mrf.mxu0
        %v2780 = vadd.f32 %v968, %v2779
        %v2781 = vpop.f32.mrf.mxu0
        %v2782 = vadd.f32 %v972, %v2781
        %2783 = vmatprep.mubr.bf16.mxu0 %v649
        %2784 = vmatmul.mubr.bf16.gmra.mxu0 %v648
        %v2785 = vpop.f32.mrf.mxu0
        %v2786 = vadd.f32 %v968, %v2785
        %v2787 = vpop.f32.mrf.mxu0
        %v2788 = vadd.f32 %v972, %v2787
        %v2789 = vpop.f32.mrf.mxu0
        %v2790 = vadd.f32 %v968, %v2789
        %v2791 = vpop.f32.mrf.mxu0
        %v2792 = vadd.f32 %v972, %v2791
        %2793 = vmatprep.mubr.bf16.mxu0 %v652
        %2794 = vmatmul.mubr.bf16.gmra.mxu0 %v651
        %v2795 = vpop.f32.mrf.mxu0
        %v2796 = vadd.f32 %v968, %v2795
        %v2797 = vpop.f32.mrf.mxu0
        %v2798 = vadd.f32 %v972, %v2797
        %v2799 = vpop.f32.mrf.mxu0
        %v2800 = vadd.f32 %v968, %v2799
        %v2801 = vpop.f32.mrf.mxu0
        %v2802 = vadd.f32 %v972, %v2801
        %2803 = vmatprep.mubr.bf16.mxu0 %v655
        %2804 = vmatmul.mubr.bf16.gmra.mxu0 %v654
        %v2805 = vpop.f32.mrf.mxu0
        %v2806 = vadd.f32 %v968, %v2805
        %v2807 = vpop.f32.mrf.mxu0
        %v2808 = vadd.f32 %v972, %v2807
        %v2809 = vpop.f32.mrf.mxu0
        %v2810 = vadd.f32 %v968, %v2809
        %v2811 = vpop.f32.mrf.mxu0
        %v2812 = vadd.f32 %v972, %v2811
        %2813 = vdwg.mxu0
        %2814 = vmatprep.subr.bf16.mxu0 %v2154
        %2815 = vmatpush1.bf16.msra.mxu0 %v2153
        %2816 = vmatprep.subr.bf16.mxu0 %v2142
        %2817 = vmatpush1.bf16.msra.mxu0 %v2141
        %2818 = vmatprep.subr.bf16.mxu0 %v2130
        %2819 = vmatpush1.bf16.msra.mxu0 %v2129
        %2820 = vmatprep.subr.bf16.mxu0 %v2118
        %2821 = vmatpush1.bf16.msra.mxu0 %v2117
        %2822 = vmatprep.subr.bf16.mxu0 %v2106
        %2823 = vmatpush1.bf16.msra.mxu0 %v2105
        %2824 = vmatprep.subr.bf16.mxu0 %v2094
        %2825 = vmatpush1.bf16.msra.mxu0 %v2093
        %2826 = vmatprep.subr.bf16.mxu0 %v2082
        %2827 = vmatpush1.bf16.msra.mxu0 %v2081
        %2828 = vmatprep.subr.bf16.mxu0 %v2070
        %2829 = vmatpush1.bf16.msra.mxu0 %v2069
        %2830 = vmatprep.subr.bf16.mxu0 0
        %2831 = vmatpush2.bf16.msra.mxu0 0
        %2832 = vmatprep.subr.bf16.mxu0 0
        %2833 = vmatpush2.bf16.msra.mxu0 0
        %2834 = vmatprep.subr.bf16.mxu0 0
        %2835 = vmatpush2.bf16.msra.mxu0 0
        %2836 = vmatprep.subr.bf16.mxu0 0
        %2837 = vmatpush2.bf16.msra.mxu0 0
        %2838 = vmatprep.subr.bf16.mxu0 0
        %2839 = vmatpush2.bf16.msra.mxu0 0
        %2840 = vmatprep.subr.bf16.mxu0 0
        %2841 = vmatpush2.bf16.msra.mxu0 0
        %2842 = vmatprep.subr.bf16.mxu0 0
        %2843 = vmatpush2.bf16.msra.mxu0 0
        %2844 = vmatprep.subr.bf16.mxu0 0
        %2845 = vmatpush2.bf16.msra.mxu0 0
        %2846 = vmatprep.mubr.bf16.mxu0 0
        %2847 = vmatmul.mubr.bf16.gmra.mxu0 %v647
        %v2848 = vpop.f32.mrf.mxu0
        %v2849 = vadd.f32 %v2776, %v2848
        %v2850 = vpop.f32.mrf.mxu0
        %v2851 = vadd.f32 %v2778, %v2850
        %v2852 = vpop.f32.mrf.mxu0
        %v2853 = vadd.f32 %v2780, %v2852
        %v2854 = vpop.f32.mrf.mxu0
        %v2855 = vadd.f32 %v2782, %v2854
        %2856 = vmatprep.mubr.bf16.mxu0 0
        %2857 = vmatmul.mubr.bf16.gmra.mxu0 %v650
        %v2858 = vpop.f32.mrf.mxu0
        %v2859 = vadd.f32 %v2786, %v2858
        %v2860 = vpop.f32.mrf.mxu0
        %v2861 = vadd.f32 %v2788, %v2860
        %v2862 = vpop.f32.mrf.mxu0
        %v2863 = vadd.f32 %v2790, %v2862
        %v2864 = vpop.f32.mrf.mxu0
        %v2865 = vadd.f32 %v2792, %v2864
        %2866 = vmatprep.mubr.bf16.mxu0 0
        %2867 = vmatmul.mubr.bf16.gmra.mxu0 %v653
        %v2868 = vpop.f32.mrf.mxu0
        %v2869 = vadd.f32 %v2796, %v2868
        %v2870 = vpop.f32.mrf.mxu0
        %v2871 = vadd.f32 %v2798, %v2870
        %v2872 = vpop.f32.mrf.mxu0
        %v2873 = vadd.f32 %v2800, %v2872
        %v2874 = vpop.f32.mrf.mxu0
        %v2875 = vadd.f32 %v2802, %v2874
        %2876 = vmatprep.mubr.bf16.mxu0 0
        %2877 = vmatmul.mubr.bf16.gmra.mxu0 %v656
        %v2878 = vpop.f32.mrf.mxu0
        %v2879 = vadd.f32 %v2806, %v2878
        %v2880 = vpop.f32.mrf.mxu0
        %v2881 = vadd.f32 %v2808, %v2880
        %v2882 = vpop.f32.mrf.mxu0
        %v2883 = vadd.f32 %v2810, %v2882
        %v2884 = vpop.f32.mrf.mxu0
        %v2885 = vadd.f32 %v2812, %v2884
        %2886 = vdwg.mxu0
        %2887 = vmatprep.subr.bf16.mxu0 %v1964
        %2888 = vmatpush1.bf16.msra.mxu0 %v1963
        %2889 = vmatprep.subr.bf16.mxu0 %v1952
        %2890 = vmatpush1.bf16.msra.mxu0 %v1951
        %2891 = vmatprep.subr.bf16.mxu0 %v1940
        %2892 = vmatpush1.bf16.msra.mxu0 %v1939
        %2893 = vmatprep.subr.bf16.mxu0 %v1928
        %2894 = vmatpush1.bf16.msra.mxu0 %v1927
        %2895 = vmatprep.subr.bf16.mxu0 %v1916
        %2896 = vmatpush1.bf16.msra.mxu0 %v1915
        %2897 = vmatprep.subr.bf16.mxu0 %v1904
        %2898 = vmatpush1.bf16.msra.mxu0 %v1903
        %2899 = vmatprep.subr.bf16.mxu0 %v1892
        %2900 = vmatpush1.bf16.msra.mxu0 %v1891
        %2901 = vmatprep.subr.bf16.mxu0 %v1880
        %2902 = vmatpush1.bf16.msra.mxu0 %v1879
        %2903 = vmatprep.subr.bf16.mxu0 %v2060
        %2904 = vmatpush2.bf16.msra.mxu0 %v2059
        %2905 = vmatprep.subr.bf16.mxu0 %v2048
        %2906 = vmatpush2.bf16.msra.mxu0 %v2047
        %2907 = vmatprep.subr.bf16.mxu0 %v2036
        %2908 = vmatpush2.bf16.msra.mxu0 %v2035
        %2909 = vmatprep.subr.bf16.mxu0 %v2024
        %2910 = vmatpush2.bf16.msra.mxu0 %v2023
        %2911 = vmatprep.subr.bf16.mxu0 %v2012
        %2912 = vmatpush2.bf16.msra.mxu0 %v2011
        %2913 = vmatprep.subr.bf16.mxu0 %v2000
        %2914 = vmatpush2.bf16.msra.mxu0 %v1999
        %2915 = vmatprep.subr.bf16.mxu0 %v1988
        %2916 = vmatpush2.bf16.msra.mxu0 %v1987
        %2917 = vmatprep.subr.bf16.mxu0 %v1976
        %2918 = vmatpush2.bf16.msra.mxu0 %v1975
        %2919 = vmatprep.mubr.bf16.mxu0 %v646
        %2920 = vmatmul.mubr.bf16.gmra.mxu0 %v645
        %v2921 = vpop.f32.mrf.mxu0
        %v2922 = vadd.f32 %v976, %v2921
        %v2923 = vpop.f32.mrf.mxu0
        %v2924 = vadd.f32 %v980, %v2923
        %v2925 = vpop.f32.mrf.mxu0
        %v2926 = vadd.f32 %v976, %v2925
        %v2927 = vpop.f32.mrf.mxu0
        %v2928 = vadd.f32 %v980, %v2927
        %2929 = vmatprep.mubr.bf16.mxu0 %v649
        %2930 = vmatmul.mubr.bf16.gmra.mxu0 %v648
        %v2931 = vpop.f32.mrf.mxu0
        %v2932 = vadd.f32 %v976, %v2931
        %v2933 = vpop.f32.mrf.mxu0
        %v2934 = vadd.f32 %v980, %v2933
        %v2935 = vpop.f32.mrf.mxu0
        %v2936 = vadd.f32 %v976, %v2935
        %v2937 = vpop.f32.mrf.mxu0
        %v2938 = vadd.f32 %v980, %v2937
        %2939 = vmatprep.mubr.bf16.mxu0 %v652
        %2940 = vmatmul.mubr.bf16.gmra.mxu0 %v651
        %v2941 = vpop.f32.mrf.mxu0
        %v2942 = vadd.f32 %v976, %v2941
        %v2943 = vpop.f32.mrf.mxu0
        %v2944 = vadd.f32 %v980, %v2943
        %v2945 = vpop.f32.mrf.mxu0
        %v2946 = vadd.f32 %v976, %v2945
        %v2947 = vpop.f32.mrf.mxu0
        %v2948 = vadd.f32 %v980, %v2947
        %2949 = vmatprep.mubr.bf16.mxu0 %v655
        %2950 = vmatmul.mubr.bf16.gmra.mxu0 %v654
        %v2951 = vpop.f32.mrf.mxu0
        %v2952 = vadd.f32 %v976, %v2951
        %v2953 = vpop.f32.mrf.mxu0
        %v2954 = vadd.f32 %v980, %v2953
        %v2955 = vpop.f32.mrf.mxu0
        %v2956 = vadd.f32 %v976, %v2955
        %v2957 = vpop.f32.mrf.mxu0
        %v2958 = vadd.f32 %v980, %v2957
        %2959 = vdwg.mxu0
        %2960 = vmatprep.subr.bf16.mxu0 %v2156
        %2961 = vmatpush1.bf16.msra.mxu0 %v2155
        %2962 = vmatprep.subr.bf16.mxu0 %v2144
        %2963 = vmatpush1.bf16.msra.mxu0 %v2143
        %2964 = vmatprep.subr.bf16.mxu0 %v2132
        %2965 = vmatpush1.bf16.msra.mxu0 %v2131
        %2966 = vmatprep.subr.bf16.mxu0 %v2120
        %2967 = vmatpush1.bf16.msra.mxu0 %v2119
        %2968 = vmatprep.subr.bf16.mxu0 %v2108
        %2969 = vmatpush1.bf16.msra.mxu0 %v2107
        %2970 = vmatprep.subr.bf16.mxu0 %v2096
        %2971 = vmatpush1.bf16.msra.mxu0 %v2095
        %2972 = vmatprep.subr.bf16.mxu0 %v2084
        %2973 = vmatpush1.bf16.msra.mxu0 %v2083
        %2974 = vmatprep.subr.bf16.mxu0 %v2072
        %2975 = vmatpush1.bf16.msra.mxu0 %v2071
        %2976 = vmatprep.subr.bf16.mxu0 0
        %2977 = vmatpush2.bf16.msra.mxu0 0
        %2978 = vmatprep.subr.bf16.mxu0 0
        %2979 = vmatpush2.bf16.msra.mxu0 0
        %2980 = vmatprep.subr.bf16.mxu0 0
        %2981 = vmatpush2.bf16.msra.mxu0 0
        %2982 = vmatprep.subr.bf16.mxu0 0
        %2983 = vmatpush2.bf16.msra.mxu0 0
        %2984 = vmatprep.subr.bf16.mxu0 0
        %2985 = vmatpush2.bf16.msra.mxu0 0
        %2986 = vmatprep.subr.bf16.mxu0 0
        %2987 = vmatpush2.bf16.msra.mxu0 0
        %2988 = vmatprep.subr.bf16.mxu0 0
        %2989 = vmatpush2.bf16.msra.mxu0 0
        %2990 = vmatprep.subr.bf16.mxu0 0
        %2991 = vmatpush2.bf16.msra.mxu0 0
        %2992 = vmatprep.mubr.bf16.mxu0 0
        %2993 = vmatmul.mubr.bf16.gmra.mxu0 %v647
        %v2994 = vpop.f32.mrf.mxu0
        %v2995 = vadd.f32 %v2922, %v2994
        %v2996 = vpop.f32.mrf.mxu0
        %v2997 = vadd.f32 %v2924, %v2996
        %v2998 = vpop.f32.mrf.mxu0
        %v2999 = vadd.f32 %v2926, %v2998
        %v3000 = vpop.f32.mrf.mxu0
        %v3001 = vadd.f32 %v2928, %v3000
        %3002 = vmatprep.mubr.bf16.mxu0 0
        %3003 = vmatmul.mubr.bf16.gmra.mxu0 %v650
        %v3004 = vpop.f32.mrf.mxu0
        %v3005 = vadd.f32 %v2932, %v3004
        %v3006 = vpop.f32.mrf.mxu0
        %v3007 = vadd.f32 %v2934, %v3006
        %v3008 = vpop.f32.mrf.mxu0
        %v3009 = vadd.f32 %v2936, %v3008
        %v3010 = vpop.f32.mrf.mxu0
        %v3011 = vadd.f32 %v2938, %v3010
        %3012 = vmatprep.mubr.bf16.mxu0 0
        %3013 = vmatmul.mubr.bf16.gmra.mxu0 %v653
        %v3014 = vpop.f32.mrf.mxu0
        %v3015 = vadd.f32 %v2942, %v3014
        %v3016 = vpop.f32.mrf.mxu0
        %v3017 = vadd.f32 %v2944, %v3016
        %v3018 = vpop.f32.mrf.mxu0
        %v3019 = vadd.f32 %v2946, %v3018
        %v3020 = vpop.f32.mrf.mxu0
        %v3021 = vadd.f32 %v2948, %v3020
        %3022 = vmatprep.mubr.bf16.mxu0 0
        %3023 = vmatmul.mubr.bf16.gmra.mxu0 %v656
        %v3024 = vpop.f32.mrf.mxu0
        %v3025 = vadd.f32 %v2952, %v3024
        %v3026 = vpop.f32.mrf.mxu0
        %v3027 = vadd.f32 %v2954, %v3026
        %v3028 = vpop.f32.mrf.mxu0
        %v3029 = vadd.f32 %v2956, %v3028
        %v3030 = vpop.f32.mrf.mxu0
        %v3031 = vadd.f32 %v2958, %v3030
        %3032 = vdwg.mxu0
        %3033 = vmatprep.subr.bf16.mxu0 %v1966
        %3034 = vmatpush1.bf16.msra.mxu0 %v1965
        %3035 = vmatprep.subr.bf16.mxu0 %v1954
        %3036 = vmatpush1.bf16.msra.mxu0 %v1953
        %3037 = vmatprep.subr.bf16.mxu0 %v1942
        %3038 = vmatpush1.bf16.msra.mxu0 %v1941
        %3039 = vmatprep.subr.bf16.mxu0 %v1930
        %3040 = vmatpush1.bf16.msra.mxu0 %v1929
        %3041 = vmatprep.subr.bf16.mxu0 %v1918
        %3042 = vmatpush1.bf16.msra.mxu0 %v1917
        %3043 = vmatprep.subr.bf16.mxu0 %v1906
        %3044 = vmatpush1.bf16.msra.mxu0 %v1905
        %3045 = vmatprep.subr.bf16.mxu0 %v1894
        %3046 = vmatpush1.bf16.msra.mxu0 %v1893
        %3047 = vmatprep.subr.bf16.mxu0 %v1882
        %3048 = vmatpush1.bf16.msra.mxu0 %v1881
        %3049 = vmatprep.subr.bf16.mxu0 %v2062
        %3050 = vmatpush2.bf16.msra.mxu0 %v2061
        %3051 = vmatprep.subr.bf16.mxu0 %v2050
        %3052 = vmatpush2.bf16.msra.mxu0 %v2049
        %3053 = vmatprep.subr.bf16.mxu0 %v2038
        %3054 = vmatpush2.bf16.msra.mxu0 %v2037
        %3055 = vmatprep.subr.bf16.mxu0 %v2026
        %3056 = vmatpush2.bf16.msra.mxu0 %v2025
        %3057 = vmatprep.subr.bf16.mxu0 %v2014
        %3058 = vmatpush2.bf16.msra.mxu0 %v2013
        %3059 = vmatprep.subr.bf16.mxu0 %v2002
        %3060 = vmatpush2.bf16.msra.mxu0 %v2001
        %3061 = vmatprep.subr.bf16.mxu0 %v1990
        %3062 = vmatpush2.bf16.msra.mxu0 %v1989
        %3063 = vmatprep.subr.bf16.mxu0 %v1978
        %3064 = vmatpush2.bf16.msra.mxu0 %v1977
        %3065 = vmatprep.mubr.bf16.mxu0 %v646
        %3066 = vmatmul.mubr.bf16.gmra.mxu0 %v645
        %v3067 = vpop.f32.mrf.mxu0
        %v3068 = vadd.f32 %v984, %v3067
        %v3069 = vpop.f32.mrf.mxu0
        %v3070 = vadd.f32 %v988, %v3069
        %v3071 = vpop.f32.mrf.mxu0
        %v3072 = vadd.f32 %v984, %v3071
        %v3073 = vpop.f32.mrf.mxu0
        %v3074 = vadd.f32 %v988, %v3073
        %3075 = vmatprep.mubr.bf16.mxu0 %v649
        %3076 = vmatmul.mubr.bf16.gmra.mxu0 %v648
        %v3077 = vpop.f32.mrf.mxu0
        %v3078 = vadd.f32 %v984, %v3077
        %v3079 = vpop.f32.mrf.mxu0
        %v3080 = vadd.f32 %v988, %v3079
        %v3081 = vpop.f32.mrf.mxu0
        %v3082 = vadd.f32 %v984, %v3081
        %v3083 = vpop.f32.mrf.mxu0
        %v3084 = vadd.f32 %v988, %v3083
        %3085 = vmatprep.mubr.bf16.mxu0 %v652
        %3086 = vmatmul.mubr.bf16.gmra.mxu0 %v651
        %v3087 = vpop.f32.mrf.mxu0
        %v3088 = vadd.f32 %v984, %v3087
        %v3089 = vpop.f32.mrf.mxu0
        %v3090 = vadd.f32 %v988, %v3089
        %v3091 = vpop.f32.mrf.mxu0
        %v3092 = vadd.f32 %v984, %v3091
        %v3093 = vpop.f32.mrf.mxu0
        %v3094 = vadd.f32 %v988, %v3093
        %3095 = vmatprep.mubr.bf16.mxu0 %v655
        %3096 = vmatmul.mubr.bf16.gmra.mxu0 %v654
        %v3097 = vpop.f32.mrf.mxu0
        %v3098 = vadd.f32 %v984, %v3097
        %v3099 = vpop.f32.mrf.mxu0
        %v3100 = vadd.f32 %v988, %v3099
        %v3101 = vpop.f32.mrf.mxu0
        %v3102 = vadd.f32 %v984, %v3101
        %v3103 = vpop.f32.mrf.mxu0
        %v3104 = vadd.f32 %v988, %v3103
        %3105 = vdwg.mxu0
        %3106 = vmatprep.subr.bf16.mxu0 %v2158
        %3107 = vmatpush1.bf16.msra.mxu0 %v2157
        %3108 = vmatprep.subr.bf16.mxu0 %v2146
        %3109 = vmatpush1.bf16.msra.mxu0 %v2145
        %3110 = vmatprep.subr.bf16.mxu0 %v2134
        %3111 = vmatpush1.bf16.msra.mxu0 %v2133
        %3112 = vmatprep.subr.bf16.mxu0 %v2122
        %3113 = vmatpush1.bf16.msra.mxu0 %v2121
        %3114 = vmatprep.subr.bf16.mxu0 %v2110
        %3115 = vmatpush1.bf16.msra.mxu0 %v2109
        %3116 = vmatprep.subr.bf16.mxu0 %v2098
        %3117 = vmatpush1.bf16.msra.mxu0 %v2097
        %3118 = vmatprep.subr.bf16.mxu0 %v2086
        %3119 = vmatpush1.bf16.msra.mxu0 %v2085
        %3120 = vmatprep.subr.bf16.mxu0 %v2074
        %3121 = vmatpush1.bf16.msra.mxu0 %v2073
        %3122 = vmatprep.subr.bf16.mxu0 0
        %3123 = vmatpush2.bf16.msra.mxu0 0
        %3124 = vmatprep.subr.bf16.mxu0 0
        %3125 = vmatpush2.bf16.msra.mxu0 0
        %3126 = vmatprep.subr.bf16.mxu0 0
        %3127 = vmatpush2.bf16.msra.mxu0 0
        %3128 = vmatprep.subr.bf16.mxu0 0
        %3129 = vmatpush2.bf16.msra.mxu0 0
        %3130 = vmatprep.subr.bf16.mxu0 0
        %3131 = vmatpush2.bf16.msra.mxu0 0
        %3132 = vmatprep.subr.bf16.mxu0 0
        %3133 = vmatpush2.bf16.msra.mxu0 0
        %3134 = vmatprep.subr.bf16.mxu0 0
        %3135 = vmatpush2.bf16.msra.mxu0 0
        %3136 = vmatprep.subr.bf16.mxu0 0
        %3137 = vmatpush2.bf16.msra.mxu0 0
        %3138 = vmatprep.mubr.bf16.mxu0 0
        %3139 = vmatmul.mubr.bf16.gmra.mxu0 %v647
        %v3140 = vpop.f32.mrf.mxu0
        %v3141 = vadd.f32 %v3068, %v3140
        %v3142 = vpop.f32.mrf.mxu0
        %v3143 = vadd.f32 %v3070, %v3142
        %v3144 = vpop.f32.mrf.mxu0
        %v3145 = vadd.f32 %v3072, %v3144
        %v3146 = vpop.f32.mrf.mxu0
        %v3147 = vadd.f32 %v3074, %v3146
        %3148 = vmatprep.mubr.bf16.mxu0 0
        %3149 = vmatmul.mubr.bf16.gmra.mxu0 %v650
        %v3150 = vpop.f32.mrf.mxu0
        %v3151 = vadd.f32 %v3078, %v3150
        %v3152 = vpop.f32.mrf.mxu0
        %v3153 = vadd.f32 %v3080, %v3152
        %v3154 = vpop.f32.mrf.mxu0
        %v3155 = vadd.f32 %v3082, %v3154
        %v3156 = vpop.f32.mrf.mxu0
        %v3157 = vadd.f32 %v3084, %v3156
        %3158 = vmatprep.mubr.bf16.mxu0 0
        %3159 = vmatmul.mubr.bf16.gmra.mxu0 %v653
        %v3160 = vpop.f32.mrf.mxu0
        %v3161 = vadd.f32 %v3088, %v3160
        %v3162 = vpop.f32.mrf.mxu0
        %v3163 = vadd.f32 %v3090, %v3162
        %v3164 = vpop.f32.mrf.mxu0
        %v3165 = vadd.f32 %v3092, %v3164
        %v3166 = vpop.f32.mrf.mxu0
        %v3167 = vadd.f32 %v3094, %v3166
        %3168 = vmatprep.mubr.bf16.mxu0 0
        %3169 = vmatmul.mubr.bf16.gmra.mxu0 %v656
        %v3170 = vpop.f32.mrf.mxu0
        %v3171 = vadd.f32 %v3098, %v3170
        %v3172 = vpop.f32.mrf.mxu0
        %v3173 = vadd.f32 %v3100, %v3172
        %v3174 = vpop.f32.mrf.mxu0
        %v3175 = vadd.f32 %v3102, %v3174
        %v3176 = vpop.f32.mrf.mxu0
        %v3177 = vadd.f32 %v3104, %v3176
        %3178 = vdwg.mxu0
        %3179 = vmatprep.subr.bf16.mxu0 %v1968
        %3180 = vmatpush1.bf16.msra.mxu0 %v1967
        %3181 = vmatprep.subr.bf16.mxu0 %v1956
        %3182 = vmatpush1.bf16.msra.mxu0 %v1955
        %3183 = vmatprep.subr.bf16.mxu0 %v1944
        %3184 = vmatpush1.bf16.msra.mxu0 %v1943
        %3185 = vmatprep.subr.bf16.mxu0 %v1932
        %3186 = vmatpush1.bf16.msra.mxu0 %v1931
        %3187 = vmatprep.subr.bf16.mxu0 %v1920
        %3188 = vmatpush1.bf16.msra.mxu0 %v1919
        %3189 = vmatprep.subr.bf16.mxu0 %v1908
        %3190 = vmatpush1.bf16.msra.mxu0 %v1907
        %3191 = vmatprep.subr.bf16.mxu0 %v1896
        %3192 = vmatpush1.bf16.msra.mxu0 %v1895
        %3193 = vmatprep.subr.bf16.mxu0 %v1884
        %3194 = vmatpush1.bf16.msra.mxu0 %v1883
        %3195 = vmatprep.subr.bf16.mxu0 %v2064
        %3196 = vmatpush2.bf16.msra.mxu0 %v2063
        %3197 = vmatprep.subr.bf16.mxu0 %v2052
        %3198 = vmatpush2.bf16.msra.mxu0 %v2051
        %3199 = vmatprep.subr.bf16.mxu0 %v2040
        %3200 = vmatpush2.bf16.msra.mxu0 %v2039
        %3201 = vmatprep.subr.bf16.mxu0 %v2028
        %3202 = vmatpush2.bf16.msra.mxu0 %v2027
        %3203 = vmatprep.subr.bf16.mxu0 %v2016
        %3204 = vmatpush2.bf16.msra.mxu0 %v2015
        %3205 = vmatprep.subr.bf16.mxu0 %v2004
        %3206 = vmatpush2.bf16.msra.mxu0 %v2003
        %3207 = vmatprep.subr.bf16.mxu0 %v1992
        %3208 = vmatpush2.bf16.msra.mxu0 %v1991
        %3209 = vmatprep.subr.bf16.mxu0 %v1980
        %3210 = vmatpush2.bf16.msra.mxu0 %v1979
        %3211 = vmatprep.mubr.bf16.mxu0 %v646
        %3212 = vmatmul.mubr.bf16.gmra.mxu0 %v645
        %v3213 = vpop.f32.mrf.mxu0
        %v3214 = vadd.f32 %v992, %v3213
        %v3215 = vpop.f32.mrf.mxu0
        %v3216 = vadd.f32 %v996, %v3215
        %v3217 = vpop.f32.mrf.mxu0
        %v3218 = vadd.f32 %v992, %v3217
        %v3219 = vpop.f32.mrf.mxu0
        %v3220 = vadd.f32 %v996, %v3219
        %3221 = vmatprep.mubr.bf16.mxu0 %v649
        %3222 = vmatmul.mubr.bf16.gmra.mxu0 %v648
        %v3223 = vpop.f32.mrf.mxu0
        %v3224 = vadd.f32 %v992, %v3223
        %v3225 = vpop.f32.mrf.mxu0
        %v3226 = vadd.f32 %v996, %v3225
        %v3227 = vpop.f32.mrf.mxu0
        %v3228 = vadd.f32 %v992, %v3227
        %v3229 = vpop.f32.mrf.mxu0
        %v3230 = vadd.f32 %v996, %v3229
        %3231 = vmatprep.mubr.bf16.mxu0 %v652
        %3232 = vmatmul.mubr.bf16.gmra.mxu0 %v651
        %v3233 = vpop.f32.mrf.mxu0
        %v3234 = vadd.f32 %v992, %v3233
        %v3235 = vpop.f32.mrf.mxu0
        %v3236 = vadd.f32 %v996, %v3235
        %v3237 = vpop.f32.mrf.mxu0
        %v3238 = vadd.f32 %v992, %v3237
        %v3239 = vpop.f32.mrf.mxu0
        %v3240 = vadd.f32 %v996, %v3239
        %3241 = vmatprep.mubr.bf16.mxu0 %v655
        %3242 = vmatmul.mubr.bf16.gmra.mxu0 %v654
        %v3243 = vpop.f32.mrf.mxu0
        %v3244 = vadd.f32 %v992, %v3243
        %v3245 = vpop.f32.mrf.mxu0
        %v3246 = vadd.f32 %v996, %v3245
        %v3247 = vpop.f32.mrf.mxu0
        %v3248 = vadd.f32 %v992, %v3247
        %v3249 = vpop.f32.mrf.mxu0
        %v3250 = vadd.f32 %v996, %v3249
        %3251 = vdwg.mxu0
        %3252 = vmatprep.subr.bf16.mxu0 %v2160
        %3253 = vmatpush1.bf16.msra.mxu0 %v2159
        %3254 = vmatprep.subr.bf16.mxu0 %v2148
        %3255 = vmatpush1.bf16.msra.mxu0 %v2147
        %3256 = vmatprep.subr.bf16.mxu0 %v2136
        %3257 = vmatpush1.bf16.msra.mxu0 %v2135
        %3258 = vmatprep.subr.bf16.mxu0 %v2124
        %3259 = vmatpush1.bf16.msra.mxu0 %v2123
        %3260 = vmatprep.subr.bf16.mxu0 %v2112
        %3261 = vmatpush1.bf16.msra.mxu0 %v2111
        %3262 = vmatprep.subr.bf16.mxu0 %v2100
        %3263 = vmatpush1.bf16.msra.mxu0 %v2099
        %3264 = vmatprep.subr.bf16.mxu0 %v2088
        %3265 = vmatpush1.bf16.msra.mxu0 %v2087
        %3266 = vmatprep.subr.bf16.mxu0 %v2076
        %3267 = vmatpush1.bf16.msra.mxu0 %v2075
        %3268 = vmatprep.subr.bf16.mxu0 0
        %3269 = vmatpush2.bf16.msra.mxu0 0
        %3270 = vmatprep.subr.bf16.mxu0 0
        %3271 = vmatpush2.bf16.msra.mxu0 0
        %3272 = vmatprep.subr.bf16.mxu0 0
        %3273 = vmatpush2.bf16.msra.mxu0 0
        %3274 = vmatprep.subr.bf16.mxu0 0
        %3275 = vmatpush2.bf16.msra.mxu0 0
        %3276 = vmatprep.subr.bf16.mxu0 0
        %3277 = vmatpush2.bf16.msra.mxu0 0
        %3278 = vmatprep.subr.bf16.mxu0 0
        %3279 = vmatpush2.bf16.msra.mxu0 0
        %3280 = vmatprep.subr.bf16.mxu0 0
        %3281 = vmatpush2.bf16.msra.mxu0 0
        %3282 = vmatprep.subr.bf16.mxu0 0
        %3283 = vmatpush2.bf16.msra.mxu0 0
        %3284 = vmatprep.mubr.bf16.mxu0 0
        %3285 = vmatmul.mubr.bf16.gmra.mxu0 %v647
        %v3286 = vpop.f32.mrf.mxu0
        %v3287 = vadd.f32 %v3214, %v3286
        %v3288 = vpop.f32.mrf.mxu0
        %v3289 = vadd.f32 %v3216, %v3288
        %v3290 = vpop.f32.mrf.mxu0
        %v3291 = vadd.f32 %v3218, %v3290
        %v3292 = vpop.f32.mrf.mxu0
        %v3293 = vadd.f32 %v3220, %v3292
        %3294 = vmatprep.mubr.bf16.mxu0 0
        %3295 = vmatmul.mubr.bf16.gmra.mxu0 %v650
        %v3296 = vpop.f32.mrf.mxu0
        %v3297 = vadd.f32 %v3224, %v3296
        %v3298 = vpop.f32.mrf.mxu0
        %v3299 = vadd.f32 %v3226, %v3298
        %v3300 = vpop.f32.mrf.mxu0
        %v3301 = vadd.f32 %v3228, %v3300
        %v3302 = vpop.f32.mrf.mxu0
        %v3303 = vadd.f32 %v3230, %v3302
        %3304 = vmatprep.mubr.bf16.mxu0 0
        %3305 = vmatmul.mubr.bf16.gmra.mxu0 %v653
        %v3306 = vpop.f32.mrf.mxu0
        %v3307 = vadd.f32 %v3234, %v3306
        %v3308 = vpop.f32.mrf.mxu0
        %v3309 = vadd.f32 %v3236, %v3308
        %v3310 = vpop.f32.mrf.mxu0
        %v3311 = vadd.f32 %v3238, %v3310
        %v3312 = vpop.f32.mrf.mxu0
        %v3313 = vadd.f32 %v3240, %v3312
        %3314 = vmatprep.mubr.bf16.mxu0 0
        %3315 = vmatmul.mubr.bf16.gmra.mxu0 %v656
        %v3316 = vpop.f32.mrf.mxu0
        %v3317 = vadd.f32 %v3244, %v3316
        %v3318 = vpop.f32.mrf.mxu0
        %v3319 = vadd.f32 %v3246, %v3318
        %v3320 = vpop.f32.mrf.mxu0
        %v3321 = vadd.f32 %v3248, %v3320
        %v3322 = vpop.f32.mrf.mxu0
        %v3323 = vadd.f32 %v3250, %v3322
        %3324 = vdwg.mxu0
        %v3325 = vpack.c.bf16 %v2561, %v2557
        %v3326 = vpack.c.bf16 %v2563, %v2559
        %v3327 = vpack.c.bf16 %v2707, %v2703
        %v3328 = vpack.c.bf16 %v2709, %v2705
        %v3329 = vpack.c.bf16 %v2853, %v2849
        %v3330 = vpack.c.bf16 %v2855, %v2851
        %v3331 = vpack.c.bf16 %v2999, %v2995
        %v3332 = vpack.c.bf16 %v3001, %v2997
        %v3333 = vpack.c.bf16 %v3145, %v3141
        %v3334 = vpack.c.bf16 %v3147, %v3143
        %v3335 = vpack.c.bf16 %v3291, %v3287
        %v3336 = vpack.c.bf16 %v3293, %v3289
        %v3337 = vpack.c.bf16 %v2571, %v2567
        %v3338 = vpack.c.bf16 %v2573, %v2569
        %v3339 = vpack.c.bf16 %v2717, %v2713
        %v3340 = vpack.c.bf16 %v2719, %v2715
        %v3341 = vpack.c.bf16 %v2863, %v2859
        %v3342 = vpack.c.bf16 %v2865, %v2861
        %v3343 = vpack.c.bf16 %v3009, %v3005
        %v3344 = vpack.c.bf16 %v3011, %v3007
        %v3345 = vpack.c.bf16 %v3155, %v3151
        %v3346 = vpack.c.bf16 %v3157, %v3153
        %v3347 = vpack.c.bf16 %v3301, %v3297
        %v3348 = vpack.c.bf16 %v3303, %v3299
        %v3349 = vpack.c.bf16 %v2581, %v2577
        %v3350 = vpack.c.bf16 %v2583, %v2579
        %v3351 = vpack.c.bf16 %v2727, %v2723
        %v3352 = vpack.c.bf16 %v2729, %v2725
        %v3353 = vpack.c.bf16 %v2873, %v2869
        %v3354 = vpack.c.bf16 %v2875, %v2871
        %v3355 = vpack.c.bf16 %v3019, %v3015
        %v3356 = vpack.c.bf16 %v3021, %v3017
        %v3357 = vpack.c.bf16 %v3165, %v3161
        %v3358 = vpack.c.bf16 %v3167, %v3163
        %v3359 = vpack.c.bf16 %v3311, %v3307
        %v3360 = vpack.c.bf16 %v3313, %v3309
        %v3361 = vpack.c.bf16 %v2591, %v2587
        %v3362 = vpack.c.bf16 %v2593, %v2589
        %v3363 = vpack.c.bf16 %v2737, %v2733
        %v3364 = vpack.c.bf16 %v2739, %v2735
        %v3365 = vpack.c.bf16 %v2883, %v2879
        %v3366 = vpack.c.bf16 %v2885, %v2881
        %v3367 = vpack.c.bf16 %v3029, %v3025
        %v3368 = vpack.c.bf16 %v3031, %v3027
        %v3369 = vpack.c.bf16 %v3175, %v3171
        %v3370 = vpack.c.bf16 %v3177, %v3173
        %v3371 = vpack.c.bf16 %v3321, %v3317
        %v3372 = vpack.c.bf16 %v3323, %v3319
        %3373 = vmatprep.subr.bf16.mxu0 0
        %3374 = vmatpush1.bf16.xpose.msra.mxu0 0
        %3375 = vmatprep.subr.bf16.mxu0 0
        %3376 = vmatpush1.bf16.xpose.msra.mxu0 0
        %3377 = vmatprep.subr.bf16.mxu0 0
        %3378 = vmatpush1.bf16.xpose.msra.mxu0 0
        %3379 = vmatprep.subr.bf16.mxu0 0
        %3380 = vmatpush1.bf16.xpose.msra.mxu0 0
        %3381 = vmatprep.subr.bf16.mxu0 0
        %3382 = vmatpush1.bf16.xpose.msra.mxu0 %v3365
        %3383 = vmatprep.subr.bf16.mxu0 0
        %3384 = vmatpush1.bf16.xpose.msra.mxu0 %v3353
        %3385 = vmatprep.subr.bf16.mxu0 0
        %3386 = vmatpush1.bf16.xpose.msra.mxu0 %v3341
        %3387 = vmatprep.subr.bf16.mxu0 0
        %3388 = vmatpush1.bf16.xpose.msra.mxu0 %v3329
        %3389 = vmatprep.subr.bf16.mxu0 0
        %3390 = vmatpush2.bf16.xpose.msra.mxu0 0
        %3391 = vmatprep.subr.bf16.mxu0 0
        %3392 = vmatpush2.bf16.xpose.msra.mxu0 0
        %3393 = vmatprep.subr.bf16.mxu0 0
        %3394 = vmatpush2.bf16.xpose.msra.mxu0 0
        %3395 = vmatprep.subr.bf16.mxu0 0
        %3396 = vmatpush2.bf16.xpose.msra.mxu0 0
        %3397 = vmatprep.subr.bf16.mxu0 0
        %3398 = vmatpush2.bf16.xpose.msra.mxu0 0
        %3399 = vmatprep.subr.bf16.mxu0 0
        %3400 = vmatpush2.bf16.xpose.msra.mxu0 0
        %3401 = vmatprep.subr.bf16.mxu0 0
        %3402 = vmatpush2.bf16.xpose.msra.mxu0 0
        %3403 = vmatprep.subr.bf16.mxu0 0
        %3404 = vmatpush2.bf16.xpose.msra.mxu0 0
        %3405 = vmatprep.mubr.bf16.mxu0 0
        %3406 = vmatmul.mubr.bf16.gmra.mxu0 %v3325
        %v3407 = vpop.f32.mrf.mxu0
        %v3408 = vadd.f32 0.0, %v3407
        %v3409 = vpop.f32.mrf.mxu0
        %v3410 = vpop.f32.mrf.mxu0
        %v3411 = vadd.f32 0.0, %v3410
        %v3412 = vpop.f32.mrf.mxu0
        %3413 = vmatprep.mubr.bf16.mxu0 0
        %3414 = vmatmul.mubr.bf16.gmra.mxu0 %v3337
        %v3415 = vpop.f32.mrf.mxu0
        %v3416 = vadd.f32 0.0, %v3415
        %v3417 = vpop.f32.mrf.mxu0
        %v3418 = vpop.f32.mrf.mxu0
        %v3419 = vadd.f32 0.0, %v3418
        %v3420 = vpop.f32.mrf.mxu0
        %3421 = vmatprep.mubr.bf16.mxu0 0
        %3422 = vmatmul.mubr.bf16.gmra.mxu0 %v3349
        %v3423 = vpop.f32.mrf.mxu0
        %v3424 = vadd.f32 0.0, %v3423
        %v3425 = vpop.f32.mrf.mxu0
        %v3426 = vpop.f32.mrf.mxu0
        %v3427 = vadd.f32 0.0, %v3426
        %v3428 = vpop.f32.mrf.mxu0
        %3429 = vmatprep.mubr.bf16.mxu0 0
        %3430 = vmatmul.mubr.bf16.gmra.mxu0 %v3361
        %v3431 = vpop.f32.mrf.mxu0
        %v3432 = vadd.f32 0.0, %v3431
        %v3433 = vpop.f32.mrf.mxu0
        %v3434 = vpop.f32.mrf.mxu0
        %v3435 = vadd.f32 0.0, %v3434
        %v3436 = vpop.f32.mrf.mxu0
        %3437 = vdwg.mxu0
        %v3438 = vmul.f32 %v3408, 0.10206208
        %v3439 = vmul.f32 %v3411, 0.10206208
        %v3440 = vmul.f32 %v3416, 0.10206208
        %v3441 = vmul.f32 %v3419, 0.10206208
        %v3442 = vmul.f32 %v3424, 0.10206208
        %v3443 = vmul.f32 %v3427, 0.10206208
        %v3444 = vmul.f32 %v3432, 0.10206208
        %v3445 = vmul.f32 %v3435, 0.10206208
        %vm3446 = vcmask 523264
        %v3447 = vsel %vm3446, %v3438, -inf
        %3448 = vmax.xlane.f32.xlu0 %v3447
        %v3449 = vpop.xlane.xlu0 %3448
        %v3450 = vsel %vm3446, %v3439, -inf
        %3451 = vmax.xlane.f32.xlu0 %v3450
        %v3452 = vpop.xlane.xlu0 %3451
        %v3453 = vsel %vm3446, %v3440, -inf
        %3454 = vmax.xlane.f32.xlu0 %v3453
        %v3455 = vpop.xlane.xlu0 %3454
        %v3456 = vsel %vm3446, %v3441, -inf
        %3457 = vmax.xlane.f32.xlu0 %v3456
        %v3458 = vpop.xlane.xlu0 %3457
        %v3459 = vsel %vm3446, %v3442, -inf
        %3460 = vmax.xlane.f32.xlu0 %v3459
        %v3461 = vpop.xlane.xlu0 %3460
        %v3462 = vsel %vm3446, %v3443, -inf
        %3463 = vmax.xlane.f32.xlu0 %v3462
        %v3464 = vpop.xlane.xlu0 %3463
        %v3465 = vsel %vm3446, %v3444, -inf
        %3466 = vmax.xlane.f32.xlu0 %v3465
        %v3467 = vpop.xlane.xlu0 %3466
        %v3468 = vsel %vm3446, %v3445, -inf
        %3469 = vmax.xlane.f32.xlu0 %v3468
        %v3470 = vpop.xlane.xlu0 %3469
        %v3471 = vsub.f32 %v3438, %v3449
        %v3472 = vsub.f32 %v3439, %v3452
        %v3473 = vsub.f32 %v3440, %v3455
        %v3474 = vsub.f32 %v3441, %v3458
        %v3475 = vsub.f32 %v3442, %v3461
        %v3476 = vsub.f32 %v3443, %v3464
        %v3477 = vsub.f32 %v3444, %v3467
        %v3478 = vsub.f32 %v3445, %v3470
        %v3479 = vmul.f32 %v3471, 1.442695
        %v3480 = vpow.pop %v3479
        %v3481 = vmul.f32 %v3472, 1.442695
        %v3482 = vpow.pop %v3481
        %v3483 = vmul.f32 %v3473, 1.442695
        %v3484 = vpow.pop %v3483
        %v3485 = vmul.f32 %v3474, 1.442695
        %v3486 = vpow.pop %v3485
        %v3487 = vmul.f32 %v3475, 1.442695
        %v3488 = vpow.pop %v3487
        %v3489 = vmul.f32 %v3476, 1.442695
        %v3490 = vpow.pop %v3489
        %v3491 = vmul.f32 %v3477, 1.442695
        %v3492 = vpow.pop %v3491
        %v3493 = vmul.f32 %v3478, 1.442695
        %v3494 = vpow.pop %v3493
        %v3495 = vsel %vm3446, %v3480, 0.0
        %3496 = vadd.xlane.f32.xlu0 %v3495
        %v3497 = vpop.xlane.xlu0 %3496
        %v3498 = vsel %vm3446, %v3482, 0.0
        %3499 = vadd.xlane.f32.xlu0 %v3498
        %v3500 = vpop.xlane.xlu0 %3499
        %v3501 = vsel %vm3446, %v3484, 0.0
        %3502 = vadd.xlane.f32.xlu0 %v3501
        %v3503 = vpop.xlane.xlu0 %3502
        %v3504 = vsel %vm3446, %v3486, 0.0
        %3505 = vadd.xlane.f32.xlu0 %v3504
        %v3506 = vpop.xlane.xlu0 %3505
        %v3507 = vsel %vm3446, %v3488, 0.0
        %3508 = vadd.xlane.f32.xlu0 %v3507
        %v3509 = vpop.xlane.xlu0 %3508
        %v3510 = vsel %vm3446, %v3490, 0.0
        %3511 = vadd.xlane.f32.xlu0 %v3510
        %v3512 = vpop.xlane.xlu0 %3511
        %v3513 = vsel %vm3446, %v3492, 0.0
        %3514 = vadd.xlane.f32.xlu0 %v3513
        %v3515 = vpop.xlane.xlu0 %3514
        %v3516 = vsel %vm3446, %v3494, 0.0
        %3517 = vadd.xlane.f32.xlu0 %v3516
        %v3518 = vpop.xlane.xlu0 %3517
        %v3519 = vpack.c.bf16 %v3482, %v3480
        %v3520 = vpack.c.bf16 %v3486, %v3484
        %v3521 = vpack.c.bf16 %v3490, %v3488
        %v3522 = vpack.c.bf16 %v3494, %v3492
        %v3524 = vsel %vm3446, %v3519, 0
        %v3527 = vsel %vm3446, %v3520, 0
        %v3530 = vsel %vm3446, %v3521, 0
        %v3533 = vsel %vm3446, %v3522, 0
        %3535 = vmatprep.subr.bf16.mxu0 0
        %3536 = vmatpush1.bf16.msra.mxu0 0
        %3537 = vmatprep.subr.bf16.mxu0 0
        %3538 = vmatpush1.bf16.msra.mxu0 0
        %3539 = vmatprep.subr.bf16.mxu0 0
        %3540 = vmatpush1.bf16.msra.mxu0 0
        %3541 = vmatprep.subr.bf16.mxu0 0
        %3542 = vmatpush1.bf16.msra.mxu0 0
        %3543 = vmatprep.subr.bf16.mxu0 0
        %3544 = vmatpush1.bf16.msra.mxu0 %v3369
        %3545 = vmatprep.subr.bf16.mxu0 0
        %3546 = vmatpush1.bf16.msra.mxu0 %v3357
        %3547 = vmatprep.subr.bf16.mxu0 0
        %3548 = vmatpush1.bf16.msra.mxu0 %v3345
        %3549 = vmatprep.subr.bf16.mxu0 0
        %3550 = vmatpush1.bf16.msra.mxu0 %v3333
        %3551 = vmatprep.subr.bf16.mxu0 0
        %3552 = vmatpush2.bf16.msra.mxu0 0
        %3553 = vmatprep.subr.bf16.mxu0 0
        %3554 = vmatpush2.bf16.msra.mxu0 0
        %3555 = vmatprep.subr.bf16.mxu0 0
        %3556 = vmatpush2.bf16.msra.mxu0 0
        %3557 = vmatprep.subr.bf16.mxu0 0
        %3558 = vmatpush2.bf16.msra.mxu0 0
        %3559 = vmatprep.subr.bf16.mxu0 0
        %3560 = vmatpush2.bf16.msra.mxu0 0
        %3561 = vmatprep.subr.bf16.mxu0 0
        %3562 = vmatpush2.bf16.msra.mxu0 0
        %3563 = vmatprep.subr.bf16.mxu0 0
        %3564 = vmatpush2.bf16.msra.mxu0 0
        %3565 = vmatprep.subr.bf16.mxu0 0
        %3566 = vmatpush2.bf16.msra.mxu0 0
        %3567 = vmatprep.mubr.bf16.mxu0 0
        %3568 = vmatmul.mubr.bf16.gmra.mxu0 %v3524
        %v3569 = vpop.f32.mrf.mxu0
        %v3570 = vadd.f32 0.0, %v3569
        %v3571 = vpop.f32.mrf.mxu0
        %v3572 = vpop.f32.mrf.mxu0
        %v3573 = vadd.f32 0.0, %v3572
        %v3574 = vpop.f32.mrf.mxu0
        %3575 = vmatprep.mubr.bf16.mxu0 0
        %3576 = vmatmul.mubr.bf16.gmra.mxu0 %v3527
        %v3577 = vpop.f32.mrf.mxu0
        %v3578 = vadd.f32 0.0, %v3577
        %v3579 = vpop.f32.mrf.mxu0
        %v3580 = vpop.f32.mrf.mxu0
        %v3581 = vadd.f32 0.0, %v3580
        %v3582 = vpop.f32.mrf.mxu0
        %3583 = vmatprep.mubr.bf16.mxu0 0
        %3584 = vmatmul.mubr.bf16.gmra.mxu0 %v3530
        %v3585 = vpop.f32.mrf.mxu0
        %v3586 = vadd.f32 0.0, %v3585
        %v3587 = vpop.f32.mrf.mxu0
        %v3588 = vpop.f32.mrf.mxu0
        %v3589 = vadd.f32 0.0, %v3588
        %v3590 = vpop.f32.mrf.mxu0
        %3591 = vmatprep.mubr.bf16.mxu0 0
        %3592 = vmatmul.mubr.bf16.gmra.mxu0 %v3533
        %v3593 = vpop.f32.mrf.mxu0
        %v3594 = vadd.f32 0.0, %v3593
        %v3595 = vpop.f32.mrf.mxu0
        %v3596 = vpop.f32.mrf.mxu0
        %v3597 = vadd.f32 0.0, %v3596
        %v3598 = vpop.f32.mrf.mxu0
        %3599 = vdwg.mxu0
        %v3600 = vrcp.pop %v3497
        %v3601 = vrcp.pop %v3500
        %v3602 = vrcp.pop %v3503
        %v3603 = vrcp.pop %v3506
        %v3604 = vrcp.pop %v3509
        %v3605 = vrcp.pop %v3512
        %v3606 = vrcp.pop %v3515
        %v3607 = vrcp.pop %v3518
        %v3608 = vmul.f32 %v3570, %v3600
        %v3609 = vmul.f32 %v3573, %v3601
        %v3610 = vmul.f32 %v3578, %v3602
        %v3611 = vmul.f32 %v3581, %v3603
        %v3612 = vmul.f32 %v3586, %v3604
        %v3613 = vmul.f32 %v3589, %v3605
        %v3614 = vmul.f32 %v3594, %v3606
        %v3615 = vmul.f32 %v3597, %v3607
        %v3616 = vpack.c.bf16 %v3609, %v3608
        %v3617 = vpack.c.bf16 %v3611, %v3610
        %v3618 = vpack.c.bf16 %v3613, %v3612
        %v3619 = vpack.c.bf16 %v3615, %v3614
        %v3620 = vld [vmem:[#allocation8] sm:$0xff]
        %v3621 = vld [vmem:[#allocation8 + $0x8] sm:$0xf]
        %v3622 = vld [vmem:[#allocation8 + $0xc] sm:$0xff]
        %v3623 = vld [vmem:[#allocation8 + $0x14] sm:$0xf]
        %v3624 = vld [vmem:[#allocation8 + $0x18] sm:$0xff]
        %v3625 = vld [vmem:[#allocation8 + $0x20] sm:$0xf]
        %v3626 = vld [vmem:[#allocation8 + $0x24] sm:$0xff]
        %v3627 = vld [vmem:[#allocation8 + $0x2c] sm:$0xf]
        %v3628 = vld [vmem:[#allocation8 + $0x30] sm:$0xff]
        %v3629 = vld [vmem:[#allocation8 + $0x38] sm:$0xf]
        %v3630 = vld [vmem:[#allocation8 + $0x3c] sm:$0xff]
        %v3631 = vld [vmem:[#allocation8 + $0x44] sm:$0xf]
        %v3632 = vld [vmem:[#allocation8 + $0x48] sm:$0xff]
        %v3633 = vld [vmem:[#allocation8 + $0x50] sm:$0xf]
        %v3634 = vld [vmem:[#allocation8 + $0x54] sm:$0xff]
        %v3635 = vld [vmem:[#allocation8 + $0x5c] sm:$0xf]
        %v3636 = vld [vmem:[#allocation8 + $0x60] sm:$0xff]
        %v3637 = vld [vmem:[#allocation8 + $0x68] sm:$0xf]
        %v3638 = vld [vmem:[#allocation8 + $0x6c] sm:$0xff]
        %v3639 = vld [vmem:[#allocation8 + $0x74] sm:$0xf]
        %v3640 = vld [vmem:[#allocation8 + $0x78] sm:$0xff]
        %v3641 = vld [vmem:[#allocation8 + $0x80] sm:$0xf]
        %v3642 = vld [vmem:[#allocation8 + $0x84] sm:$0xff]
        %v3643 = vld [vmem:[#allocation8 + $0x8c] sm:$0xf]
        %v3644 = vld [vmem:[#allocation8 + $0x90] sm:$0xff]
        %v3645 = vld [vmem:[#allocation8 + $0x98] sm:$0xf]
        %v3646 = vld [vmem:[#allocation8 + $0x9c] sm:$0xff]
        %v3647 = vld [vmem:[#allocation8 + $0xa4] sm:$0xf]
        %v3648 = vld [vmem:[#allocation8 + $0xa8] sm:$0xff]
        %v3649 = vld [vmem:[#allocation8 + $0xb0] sm:$0xf]
        %v3650 = vld [vmem:[#allocation8 + $0xb4] sm:$0xff]
        %v3651 = vld [vmem:[#allocation8 + $0xbc] sm:$0xf]
        %3652 = vmatprep.subr.bf16.mxu0 0
        %3653 = vmatpush1.bf16.xpose.msra.mxu0 0
        %3654 = vmatprep.subr.bf16.mxu0 0
        %3655 = vmatpush1.bf16.xpose.msra.mxu0 0
        %3656 = vmatprep.subr.bf16.mxu0 0
        %3657 = vmatpush1.bf16.xpose.msra.mxu0 0
        %3658 = vmatprep.subr.bf16.mxu0 0
        %3659 = vmatpush1.bf16.xpose.msra.mxu0 0
        %3660 = vmatprep.subr.bf16.mxu0 0
        %3661 = vmatpush1.bf16.xpose.msra.mxu0 %v3366
        %3662 = vmatprep.subr.bf16.mxu0 0
        %3663 = vmatpush1.bf16.xpose.msra.mxu0 %v3354
        %3664 = vmatprep.subr.bf16.mxu0 0
        %3665 = vmatpush1.bf16.xpose.msra.mxu0 %v3342
        %3666 = vmatprep.subr.bf16.mxu0 0
        %3667 = vmatpush1.bf16.xpose.msra.mxu0 %v3330
        %3668 = vmatprep.subr.bf16.mxu0 0
        %3669 = vmatpush2.bf16.xpose.msra.mxu0 0
        %3670 = vmatprep.subr.bf16.mxu0 0
        %3671 = vmatpush2.bf16.xpose.msra.mxu0 0
        %3672 = vmatprep.subr.bf16.mxu0 0
        %3673 = vmatpush2.bf16.xpose.msra.mxu0 0
        %3674 = vmatprep.subr.bf16.mxu0 0
        %3675 = vmatpush2.bf16.xpose.msra.mxu0 0
        %3676 = vmatprep.subr.bf16.mxu0 0
        %3677 = vmatpush2.bf16.xpose.msra.mxu0 0
        %3678 = vmatprep.subr.bf16.mxu0 0
        %3679 = vmatpush2.bf16.xpose.msra.mxu0 0
        %3680 = vmatprep.subr.bf16.mxu0 0
        %3681 = vmatpush2.bf16.xpose.msra.mxu0 0
        %3682 = vmatprep.subr.bf16.mxu0 0
        %3683 = vmatpush2.bf16.xpose.msra.mxu0 0
        %3684 = vmatprep.mubr.bf16.mxu0 0
        %3685 = vmatmul.mubr.bf16.gmra.mxu0 %v3326
        %v3686 = vpop.f32.mrf.mxu0
        %v3687 = vadd.f32 0.0, %v3686
        %v3688 = vpop.f32.mrf.mxu0
        %v3689 = vpop.f32.mrf.mxu0
        %v3690 = vadd.f32 0.0, %v3689
        %v3691 = vpop.f32.mrf.mxu0
        %3692 = vmatprep.mubr.bf16.mxu0 0
        %3693 = vmatmul.mubr.bf16.gmra.mxu0 %v3338
        %v3694 = vpop.f32.mrf.mxu0
        %v3695 = vadd.f32 0.0, %v3694
        %v3696 = vpop.f32.mrf.mxu0
        %v3697 = vpop.f32.mrf.mxu0
        %v3698 = vadd.f32 0.0, %v3697
        %v3699 = vpop.f32.mrf.mxu0
        %3700 = vmatprep.mubr.bf16.mxu0 0
        %3701 = vmatmul.mubr.bf16.gmra.mxu0 %v3350
        %v3702 = vpop.f32.mrf.mxu0
        %v3703 = vadd.f32 0.0, %v3702
        %v3704 = vpop.f32.mrf.mxu0
        %v3705 = vpop.f32.mrf.mxu0
        %v3706 = vadd.f32 0.0, %v3705
        %v3707 = vpop.f32.mrf.mxu0
        %3708 = vmatprep.mubr.bf16.mxu0 0
        %3709 = vmatmul.mubr.bf16.gmra.mxu0 %v3362
        %v3710 = vpop.f32.mrf.mxu0
        %v3711 = vadd.f32 0.0, %v3710
        %v3712 = vpop.f32.mrf.mxu0
        %v3713 = vpop.f32.mrf.mxu0
        %v3714 = vadd.f32 0.0, %v3713
        %v3715 = vpop.f32.mrf.mxu0
        %3716 = vdwg.mxu0
        %v3717 = vmul.f32 %v3687, 0.10206208
        %v3718 = vmul.f32 %v3690, 0.10206208
        %v3719 = vmul.f32 %v3695, 0.10206208
        %v3720 = vmul.f32 %v3698, 0.10206208
        %v3721 = vmul.f32 %v3703, 0.10206208
        %v3722 = vmul.f32 %v3706, 0.10206208
        %v3723 = vmul.f32 %v3711, 0.10206208
        %v3724 = vmul.f32 %v3714, 0.10206208
        %v3725 = vsel %vm3446, %v3717, -inf
        %3726 = vmax.xlane.f32.xlu0 %v3725
        %v3727 = vpop.xlane.xlu0 %3726
        %v3728 = vsel %vm3446, %v3718, -inf
        %3729 = vmax.xlane.f32.xlu0 %v3728
        %v3730 = vpop.xlane.xlu0 %3729
        %v3731 = vsel %vm3446, %v3719, -inf
        %3732 = vmax.xlane.f32.xlu0 %v3731
        %v3733 = vpop.xlane.xlu0 %3732
        %v3734 = vsel %vm3446, %v3720, -inf
        %3735 = vmax.xlane.f32.xlu0 %v3734
        %v3736 = vpop.xlane.xlu0 %3735
        %v3737 = vsel %vm3446, %v3721, -inf
        %3738 = vmax.xlane.f32.xlu0 %v3737
        %v3739 = vpop.xlane.xlu0 %3738
        %v3740 = vsel %vm3446, %v3722, -inf
        %3741 = vmax.xlane.f32.xlu0 %v3740
        %v3742 = vpop.xlane.xlu0 %3741
        %v3743 = vsel %vm3446, %v3723, -inf
        %3744 = vmax.xlane.f32.xlu0 %v3743
        %v3745 = vpop.xlane.xlu0 %3744
        %v3746 = vsel %vm3446, %v3724, -inf
        %3747 = vmax.xlane.f32.xlu0 %v3746
        %v3748 = vpop.xlane.xlu0 %3747
        %v3749 = vsub.f32 %v3717, %v3727
        %v3750 = vsub.f32 %v3718, %v3730
        %v3751 = vsub.f32 %v3719, %v3733
        %v3752 = vsub.f32 %v3720, %v3736
        %v3753 = vsub.f32 %v3721, %v3739
        %v3754 = vsub.f32 %v3722, %v3742
        %v3755 = vsub.f32 %v3723, %v3745
        %v3756 = vsub.f32 %v3724, %v3748
        %v3757 = vmul.f32 %v3749, 1.442695
        %v3758 = vpow.pop %v3757
        %v3759 = vmul.f32 %v3750, 1.442695
        %v3760 = vpow.pop %v3759
        %v3761 = vmul.f32 %v3751, 1.442695
        %v3762 = vpow.pop %v3761
        %v3763 = vmul.f32 %v3752, 1.442695
        %v3764 = vpow.pop %v3763
        %v3765 = vmul.f32 %v3753, 1.442695
        %v3766 = vpow.pop %v3765
        %v3767 = vmul.f32 %v3754, 1.442695
        %v3768 = vpow.pop %v3767
        %v3769 = vmul.f32 %v3755, 1.442695
        %v3770 = vpow.pop %v3769
        %v3771 = vmul.f32 %v3756, 1.442695
        %v3772 = vpow.pop %v3771
        %v3773 = vsel %vm3446, %v3758, 0.0
        %3774 = vadd.xlane.f32.xlu0 %v3773
        %v3775 = vpop.xlane.xlu0 %3774
        %v3776 = vsel %vm3446, %v3760, 0.0
        %3777 = vadd.xlane.f32.xlu0 %v3776
        %v3778 = vpop.xlane.xlu0 %3777
        %v3779 = vsel %vm3446, %v3762, 0.0
        %3780 = vadd.xlane.f32.xlu0 %v3779
        %v3781 = vpop.xlane.xlu0 %3780
        %v3782 = vsel %vm3446, %v3764, 0.0
        %3783 = vadd.xlane.f32.xlu0 %v3782
        %v3784 = vpop.xlane.xlu0 %3783
        %v3785 = vsel %vm3446, %v3766, 0.0
        %3786 = vadd.xlane.f32.xlu0 %v3785
        %v3787 = vpop.xlane.xlu0 %3786
        %v3788 = vsel %vm3446, %v3768, 0.0
        %3789 = vadd.xlane.f32.xlu0 %v3788
        %v3790 = vpop.xlane.xlu0 %3789
        %v3791 = vsel %vm3446, %v3770, 0.0
        %3792 = vadd.xlane.f32.xlu0 %v3791
        %v3793 = vpop.xlane.xlu0 %3792
        %v3794 = vsel %vm3446, %v3772, 0.0
        %3795 = vadd.xlane.f32.xlu0 %v3794
        %v3796 = vpop.xlane.xlu0 %3795
        %v3797 = vpack.c.bf16 %v3760, %v3758
        %v3798 = vpack.c.bf16 %v3764, %v3762
        %v3799 = vpack.c.bf16 %v3768, %v3766
        %v3800 = vpack.c.bf16 %v3772, %v3770
        %v3802 = vsel %vm3446, %v3797, 0
        %v3805 = vsel %vm3446, %v3798, 0
        %v3808 = vsel %vm3446, %v3799, 0
        %v3811 = vsel %vm3446, %v3800, 0
        %3813 = vmatprep.subr.bf16.mxu0 0
        %3814 = vmatpush1.bf16.msra.mxu0 0
        %3815 = vmatprep.subr.bf16.mxu0 0
        %3816 = vmatpush1.bf16.msra.mxu0 0
        %3817 = vmatprep.subr.bf16.mxu0 0
        %3818 = vmatpush1.bf16.msra.mxu0 0
        %3819 = vmatprep.subr.bf16.mxu0 0
        %3820 = vmatpush1.bf16.msra.mxu0 0
        %3821 = vmatprep.subr.bf16.mxu0 0
        %3822 = vmatpush1.bf16.msra.mxu0 %v3370
        %3823 = vmatprep.subr.bf16.mxu0 0
        %3824 = vmatpush1.bf16.msra.mxu0 %v3358
        %3825 = vmatprep.subr.bf16.mxu0 0
        %3826 = vmatpush1.bf16.msra.mxu0 %v3346
        %3827 = vmatprep.subr.bf16.mxu0 0
        %3828 = vmatpush1.bf16.msra.mxu0 %v3334
        %3829 = vmatprep.subr.bf16.mxu0 0
        %3830 = vmatpush2.bf16.msra.mxu0 0
        %3831 = vmatprep.subr.bf16.mxu0 0
        %3832 = vmatpush2.bf16.msra.mxu0 0
        %3833 = vmatprep.subr.bf16.mxu0 0
        %3834 = vmatpush2.bf16.msra.mxu0 0
        %3835 = vmatprep.subr.bf16.mxu0 0
        %3836 = vmatpush2.bf16.msra.mxu0 0
        %3837 = vmatprep.subr.bf16.mxu0 0
        %3838 = vmatpush2.bf16.msra.mxu0 0
        %3839 = vmatprep.subr.bf16.mxu0 0
        %3840 = vmatpush2.bf16.msra.mxu0 0
        %3841 = vmatprep.subr.bf16.mxu0 0
        %3842 = vmatpush2.bf16.msra.mxu0 0
        %3843 = vmatprep.subr.bf16.mxu0 0
        %3844 = vmatpush2.bf16.msra.mxu0 0
        %3845 = vmatprep.mubr.bf16.mxu0 0
        %3846 = vmatmul.mubr.bf16.gmra.mxu0 %v3802
        %v3847 = vpop.f32.mrf.mxu0
        %v3848 = vadd.f32 0.0, %v3847
        %v3849 = vpop.f32.mrf.mxu0
        %v3850 = vpop.f32.mrf.mxu0
        %v3851 = vadd.f32 0.0, %v3850
        %v3852 = vpop.f32.mrf.mxu0
        %3853 = vmatprep.mubr.bf16.mxu0 0
        %3854 = vmatmul.mubr.bf16.gmra.mxu0 %v3805
        %v3855 = vpop.f32.mrf.mxu0
        %v3856 = vadd.f32 0.0, %v3855
        %v3857 = vpop.f32.mrf.mxu0
        %v3858 = vpop.f32.mrf.mxu0
        %v3859 = vadd.f32 0.0, %v3858
        %v3860 = vpop.f32.mrf.mxu0
        %3861 = vmatprep.mubr.bf16.mxu0 0
        %3862 = vmatmul.mubr.bf16.gmra.mxu0 %v3808
        %v3863 = vpop.f32.mrf.mxu0
        %v3864 = vadd.f32 0.0, %v3863
        %v3865 = vpop.f32.mrf.mxu0
        %v3866 = vpop.f32.mrf.mxu0
        %v3867 = vadd.f32 0.0, %v3866
        %v3868 = vpop.f32.mrf.mxu0
        %3869 = vmatprep.mubr.bf16.mxu0 0
        %3870 = vmatmul.mubr.bf16.gmra.mxu0 %v3811
        %v3871 = vpop.f32.mrf.mxu0
        %v3872 = vadd.f32 0.0, %v3871
        %v3873 = vpop.f32.mrf.mxu0
        %v3874 = vpop.f32.mrf.mxu0
        %v3875 = vadd.f32 0.0, %v3874
        %v3876 = vpop.f32.mrf.mxu0
        %3877 = vdwg.mxu0
        %v3878 = vrcp.pop %v3775
        %v3879 = vrcp.pop %v3778
        %v3880 = vrcp.pop %v3781
        %v3881 = vrcp.pop %v3784
        %v3882 = vrcp.pop %v3787
        %v3883 = vrcp.pop %v3790
        %v3884 = vrcp.pop %v3793
        %v3885 = vrcp.pop %v3796
        %v3886 = vmul.f32 %v3848, %v3878
        %v3887 = vmul.f32 %v3851, %v3879
        %v3888 = vmul.f32 %v3856, %v3880
        %v3889 = vmul.f32 %v3859, %v3881
        %v3890 = vmul.f32 %v3864, %v3882
        %v3891 = vmul.f32 %v3867, %v3883
        %v3892 = vmul.f32 %v3872, %v3884
        %v3893 = vmul.f32 %v3875, %v3885
        %v3894 = vpack.c.bf16 %v3887, %v3886
        %v3895 = vpack.c.bf16 %v3889, %v3888
        %v3896 = vpack.c.bf16 %v3891, %v3890
        %v3897 = vpack.c.bf16 %v3893, %v3892
        %v3898 = vld [vmem:[#allocation8 + $0xc0] sm:$0xff]
        %v3899 = vld [vmem:[#allocation8 + $0xc8] sm:$0xf]
        %v3900 = vld [vmem:[#allocation8 + $0xcc] sm:$0xff]
        %v3901 = vld [vmem:[#allocation8 + $0xd4] sm:$0xf]
        %v3902 = vld [vmem:[#allocation8 + $0xd8] sm:$0xff]
        %v3903 = vld [vmem:[#allocation8 + $0xe0] sm:$0xf]
        %v3904 = vld [vmem:[#allocation8 + $0xe4] sm:$0xff]
        %v3905 = vld [vmem:[#allocation8 + $0xec] sm:$0xf]
        %v3906 = vld [vmem:[#allocation8 + $0xf0] sm:$0xff]
        %v3907 = vld [vmem:[#allocation8 + $0xf8] sm:$0xf]
        %v3908 = vld [vmem:[#allocation8 + $0xfc] sm:$0xff]
        %v3909 = vld [vmem:[#allocation8 + $0x104] sm:$0xf]
        %v3910 = vld [vmem:[#allocation8 + $0x108] sm:$0xff]
        %v3911 = vld [vmem:[#allocation8 + $0x110] sm:$0xf]
        %v3912 = vld [vmem:[#allocation8 + $0x114] sm:$0xff]
        %v3913 = vld [vmem:[#allocation8 + $0x11c] sm:$0xf]
        %v3914 = vld [vmem:[#allocation8 + $0x120] sm:$0xff]
        %v3915 = vld [vmem:[#allocation8 + $0x128] sm:$0xf]
        %v3916 = vld [vmem:[#allocation8 + $0x12c] sm:$0xff]
        %v3917 = vld [vmem:[#allocation8 + $0x134] sm:$0xf]
        %v3918 = vld [vmem:[#allocation8 + $0x138] sm:$0xff]
        %v3919 = vld [vmem:[#allocation8 + $0x140] sm:$0xf]
        %v3920 = vld [vmem:[#allocation8 + $0x144] sm:$0xff]
        %v3921 = vld [vmem:[#allocation8 + $0x14c] sm:$0xf]
        %v3922 = vld [vmem:[#allocation8 + $0x150] sm:$0xff]
        %v3923 = vld [vmem:[#allocation8 + $0x158] sm:$0xf]
        %v3924 = vld [vmem:[#allocation8 + $0x15c] sm:$0xff]
        %v3925 = vld [vmem:[#allocation8 + $0x164] sm:$0xf]
        %v3926 = vld [vmem:[#allocation8 + $0x168] sm:$0xff]
        %v3927 = vld [vmem:[#allocation8 + $0x170] sm:$0xf]
        %v3928 = vld [vmem:[#allocation8 + $0x174] sm:$0xff]
        %v3929 = vld [vmem:[#allocation8 + $0x17c] sm:$0xf]
        %v3962 = vunpack.c.l.b16 %v3898
        %v3963 = vunpack.c.h.b16 %v3898
        %v3964 = vunpack.c.l.b16 %v3899
        %v3965 = vunpack.c.l.b16 %v3900
        %v3966 = vunpack.c.h.b16 %v3900
        %v3967 = vunpack.c.l.b16 %v3901
        %v3968 = vunpack.c.l.b16 %v3902
        %v3969 = vunpack.c.h.b16 %v3902
        %v3970 = vunpack.c.l.b16 %v3903
        %v3971 = vunpack.c.l.b16 %v3904
        %v3972 = vunpack.c.h.b16 %v3904
        %v3973 = vunpack.c.l.b16 %v3905
        %v3974 = vunpack.c.l.b16 %v3906
        %v3975 = vunpack.c.h.b16 %v3906
        %v3976 = vunpack.c.l.b16 %v3907
        %v3977 = vunpack.c.l.b16 %v3908
        %v3978 = vunpack.c.h.b16 %v3908
        %v3979 = vunpack.c.l.b16 %v3909
        %v3980 = vunpack.c.l.b16 %v3910
        %v3981 = vunpack.c.h.b16 %v3910
        %v3982 = vunpack.c.l.b16 %v3911
        %v3983 = vunpack.c.l.b16 %v3912
        %v3984 = vunpack.c.h.b16 %v3912
        %v3985 = vunpack.c.l.b16 %v3913
        %v3986 = vunpack.c.l.b16 %v3914
        %v3987 = vunpack.c.h.b16 %v3914
        %v3988 = vunpack.c.l.b16 %v3915
        %v3989 = vunpack.c.l.b16 %v3916
        %v3990 = vunpack.c.h.b16 %v3916
        %v3991 = vunpack.c.l.b16 %v3917
        %v3992 = vunpack.c.l.b16 %v3918
        %v3993 = vunpack.c.h.b16 %v3918
        %v3994 = vunpack.c.l.b16 %v3919
        %v3995 = vunpack.c.l.b16 %v3920
        %v3996 = vunpack.c.h.b16 %v3920
        %v3997 = vunpack.c.l.b16 %v3921
        %v3998 = vunpack.c.l.b16 %v3922
        %v3999 = vunpack.c.h.b16 %v3922
        %v4000 = vunpack.c.l.b16 %v3923
        %v4001 = vunpack.c.l.b16 %v3924
        %v4002 = vunpack.c.h.b16 %v3924
        %v4003 = vunpack.c.l.b16 %v3925
        %v4004 = vunpack.c.l.b16 %v3926
        %v4005 = vunpack.c.h.b16 %v3926
        %v4006 = vunpack.c.l.b16 %v3927
        %v4007 = vunpack.c.l.b16 %v3928
        %v4008 = vunpack.c.h.b16 %v3928
        %v4009 = vunpack.c.l.b16 %v3929
        %v4010 = vpack.c.b16 %v3965, %v3962
        %v4011 = vpack.c.b16 %v3966, %v3963
        %v4012 = vpack.c.b16 %v3967, %v3964
        %v4013 = vpack.c.b16 %v3971, %v3968
        %v4014 = vpack.c.b16 %v3972, %v3969
        %v4015 = vpack.c.b16 %v3973, %v3970
        %v4016 = vpack.c.b16 %v3977, %v3974
        %v4017 = vpack.c.b16 %v3978, %v3975
        %v4018 = vpack.c.b16 %v3979, %v3976
        %v4019 = vpack.c.b16 %v3983, %v3980
        %v4020 = vpack.c.b16 %v3984, %v3981
        %v4021 = vpack.c.b16 %v3985, %v3982
        %v4022 = vpack.c.b16 %v3989, %v3986
        %v4023 = vpack.c.b16 %v3990, %v3987
        %v4024 = vpack.c.b16 %v3991, %v3988
        %v4025 = vpack.c.b16 %v3995, %v3992
        %v4026 = vpack.c.b16 %v3996, %v3993
        %v4027 = vpack.c.b16 %v3997, %v3994
        %v4028 = vpack.c.b16 %v4001, %v3998
        %v4029 = vpack.c.b16 %v4002, %v3999
        %v4030 = vpack.c.b16 %v4003, %v4000
        %v4031 = vpack.c.b16 %v4007, %v4004
        %v4032 = vpack.c.b16 %v4008, %v4005
        %v4033 = vpack.c.b16 %v4009, %v4006
        %4058 = vmatprep.subr.bf16.mxu0 %v4032
        %4059 = vmatpush1.bf16.msra.mxu0 %v4031
        %4060 = vmatprep.subr.bf16.mxu0 %v4029
        %4061 = vmatpush1.bf16.msra.mxu0 %v4028
        %4062 = vmatprep.subr.bf16.mxu0 %v4026
        %4063 = vmatpush1.bf16.msra.mxu0 %v4025
        %4064 = vmatprep.subr.bf16.mxu0 %v4023
        %4065 = vmatpush1.bf16.msra.mxu0 %v4022
        %4066 = vmatprep.subr.bf16.mxu0 %v4020
        %4067 = vmatpush1.bf16.msra.mxu0 %v4019
        %4068 = vmatprep.subr.bf16.mxu0 %v4017
        %4069 = vmatpush1.bf16.msra.mxu0 %v4016
        %4070 = vmatprep.subr.bf16.mxu0 %v4014
        %4071 = vmatpush1.bf16.msra.mxu0 %v4013
        %4072 = vmatprep.subr.bf16.mxu0 %v4011
        %4073 = vmatpush1.bf16.msra.mxu0 %v4010
        %4074 = vmatprep.subr.bf16.mxu0 0
        %4075 = vmatpush2.bf16.msra.mxu0 0
        %4076 = vmatprep.subr.bf16.mxu0 0
        %4077 = vmatpush2.bf16.msra.mxu0 0
        %4078 = vmatprep.subr.bf16.mxu0 0
        %4079 = vmatpush2.bf16.msra.mxu0 0
        %4080 = vmatprep.subr.bf16.mxu0 0
        %4081 = vmatpush2.bf16.msra.mxu0 0
        %4082 = vmatprep.subr.bf16.mxu0 0
        %4083 = vmatpush2.bf16.msra.mxu0 0
        %4084 = vmatprep.subr.bf16.mxu0 0
        %4085 = vmatpush2.bf16.msra.mxu0 0
        %4086 = vmatprep.subr.bf16.mxu0 0
        %4087 = vmatpush2.bf16.msra.mxu0 0
        %4088 = vmatprep.subr.bf16.mxu0 0
        %4089 = vmatpush2.bf16.msra.mxu0 0
        %4090 = vmatprep.mubr.bf16.mxu0 0
        %4091 = vmatmul.mubr.bf16.gmra.mxu0 %v3894
        %v4092 = vpop.f32.mrf.mxu0
        %v4093 = vadd.f32 0.0, %v4092
        %v4094 = vpop.f32.mrf.mxu0
        %v4095 = vadd.f32 0.0, %v4094
        %v4096 = vpop.f32.mrf.mxu0
        %v4097 = vadd.f32 0.0, %v4096
        %v4098 = vpop.f32.mrf.mxu0
        %v4099 = vadd.f32 0.0, %v4098
        %4100 = vmatprep.mubr.bf16.mxu0 0
        %4101 = vmatmul.mubr.bf16.gmra.mxu0 %v3895
        %v4102 = vpop.f32.mrf.mxu0
        %v4103 = vadd.f32 0.0, %v4102
        %v4104 = vpop.f32.mrf.mxu0
        %v4105 = vadd.f32 0.0, %v4104
        %v4106 = vpop.f32.mrf.mxu0
        %v4107 = vadd.f32 0.0, %v4106
        %v4108 = vpop.f32.mrf.mxu0
        %v4109 = vadd.f32 0.0, %v4108
        %4110 = vmatprep.mubr.bf16.mxu0 0
        %4111 = vmatmul.mubr.bf16.gmra.mxu0 %v3896
        %v4112 = vpop.f32.mrf.mxu0
        %v4113 = vadd.f32 0.0, %v4112
        %v4114 = vpop.f32.mrf.mxu0
        %v4115 = vadd.f32 0.0, %v4114
        %v4116 = vpop.f32.mrf.mxu0
        %v4117 = vadd.f32 0.0, %v4116
        %v4118 = vpop.f32.mrf.mxu0
        %v4119 = vadd.f32 0.0, %v4118
        %4120 = vmatprep.mubr.bf16.mxu0 0
        %4121 = vmatmul.mubr.bf16.gmra.mxu0 %v3897
        %v4122 = vpop.f32.mrf.mxu0
        %v4123 = vadd.f32 0.0, %v4122
        %v4124 = vpop.f32.mrf.mxu0
        %v4125 = vadd.f32 0.0, %v4124
        %v4126 = vpop.f32.mrf.mxu0
        %v4127 = vadd.f32 0.0, %v4126
        %v4128 = vpop.f32.mrf.mxu0
        %v4129 = vadd.f32 0.0, %v4128
        %4130 = vdwg.mxu0
        %4131 = vmatprep.subr.bf16.mxu0 0
        %4132 = vmatpush1.bf16.msra.mxu0 %v4033
        %4133 = vmatprep.subr.bf16.mxu0 0
        %4134 = vmatpush1.bf16.msra.mxu0 %v4030
        %4135 = vmatprep.subr.bf16.mxu0 0
        %4136 = vmatpush1.bf16.msra.mxu0 %v4027
        %4137 = vmatprep.subr.bf16.mxu0 0
        %4138 = vmatpush1.bf16.msra.mxu0 %v4024
        %4139 = vmatprep.subr.bf16.mxu0 0
        %4140 = vmatpush1.bf16.msra.mxu0 %v4021
        %4141 = vmatprep.subr.bf16.mxu0 0
        %4142 = vmatpush1.bf16.msra.mxu0 %v4018
        %4143 = vmatprep.subr.bf16.mxu0 0
        %4144 = vmatpush1.bf16.msra.mxu0 %v4015
        %4145 = vmatprep.subr.bf16.mxu0 0
        %4146 = vmatpush1.bf16.msra.mxu0 %v4012
        %4147 = vmatprep.subr.bf16.mxu0 0
        %4148 = vmatpush2.bf16.msra.mxu0 0
        %4149 = vmatprep.subr.bf16.mxu0 0
        %4150 = vmatpush2.bf16.msra.mxu0 0
        %4151 = vmatprep.subr.bf16.mxu0 0
        %4152 = vmatpush2.bf16.msra.mxu0 0
        %4153 = vmatprep.subr.bf16.mxu0 0
        %4154 = vmatpush2.bf16.msra.mxu0 0
        %4155 = vmatprep.subr.bf16.mxu0 0
        %4156 = vmatpush2.bf16.msra.mxu0 0
        %4157 = vmatprep.subr.bf16.mxu0 0
        %4158 = vmatpush2.bf16.msra.mxu0 0
        %4159 = vmatprep.subr.bf16.mxu0 0
        %4160 = vmatpush2.bf16.msra.mxu0 0
        %4161 = vmatprep.subr.bf16.mxu0 0
        %4162 = vmatpush2.bf16.msra.mxu0 0
        %4163 = vmatprep.mubr.bf16.mxu0 0
        %4164 = vmatmul.mubr.bf16.gmra.mxu0 %v3894
        %v4165 = vpop.f32.mrf.mxu0
        %v4166 = vadd.f32 0.0, %v4165
        %v4167 = vpop.f32.mrf.mxu0
        %v4168 = vpop.f32.mrf.mxu0
        %v4169 = vadd.f32 0.0, %v4168
        %v4170 = vpop.f32.mrf.mxu0
        %4171 = vmatprep.mubr.bf16.mxu0 0
        %4172 = vmatmul.mubr.bf16.gmra.mxu0 %v3895
        %v4173 = vpop.f32.mrf.mxu0
        %v4174 = vadd.f32 0.0, %v4173
        %v4175 = vpop.f32.mrf.mxu0
        %v4176 = vpop.f32.mrf.mxu0
        %v4177 = vadd.f32 0.0, %v4176
        %v4178 = vpop.f32.mrf.mxu0
        %4179 = vmatprep.mubr.bf16.mxu0 0
        %4180 = vmatmul.mubr.bf16.gmra.mxu0 %v3896
        %v4181 = vpop.f32.mrf.mxu0
        %v4182 = vadd.f32 0.0, %v4181
        %v4183 = vpop.f32.mrf.mxu0
        %v4184 = vpop.f32.mrf.mxu0
        %v4185 = vadd.f32 0.0, %v4184
        %v4186 = vpop.f32.mrf.mxu0
        %4187 = vmatprep.mubr.bf16.mxu0 0
        %4188 = vmatmul.mubr.bf16.gmra.mxu0 %v3897
        %v4189 = vpop.f32.mrf.mxu0
        %v4190 = vadd.f32 0.0, %v4189
        %v4191 = vpop.f32.mrf.mxu0
        %v4192 = vpop.f32.mrf.mxu0
        %v4193 = vadd.f32 0.0, %v4192
        %v4194 = vpop.f32.mrf.mxu0
        %4195 = vdwg.mxu0
        %v4228 = vunpack.c.l.b16 %v3620
        %v4229 = vunpack.c.h.b16 %v3620
        %v4230 = vunpack.c.l.b16 %v3621
        %v4231 = vunpack.c.l.b16 %v3622
        %v4232 = vunpack.c.h.b16 %v3622
        %v4233 = vunpack.c.l.b16 %v3623
        %v4234 = vunpack.c.l.b16 %v3624
        %v4235 = vunpack.c.h.b16 %v3624
        %v4236 = vunpack.c.l.b16 %v3625
        %v4237 = vunpack.c.l.b16 %v3626
        %v4238 = vunpack.c.h.b16 %v3626
        %v4239 = vunpack.c.l.b16 %v3627
        %v4240 = vunpack.c.l.b16 %v3628
        %v4241 = vunpack.c.h.b16 %v3628
        %v4242 = vunpack.c.l.b16 %v3629
        %v4243 = vunpack.c.l.b16 %v3630
        %v4244 = vunpack.c.h.b16 %v3630
        %v4245 = vunpack.c.l.b16 %v3631
        %v4246 = vunpack.c.l.b16 %v3632
        %v4247 = vunpack.c.h.b16 %v3632
        %v4248 = vunpack.c.l.b16 %v3633
        %v4249 = vunpack.c.l.b16 %v3634
        %v4250 = vunpack.c.h.b16 %v3634
        %v4251 = vunpack.c.l.b16 %v3635
        %v4252 = vunpack.c.l.b16 %v3636
        %v4253 = vunpack.c.h.b16 %v3636
        %v4254 = vunpack.c.l.b16 %v3637
        %v4255 = vunpack.c.l.b16 %v3638
        %v4256 = vunpack.c.h.b16 %v3638
        %v4257 = vunpack.c.l.b16 %v3639
        %v4258 = vunpack.c.l.b16 %v3640
        %v4259 = vunpack.c.h.b16 %v3640
        %v4260 = vunpack.c.l.b16 %v3641
        %v4261 = vunpack.c.l.b16 %v3642
        %v4262 = vunpack.c.h.b16 %v3642
        %v4263 = vunpack.c.l.b16 %v3643
        %v4264 = vunpack.c.l.b16 %v3644
        %v4265 = vunpack.c.h.b16 %v3644
        %v4266 = vunpack.c.l.b16 %v3645
        %v4267 = vunpack.c.l.b16 %v3646
        %v4268 = vunpack.c.h.b16 %v3646
        %v4269 = vunpack.c.l.b16 %v3647
        %v4270 = vunpack.c.l.b16 %v3648
        %v4271 = vunpack.c.h.b16 %v3648
        %v4272 = vunpack.c.l.b16 %v3649
        %v4273 = vunpack.c.l.b16 %v3650
        %v4274 = vunpack.c.h.b16 %v3650
        %v4275 = vunpack.c.l.b16 %v3651
        %v4276 = vpack.c.b16 %v4231, %v4228
        %v4277 = vpack.c.b16 %v4232, %v4229
        %v4278 = vpack.c.b16 %v4233, %v4230
        %v4279 = vpack.c.b16 %v4237, %v4234
        %v4280 = vpack.c.b16 %v4238, %v4235
        %v4281 = vpack.c.b16 %v4239, %v4236
        %v4282 = vpack.c.b16 %v4243, %v4240
        %v4283 = vpack.c.b16 %v4244, %v4241
        %v4284 = vpack.c.b16 %v4245, %v4242
        %v4285 = vpack.c.b16 %v4249, %v4246
        %v4286 = vpack.c.b16 %v4250, %v4247
        %v4287 = vpack.c.b16 %v4251, %v4248
        %v4288 = vpack.c.b16 %v4255, %v4252
        %v4289 = vpack.c.b16 %v4256, %v4253
        %v4290 = vpack.c.b16 %v4257, %v4254
        %v4291 = vpack.c.b16 %v4261, %v4258
        %v4292 = vpack.c.b16 %v4262, %v4259
        %v4293 = vpack.c.b16 %v4263, %v4260
        %v4294 = vpack.c.b16 %v4267, %v4264
        %v4295 = vpack.c.b16 %v4268, %v4265
        %v4296 = vpack.c.b16 %v4269, %v4266
        %v4297 = vpack.c.b16 %v4273, %v4270
        %v4298 = vpack.c.b16 %v4274, %v4271
        %v4299 = vpack.c.b16 %v4275, %v4272
        %4324 = vmatprep.subr.bf16.mxu0 %v4298
        %4325 = vmatpush1.bf16.msra.mxu0 %v4297
        %4326 = vmatprep.subr.bf16.mxu0 %v4295
        %4327 = vmatpush1.bf16.msra.mxu0 %v4294
        %4328 = vmatprep.subr.bf16.mxu0 %v4292
        %4329 = vmatpush1.bf16.msra.mxu0 %v4291
        %4330 = vmatprep.subr.bf16.mxu0 %v4289
        %4331 = vmatpush1.bf16.msra.mxu0 %v4288
        %4332 = vmatprep.subr.bf16.mxu0 %v4286
        %4333 = vmatpush1.bf16.msra.mxu0 %v4285
        %4334 = vmatprep.subr.bf16.mxu0 %v4283
        %4335 = vmatpush1.bf16.msra.mxu0 %v4282
        %4336 = vmatprep.subr.bf16.mxu0 %v4280
        %4337 = vmatpush1.bf16.msra.mxu0 %v4279
        %4338 = vmatprep.subr.bf16.mxu0 %v4277
        %4339 = vmatpush1.bf16.msra.mxu0 %v4276
        %4340 = vmatprep.subr.bf16.mxu0 0
        %4341 = vmatpush2.bf16.msra.mxu0 0
        %4342 = vmatprep.subr.bf16.mxu0 0
        %4343 = vmatpush2.bf16.msra.mxu0 0
        %4344 = vmatprep.subr.bf16.mxu0 0
        %4345 = vmatpush2.bf16.msra.mxu0 0
        %4346 = vmatprep.subr.bf16.mxu0 0
        %4347 = vmatpush2.bf16.msra.mxu0 0
        %4348 = vmatprep.subr.bf16.mxu0 0
        %4349 = vmatpush2.bf16.msra.mxu0 0
        %4350 = vmatprep.subr.bf16.mxu0 0
        %4351 = vmatpush2.bf16.msra.mxu0 0
        %4352 = vmatprep.subr.bf16.mxu0 0
        %4353 = vmatpush2.bf16.msra.mxu0 0
        %4354 = vmatprep.subr.bf16.mxu0 0
        %4355 = vmatpush2.bf16.msra.mxu0 0
        %4356 = vmatprep.mubr.bf16.mxu0 0
        %4357 = vmatmul.mubr.bf16.gmra.mxu0 %v3616
        %v4358 = vpop.f32.mrf.mxu0
        %v4359 = vadd.f32 %v4093, %v4358
        %v4360 = vpop.f32.mrf.mxu0
        %v4361 = vadd.f32 %v4095, %v4360
        %v4362 = vpop.f32.mrf.mxu0
        %v4363 = vadd.f32 %v4097, %v4362
        %v4364 = vpop.f32.mrf.mxu0
        %v4365 = vadd.f32 %v4099, %v4364
        %4366 = vmatprep.mubr.bf16.mxu0 0
        %4367 = vmatmul.mubr.bf16.gmra.mxu0 %v3617
        %v4368 = vpop.f32.mrf.mxu0
        %v4369 = vadd.f32 %v4103, %v4368
        %v4370 = vpop.f32.mrf.mxu0
        %v4371 = vadd.f32 %v4105, %v4370
        %v4372 = vpop.f32.mrf.mxu0
        %v4373 = vadd.f32 %v4107, %v4372
        %v4374 = vpop.f32.mrf.mxu0
        %v4375 = vadd.f32 %v4109, %v4374
        %4376 = vmatprep.mubr.bf16.mxu0 0
        %4377 = vmatmul.mubr.bf16.gmra.mxu0 %v3618
        %v4378 = vpop.f32.mrf.mxu0
        %v4379 = vadd.f32 %v4113, %v4378
        %v4380 = vpop.f32.mrf.mxu0
        %v4381 = vadd.f32 %v4115, %v4380
        %v4382 = vpop.f32.mrf.mxu0
        %v4383 = vadd.f32 %v4117, %v4382
        %v4384 = vpop.f32.mrf.mxu0
        %v4385 = vadd.f32 %v4119, %v4384
        %4386 = vmatprep.mubr.bf16.mxu0 0
        %4387 = vmatmul.mubr.bf16.gmra.mxu0 %v3619
        %v4388 = vpop.f32.mrf.mxu0
        %v4389 = vadd.f32 %v4123, %v4388
        %v4390 = vpop.f32.mrf.mxu0
        %v4391 = vadd.f32 %v4125, %v4390
        %v4392 = vpop.f32.mrf.mxu0
        %v4393 = vadd.f32 %v4127, %v4392
        %v4394 = vpop.f32.mrf.mxu0
        %v4395 = vadd.f32 %v4129, %v4394
        %4396 = vdwg.mxu0
        %4397 = vmatprep.subr.bf16.mxu0 0
        %4398 = vmatpush1.bf16.msra.mxu0 %v4299
        %4399 = vmatprep.subr.bf16.mxu0 0
        %4400 = vmatpush1.bf16.msra.mxu0 %v4296
        %4401 = vmatprep.subr.bf16.mxu0 0
        %4402 = vmatpush1.bf16.msra.mxu0 %v4293
        %4403 = vmatprep.subr.bf16.mxu0 0
        %4404 = vmatpush1.bf16.msra.mxu0 %v4290
        %4405 = vmatprep.subr.bf16.mxu0 0
        %4406 = vmatpush1.bf16.msra.mxu0 %v4287
        %4407 = vmatprep.subr.bf16.mxu0 0
        %4408 = vmatpush1.bf16.msra.mxu0 %v4284
        %4409 = vmatprep.subr.bf16.mxu0 0
        %4410 = vmatpush1.bf16.msra.mxu0 %v4281
        %4411 = vmatprep.subr.bf16.mxu0 0
        %4412 = vmatpush1.bf16.msra.mxu0 %v4278
        %4413 = vmatprep.subr.bf16.mxu0 0
        %4414 = vmatpush2.bf16.msra.mxu0 0
        %4415 = vmatprep.subr.bf16.mxu0 0
        %4416 = vmatpush2.bf16.msra.mxu0 0
        %4417 = vmatprep.subr.bf16.mxu0 0
        %4418 = vmatpush2.bf16.msra.mxu0 0
        %4419 = vmatprep.subr.bf16.mxu0 0
        %4420 = vmatpush2.bf16.msra.mxu0 0
        %4421 = vmatprep.subr.bf16.mxu0 0
        %4422 = vmatpush2.bf16.msra.mxu0 0
        %4423 = vmatprep.subr.bf16.mxu0 0
        %4424 = vmatpush2.bf16.msra.mxu0 0
        %4425 = vmatprep.subr.bf16.mxu0 0
        %4426 = vmatpush2.bf16.msra.mxu0 0
        %4427 = vmatprep.subr.bf16.mxu0 0
        %4428 = vmatpush2.bf16.msra.mxu0 0
        %4429 = vmatprep.mubr.bf16.mxu0 0
        %4430 = vmatmul.mubr.bf16.gmra.mxu0 %v3616
        %v4431 = vpop.f32.mrf.mxu0
        %v4432 = vadd.f32 %v4166, %v4431
        %v4433 = vpop.f32.mrf.mxu0
        %v4434 = vpop.f32.mrf.mxu0
        %v4435 = vadd.f32 %v4169, %v4434
        %v4436 = vpop.f32.mrf.mxu0
        %4437 = vmatprep.mubr.bf16.mxu0 0
        %4438 = vmatmul.mubr.bf16.gmra.mxu0 %v3617
        %v4439 = vpop.f32.mrf.mxu0
        %v4440 = vadd.f32 %v4174, %v4439
        %v4441 = vpop.f32.mrf.mxu0
        %v4442 = vpop.f32.mrf.mxu0
        %v4443 = vadd.f32 %v4177, %v4442
        %v4444 = vpop.f32.mrf.mxu0
        %4445 = vmatprep.mubr.bf16.mxu0 0
        %4446 = vmatmul.mubr.bf16.gmra.mxu0 %v3618
        %v4447 = vpop.f32.mrf.mxu0
        %v4448 = vadd.f32 %v4182, %v4447
        %v4449 = vpop.f32.mrf.mxu0
        %v4450 = vpop.f32.mrf.mxu0
        %v4451 = vadd.f32 %v4185, %v4450
        %v4452 = vpop.f32.mrf.mxu0
        %4453 = vmatprep.mubr.bf16.mxu0 0
        %4454 = vmatmul.mubr.bf16.gmra.mxu0 %v3619
        %v4455 = vpop.f32.mrf.mxu0
        %v4456 = vadd.f32 %v4190, %v4455
        %v4457 = vpop.f32.mrf.mxu0
        %v4458 = vpop.f32.mrf.mxu0
        %v4459 = vadd.f32 %v4193, %v4458
        %v4460 = vpop.f32.mrf.mxu0
        %4461 = vdwg.mxu0
        %4462 = vmatprep.subr.bf16.mxu0 0
        %4463 = vmatpush1.bf16.xpose.msra.mxu0 0
        %4464 = vmatprep.subr.bf16.mxu0 0
        %4465 = vmatpush1.bf16.xpose.msra.mxu0 0
        %4466 = vmatprep.subr.bf16.mxu0 0
        %4467 = vmatpush1.bf16.xpose.msra.mxu0 0
        %4468 = vmatprep.subr.bf16.mxu0 0
        %4469 = vmatpush1.bf16.xpose.msra.mxu0 0
        %4470 = vmatprep.subr.bf16.mxu0 0
        %4471 = vmatpush1.bf16.xpose.msra.mxu0 %v3367
        %4472 = vmatprep.subr.bf16.mxu0 0
        %4473 = vmatpush1.bf16.xpose.msra.mxu0 %v3355
        %4474 = vmatprep.subr.bf16.mxu0 0
        %4475 = vmatpush1.bf16.xpose.msra.mxu0 %v3343
        %4476 = vmatprep.subr.bf16.mxu0 0
        %4477 = vmatpush1.bf16.xpose.msra.mxu0 %v3331
        %4478 = vmatprep.subr.bf16.mxu0 0
        %4479 = vmatpush2.bf16.xpose.msra.mxu0 0
        %4480 = vmatprep.subr.bf16.mxu0 0
        %4481 = vmatpush2.bf16.xpose.msra.mxu0 0
        %4482 = vmatprep.subr.bf16.mxu0 0
        %4483 = vmatpush2.bf16.xpose.msra.mxu0 0
        %4484 = vmatprep.subr.bf16.mxu0 0
        %4485 = vmatpush2.bf16.xpose.msra.mxu0 0
        %4486 = vmatprep.subr.bf16.mxu0 0
        %4487 = vmatpush2.bf16.xpose.msra.mxu0 0
        %4488 = vmatprep.subr.bf16.mxu0 0
        %4489 = vmatpush2.bf16.xpose.msra.mxu0 0
        %4490 = vmatprep.subr.bf16.mxu0 0
        %4491 = vmatpush2.bf16.xpose.msra.mxu0 0
        %4492 = vmatprep.subr.bf16.mxu0 0
        %4493 = vmatpush2.bf16.xpose.msra.mxu0 0
        %4494 = vmatprep.mubr.bf16.mxu0 0
        %4495 = vmatmul.mubr.bf16.gmra.mxu0 %v3327
        %v4496 = vpop.f32.mrf.mxu0
        %v4497 = vadd.f32 0.0, %v4496
        %v4498 = vpop.f32.mrf.mxu0
        %v4499 = vpop.f32.mrf.mxu0
        %v4500 = vadd.f32 0.0, %v4499
        %v4501 = vpop.f32.mrf.mxu0
        %4502 = vmatprep.mubr.bf16.mxu0 0
        %4503 = vmatmul.mubr.bf16.gmra.mxu0 %v3339
        %v4504 = vpop.f32.mrf.mxu0
        %v4505 = vadd.f32 0.0, %v4504
        %v4506 = vpop.f32.mrf.mxu0
        %v4507 = vpop.f32.mrf.mxu0
        %v4508 = vadd.f32 0.0, %v4507
        %v4509 = vpop.f32.mrf.mxu0
        %4510 = vmatprep.mubr.bf16.mxu0 0
        %4511 = vmatmul.mubr.bf16.gmra.mxu0 %v3351
        %v4512 = vpop.f32.mrf.mxu0
        %v4513 = vadd.f32 0.0, %v4512
        %v4514 = vpop.f32.mrf.mxu0
        %v4515 = vpop.f32.mrf.mxu0
        %v4516 = vadd.f32 0.0, %v4515
        %v4517 = vpop.f32.mrf.mxu0
        %4518 = vmatprep.mubr.bf16.mxu0 0
        %4519 = vmatmul.mubr.bf16.gmra.mxu0 %v3363
        %v4520 = vpop.f32.mrf.mxu0
        %v4521 = vadd.f32 0.0, %v4520
        %v4522 = vpop.f32.mrf.mxu0
        %v4523 = vpop.f32.mrf.mxu0
        %v4524 = vadd.f32 0.0, %v4523
        %v4525 = vpop.f32.mrf.mxu0
        %4526 = vdwg.mxu0
        %v4527 = vmul.f32 %v4497, 0.10206208
        %v4528 = vmul.f32 %v4500, 0.10206208
        %v4529 = vmul.f32 %v4505, 0.10206208
        %v4530 = vmul.f32 %v4508, 0.10206208
        %v4531 = vmul.f32 %v4513, 0.10206208
        %v4532 = vmul.f32 %v4516, 0.10206208
        %v4533 = vmul.f32 %v4521, 0.10206208
        %v4534 = vmul.f32 %v4524, 0.10206208
        %v4535 = vsel %vm3446, %v4527, -inf
        %4536 = vmax.xlane.f32.xlu0 %v4535
        %v4537 = vpop.xlane.xlu0 %4536
        %v4538 = vsel %vm3446, %v4528, -inf
        %4539 = vmax.xlane.f32.xlu0 %v4538
        %v4540 = vpop.xlane.xlu0 %4539
        %v4541 = vsel %vm3446, %v4529, -inf
        %4542 = vmax.xlane.f32.xlu0 %v4541
        %v4543 = vpop.xlane.xlu0 %4542
        %v4544 = vsel %vm3446, %v4530, -inf
        %4545 = vmax.xlane.f32.xlu0 %v4544
        %v4546 = vpop.xlane.xlu0 %4545
        %v4547 = vsel %vm3446, %v4531, -inf
        %4548 = vmax.xlane.f32.xlu0 %v4547
        %v4549 = vpop.xlane.xlu0 %4548
        %v4550 = vsel %vm3446, %v4532, -inf
        %4551 = vmax.xlane.f32.xlu0 %v4550
        %v4552 = vpop.xlane.xlu0 %4551
        %v4553 = vsel %vm3446, %v4533, -inf
        %4554 = vmax.xlane.f32.xlu0 %v4553
        %v4555 = vpop.xlane.xlu0 %4554
        %v4556 = vsel %vm3446, %v4534, -inf
        %4557 = vmax.xlane.f32.xlu0 %v4556
        %v4558 = vpop.xlane.xlu0 %4557
        %v4559 = vsub.f32 %v4527, %v4537
        %v4560 = vsub.f32 %v4528, %v4540
        %v4561 = vsub.f32 %v4529, %v4543
        %v4562 = vsub.f32 %v4530, %v4546
        %v4563 = vsub.f32 %v4531, %v4549
        %v4564 = vsub.f32 %v4532, %v4552
        %v4565 = vsub.f32 %v4533, %v4555
        %v4566 = vsub.f32 %v4534, %v4558
        %v4567 = vmul.f32 %v4559, 1.442695
        %v4568 = vpow.pop %v4567
        %v4569 = vmul.f32 %v4560, 1.442695
        %v4570 = vpow.pop %v4569
        %v4571 = vmul.f32 %v4561, 1.442695
        %v4572 = vpow.pop %v4571
        %v4573 = vmul.f32 %v4562, 1.442695
        %v4574 = vpow.pop %v4573
        %v4575 = vmul.f32 %v4563, 1.442695
        %v4576 = vpow.pop %v4575
        %v4577 = vmul.f32 %v4564, 1.442695
        %v4578 = vpow.pop %v4577
        %v4579 = vmul.f32 %v4565, 1.442695
        %v4580 = vpow.pop %v4579
        %v4581 = vmul.f32 %v4566, 1.442695
        %v4582 = vpow.pop %v4581
        %v4583 = vsel %vm3446, %v4568, 0.0
        %4584 = vadd.xlane.f32.xlu0 %v4583
        %v4585 = vpop.xlane.xlu0 %4584
        %v4586 = vsel %vm3446, %v4570, 0.0
        %4587 = vadd.xlane.f32.xlu0 %v4586
        %v4588 = vpop.xlane.xlu0 %4587
        %v4589 = vsel %vm3446, %v4572, 0.0
        %4590 = vadd.xlane.f32.xlu0 %v4589
        %v4591 = vpop.xlane.xlu0 %4590
        %v4592 = vsel %vm3446, %v4574, 0.0
        %4593 = vadd.xlane.f32.xlu0 %v4592
        %v4594 = vpop.xlane.xlu0 %4593
        %v4595 = vsel %vm3446, %v4576, 0.0
        %4596 = vadd.xlane.f32.xlu0 %v4595
        %v4597 = vpop.xlane.xlu0 %4596
        %v4598 = vsel %vm3446, %v4578, 0.0
        %4599 = vadd.xlane.f32.xlu0 %v4598
        %v4600 = vpop.xlane.xlu0 %4599
        %v4601 = vsel %vm3446, %v4580, 0.0
        %4602 = vadd.xlane.f32.xlu0 %v4601
        %v4603 = vpop.xlane.xlu0 %4602
        %v4604 = vsel %vm3446, %v4582, 0.0
        %4605 = vadd.xlane.f32.xlu0 %v4604
        %v4606 = vpop.xlane.xlu0 %4605
        %v4607 = vpack.c.bf16 %v4570, %v4568
        %v4608 = vpack.c.bf16 %v4574, %v4572
        %v4609 = vpack.c.bf16 %v4578, %v4576
        %v4610 = vpack.c.bf16 %v4582, %v4580
        %v4612 = vsel %vm3446, %v4607, 0
        %v4615 = vsel %vm3446, %v4608, 0
        %v4618 = vsel %vm3446, %v4609, 0
        %v4621 = vsel %vm3446, %v4610, 0
        %4623 = vmatprep.subr.bf16.mxu0 0
        %4624 = vmatpush1.bf16.msra.mxu0 0
        %4625 = vmatprep.subr.bf16.mxu0 0
        %4626 = vmatpush1.bf16.msra.mxu0 0
        %4627 = vmatprep.subr.bf16.mxu0 0
        %4628 = vmatpush1.bf16.msra.mxu0 0
        %4629 = vmatprep.subr.bf16.mxu0 0
        %4630 = vmatpush1.bf16.msra.mxu0 0
        %4631 = vmatprep.subr.bf16.mxu0 0
        %4632 = vmatpush1.bf16.msra.mxu0 %v3371
        %4633 = vmatprep.subr.bf16.mxu0 0
        %4634 = vmatpush1.bf16.msra.mxu0 %v3359
        %4635 = vmatprep.subr.bf16.mxu0 0
        %4636 = vmatpush1.bf16.msra.mxu0 %v3347
        %4637 = vmatprep.subr.bf16.mxu0 0
        %4638 = vmatpush1.bf16.msra.mxu0 %v3335
        %4639 = vmatprep.subr.bf16.mxu0 0
        %4640 = vmatpush2.bf16.msra.mxu0 0
        %4641 = vmatprep.subr.bf16.mxu0 0
        %4642 = vmatpush2.bf16.msra.mxu0 0
        %4643 = vmatprep.subr.bf16.mxu0 0
        %4644 = vmatpush2.bf16.msra.mxu0 0
        %4645 = vmatprep.subr.bf16.mxu0 0
        %4646 = vmatpush2.bf16.msra.mxu0 0
        %4647 = vmatprep.subr.bf16.mxu0 0
        %4648 = vmatpush2.bf16.msra.mxu0 0
        %4649 = vmatprep.subr.bf16.mxu0 0
        %4650 = vmatpush2.bf16.msra.mxu0 0
        %4651 = vmatprep.subr.bf16.mxu0 0
        %4652 = vmatpush2.bf16.msra.mxu0 0
        %4653 = vmatprep.subr.bf16.mxu0 0
        %4654 = vmatpush2.bf16.msra.mxu0 0
        %4655 = vmatprep.mubr.bf16.mxu0 0
        %4656 = vmatmul.mubr.bf16.gmra.mxu0 %v4612
        %v4657 = vpop.f32.mrf.mxu0
        %v4658 = vadd.f32 0.0, %v4657
        %v4659 = vpop.f32.mrf.mxu0
        %v4660 = vpop.f32.mrf.mxu0
        %v4661 = vadd.f32 0.0, %v4660
        %v4662 = vpop.f32.mrf.mxu0
        %4663 = vmatprep.mubr.bf16.mxu0 0
        %4664 = vmatmul.mubr.bf16.gmra.mxu0 %v4615
        %v4665 = vpop.f32.mrf.mxu0
        %v4666 = vadd.f32 0.0, %v4665
        %v4667 = vpop.f32.mrf.mxu0
        %v4668 = vpop.f32.mrf.mxu0
        %v4669 = vadd.f32 0.0, %v4668
        %v4670 = vpop.f32.mrf.mxu0
        %4671 = vmatprep.mubr.bf16.mxu0 0
        %4672 = vmatmul.mubr.bf16.gmra.mxu0 %v4618
        %v4673 = vpop.f32.mrf.mxu0
        %v4674 = vadd.f32 0.0, %v4673
        %v4675 = vpop.f32.mrf.mxu0
        %v4676 = vpop.f32.mrf.mxu0
        %v4677 = vadd.f32 0.0, %v4676
        %v4678 = vpop.f32.mrf.mxu0
        %4679 = vmatprep.mubr.bf16.mxu0 0
        %4680 = vmatmul.mubr.bf16.gmra.mxu0 %v4621
        %v4681 = vpop.f32.mrf.mxu0
        %v4682 = vadd.f32 0.0, %v4681
        %v4683 = vpop.f32.mrf.mxu0
        %v4684 = vpop.f32.mrf.mxu0
        %v4685 = vadd.f32 0.0, %v4684
        %v4686 = vpop.f32.mrf.mxu0
        %4687 = vdwg.mxu0
        %v4688 = vrcp.pop %v4585
        %v4689 = vrcp.pop %v4588
        %v4690 = vrcp.pop %v4591
        %v4691 = vrcp.pop %v4594
        %v4692 = vrcp.pop %v4597
        %v4693 = vrcp.pop %v4600
        %v4694 = vrcp.pop %v4603
        %v4695 = vrcp.pop %v4606
        %v4696 = vmul.f32 %v4658, %v4688
        %v4697 = vmul.f32 %v4661, %v4689
        %v4698 = vmul.f32 %v4666, %v4690
        %v4699 = vmul.f32 %v4669, %v4691
        %v4700 = vmul.f32 %v4674, %v4692
        %v4701 = vmul.f32 %v4677, %v4693
        %v4702 = vmul.f32 %v4682, %v4694
        %v4703 = vmul.f32 %v4685, %v4695
        %v4704 = vpack.c.bf16 %v4697, %v4696
        %v4705 = vpack.c.bf16 %v4699, %v4698
        %v4706 = vpack.c.bf16 %v4701, %v4700
        %v4707 = vpack.c.bf16 %v4703, %v4702
        %v4708 = vld [vmem:[#allocation8 + $0x180] sm:$0xff]
        %v4709 = vld [vmem:[#allocation8 + $0x188] sm:$0xf]
        %v4710 = vld [vmem:[#allocation8 + $0x18c] sm:$0xff]
        %v4711 = vld [vmem:[#allocation8 + $0x194] sm:$0xf]
        %v4712 = vld [vmem:[#allocation8 + $0x198] sm:$0xff]
        %v4713 = vld [vmem:[#allocation8 + $0x1a0] sm:$0xf]
        %v4714 = vld [vmem:[#allocation8 + $0x1a4] sm:$0xff]
        %v4715 = vld [vmem:[#allocation8 + $0x1ac] sm:$0xf]
        %v4716 = vld [vmem:[#allocation8 + $0x1b0] sm:$0xff]
        %v4717 = vld [vmem:[#allocation8 + $0x1b8] sm:$0xf]
        %v4718 = vld [vmem:[#allocation8 + $0x1bc] sm:$0xff]
        %v4719 = vld [vmem:[#allocation8 + $0x1c4] sm:$0xf]
        %v4720 = vld [vmem:[#allocation8 + $0x1c8] sm:$0xff]
        %v4721 = vld [vmem:[#allocation8 + $0x1d0] sm:$0xf]
        %v4722 = vld [vmem:[#allocation8 + $0x1d4] sm:$0xff]
        %v4723 = vld [vmem:[#allocation8 + $0x1dc] sm:$0xf]
        %v4724 = vld [vmem:[#allocation8 + $0x1e0] sm:$0xff]
        %v4725 = vld [vmem:[#allocation8 + $0x1e8] sm:$0xf]
        %v4726 = vld [vmem:[#allocation8 + $0x1ec] sm:$0xff]
        %v4727 = vld [vmem:[#allocation8 + $0x1f4] sm:$0xf]
        %v4728 = vld [vmem:[#allocation8 + $0x1f8] sm:$0xff]
        %v4729 = vld [vmem:[#allocation8 + $0x200] sm:$0xf]
        %v4730 = vld [vmem:[#allocation8 + $0x204] sm:$0xff]
        %v4731 = vld [vmem:[#allocation8 + $0x20c] sm:$0xf]
        %v4732 = vld [vmem:[#allocation8 + $0x210] sm:$0xff]
        %v4733 = vld [vmem:[#allocation8 + $0x218] sm:$0xf]
        %v4734 = vld [vmem:[#allocation8 + $0x21c] sm:$0xff]
        %v4735 = vld [vmem:[#allocation8 + $0x224] sm:$0xf]
        %v4736 = vld [vmem:[#allocation8 + $0x228] sm:$0xff]
        %v4737 = vld [vmem:[#allocation8 + $0x230] sm:$0xf]
        %v4738 = vld [vmem:[#allocation8 + $0x234] sm:$0xff]
        %v4739 = vld [vmem:[#allocation8 + $0x23c] sm:$0xf]
        %v4772 = vunpack.c.l.b16 %v4708
        %v4773 = vunpack.c.h.b16 %v4708
        %v4774 = vunpack.c.l.b16 %v4709
        %v4775 = vunpack.c.l.b16 %v4710
        %v4776 = vunpack.c.h.b16 %v4710
        %v4777 = vunpack.c.l.b16 %v4711
        %v4778 = vunpack.c.l.b16 %v4712
        %v4779 = vunpack.c.h.b16 %v4712
        %v4780 = vunpack.c.l.b16 %v4713
        %v4781 = vunpack.c.l.b16 %v4714
        %v4782 = vunpack.c.h.b16 %v4714
        %v4783 = vunpack.c.l.b16 %v4715
        %v4784 = vunpack.c.l.b16 %v4716
        %v4785 = vunpack.c.h.b16 %v4716
        %v4786 = vunpack.c.l.b16 %v4717
        %v4787 = vunpack.c.l.b16 %v4718
        %v4788 = vunpack.c.h.b16 %v4718
        %v4789 = vunpack.c.l.b16 %v4719
        %v4790 = vunpack.c.l.b16 %v4720
        %v4791 = vunpack.c.h.b16 %v4720
        %v4792 = vunpack.c.l.b16 %v4721
        %v4793 = vunpack.c.l.b16 %v4722
        %v4794 = vunpack.c.h.b16 %v4722
        %v4795 = vunpack.c.l.b16 %v4723
        %v4796 = vunpack.c.l.b16 %v4724
        %v4797 = vunpack.c.h.b16 %v4724
        %v4798 = vunpack.c.l.b16 %v4725
        %v4799 = vunpack.c.l.b16 %v4726
        %v4800 = vunpack.c.h.b16 %v4726
        %v4801 = vunpack.c.l.b16 %v4727
        %v4802 = vunpack.c.l.b16 %v4728
        %v4803 = vunpack.c.h.b16 %v4728
        %v4804 = vunpack.c.l.b16 %v4729
        %v4805 = vunpack.c.l.b16 %v4730
        %v4806 = vunpack.c.h.b16 %v4730
        %v4807 = vunpack.c.l.b16 %v4731
        %v4808 = vunpack.c.l.b16 %v4732
        %v4809 = vunpack.c.h.b16 %v4732
        %v4810 = vunpack.c.l.b16 %v4733
        %v4811 = vunpack.c.l.b16 %v4734
        %v4812 = vunpack.c.h.b16 %v4734
        %v4813 = vunpack.c.l.b16 %v4735
        %v4814 = vunpack.c.l.b16 %v4736
        %v4815 = vunpack.c.h.b16 %v4736
        %v4816 = vunpack.c.l.b16 %v4737
        %v4817 = vunpack.c.l.b16 %v4738
        %v4818 = vunpack.c.h.b16 %v4738
        %v4819 = vunpack.c.l.b16 %v4739
        %v4820 = vpack.c.b16 %v4775, %v4772
        %v4821 = vpack.c.b16 %v4776, %v4773
        %v4822 = vpack.c.b16 %v4777, %v4774
        %v4823 = vpack.c.b16 %v4781, %v4778
        %v4824 = vpack.c.b16 %v4782, %v4779
        %v4825 = vpack.c.b16 %v4783, %v4780
        %v4826 = vpack.c.b16 %v4787, %v4784
        %v4827 = vpack.c.b16 %v4788, %v4785
        %v4828 = vpack.c.b16 %v4789, %v4786
        %v4829 = vpack.c.b16 %v4793, %v4790
        %v4830 = vpack.c.b16 %v4794, %v4791
        %v4831 = vpack.c.b16 %v4795, %v4792
        %v4832 = vpack.c.b16 %v4799, %v4796
        %v4833 = vpack.c.b16 %v4800, %v4797
        %v4834 = vpack.c.b16 %v4801, %v4798
        %v4835 = vpack.c.b16 %v4805, %v4802
        %v4836 = vpack.c.b16 %v4806, %v4803
        %v4837 = vpack.c.b16 %v4807, %v4804
        %v4838 = vpack.c.b16 %v4811, %v4808
        %v4839 = vpack.c.b16 %v4812, %v4809
        %v4840 = vpack.c.b16 %v4813, %v4810
        %v4841 = vpack.c.b16 %v4817, %v4814
        %v4842 = vpack.c.b16 %v4818, %v4815
        %v4843 = vpack.c.b16 %v4819, %v4816
        %4868 = vmatprep.subr.bf16.mxu0 %v4842
        %4869 = vmatpush1.bf16.msra.mxu0 %v4841
        %4870 = vmatprep.subr.bf16.mxu0 %v4839
        %4871 = vmatpush1.bf16.msra.mxu0 %v4838
        %4872 = vmatprep.subr.bf16.mxu0 %v4836
        %4873 = vmatpush1.bf16.msra.mxu0 %v4835
        %4874 = vmatprep.subr.bf16.mxu0 %v4833
        %4875 = vmatpush1.bf16.msra.mxu0 %v4832
        %4876 = vmatprep.subr.bf16.mxu0 %v4830
        %4877 = vmatpush1.bf16.msra.mxu0 %v4829
        %4878 = vmatprep.subr.bf16.mxu0 %v4827
        %4879 = vmatpush1.bf16.msra.mxu0 %v4826
        %4880 = vmatprep.subr.bf16.mxu0 %v4824
        %4881 = vmatpush1.bf16.msra.mxu0 %v4823
        %4882 = vmatprep.subr.bf16.mxu0 %v4821
        %4883 = vmatpush1.bf16.msra.mxu0 %v4820
        %4884 = vmatprep.subr.bf16.mxu0 0
        %4885 = vmatpush2.bf16.msra.mxu0 0
        %4886 = vmatprep.subr.bf16.mxu0 0
        %4887 = vmatpush2.bf16.msra.mxu0 0
        %4888 = vmatprep.subr.bf16.mxu0 0
        %4889 = vmatpush2.bf16.msra.mxu0 0
        %4890 = vmatprep.subr.bf16.mxu0 0
        %4891 = vmatpush2.bf16.msra.mxu0 0
        %4892 = vmatprep.subr.bf16.mxu0 0
        %4893 = vmatpush2.bf16.msra.mxu0 0
        %4894 = vmatprep.subr.bf16.mxu0 0
        %4895 = vmatpush2.bf16.msra.mxu0 0
        %4896 = vmatprep.subr.bf16.mxu0 0
        %4897 = vmatpush2.bf16.msra.mxu0 0
        %4898 = vmatprep.subr.bf16.mxu0 0
        %4899 = vmatpush2.bf16.msra.mxu0 0
        %4900 = vmatprep.mubr.bf16.mxu0 0
        %4901 = vmatmul.mubr.bf16.gmra.mxu0 %v4704
        %v4902 = vpop.f32.mrf.mxu0
        %v4903 = vadd.f32 0.0, %v4902
        %v4904 = vpop.f32.mrf.mxu0
        %v4905 = vadd.f32 0.0, %v4904
        %v4906 = vpop.f32.mrf.mxu0
        %v4907 = vadd.f32 0.0, %v4906
        %v4908 = vpop.f32.mrf.mxu0
        %v4909 = vadd.f32 0.0, %v4908
        %4910 = vmatprep.mubr.bf16.mxu0 0
        %4911 = vmatmul.mubr.bf16.gmra.mxu0 %v4705
        %v4912 = vpop.f32.mrf.mxu0
        %v4913 = vadd.f32 0.0, %v4912
        %v4914 = vpop.f32.mrf.mxu0
        %v4915 = vadd.f32 0.0, %v4914
        %v4916 = vpop.f32.mrf.mxu0
        %v4917 = vadd.f32 0.0, %v4916
        %v4918 = vpop.f32.mrf.mxu0
        %v4919 = vadd.f32 0.0, %v4918
        %4920 = vmatprep.mubr.bf16.mxu0 0
        %4921 = vmatmul.mubr.bf16.gmra.mxu0 %v4706
        %v4922 = vpop.f32.mrf.mxu0
        %v4923 = vadd.f32 0.0, %v4922
        %v4924 = vpop.f32.mrf.mxu0
        %v4925 = vadd.f32 0.0, %v4924
        %v4926 = vpop.f32.mrf.mxu0
        %v4927 = vadd.f32 0.0, %v4926
        %v4928 = vpop.f32.mrf.mxu0
        %v4929 = vadd.f32 0.0, %v4928
        %4930 = vmatprep.mubr.bf16.mxu0 0
        %4931 = vmatmul.mubr.bf16.gmra.mxu0 %v4707
        %v4932 = vpop.f32.mrf.mxu0
        %v4933 = vadd.f32 0.0, %v4932
        %v4934 = vpop.f32.mrf.mxu0
        %v4935 = vadd.f32 0.0, %v4934
        %v4936 = vpop.f32.mrf.mxu0
        %v4937 = vadd.f32 0.0, %v4936
        %v4938 = vpop.f32.mrf.mxu0
        %v4939 = vadd.f32 0.0, %v4938
        %4940 = vdwg.mxu0
        %4941 = vmatprep.subr.bf16.mxu0 0
        %4942 = vmatpush1.bf16.msra.mxu0 %v4843
        %4943 = vmatprep.subr.bf16.mxu0 0
        %4944 = vmatpush1.bf16.msra.mxu0 %v4840
        %4945 = vmatprep.subr.bf16.mxu0 0
        %4946 = vmatpush1.bf16.msra.mxu0 %v4837
        %4947 = vmatprep.subr.bf16.mxu0 0
        %4948 = vmatpush1.bf16.msra.mxu0 %v4834
        %4949 = vmatprep.subr.bf16.mxu0 0
        %4950 = vmatpush1.bf16.msra.mxu0 %v4831
        %4951 = vmatprep.subr.bf16.mxu0 0
        %4952 = vmatpush1.bf16.msra.mxu0 %v4828
        %4953 = vmatprep.subr.bf16.mxu0 0
        %4954 = vmatpush1.bf16.msra.mxu0 %v4825
        %4955 = vmatprep.subr.bf16.mxu0 0
        %4956 = vmatpush1.bf16.msra.mxu0 %v4822
        %4957 = vmatprep.subr.bf16.mxu0 0
        %4958 = vmatpush2.bf16.msra.mxu0 0
        %4959 = vmatprep.subr.bf16.mxu0 0
        %4960 = vmatpush2.bf16.msra.mxu0 0
        %4961 = vmatprep.subr.bf16.mxu0 0
        %4962 = vmatpush2.bf16.msra.mxu0 0
        %4963 = vmatprep.subr.bf16.mxu0 0
        %4964 = vmatpush2.bf16.msra.mxu0 0
        %4965 = vmatprep.subr.bf16.mxu0 0
        %4966 = vmatpush2.bf16.msra.mxu0 0
        %4967 = vmatprep.subr.bf16.mxu0 0
        %4968 = vmatpush2.bf16.msra.mxu0 0
        %4969 = vmatprep.subr.bf16.mxu0 0
        %4970 = vmatpush2.bf16.msra.mxu0 0
        %4971 = vmatprep.subr.bf16.mxu0 0
        %4972 = vmatpush2.bf16.msra.mxu0 0
        %4973 = vmatprep.mubr.bf16.mxu0 0
        %4974 = vmatmul.mubr.bf16.gmra.mxu0 %v4704
        %v4975 = vpop.f32.mrf.mxu0
        %v4976 = vadd.f32 0.0, %v4975
        %v4977 = vpop.f32.mrf.mxu0
        %v4978 = vpop.f32.mrf.mxu0
        %v4979 = vadd.f32 0.0, %v4978
        %v4980 = vpop.f32.mrf.mxu0
        %4981 = vmatprep.mubr.bf16.mxu0 0
        %4982 = vmatmul.mubr.bf16.gmra.mxu0 %v4705
        %v4983 = vpop.f32.mrf.mxu0
        %v4984 = vadd.f32 0.0, %v4983
        %v4985 = vpop.f32.mrf.mxu0
        %v4986 = vpop.f32.mrf.mxu0
        %v4987 = vadd.f32 0.0, %v4986
        %v4988 = vpop.f32.mrf.mxu0
        %4989 = vmatprep.mubr.bf16.mxu0 0
        %4990 = vmatmul.mubr.bf16.gmra.mxu0 %v4706
        %v4991 = vpop.f32.mrf.mxu0
        %v4992 = vadd.f32 0.0, %v4991
        %v4993 = vpop.f32.mrf.mxu0
        %v4994 = vpop.f32.mrf.mxu0
        %v4995 = vadd.f32 0.0, %v4994
        %v4996 = vpop.f32.mrf.mxu0
        %4997 = vmatprep.mubr.bf16.mxu0 0
        %4998 = vmatmul.mubr.bf16.gmra.mxu0 %v4707
        %v4999 = vpop.f32.mrf.mxu0
        %v5000 = vadd.f32 0.0, %v4999
        %v5001 = vpop.f32.mrf.mxu0
        %v5002 = vpop.f32.mrf.mxu0
        %v5003 = vadd.f32 0.0, %v5002
        %v5004 = vpop.f32.mrf.mxu0
        %5005 = vdwg.mxu0
        %v5006 = vadd.f32 %v4359, %v4903
        %v5007 = vadd.f32 %v4361, %v4905
        %v5008 = vadd.f32 %v4432, %v4976
        %v5009 = vadd.f32 %v4363, %v4907
        %v5010 = vadd.f32 %v4365, %v4909
        %v5011 = vadd.f32 %v4435, %v4979
        %v5012 = vadd.f32 %v4369, %v4913
        %v5013 = vadd.f32 %v4371, %v4915
        %v5014 = vadd.f32 %v4440, %v4984
        %v5015 = vadd.f32 %v4373, %v4917
        %v5016 = vadd.f32 %v4375, %v4919
        %v5017 = vadd.f32 %v4443, %v4987
        %v5018 = vadd.f32 %v4379, %v4923
        %v5019 = vadd.f32 %v4381, %v4925
        %v5020 = vadd.f32 %v4448, %v4992
        %v5021 = vadd.f32 %v4383, %v4927
        %v5022 = vadd.f32 %v4385, %v4929
        %v5023 = vadd.f32 %v4451, %v4995
        %v5024 = vadd.f32 %v4389, %v4933
        %v5025 = vadd.f32 %v4391, %v4935
        %v5026 = vadd.f32 %v4456, %v5000
        %v5027 = vadd.f32 %v4393, %v4937
        %v5028 = vadd.f32 %v4395, %v4939
        %v5029 = vadd.f32 %v4459, %v5003
        %5030 = vmatprep.subr.bf16.mxu0 0
        %5031 = vmatpush1.bf16.xpose.msra.mxu0 0
        %5032 = vmatprep.subr.bf16.mxu0 0
        %5033 = vmatpush1.bf16.xpose.msra.mxu0 0
        %5034 = vmatprep.subr.bf16.mxu0 0
        %5035 = vmatpush1.bf16.xpose.msra.mxu0 0
        %5036 = vmatprep.subr.bf16.mxu0 0
        %5037 = vmatpush1.bf16.xpose.msra.mxu0 0
        %5038 = vmatprep.subr.bf16.mxu0 0
        %5039 = vmatpush1.bf16.xpose.msra.mxu0 %v3368
        %5040 = vmatprep.subr.bf16.mxu0 0
        %5041 = vmatpush1.bf16.xpose.msra.mxu0 %v3356
        %5042 = vmatprep.subr.bf16.mxu0 0
        %5043 = vmatpush1.bf16.xpose.msra.mxu0 %v3344
        %5044 = vmatprep.subr.bf16.mxu0 0
        %5045 = vmatpush1.bf16.xpose.msra.mxu0 %v3332
        %5046 = vmatprep.subr.bf16.mxu0 0
        %5047 = vmatpush2.bf16.xpose.msra.mxu0 0
        %5048 = vmatprep.subr.bf16.mxu0 0
        %5049 = vmatpush2.bf16.xpose.msra.mxu0 0
        %5050 = vmatprep.subr.bf16.mxu0 0
        %5051 = vmatpush2.bf16.xpose.msra.mxu0 0
        %5052 = vmatprep.subr.bf16.mxu0 0
        %5053 = vmatpush2.bf16.xpose.msra.mxu0 0
        %5054 = vmatprep.subr.bf16.mxu0 0
        %5055 = vmatpush2.bf16.xpose.msra.mxu0 0
        %5056 = vmatprep.subr.bf16.mxu0 0
        %5057 = vmatpush2.bf16.xpose.msra.mxu0 0
        %5058 = vmatprep.subr.bf16.mxu0 0
        %5059 = vmatpush2.bf16.xpose.msra.mxu0 0
        %5060 = vmatprep.subr.bf16.mxu0 0
        %5061 = vmatpush2.bf16.xpose.msra.mxu0 0
        %5062 = vmatprep.mubr.bf16.mxu0 0
        %5063 = vmatmul.mubr.bf16.gmra.mxu0 %v3328
        %v5064 = vpop.f32.mrf.mxu0
        %v5065 = vadd.f32 0.0, %v5064
        %v5066 = vpop.f32.mrf.mxu0
        %v5067 = vpop.f32.mrf.mxu0
        %v5068 = vadd.f32 0.0, %v5067
        %v5069 = vpop.f32.mrf.mxu0
        %5070 = vmatprep.mubr.bf16.mxu0 0
        %5071 = vmatmul.mubr.bf16.gmra.mxu0 %v3340
        %v5072 = vpop.f32.mrf.mxu0
        %v5073 = vadd.f32 0.0, %v5072
        %v5074 = vpop.f32.mrf.mxu0
        %v5075 = vpop.f32.mrf.mxu0
        %v5076 = vadd.f32 0.0, %v5075
        %v5077 = vpop.f32.mrf.mxu0
        %5078 = vmatprep.mubr.bf16.mxu0 0
        %5079 = vmatmul.mubr.bf16.gmra.mxu0 %v3352
        %v5080 = vpop.f32.mrf.mxu0
        %v5081 = vadd.f32 0.0, %v5080
        %v5082 = vpop.f32.mrf.mxu0
        %v5083 = vpop.f32.mrf.mxu0
        %v5084 = vadd.f32 0.0, %v5083
        %v5085 = vpop.f32.mrf.mxu0
        %5086 = vmatprep.mubr.bf16.mxu0 0
        %5087 = vmatmul.mubr.bf16.gmra.mxu0 %v3364
        %v5088 = vpop.f32.mrf.mxu0
        %v5089 = vadd.f32 0.0, %v5088
        %v5090 = vpop.f32.mrf.mxu0
        %v5091 = vpop.f32.mrf.mxu0
        %v5092 = vadd.f32 0.0, %v5091
        %v5093 = vpop.f32.mrf.mxu0
        %5094 = vdwg.mxu0
        %v5095 = vmul.f32 %v5065, 0.10206208
        %v5096 = vmul.f32 %v5068, 0.10206208
        %v5097 = vmul.f32 %v5073, 0.10206208
        %v5098 = vmul.f32 %v5076, 0.10206208
        %v5099 = vmul.f32 %v5081, 0.10206208
        %v5100 = vmul.f32 %v5084, 0.10206208
        %v5101 = vmul.f32 %v5089, 0.10206208
        %v5102 = vmul.f32 %v5092, 0.10206208
        %v5103 = vsel %vm3446, %v5095, -inf
        %5104 = vmax.xlane.f32.xlu0 %v5103
        %v5105 = vpop.xlane.xlu0 %5104
        %v5106 = vsel %vm3446, %v5096, -inf
        %5107 = vmax.xlane.f32.xlu0 %v5106
        %v5108 = vpop.xlane.xlu0 %5107
        %v5109 = vsel %vm3446, %v5097, -inf
        %5110 = vmax.xlane.f32.xlu0 %v5109
        %v5111 = vpop.xlane.xlu0 %5110
        %v5112 = vsel %vm3446, %v5098, -inf
        %5113 = vmax.xlane.f32.xlu0 %v5112
        %v5114 = vpop.xlane.xlu0 %5113
        %v5115 = vsel %vm3446, %v5099, -inf
        %5116 = vmax.xlane.f32.xlu0 %v5115
        %v5117 = vpop.xlane.xlu0 %5116
        %v5118 = vsel %vm3446, %v5100, -inf
        %5119 = vmax.xlane.f32.xlu0 %v5118
        %v5120 = vpop.xlane.xlu0 %5119
        %v5121 = vsel %vm3446, %v5101, -inf
        %5122 = vmax.xlane.f32.xlu0 %v5121
        %v5123 = vpop.xlane.xlu0 %5122
        %v5124 = vsel %vm3446, %v5102, -inf
        %5125 = vmax.xlane.f32.xlu0 %v5124
        %v5126 = vpop.xlane.xlu0 %5125
        %v5127 = vsub.f32 %v5095, %v5105
        %v5128 = vsub.f32 %v5096, %v5108
        %v5129 = vsub.f32 %v5097, %v5111
        %v5130 = vsub.f32 %v5098, %v5114
        %v5131 = vsub.f32 %v5099, %v5117
        %v5132 = vsub.f32 %v5100, %v5120
        %v5133 = vsub.f32 %v5101, %v5123
        %v5134 = vsub.f32 %v5102, %v5126
        %v5135 = vmul.f32 %v5127, 1.442695
        %v5136 = vpow.pop %v5135
        %v5137 = vmul.f32 %v5128, 1.442695
        %v5138 = vpow.pop %v5137
        %v5139 = vmul.f32 %v5129, 1.442695
        %v5140 = vpow.pop %v5139
        %v5141 = vmul.f32 %v5130, 1.442695
        %v5142 = vpow.pop %v5141
        %v5143 = vmul.f32 %v5131, 1.442695
        %v5144 = vpow.pop %v5143
        %v5145 = vmul.f32 %v5132, 1.442695
        %v5146 = vpow.pop %v5145
        %v5147 = vmul.f32 %v5133, 1.442695
        %v5148 = vpow.pop %v5147
        %v5149 = vmul.f32 %v5134, 1.442695
        %v5150 = vpow.pop %v5149
        %v5151 = vsel %vm3446, %v5136, 0.0
        %5152 = vadd.xlane.f32.xlu0 %v5151
        %v5153 = vpop.xlane.xlu0 %5152
        %v5154 = vsel %vm3446, %v5138, 0.0
        %5155 = vadd.xlane.f32.xlu0 %v5154
        %v5156 = vpop.xlane.xlu0 %5155
        %v5157 = vsel %vm3446, %v5140, 0.0
        %5158 = vadd.xlane.f32.xlu0 %v5157
        %v5159 = vpop.xlane.xlu0 %5158
        %v5160 = vsel %vm3446, %v5142, 0.0
        %5161 = vadd.xlane.f32.xlu0 %v5160
        %v5162 = vpop.xlane.xlu0 %5161
        %v5163 = vsel %vm3446, %v5144, 0.0
        %5164 = vadd.xlane.f32.xlu0 %v5163
        %v5165 = vpop.xlane.xlu0 %5164
        %v5166 = vsel %vm3446, %v5146, 0.0
        %5167 = vadd.xlane.f32.xlu0 %v5166
        %v5168 = vpop.xlane.xlu0 %5167
        %v5169 = vsel %vm3446, %v5148, 0.0
        %5170 = vadd.xlane.f32.xlu0 %v5169
        %v5171 = vpop.xlane.xlu0 %5170
        %v5172 = vsel %vm3446, %v5150, 0.0
        %5173 = vadd.xlane.f32.xlu0 %v5172
        %v5174 = vpop.xlane.xlu0 %5173
        %v5175 = vpack.c.bf16 %v5138, %v5136
        %v5176 = vpack.c.bf16 %v5142, %v5140
        %v5177 = vpack.c.bf16 %v5146, %v5144
        %v5178 = vpack.c.bf16 %v5150, %v5148
        %v5180 = vsel %vm3446, %v5175, 0
        %v5183 = vsel %vm3446, %v5176, 0
        %v5186 = vsel %vm3446, %v5177, 0
        %v5189 = vsel %vm3446, %v5178, 0
        %5191 = vmatprep.subr.bf16.mxu0 0
        %5192 = vmatpush1.bf16.msra.mxu0 0
        %5193 = vmatprep.subr.bf16.mxu0 0
        %5194 = vmatpush1.bf16.msra.mxu0 0
        %5195 = vmatprep.subr.bf16.mxu0 0
        %5196 = vmatpush1.bf16.msra.mxu0 0
        %5197 = vmatprep.subr.bf16.mxu0 0
        %5198 = vmatpush1.bf16.msra.mxu0 0
        %5199 = vmatprep.subr.bf16.mxu0 0
        %5200 = vmatpush1.bf16.msra.mxu0 %v3372
        %5201 = vmatprep.subr.bf16.mxu0 0
        %5202 = vmatpush1.bf16.msra.mxu0 %v3360
        %5203 = vmatprep.subr.bf16.mxu0 0
        %5204 = vmatpush1.bf16.msra.mxu0 %v3348
        %5205 = vmatprep.subr.bf16.mxu0 0
        %5206 = vmatpush1.bf16.msra.mxu0 %v3336
        %5207 = vmatprep.subr.bf16.mxu0 0
        %5208 = vmatpush2.bf16.msra.mxu0 0
        %5209 = vmatprep.subr.bf16.mxu0 0
        %5210 = vmatpush2.bf16.msra.mxu0 0
        %5211 = vmatprep.subr.bf16.mxu0 0
        %5212 = vmatpush2.bf16.msra.mxu0 0
        %5213 = vmatprep.subr.bf16.mxu0 0
        %5214 = vmatpush2.bf16.msra.mxu0 0
        %5215 = vmatprep.subr.bf16.mxu0 0
        %5216 = vmatpush2.bf16.msra.mxu0 0
        %5217 = vmatprep.subr.bf16.mxu0 0
        %5218 = vmatpush2.bf16.msra.mxu0 0
        %5219 = vmatprep.subr.bf16.mxu0 0
        %5220 = vmatpush2.bf16.msra.mxu0 0
        %5221 = vmatprep.subr.bf16.mxu0 0
        %5222 = vmatpush2.bf16.msra.mxu0 0
        %5223 = vmatprep.mubr.bf16.mxu0 0
        %5224 = vmatmul.mubr.bf16.gmra.mxu0 %v5180
        %v5225 = vpop.f32.mrf.mxu0
        %v5226 = vadd.f32 0.0, %v5225
        %v5227 = vpop.f32.mrf.mxu0
        %v5228 = vpop.f32.mrf.mxu0
        %v5229 = vadd.f32 0.0, %v5228
        %v5230 = vpop.f32.mrf.mxu0
        %5231 = vmatprep.mubr.bf16.mxu0 0
        %5232 = vmatmul.mubr.bf16.gmra.mxu0 %v5183
        %v5233 = vpop.f32.mrf.mxu0
        %v5234 = vadd.f32 0.0, %v5233
        %v5235 = vpop.f32.mrf.mxu0
        %v5236 = vpop.f32.mrf.mxu0
        %v5237 = vadd.f32 0.0, %v5236
        %v5238 = vpop.f32.mrf.mxu0
        %5239 = vmatprep.mubr.bf16.mxu0 0
        %5240 = vmatmul.mubr.bf16.gmra.mxu0 %v5186
        %v5241 = vpop.f32.mrf.mxu0
        %v5242 = vadd.f32 0.0, %v5241
        %v5243 = vpop.f32.mrf.mxu0
        %v5244 = vpop.f32.mrf.mxu0
        %v5245 = vadd.f32 0.0, %v5244
        %v5246 = vpop.f32.mrf.mxu0
        %5247 = vmatprep.mubr.bf16.mxu0 0
        %5248 = vmatmul.mubr.bf16.gmra.mxu0 %v5189
        %v5249 = vpop.f32.mrf.mxu0
        %v5250 = vadd.f32 0.0, %v5249
        %v5251 = vpop.f32.mrf.mxu0
        %v5252 = vpop.f32.mrf.mxu0
        %v5253 = vadd.f32 0.0, %v5252
        %v5254 = vpop.f32.mrf.mxu0
        %5255 = vdwg.mxu0
        %v5256 = vrcp.pop %v5153
        %v5257 = vrcp.pop %v5156
        %v5258 = vrcp.pop %v5159
        %v5259 = vrcp.pop %v5162
        %v5260 = vrcp.pop %v5165
        %v5261 = vrcp.pop %v5168
        %v5262 = vrcp.pop %v5171
        %v5263 = vrcp.pop %v5174
        %v5264 = vmul.f32 %v5226, %v5256
        %v5265 = vmul.f32 %v5229, %v5257
        %v5266 = vmul.f32 %v5234, %v5258
        %v5267 = vmul.f32 %v5237, %v5259
        %v5268 = vmul.f32 %v5242, %v5260
        %v5269 = vmul.f32 %v5245, %v5261
        %v5270 = vmul.f32 %v5250, %v5262
        %v5271 = vmul.f32 %v5253, %v5263
        %v5272 = vpack.c.bf16 %v5265, %v5264
        %v5273 = vpack.c.bf16 %v5267, %v5266
        %v5274 = vpack.c.bf16 %v5269, %v5268
        %v5275 = vpack.c.bf16 %v5271, %v5270
        %v5276 = vld [vmem:[#allocation8 + $0x240] sm:$0xff]
        %v5277 = vld [vmem:[#allocation8 + $0x248] sm:$0xf]
        %v5278 = vld [vmem:[#allocation8 + $0x24c] sm:$0xff]
        %v5279 = vld [vmem:[#allocation8 + $0x254] sm:$0xf]
        %v5280 = vld [vmem:[#allocation8 + $0x258] sm:$0xff]
        %v5281 = vld [vmem:[#allocation8 + $0x260] sm:$0xf]
        %v5282 = vld [vmem:[#allocation8 + $0x264] sm:$0xff]
        %v5283 = vld [vmem:[#allocation8 + $0x26c] sm:$0xf]
        %v5284 = vld [vmem:[#allocation8 + $0x270] sm:$0xff]
        %v5285 = vld [vmem:[#allocation8 + $0x278] sm:$0xf]
        %v5286 = vld [vmem:[#allocation8 + $0x27c] sm:$0xff]
        %v5287 = vld [vmem:[#allocation8 + $0x284] sm:$0xf]
        %v5288 = vld [vmem:[#allocation8 + $0x288] sm:$0xff]
        %v5289 = vld [vmem:[#allocation8 + $0x290] sm:$0xf]
        %v5290 = vld [vmem:[#allocation8 + $0x294] sm:$0xff]
        %v5291 = vld [vmem:[#allocation8 + $0x29c] sm:$0xf]
        %v5292 = vld [vmem:[#allocation8 + $0x2a0] sm:$0xff]
        %v5293 = vld [vmem:[#allocation8 + $0x2a8] sm:$0xf]
        %v5294 = vld [vmem:[#allocation8 + $0x2ac] sm:$0xff]
        %v5295 = vld [vmem:[#allocation8 + $0x2b4] sm:$0xf]
        %v5296 = vld [vmem:[#allocation8 + $0x2b8] sm:$0xff]
        %v5297 = vld [vmem:[#allocation8 + $0x2c0] sm:$0xf]
        %v5298 = vld [vmem:[#allocation8 + $0x2c4] sm:$0xff]
        %v5299 = vld [vmem:[#allocation8 + $0x2cc] sm:$0xf]
        %v5300 = vld [vmem:[#allocation8 + $0x2d0] sm:$0xff]
        %v5301 = vld [vmem:[#allocation8 + $0x2d8] sm:$0xf]
        %v5302 = vld [vmem:[#allocation8 + $0x2dc] sm:$0xff]
        %v5303 = vld [vmem:[#allocation8 + $0x2e4] sm:$0xf]
        %v5304 = vld [vmem:[#allocation8 + $0x2e8] sm:$0xff]
        %v5305 = vld [vmem:[#allocation8 + $0x2f0] sm:$0xf]
        %v5306 = vld [vmem:[#allocation8 + $0x2f4] sm:$0xff]
        %v5307 = vld [vmem:[#allocation8 + $0x2fc] sm:$0xf]
        %v5340 = vunpack.c.l.b16 %v5276
        %v5341 = vunpack.c.h.b16 %v5276
        %v5342 = vunpack.c.l.b16 %v5277
        %v5343 = vunpack.c.l.b16 %v5278
        %v5344 = vunpack.c.h.b16 %v5278
        %v5345 = vunpack.c.l.b16 %v5279
        %v5346 = vunpack.c.l.b16 %v5280
        %v5347 = vunpack.c.h.b16 %v5280
        %v5348 = vunpack.c.l.b16 %v5281
        %v5349 = vunpack.c.l.b16 %v5282
        %v5350 = vunpack.c.h.b16 %v5282
        %v5351 = vunpack.c.l.b16 %v5283
        %v5352 = vunpack.c.l.b16 %v5284
        %v5353 = vunpack.c.h.b16 %v5284
        %v5354 = vunpack.c.l.b16 %v5285
        %v5355 = vunpack.c.l.b16 %v5286
        %v5356 = vunpack.c.h.b16 %v5286
        %v5357 = vunpack.c.l.b16 %v5287
        %v5358 = vunpack.c.l.b16 %v5288
        %v5359 = vunpack.c.h.b16 %v5288
        %v5360 = vunpack.c.l.b16 %v5289
        %v5361 = vunpack.c.l.b16 %v5290
        %v5362 = vunpack.c.h.b16 %v5290
        %v5363 = vunpack.c.l.b16 %v5291
        %v5364 = vunpack.c.l.b16 %v5292
        %v5365 = vunpack.c.h.b16 %v5292
        %v5366 = vunpack.c.l.b16 %v5293
        %v5367 = vunpack.c.l.b16 %v5294
        %v5368 = vunpack.c.h.b16 %v5294
        %v5369 = vunpack.c.l.b16 %v5295
        %v5370 = vunpack.c.l.b16 %v5296
        %v5371 = vunpack.c.h.b16 %v5296
        %v5372 = vunpack.c.l.b16 %v5297
        %v5373 = vunpack.c.l.b16 %v5298
        %v5374 = vunpack.c.h.b16 %v5298
        %v5375 = vunpack.c.l.b16 %v5299
        %v5376 = vunpack.c.l.b16 %v5300
        %v5377 = vunpack.c.h.b16 %v5300
        %v5378 = vunpack.c.l.b16 %v5301
        %v5379 = vunpack.c.l.b16 %v5302
        %v5380 = vunpack.c.h.b16 %v5302
        %v5381 = vunpack.c.l.b16 %v5303
        %v5382 = vunpack.c.l.b16 %v5304
        %v5383 = vunpack.c.h.b16 %v5304
        %v5384 = vunpack.c.l.b16 %v5305
        %v5385 = vunpack.c.l.b16 %v5306
        %v5386 = vunpack.c.h.b16 %v5306
        %v5387 = vunpack.c.l.b16 %v5307
        %v5388 = vpack.c.b16 %v5343, %v5340
        %v5389 = vpack.c.b16 %v5344, %v5341
        %v5390 = vpack.c.b16 %v5345, %v5342
        %v5391 = vpack.c.b16 %v5349, %v5346
        %v5392 = vpack.c.b16 %v5350, %v5347
        %v5393 = vpack.c.b16 %v5351, %v5348
        %v5394 = vpack.c.b16 %v5355, %v5352
        %v5395 = vpack.c.b16 %v5356, %v5353
        %v5396 = vpack.c.b16 %v5357, %v5354
        %v5397 = vpack.c.b16 %v5361, %v5358
        %v5398 = vpack.c.b16 %v5362, %v5359
        %v5399 = vpack.c.b16 %v5363, %v5360
        %v5400 = vpack.c.b16 %v5367, %v5364
        %v5401 = vpack.c.b16 %v5368, %v5365
        %v5402 = vpack.c.b16 %v5369, %v5366
        %v5403 = vpack.c.b16 %v5373, %v5370
        %v5404 = vpack.c.b16 %v5374, %v5371
        %v5405 = vpack.c.b16 %v5375, %v5372
        %v5406 = vpack.c.b16 %v5379, %v5376
        %v5407 = vpack.c.b16 %v5380, %v5377
        %v5408 = vpack.c.b16 %v5381, %v5378
        %v5409 = vpack.c.b16 %v5385, %v5382
        %v5410 = vpack.c.b16 %v5386, %v5383
        %v5411 = vpack.c.b16 %v5387, %v5384
        %5436 = vmatprep.subr.bf16.mxu0 %v5410
        %5437 = vmatpush1.bf16.msra.mxu0 %v5409
        %5438 = vmatprep.subr.bf16.mxu0 %v5407
        %5439 = vmatpush1.bf16.msra.mxu0 %v5406
        %5440 = vmatprep.subr.bf16.mxu0 %v5404
        %5441 = vmatpush1.bf16.msra.mxu0 %v5403
        %5442 = vmatprep.subr.bf16.mxu0 %v5401
        %5443 = vmatpush1.bf16.msra.mxu0 %v5400
        %5444 = vmatprep.subr.bf16.mxu0 %v5398
        %5445 = vmatpush1.bf16.msra.mxu0 %v5397
        %5446 = vmatprep.subr.bf16.mxu0 %v5395
        %5447 = vmatpush1.bf16.msra.mxu0 %v5394
        %5448 = vmatprep.subr.bf16.mxu0 %v5392
        %5449 = vmatpush1.bf16.msra.mxu0 %v5391
        %5450 = vmatprep.subr.bf16.mxu0 %v5389
        %5451 = vmatpush1.bf16.msra.mxu0 %v5388
        %5452 = vmatprep.subr.bf16.mxu0 0
        %5453 = vmatpush2.bf16.msra.mxu0 0
        %5454 = vmatprep.subr.bf16.mxu0 0
        %5455 = vmatpush2.bf16.msra.mxu0 0
        %5456 = vmatprep.subr.bf16.mxu0 0
        %5457 = vmatpush2.bf16.msra.mxu0 0
        %5458 = vmatprep.subr.bf16.mxu0 0
        %5459 = vmatpush2.bf16.msra.mxu0 0
        %5460 = vmatprep.subr.bf16.mxu0 0
        %5461 = vmatpush2.bf16.msra.mxu0 0
        %5462 = vmatprep.subr.bf16.mxu0 0
        %5463 = vmatpush2.bf16.msra.mxu0 0
        %5464 = vmatprep.subr.bf16.mxu0 0
        %5465 = vmatpush2.bf16.msra.mxu0 0
        %5466 = vmatprep.subr.bf16.mxu0 0
        %5467 = vmatpush2.bf16.msra.mxu0 0
        %5468 = vmatprep.mubr.bf16.mxu0 0
        %5469 = vmatmul.mubr.bf16.gmra.mxu0 %v5272
        %v5470 = vpop.f32.mrf.mxu0
        %v5471 = vadd.f32 0.0, %v5470
        %v5472 = vpop.f32.mrf.mxu0
        %v5473 = vadd.f32 0.0, %v5472
        %v5474 = vpop.f32.mrf.mxu0
        %v5475 = vadd.f32 0.0, %v5474
        %v5476 = vpop.f32.mrf.mxu0
        %v5477 = vadd.f32 0.0, %v5476
        %5478 = vmatprep.mubr.bf16.mxu0 0
        %5479 = vmatmul.mubr.bf16.gmra.mxu0 %v5273
        %v5480 = vpop.f32.mrf.mxu0
        %v5481 = vadd.f32 0.0, %v5480
        %v5482 = vpop.f32.mrf.mxu0
        %v5483 = vadd.f32 0.0, %v5482
        %v5484 = vpop.f32.mrf.mxu0
        %v5485 = vadd.f32 0.0, %v5484
        %v5486 = vpop.f32.mrf.mxu0
        %v5487 = vadd.f32 0.0, %v5486
        %5488 = vmatprep.mubr.bf16.mxu0 0
        %5489 = vmatmul.mubr.bf16.gmra.mxu0 %v5274
        %v5490 = vpop.f32.mrf.mxu0
        %v5491 = vadd.f32 0.0, %v5490
        %v5492 = vpop.f32.mrf.mxu0
        %v5493 = vadd.f32 0.0, %v5492
        %v5494 = vpop.f32.mrf.mxu0
        %v5495 = vadd.f32 0.0, %v5494
        %v5496 = vpop.f32.mrf.mxu0
        %v5497 = vadd.f32 0.0, %v5496
        %5498 = vmatprep.mubr.bf16.mxu0 0
        %5499 = vmatmul.mubr.bf16.gmra.mxu0 %v5275
        %v5500 = vpop.f32.mrf.mxu0
        %v5501 = vadd.f32 0.0, %v5500
        %v5502 = vpop.f32.mrf.mxu0
        %v5503 = vadd.f32 0.0, %v5502
        %v5504 = vpop.f32.mrf.mxu0
        %v5505 = vadd.f32 0.0, %v5504
        %v5506 = vpop.f32.mrf.mxu0
        %v5507 = vadd.f32 0.0, %v5506
        %5508 = vdwg.mxu0
        %5509 = vmatprep.subr.bf16.mxu0 0
        %5510 = vmatpush1.bf16.msra.mxu0 %v5411
        %5511 = vmatprep.subr.bf16.mxu0 0
        %5512 = vmatpush1.bf16.msra.mxu0 %v5408
        %5513 = vmatprep.subr.bf16.mxu0 0
        %5514 = vmatpush1.bf16.msra.mxu0 %v5405
        %5515 = vmatprep.subr.bf16.mxu0 0
        %5516 = vmatpush1.bf16.msra.mxu0 %v5402
        %5517 = vmatprep.subr.bf16.mxu0 0
        %5518 = vmatpush1.bf16.msra.mxu0 %v5399
        %5519 = vmatprep.subr.bf16.mxu0 0
        %5520 = vmatpush1.bf16.msra.mxu0 %v5396
        %5521 = vmatprep.subr.bf16.mxu0 0
        %5522 = vmatpush1.bf16.msra.mxu0 %v5393
        %5523 = vmatprep.subr.bf16.mxu0 0
        %5524 = vmatpush1.bf16.msra.mxu0 %v5390
        %5525 = vmatprep.subr.bf16.mxu0 0
        %5526 = vmatpush2.bf16.msra.mxu0 0
        %5527 = vmatprep.subr.bf16.mxu0 0
        %5528 = vmatpush2.bf16.msra.mxu0 0
        %5529 = vmatprep.subr.bf16.mxu0 0
        %5530 = vmatpush2.bf16.msra.mxu0 0
        %5531 = vmatprep.subr.bf16.mxu0 0
        %5532 = vmatpush2.bf16.msra.mxu0 0
        %5533 = vmatprep.subr.bf16.mxu0 0
        %5534 = vmatpush2.bf16.msra.mxu0 0
        %5535 = vmatprep.subr.bf16.mxu0 0
        %5536 = vmatpush2.bf16.msra.mxu0 0
        %5537 = vmatprep.subr.bf16.mxu0 0
        %5538 = vmatpush2.bf16.msra.mxu0 0
        %5539 = vmatprep.subr.bf16.mxu0 0
        %5540 = vmatpush2.bf16.msra.mxu0 0
        %5541 = vmatprep.mubr.bf16.mxu0 0
        %5542 = vmatmul.mubr.bf16.gmra.mxu0 %v5272
        %v5543 = vpop.f32.mrf.mxu0
        %v5544 = vadd.f32 0.0, %v5543
        %v5545 = vpop.f32.mrf.mxu0
        %v5546 = vpop.f32.mrf.mxu0
        %v5547 = vadd.f32 0.0, %v5546
        %v5548 = vpop.f32.mrf.mxu0
        %5549 = vmatprep.mubr.bf16.mxu0 0
        %5550 = vmatmul.mubr.bf16.gmra.mxu0 %v5273
        %v5551 = vpop.f32.mrf.mxu0
        %v5552 = vadd.f32 0.0, %v5551
        %v5553 = vpop.f32.mrf.mxu0
        %v5554 = vpop.f32.mrf.mxu0
        %v5555 = vadd.f32 0.0, %v5554
        %v5556 = vpop.f32.mrf.mxu0
        %5557 = vmatprep.mubr.bf16.mxu0 0
        %5558 = vmatmul.mubr.bf16.gmra.mxu0 %v5274
        %v5559 = vpop.f32.mrf.mxu0
        %v5560 = vadd.f32 0.0, %v5559
        %v5561 = vpop.f32.mrf.mxu0
        %v5562 = vpop.f32.mrf.mxu0
        %v5563 = vadd.f32 0.0, %v5562
        %v5564 = vpop.f32.mrf.mxu0
        %5565 = vmatprep.mubr.bf16.mxu0 0
        %5566 = vmatmul.mubr.bf16.gmra.mxu0 %v5275
        %v5567 = vpop.f32.mrf.mxu0
        %v5568 = vadd.f32 0.0, %v5567
        %v5569 = vpop.f32.mrf.mxu0
        %v5570 = vpop.f32.mrf.mxu0
        %v5571 = vadd.f32 0.0, %v5570
        %v5572 = vpop.f32.mrf.mxu0
        %5573 = vdwg.mxu0
        %v5574 = vadd.f32 %v5006, %v5471
        %v5575 = vadd.f32 %v5007, %v5473
        %v5576 = vadd.f32 %v5008, %v5544
        %v5577 = vadd.f32 %v5009, %v5475
        %v5578 = vadd.f32 %v5010, %v5477
        %v5579 = vadd.f32 %v5011, %v5547
        %v5580 = vadd.f32 %v5012, %v5481
        %v5581 = vadd.f32 %v5013, %v5483
        %v5582 = vadd.f32 %v5014, %v5552
        %v5583 = vadd.f32 %v5015, %v5485
        %v5584 = vadd.f32 %v5016, %v5487
        %v5585 = vadd.f32 %v5017, %v5555
        %v5586 = vadd.f32 %v5018, %v5491
        %v5587 = vadd.f32 %v5019, %v5493
        %v5588 = vadd.f32 %v5020, %v5560
        %v5589 = vadd.f32 %v5021, %v5495
        %v5590 = vadd.f32 %v5022, %v5497
        %v5591 = vadd.f32 %v5023, %v5563
        %v5592 = vadd.f32 %v5024, %v5501
        %v5593 = vadd.f32 %v5025, %v5503
        %v5594 = vadd.f32 %v5026, %v5568
        %v5595 = vadd.f32 %v5027, %v5505
        %v5596 = vadd.f32 %v5028, %v5507
        %v5597 = vadd.f32 %v5029, %v5571
        %v5598 = vld [vmem:[#allocation10] sm:$0x7]
        %v5600 = vlaneseq
        %v5601 = vshrl.u32 %v5600, 7
        %v5602 = vsub.s32 0, %v5601
        %v5603 = vrot.slane %v5598, %v5602
        %v5604 = vlaneseq
        %v5605 = vshrl.u32 %v5604, 7
        %v5606 = vsub.s32 1, %v5605
        %v5607 = vrot.slane %v5598, %v5606
        %v5608 = vlaneseq
        %v5609 = vshrl.u32 %v5608, 7
        %v5610 = vsub.s32 2, %v5609
        %v5611 = vrot.slane %v5598, %v5610
        %v5615 = vadd.f32 %v5574, %v5603
        %v5616 = vadd.f32 %v5575, %v5607
        %v5617 = vadd.f32 %v5576, %v5611
        %v5618 = vadd.f32 %v5577, %v5603
        %v5619 = vadd.f32 %v5578, %v5607
        %v5620 = vadd.f32 %v5579, %v5611
        %v5621 = vadd.f32 %v5580, %v5603
        %v5622 = vadd.f32 %v5581, %v5607
        %v5623 = vadd.f32 %v5582, %v5611
        %v5624 = vadd.f32 %v5583, %v5603
        %v5625 = vadd.f32 %v5584, %v5607
        %v5626 = vadd.f32 %v5585, %v5611
        %v5627 = vadd.f32 %v5586, %v5603
        %v5628 = vadd.f32 %v5587, %v5607
        %v5629 = vadd.f32 %v5588, %v5611
        %v5630 = vadd.f32 %v5589, %v5603
        %v5631 = vadd.f32 %v5590, %v5607
        %v5632 = vadd.f32 %v5591, %v5611
        %v5633 = vadd.f32 %v5592, %v5603
        %v5634 = vadd.f32 %v5593, %v5607
        %v5635 = vadd.f32 %v5594, %v5611
        %v5636 = vadd.f32 %v5595, %v5603
        %v5637 = vadd.f32 %v5596, %v5607
        %v5638 = vadd.f32 %v5597, %v5611
        %v5639 = vadd.f32 %v621, %v5615
        %v5640 = vadd.f32 %v622, %v5616
        %v5641 = vadd.f32 %v623, %v5617
        %v5642 = vadd.f32 %v624, %v5618
        %v5643 = vadd.f32 %v625, %v5619
        %v5644 = vadd.f32 %v626, %v5620
        %v5645 = vadd.f32 %v627, %v5621
        %v5646 = vadd.f32 %v628, %v5622
        %v5647 = vadd.f32 %v629, %v5623
        %v5648 = vadd.f32 %v630, %v5624
        %v5649 = vadd.f32 %v631, %v5625
        %v5650 = vadd.f32 %v632, %v5626
        %v5651 = vadd.f32 %v633, %v5627
        %v5652 = vadd.f32 %v634, %v5628
        %v5653 = vadd.f32 %v635, %v5629
        %v5654 = vadd.f32 %v636, %v5630
        %v5655 = vadd.f32 %v637, %v5631
        %v5656 = vadd.f32 %v638, %v5632
        %v5657 = vadd.f32 %v639, %v5633
        %v5658 = vadd.f32 %v640, %v5634
        %v5659 = vadd.f32 %v641, %v5635
        %v5660 = vadd.f32 %v642, %v5636
        %v5661 = vadd.f32 %v643, %v5637
        %v5662 = vadd.f32 %v644, %v5638
        %v5663 = vld [vmem:[#allocation11] sm:$0x7]
        %v5664 = vld [vmem:[#allocation13] sm:$0x7]
        %v5665 = vadd.f32 %v5639, %v5640
        %v5666 = vadd.f32 %v5665, %v5641
        %5667 = vadd.xlane.f32.xlu0 %v5666
        %v5668 = vpop.xlane.xlu0 %5667
        %v5669 = vadd.f32 %v5642, %v5643
        %v5670 = vadd.f32 %v5669, %v5644
        %5671 = vadd.xlane.f32.xlu0 %v5670
        %v5672 = vpop.xlane.xlu0 %5671
        %v5673 = vadd.f32 %v5645, %v5646
        %v5674 = vadd.f32 %v5673, %v5647
        %5675 = vadd.xlane.f32.xlu0 %v5674
        %v5676 = vpop.xlane.xlu0 %5675
        %v5677 = vadd.f32 %v5648, %v5649
        %v5678 = vadd.f32 %v5677, %v5650
        %5679 = vadd.xlane.f32.xlu0 %v5678
        %v5680 = vpop.xlane.xlu0 %5679
        %v5681 = vadd.f32 %v5651, %v5652
        %v5682 = vadd.f32 %v5681, %v5653
        %5683 = vadd.xlane.f32.xlu0 %v5682
        %v5684 = vpop.xlane.xlu0 %5683
        %v5685 = vadd.f32 %v5654, %v5655
        %v5686 = vadd.f32 %v5685, %v5656
        %5687 = vadd.xlane.f32.xlu0 %v5686
        %v5688 = vpop.xlane.xlu0 %5687
        %v5689 = vadd.f32 %v5657, %v5658
        %v5690 = vadd.f32 %v5689, %v5659
        %5691 = vadd.xlane.f32.xlu0 %v5690
        %v5692 = vpop.xlane.xlu0 %5691
        %v5693 = vadd.f32 %v5660, %v5661
        %v5694 = vadd.f32 %v5693, %v5662
        %5695 = vadd.xlane.f32.xlu0 %v5694
        %v5696 = vpop.xlane.xlu0 %5695
        %v5697 = vrcp.pop 384.0
        %v5698 = vmul.f32 %v5668, %v5697
        %v5699 = vmul.f32 %v5672, %v5697
        %v5700 = vmul.f32 %v5676, %v5697
        %v5701 = vmul.f32 %v5680, %v5697
        %v5702 = vmul.f32 %v5684, %v5697
        %v5703 = vmul.f32 %v5688, %v5697
        %v5704 = vmul.f32 %v5692, %v5697
        %v5705 = vmul.f32 %v5696, %v5697
        %v5706 = vsub.f32 %v5639, %v5698
        %v5707 = vsub.f32 %v5640, %v5698
        %v5708 = vsub.f32 %v5641, %v5698
        %v5709 = vsub.f32 %v5642, %v5699
        %v5710 = vsub.f32 %v5643, %v5699
        %v5711 = vsub.f32 %v5644, %v5699
        %v5712 = vsub.f32 %v5645, %v5700
        %v5713 = vsub.f32 %v5646, %v5700
        %v5714 = vsub.f32 %v5647, %v5700
        %v5715 = vsub.f32 %v5648, %v5701
        %v5716 = vsub.f32 %v5649, %v5701
        %v5717 = vsub.f32 %v5650, %v5701
        %v5718 = vsub.f32 %v5651, %v5702
        %v5719 = vsub.f32 %v5652, %v5702
        %v5720 = vsub.f32 %v5653, %v5702
        %v5721 = vsub.f32 %v5654, %v5703
        %v5722 = vsub.f32 %v5655, %v5703
        %v5723 = vsub.f32 %v5656, %v5703
        %v5724 = vsub.f32 %v5657, %v5704
        %v5725 = vsub.f32 %v5658, %v5704
        %v5726 = vsub.f32 %v5659, %v5704
        %v5727 = vsub.f32 %v5660, %v5705
        %v5728 = vsub.f32 %v5661, %v5705
        %v5729 = vsub.f32 %v5662, %v5705
        %v5730 = vmul.f32 %v5706, %v5706
        %v5731 = vmul.f32 %v5707, %v5707
        %v5732 = vmul.f32 %v5708, %v5708
        %v5733 = vmul.f32 %v5709, %v5709
        %v5734 = vmul.f32 %v5710, %v5710
        %v5735 = vmul.f32 %v5711, %v5711
        %v5736 = vmul.f32 %v5712, %v5712
        %v5737 = vmul.f32 %v5713, %v5713
        %v5738 = vmul.f32 %v5714, %v5714
        %v5739 = vmul.f32 %v5715, %v5715
        %v5740 = vmul.f32 %v5716, %v5716
        %v5741 = vmul.f32 %v5717, %v5717
        %v5742 = vmul.f32 %v5718, %v5718
        %v5743 = vmul.f32 %v5719, %v5719
        %v5744 = vmul.f32 %v5720, %v5720
        %v5745 = vmul.f32 %v5721, %v5721
        %v5746 = vmul.f32 %v5722, %v5722
        %v5747 = vmul.f32 %v5723, %v5723
        %v5748 = vmul.f32 %v5724, %v5724
        %v5749 = vmul.f32 %v5725, %v5725
        %v5750 = vmul.f32 %v5726, %v5726
        %v5751 = vmul.f32 %v5727, %v5727
        %v5752 = vmul.f32 %v5728, %v5728
        %v5753 = vmul.f32 %v5729, %v5729
        %v5754 = vadd.f32 %v5730, %v5731
        %v5755 = vadd.f32 %v5754, %v5732
        %5756 = vadd.xlane.f32.xlu0 %v5755
        %v5757 = vpop.xlane.xlu0 %5756
        %v5758 = vadd.f32 %v5733, %v5734
        %v5759 = vadd.f32 %v5758, %v5735
        %5760 = vadd.xlane.f32.xlu0 %v5759
        %v5761 = vpop.xlane.xlu0 %5760
        %v5762 = vadd.f32 %v5736, %v5737
        %v5763 = vadd.f32 %v5762, %v5738
        %5764 = vadd.xlane.f32.xlu0 %v5763
        %v5765 = vpop.xlane.xlu0 %5764
        %v5766 = vadd.f32 %v5739, %v5740
        %v5767 = vadd.f32 %v5766, %v5741
        %5768 = vadd.xlane.f32.xlu0 %v5767
        %v5769 = vpop.xlane.xlu0 %5768
        %v5770 = vadd.f32 %v5742, %v5743
        %v5771 = vadd.f32 %v5770, %v5744
        %5772 = vadd.xlane.f32.xlu0 %v5771
        %v5773 = vpop.xlane.xlu0 %5772
        %v5774 = vadd.f32 %v5745, %v5746
        %v5775 = vadd.f32 %v5774, %v5747
        %5776 = vadd.xlane.f32.xlu0 %v5775
        %v5777 = vpop.xlane.xlu0 %5776
        %v5778 = vadd.f32 %v5748, %v5749
        %v5779 = vadd.f32 %v5778, %v5750
        %5780 = vadd.xlane.f32.xlu0 %v5779
        %v5781 = vpop.xlane.xlu0 %5780
        %v5782 = vadd.f32 %v5751, %v5752
        %v5783 = vadd.f32 %v5782, %v5753
        %5784 = vadd.xlane.f32.xlu0 %v5783
        %v5785 = vpop.xlane.xlu0 %5784
        %v5786 = vmul.f32 %v5757, %v5697
        %v5787 = vmul.f32 %v5761, %v5697
        %v5788 = vmul.f32 %v5765, %v5697
        %v5789 = vmul.f32 %v5769, %v5697
        %v5790 = vmul.f32 %v5773, %v5697
        %v5791 = vmul.f32 %v5777, %v5697
        %v5792 = vmul.f32 %v5781, %v5697
        %v5793 = vmul.f32 %v5785, %v5697
        %v5794 = vadd.f32 %v5786, 1e-05
        %v5795 = vadd.f32 %v5787, 1e-05
        %v5796 = vadd.f32 %v5788, 1e-05
        %v5797 = vadd.f32 %v5789, 1e-05
        %v5798 = vadd.f32 %v5790, 1e-05
        %v5799 = vadd.f32 %v5791, 1e-05
        %v5800 = vadd.f32 %v5792, 1e-05
        %v5801 = vadd.f32 %v5793, 1e-05
        %v5802 = vrsqrt.pop %v5794
        %v5803 = vrsqrt.pop %v5795
        %v5804 = vrsqrt.pop %v5796
        %v5805 = vrsqrt.pop %v5797
        %v5806 = vrsqrt.pop %v5798
        %v5807 = vrsqrt.pop %v5799
        %v5808 = vrsqrt.pop %v5800
        %v5809 = vrsqrt.pop %v5801
        %v5810 = vmul.f32 %v5706, %v5802
        %v5811 = vmul.f32 %v5707, %v5802
        %v5812 = vmul.f32 %v5708, %v5802
        %v5813 = vmul.f32 %v5709, %v5803
        %v5814 = vmul.f32 %v5710, %v5803
        %v5815 = vmul.f32 %v5711, %v5803
        %v5816 = vmul.f32 %v5712, %v5804
        %v5817 = vmul.f32 %v5713, %v5804
        %v5818 = vmul.f32 %v5714, %v5804
        %v5819 = vmul.f32 %v5715, %v5805
        %v5820 = vmul.f32 %v5716, %v5805
        %v5821 = vmul.f32 %v5717, %v5805
        %v5822 = vmul.f32 %v5718, %v5806
        %v5823 = vmul.f32 %v5719, %v5806
        %v5824 = vmul.f32 %v5720, %v5806
        %v5825 = vmul.f32 %v5721, %v5807
        %v5826 = vmul.f32 %v5722, %v5807
        %v5827 = vmul.f32 %v5723, %v5807
        %v5828 = vmul.f32 %v5724, %v5808
        %v5829 = vmul.f32 %v5725, %v5808
        %v5830 = vmul.f32 %v5726, %v5808
        %v5831 = vmul.f32 %v5727, %v5809
        %v5832 = vmul.f32 %v5728, %v5809
        %v5833 = vmul.f32 %v5729, %v5809
        %v5835 = vlaneseq
        %v5836 = vshrl.u32 %v5835, 7
        %v5837 = vsub.s32 0, %v5836
        %v5838 = vrot.slane %v5663, %v5837
        %v5839 = vlaneseq
        %v5840 = vshrl.u32 %v5839, 7
        %v5841 = vsub.s32 1, %v5840
        %v5842 = vrot.slane %v5663, %v5841
        %v5843 = vlaneseq
        %v5844 = vshrl.u32 %v5843, 7
        %v5845 = vsub.s32 2, %v5844
        %v5846 = vrot.slane %v5663, %v5845
        %v5850 = vmul.f32 %v5810, %v5838
        %v5851 = vmul.f32 %v5811, %v5842
        %v5852 = vmul.f32 %v5812, %v5846
        %v5853 = vmul.f32 %v5813, %v5838
        %v5854 = vmul.f32 %v5814, %v5842
        %v5855 = vmul.f32 %v5815, %v5846
        %v5856 = vmul.f32 %v5816, %v5838
        %v5857 = vmul.f32 %v5817, %v5842
        %v5858 = vmul.f32 %v5818, %v5846
        %v5859 = vmul.f32 %v5819, %v5838
        %v5860 = vmul.f32 %v5820, %v5842
        %v5861 = vmul.f32 %v5821, %v5846
        %v5862 = vmul.f32 %v5822, %v5838
        %v5863 = vmul.f32 %v5823, %v5842
        %v5864 = vmul.f32 %v5824, %v5846
        %v5865 = vmul.f32 %v5825, %v5838
        %v5866 = vmul.f32 %v5826, %v5842
        %v5867 = vmul.f32 %v5827, %v5846
        %v5868 = vmul.f32 %v5828, %v5838
        %v5869 = vmul.f32 %v5829, %v5842
        %v5870 = vmul.f32 %v5830, %v5846
        %v5871 = vmul.f32 %v5831, %v5838
        %v5872 = vmul.f32 %v5832, %v5842
        %v5873 = vmul.f32 %v5833, %v5846
        %v5875 = vlaneseq
        %v5876 = vshrl.u32 %v5875, 7
        %v5877 = vsub.s32 0, %v5876
        %v5878 = vrot.slane %v5664, %v5877
        %v5879 = vlaneseq
        %v5880 = vshrl.u32 %v5879, 7
        %v5881 = vsub.s32 1, %v5880
        %v5882 = vrot.slane %v5664, %v5881
        %v5883 = vlaneseq
        %v5884 = vshrl.u32 %v5883, 7
        %v5885 = vsub.s32 2, %v5884
        %v5886 = vrot.slane %v5664, %v5885
        %v5890 = vadd.f32 %v5850, %v5878
        %v5891 = vadd.f32 %v5851, %v5882
        %v5892 = vadd.f32 %v5852, %v5886
        %v5893 = vadd.f32 %v5853, %v5878
        %v5894 = vadd.f32 %v5854, %v5882
        %v5895 = vadd.f32 %v5855, %v5886
        %v5896 = vadd.f32 %v5856, %v5878
        %v5897 = vadd.f32 %v5857, %v5882
        %v5898 = vadd.f32 %v5858, %v5886
        %v5899 = vadd.f32 %v5859, %v5878
        %v5900 = vadd.f32 %v5860, %v5882
        %v5901 = vadd.f32 %v5861, %v5886
        %v5902 = vadd.f32 %v5862, %v5878
        %v5903 = vadd.f32 %v5863, %v5882
        %v5904 = vadd.f32 %v5864, %v5886
        %v5905 = vadd.f32 %v5865, %v5878
        %v5906 = vadd.f32 %v5866, %v5882
        %v5907 = vadd.f32 %v5867, %v5886
        %v5908 = vadd.f32 %v5868, %v5878
        %v5909 = vadd.f32 %v5869, %v5882
        %v5910 = vadd.f32 %v5870, %v5886
        %v5911 = vadd.f32 %v5871, %v5878
        %v5912 = vadd.f32 %v5872, %v5882
        %v5913 = vadd.f32 %v5873, %v5886
        %v5914 = vpack.c.bf16 %v5893, %v5890
        %v5915 = vpack.c.bf16 %v5894, %v5891
        %v5916 = vpack.c.bf16 %v5895, %v5892
        %v5917 = vpack.c.bf16 %v5899, %v5896
        %v5918 = vpack.c.bf16 %v5900, %v5897
        %v5919 = vpack.c.bf16 %v5901, %v5898
        %v5920 = vpack.c.bf16 %v5905, %v5902
        %v5921 = vpack.c.bf16 %v5906, %v5903
        %v5922 = vpack.c.bf16 %v5907, %v5904
        %v5923 = vpack.c.bf16 %v5911, %v5908
        %v5924 = vpack.c.bf16 %v5912, %v5909
        %v5925 = vpack.c.bf16 %v5913, %v5910
        %v5926 = vld [vmem:[#allocation14] sm:$0xff]
        %v5927 = vld [vmem:[#allocation14 + $0x8] sm:$0xff]
        %v5928 = vld [vmem:[#allocation14 + $0x10] sm:$0xff]
        %v5929 = vld [vmem:[#allocation14 + $0x18] sm:$0xff]
        %v5930 = vld [vmem:[#allocation14 + $0x20] sm:$0xff]
        %v5931 = vld [vmem:[#allocation14 + $0x28] sm:$0xff]
        %v5932 = vld [vmem:[#allocation14 + $0x30] sm:$0xff]
        %v5933 = vld [vmem:[#allocation14 + $0x38] sm:$0xff]
        %v5934 = vld [vmem:[#allocation14 + $0x40] sm:$0xff]
        %v5935 = vld [vmem:[#allocation14 + $0x48] sm:$0xff]
        %v5936 = vld [vmem:[#allocation14 + $0x50] sm:$0xff]
        %v5937 = vld [vmem:[#allocation14 + $0x58] sm:$0xff]
        %v5938 = vld [vmem:[#allocation14 + $0x60] sm:$0xff]
        %v5939 = vld [vmem:[#allocation14 + $0x68] sm:$0xff]
        %v5940 = vld [vmem:[#allocation14 + $0x70] sm:$0xff]
        %v5941 = vld [vmem:[#allocation14 + $0x78] sm:$0xff]
        %v5942 = vld [vmem:[#allocation14 + $0x80] sm:$0xff]
        %v5943 = vld [vmem:[#allocation14 + $0x88] sm:$0xff]
        %v5944 = vld [vmem:[#allocation14 + $0x90] sm:$0xff]
        %v5945 = vld [vmem:[#allocation14 + $0x98] sm:$0xff]
        %v5946 = vld [vmem:[#allocation14 + $0xa0] sm:$0xff]
        %v5947 = vld [vmem:[#allocation14 + $0xa8] sm:$0xff]
        %v5948 = vld [vmem:[#allocation14 + $0xb0] sm:$0xff]
        %v5949 = vld [vmem:[#allocation14 + $0xb8] sm:$0xff]
        %v5950 = vld [vmem:[#allocation14 + $0xc0] sm:$0xff]
        %v5951 = vld [vmem:[#allocation14 + $0xc8] sm:$0xff]
        %v5952 = vld [vmem:[#allocation14 + $0xd0] sm:$0xff]
        %v5953 = vld [vmem:[#allocation14 + $0xd8] sm:$0xff]
        %v5954 = vld [vmem:[#allocation14 + $0xe0] sm:$0xff]
        %v5955 = vld [vmem:[#allocation14 + $0xe8] sm:$0xff]
        %v5956 = vld [vmem:[#allocation14 + $0xf0] sm:$0xff]
        %v5957 = vld [vmem:[#allocation14 + $0xf8] sm:$0xff]
        %v5958 = vld [vmem:[#allocation14 + $0x100] sm:$0xff]
        %v5959 = vld [vmem:[#allocation14 + $0x108] sm:$0xff]
        %v5960 = vld [vmem:[#allocation14 + $0x110] sm:$0xff]
        %v5961 = vld [vmem:[#allocation14 + $0x118] sm:$0xff]
        %v5962 = vld [vmem:[#allocation14 + $0x120] sm:$0xff]
        %v5963 = vld [vmem:[#allocation14 + $0x128] sm:$0xff]
        %v5964 = vld [vmem:[#allocation14 + $0x130] sm:$0xff]
        %v5965 = vld [vmem:[#allocation14 + $0x138] sm:$0xff]
        %v5966 = vld [vmem:[#allocation14 + $0x140] sm:$0xff]
        %v5967 = vld [vmem:[#allocation14 + $0x148] sm:$0xff]
        %v5968 = vld [vmem:[#allocation14 + $0x150] sm:$0xff]
        %v5969 = vld [vmem:[#allocation14 + $0x158] sm:$0xff]
        %v5970 = vld [vmem:[#allocation14 + $0x160] sm:$0xff]
        %v5971 = vld [vmem:[#allocation14 + $0x168] sm:$0xff]
        %v5972 = vld [vmem:[#allocation14 + $0x170] sm:$0xff]
        %v5973 = vld [vmem:[#allocation14 + $0x178] sm:$0xff]
        %v5974 = vld [vmem:[#allocation14 + $0x180] sm:$0xff]
        %v5975 = vld [vmem:[#allocation14 + $0x188] sm:$0xff]
        %v5976 = vld [vmem:[#allocation14 + $0x190] sm:$0xff]
        %v5977 = vld [vmem:[#allocation14 + $0x198] sm:$0xff]
        %v5978 = vld [vmem:[#allocation14 + $0x1a0] sm:$0xff]
        %v5979 = vld [vmem:[#allocation14 + $0x1a8] sm:$0xff]
        %v5980 = vld [vmem:[#allocation14 + $0x1b0] sm:$0xff]
        %v5981 = vld [vmem:[#allocation14 + $0x1b8] sm:$0xff]
        %v5982 = vld [vmem:[#allocation14 + $0x1c0] sm:$0xff]
        %v5983 = vld [vmem:[#allocation14 + $0x1c8] sm:$0xff]
        %v5984 = vld [vmem:[#allocation14 + $0x1d0] sm:$0xff]
        %v5985 = vld [vmem:[#allocation14 + $0x1d8] sm:$0xff]
        %v5986 = vld [vmem:[#allocation14 + $0x1e0] sm:$0xff]
        %v5987 = vld [vmem:[#allocation14 + $0x1e8] sm:$0xff]
        %v5988 = vld [vmem:[#allocation14 + $0x1f0] sm:$0xff]
        %v5989 = vld [vmem:[#allocation14 + $0x1f8] sm:$0xff]
        %v5990 = vld [vmem:[#allocation14 + $0x200] sm:$0xff]
        %v5991 = vld [vmem:[#allocation14 + $0x208] sm:$0xff]
        %v5992 = vld [vmem:[#allocation14 + $0x210] sm:$0xff]
        %v5993 = vld [vmem:[#allocation14 + $0x218] sm:$0xff]
        %v5994 = vld [vmem:[#allocation14 + $0x220] sm:$0xff]
        %v5995 = vld [vmem:[#allocation14 + $0x228] sm:$0xff]
        %v5996 = vld [vmem:[#allocation14 + $0x230] sm:$0xff]
        %v5997 = vld [vmem:[#allocation14 + $0x238] sm:$0xff]
        %v5998 = vld [vmem:[#allocation14 + $0x240] sm:$0xff]
        %v5999 = vld [vmem:[#allocation14 + $0x248] sm:$0xff]
        %v6000 = vld [vmem:[#allocation14 + $0x250] sm:$0xff]
        %v6001 = vld [vmem:[#allocation14 + $0x258] sm:$0xff]
        %v6002 = vld [vmem:[#allocation14 + $0x260] sm:$0xff]
        %v6003 = vld [vmem:[#allocation14 + $0x268] sm:$0xff]
        %v6004 = vld [vmem:[#allocation14 + $0x270] sm:$0xff]
        %v6005 = vld [vmem:[#allocation14 + $0x278] sm:$0xff]
        %v6006 = vld [vmem:[#allocation14 + $0x280] sm:$0xff]
        %v6007 = vld [vmem:[#allocation14 + $0x288] sm:$0xff]
        %v6008 = vld [vmem:[#allocation14 + $0x290] sm:$0xff]
        %v6009 = vld [vmem:[#allocation14 + $0x298] sm:$0xff]
        %v6010 = vld [vmem:[#allocation14 + $0x2a0] sm:$0xff]
        %v6011 = vld [vmem:[#allocation14 + $0x2a8] sm:$0xff]
        %v6012 = vld [vmem:[#allocation14 + $0x2b0] sm:$0xff]
        %v6013 = vld [vmem:[#allocation14 + $0x2b8] sm:$0xff]
        %v6014 = vld [vmem:[#allocation14 + $0x2c0] sm:$0xff]
        %v6015 = vld [vmem:[#allocation14 + $0x2c8] sm:$0xff]
        %v6016 = vld [vmem:[#allocation14 + $0x2d0] sm:$0xff]
        %v6017 = vld [vmem:[#allocation14 + $0x2d8] sm:$0xff]
        %v6018 = vld [vmem:[#allocation14 + $0x2e0] sm:$0xff]
        %v6019 = vld [vmem:[#allocation14 + $0x2e8] sm:$0xff]
        %v6020 = vld [vmem:[#allocation14 + $0x2f0] sm:$0xff]
        %v6021 = vld [vmem:[#allocation14 + $0x2f8] sm:$0xff]
        %v6022 = vld [vmem:[#allocation16] sm:$0xf]
        %v6024 = vlaneseq
        %v6025 = vshrl.u32 %v6024, 7
        %v6026 = vsub.s32 0, %v6025
        %v6027 = vrot.slane %v6022, %v6026
        %v6028 = vlaneseq
        %v6029 = vshrl.u32 %v6028, 7
        %v6030 = vsub.s32 1, %v6029
        %v6031 = vrot.slane %v6022, %v6030
        %v6032 = vlaneseq
        %v6033 = vshrl.u32 %v6032, 7
        %v6034 = vsub.s32 2, %v6033
        %v6035 = vrot.slane %v6022, %v6034
        %v6036 = vlaneseq
        %v6037 = vshrl.u32 %v6036, 7
        %v6038 = vsub.s32 3, %v6037
        %v6039 = vrot.slane %v6022, %v6038
        %v6140 = vunpack.c.l.b16 %v5926
        %v6141 = vunpack.c.h.b16 %v5926
        %v6142 = vunpack.c.l.b16 %v5927
        %v6143 = vunpack.c.h.b16 %v5927
        %v6144 = vunpack.c.l.b16 %v5928
        %v6145 = vunpack.c.h.b16 %v5928
        %v6146 = vunpack.c.l.b16 %v5929
        %v6147 = vunpack.c.h.b16 %v5929
        %v6148 = vunpack.c.l.b16 %v5930
        %v6149 = vunpack.c.h.b16 %v5930
        %v6150 = vunpack.c.l.b16 %v5931
        %v6151 = vunpack.c.h.b16 %v5931
        %v6152 = vunpack.c.l.b16 %v5932
        %v6153 = vunpack.c.h.b16 %v5932
        %v6154 = vunpack.c.l.b16 %v5933
        %v6155 = vunpack.c.h.b16 %v5933
        %v6156 = vunpack.c.l.b16 %v5934
        %v6157 = vunpack.c.h.b16 %v5934
        %v6158 = vunpack.c.l.b16 %v5935
        %v6159 = vunpack.c.h.b16 %v5935
        %v6160 = vunpack.c.l.b16 %v5936
        %v6161 = vunpack.c.h.b16 %v5936
        %v6162 = vunpack.c.l.b16 %v5937
        %v6163 = vunpack.c.h.b16 %v5937
        %v6164 = vunpack.c.l.b16 %v5938
        %v6165 = vunpack.c.h.b16 %v5938
        %v6166 = vunpack.c.l.b16 %v5939
        %v6167 = vunpack.c.h.b16 %v5939
        %v6168 = vunpack.c.l.b16 %v5940
        %v6169 = vunpack.c.h.b16 %v5940
        %v6170 = vunpack.c.l.b16 %v5941
        %v6171 = vunpack.c.h.b16 %v5941
        %v6172 = vunpack.c.l.b16 %v5942
        %v6173 = vunpack.c.h.b16 %v5942
        %v6174 = vunpack.c.l.b16 %v5943
        %v6175 = vunpack.c.h.b16 %v5943
        %v6176 = vunpack.c.l.b16 %v5944
        %v6177 = vunpack.c.h.b16 %v5944
        %v6178 = vunpack.c.l.b16 %v5945
        %v6179 = vunpack.c.h.b16 %v5945
        %v6180 = vunpack.c.l.b16 %v5946
        %v6181 = vunpack.c.h.b16 %v5946
        %v6182 = vunpack.c.l.b16 %v5947
        %v6183 = vunpack.c.h.b16 %v5947
        %v6184 = vunpack.c.l.b16 %v5948
        %v6185 = vunpack.c.h.b16 %v5948
        %v6186 = vunpack.c.l.b16 %v5949
        %v6187 = vunpack.c.h.b16 %v5949
        %v6188 = vunpack.c.l.b16 %v5950
        %v6189 = vunpack.c.h.b16 %v5950
        %v6190 = vunpack.c.l.b16 %v5951
        %v6191 = vunpack.c.h.b16 %v5951
        %v6192 = vunpack.c.l.b16 %v5952
        %v6193 = vunpack.c.h.b16 %v5952
        %v6194 = vunpack.c.l.b16 %v5953
        %v6195 = vunpack.c.h.b16 %v5953
        %v6196 = vunpack.c.l.b16 %v5954
        %v6197 = vunpack.c.h.b16 %v5954
        %v6198 = vunpack.c.l.b16 %v5955
        %v6199 = vunpack.c.h.b16 %v5955
        %v6200 = vunpack.c.l.b16 %v5956
        %v6201 = vunpack.c.h.b16 %v5956
        %v6202 = vunpack.c.l.b16 %v5957
        %v6203 = vunpack.c.h.b16 %v5957
        %v6204 = vunpack.c.l.b16 %v5958
        %v6205 = vunpack.c.h.b16 %v5958
        %v6206 = vunpack.c.l.b16 %v5959
        %v6207 = vunpack.c.h.b16 %v5959
        %v6208 = vunpack.c.l.b16 %v5960
        %v6209 = vunpack.c.h.b16 %v5960
        %v6210 = vunpack.c.l.b16 %v5961
        %v6211 = vunpack.c.h.b16 %v5961
        %v6212 = vunpack.c.l.b16 %v5962
        %v6213 = vunpack.c.h.b16 %v5962
        %v6214 = vunpack.c.l.b16 %v5963
        %v6215 = vunpack.c.h.b16 %v5963
        %v6216 = vunpack.c.l.b16 %v5964
        %v6217 = vunpack.c.h.b16 %v5964
        %v6218 = vunpack.c.l.b16 %v5965
        %v6219 = vunpack.c.h.b16 %v5965
        %v6220 = vunpack.c.l.b16 %v5966
        %v6221 = vunpack.c.h.b16 %v5966
        %v6222 = vunpack.c.l.b16 %v5967
        %v6223 = vunpack.c.h.b16 %v5967
        %v6224 = vunpack.c.l.b16 %v5968
        %v6225 = vunpack.c.h.b16 %v5968
        %v6226 = vunpack.c.l.b16 %v5969
        %v6227 = vunpack.c.h.b16 %v5969
        %v6228 = vunpack.c.l.b16 %v5970
        %v6229 = vunpack.c.h.b16 %v5970
        %v6230 = vunpack.c.l.b16 %v5971
        %v6231 = vunpack.c.h.b16 %v5971
        %v6232 = vunpack.c.l.b16 %v5972
        %v6233 = vunpack.c.h.b16 %v5972
        %v6234 = vunpack.c.l.b16 %v5973
        %v6235 = vunpack.c.h.b16 %v5973
        %v6236 = vunpack.c.l.b16 %v5974
        %v6237 = vunpack.c.h.b16 %v5974
        %v6238 = vunpack.c.l.b16 %v5975
        %v6239 = vunpack.c.h.b16 %v5975
        %v6240 = vunpack.c.l.b16 %v5976
        %v6241 = vunpack.c.h.b16 %v5976
        %v6242 = vunpack.c.l.b16 %v5977
        %v6243 = vunpack.c.h.b16 %v5977
        %v6244 = vunpack.c.l.b16 %v5978
        %v6245 = vunpack.c.h.b16 %v5978
        %v6246 = vunpack.c.l.b16 %v5979
        %v6247 = vunpack.c.h.b16 %v5979
        %v6248 = vunpack.c.l.b16 %v5980
        %v6249 = vunpack.c.h.b16 %v5980
        %v6250 = vunpack.c.l.b16 %v5981
        %v6251 = vunpack.c.h.b16 %v5981
        %v6252 = vunpack.c.l.b16 %v5982
        %v6253 = vunpack.c.h.b16 %v5982
        %v6254 = vunpack.c.l.b16 %v5983
        %v6255 = vunpack.c.h.b16 %v5983
        %v6256 = vunpack.c.l.b16 %v5984
        %v6257 = vunpack.c.h.b16 %v5984
        %v6258 = vunpack.c.l.b16 %v5985
        %v6259 = vunpack.c.h.b16 %v5985
        %v6260 = vunpack.c.l.b16 %v5986
        %v6261 = vunpack.c.h.b16 %v5986
        %v6262 = vunpack.c.l.b16 %v5987
        %v6263 = vunpack.c.h.b16 %v5987
        %v6264 = vunpack.c.l.b16 %v5988
        %v6265 = vunpack.c.h.b16 %v5988
        %v6266 = vunpack.c.l.b16 %v5989
        %v6267 = vunpack.c.h.b16 %v5989
        %v6268 = vunpack.c.l.b16 %v5990
        %v6269 = vunpack.c.h.b16 %v5990
        %v6270 = vunpack.c.l.b16 %v5991
        %v6271 = vunpack.c.h.b16 %v5991
        %v6272 = vunpack.c.l.b16 %v5992
        %v6273 = vunpack.c.h.b16 %v5992
        %v6274 = vunpack.c.l.b16 %v5993
        %v6275 = vunpack.c.h.b16 %v5993
        %v6276 = vunpack.c.l.b16 %v5994
        %v6277 = vunpack.c.h.b16 %v5994
        %v6278 = vunpack.c.l.b16 %v5995
        %v6279 = vunpack.c.h.b16 %v5995
        %v6280 = vunpack.c.l.b16 %v5996
        %v6281 = vunpack.c.h.b16 %v5996
        %v6282 = vunpack.c.l.b16 %v5997
        %v6283 = vunpack.c.h.b16 %v5997
        %v6284 = vunpack.c.l.b16 %v5998
        %v6285 = vunpack.c.h.b16 %v5998
        %v6286 = vunpack.c.l.b16 %v5999
        %v6287 = vunpack.c.h.b16 %v5999
        %v6288 = vunpack.c.l.b16 %v6000
        %v6289 = vunpack.c.h.b16 %v6000
        %v6290 = vunpack.c.l.b16 %v6001
        %v6291 = vunpack.c.h.b16 %v6001
        %v6292 = vunpack.c.l.b16 %v6002
        %v6293 = vunpack.c.h.b16 %v6002
        %v6294 = vunpack.c.l.b16 %v6003
        %v6295 = vunpack.c.h.b16 %v6003
        %v6296 = vunpack.c.l.b16 %v6004
        %v6297 = vunpack.c.h.b16 %v6004
        %v6298 = vunpack.c.l.b16 %v6005
        %v6299 = vunpack.c.h.b16 %v6005
        %v6300 = vunpack.c.l.b16 %v6006
        %v6301 = vunpack.c.h.b16 %v6006
        %v6302 = vunpack.c.l.b16 %v6007
        %v6303 = vunpack.c.h.b16 %v6007
        %v6304 = vunpack.c.l.b16 %v6008
        %v6305 = vunpack.c.h.b16 %v6008
        %v6306 = vunpack.c.l.b16 %v6009
        %v6307 = vunpack.c.h.b16 %v6009
        %v6308 = vunpack.c.l.b16 %v6010
        %v6309 = vunpack.c.h.b16 %v6010
        %v6310 = vunpack.c.l.b16 %v6011
        %v6311 = vunpack.c.h.b16 %v6011
        %v6312 = vunpack.c.l.b16 %v6012
        %v6313 = vunpack.c.h.b16 %v6012
        %v6314 = vunpack.c.l.b16 %v6013
        %v6315 = vunpack.c.h.b16 %v6013
        %v6316 = vunpack.c.l.b16 %v6014
        %v6317 = vunpack.c.h.b16 %v6014
        %v6318 = vunpack.c.l.b16 %v6015
        %v6319 = vunpack.c.h.b16 %v6015
        %v6320 = vunpack.c.l.b16 %v6016
        %v6321 = vunpack.c.h.b16 %v6016
        %v6322 = vunpack.c.l.b16 %v6017
        %v6323 = vunpack.c.h.b16 %v6017
        %v6324 = vunpack.c.l.b16 %v6018
        %v6325 = vunpack.c.h.b16 %v6018
        %v6326 = vunpack.c.l.b16 %v6019
        %v6327 = vunpack.c.h.b16 %v6019
        %v6328 = vunpack.c.l.b16 %v6020
        %v6329 = vunpack.c.h.b16 %v6020
        %v6330 = vunpack.c.l.b16 %v6021
        %v6331 = vunpack.c.h.b16 %v6021
        %v6332 = vpack.c.b16 %v6144, %v6140
        %v6333 = vpack.c.b16 %v6145, %v6141
        %v6334 = vpack.c.b16 %v6146, %v6142
        %v6335 = vpack.c.b16 %v6147, %v6143
        %v6336 = vpack.c.b16 %v6152, %v6148
        %v6337 = vpack.c.b16 %v6153, %v6149
        %v6338 = vpack.c.b16 %v6154, %v6150
        %v6339 = vpack.c.b16 %v6155, %v6151
        %v6340 = vpack.c.b16 %v6160, %v6156
        %v6341 = vpack.c.b16 %v6161, %v6157
        %v6342 = vpack.c.b16 %v6162, %v6158
        %v6343 = vpack.c.b16 %v6163, %v6159
        %v6344 = vpack.c.b16 %v6168, %v6164
        %v6345 = vpack.c.b16 %v6169, %v6165
        %v6346 = vpack.c.b16 %v6170, %v6166
        %v6347 = vpack.c.b16 %v6171, %v6167
        %v6348 = vpack.c.b16 %v6176, %v6172
        %v6349 = vpack.c.b16 %v6177, %v6173
        %v6350 = vpack.c.b16 %v6178, %v6174
        %v6351 = vpack.c.b16 %v6179, %v6175
        %v6352 = vpack.c.b16 %v6184, %v6180
        %v6353 = vpack.c.b16 %v6185, %v6181
        %v6354 = vpack.c.b16 %v6186, %v6182
        %v6355 = vpack.c.b16 %v6187, %v6183
        %v6356 = vpack.c.b16 %v6192, %v6188
        %v6357 = vpack.c.b16 %v6193, %v6189
        %v6358 = vpack.c.b16 %v6194, %v6190
        %v6359 = vpack.c.b16 %v6195, %v6191
        %v6360 = vpack.c.b16 %v6200, %v6196
        %v6361 = vpack.c.b16 %v6201, %v6197
        %v6362 = vpack.c.b16 %v6202, %v6198
        %v6363 = vpack.c.b16 %v6203, %v6199
        %v6364 = vpack.c.b16 %v6208, %v6204
        %v6365 = vpack.c.b16 %v6209, %v6205
        %v6366 = vpack.c.b16 %v6210, %v6206
        %v6367 = vpack.c.b16 %v6211, %v6207
        %v6368 = vpack.c.b16 %v6216, %v6212
        %v6369 = vpack.c.b16 %v6217, %v6213
        %v6370 = vpack.c.b16 %v6218, %v6214
        %v6371 = vpack.c.b16 %v6219, %v6215
        %v6372 = vpack.c.b16 %v6224, %v6220
        %v6373 = vpack.c.b16 %v6225, %v6221
        %v6374 = vpack.c.b16 %v6226, %v6222
        %v6375 = vpack.c.b16 %v6227, %v6223
        %v6376 = vpack.c.b16 %v6232, %v6228
        %v6377 = vpack.c.b16 %v6233, %v6229
        %v6378 = vpack.c.b16 %v6234, %v6230
        %v6379 = vpack.c.b16 %v6235, %v6231
        %v6380 = vpack.c.b16 %v6240, %v6236
        %v6381 = vpack.c.b16 %v6241, %v6237
        %v6382 = vpack.c.b16 %v6242, %v6238
        %v6383 = vpack.c.b16 %v6243, %v6239
        %v6384 = vpack.c.b16 %v6248, %v6244
        %v6385 = vpack.c.b16 %v6249, %v6245
        %v6386 = vpack.c.b16 %v6250, %v6246
        %v6387 = vpack.c.b16 %v6251, %v6247
        %v6388 = vpack.c.b16 %v6256, %v6252
        %v6389 = vpack.c.b16 %v6257, %v6253
        %v6390 = vpack.c.b16 %v6258, %v6254
        %v6391 = vpack.c.b16 %v6259, %v6255
        %v6392 = vpack.c.b16 %v6264, %v6260
        %v6393 = vpack.c.b16 %v6265, %v6261
        %v6394 = vpack.c.b16 %v6266, %v6262
        %v6395 = vpack.c.b16 %v6267, %v6263
        %v6396 = vpack.c.b16 %v6272, %v6268
        %v6397 = vpack.c.b16 %v6273, %v6269
        %v6398 = vpack.c.b16 %v6274, %v6270
        %v6399 = vpack.c.b16 %v6275, %v6271
        %v6400 = vpack.c.b16 %v6280, %v6276
        %v6401 = vpack.c.b16 %v6281, %v6277
        %v6402 = vpack.c.b16 %v6282, %v6278
        %v6403 = vpack.c.b16 %v6283, %v6279
        %v6404 = vpack.c.b16 %v6288, %v6284
        %v6405 = vpack.c.b16 %v6289, %v6285
        %v6406 = vpack.c.b16 %v6290, %v6286
        %v6407 = vpack.c.b16 %v6291, %v6287
        %v6408 = vpack.c.b16 %v6296, %v6292
        %v6409 = vpack.c.b16 %v6297, %v6293
        %v6410 = vpack.c.b16 %v6298, %v6294
        %v6411 = vpack.c.b16 %v6299, %v6295
        %v6412 = vpack.c.b16 %v6304, %v6300
        %v6413 = vpack.c.b16 %v6305, %v6301
        %v6414 = vpack.c.b16 %v6306, %v6302
        %v6415 = vpack.c.b16 %v6307, %v6303
        %v6416 = vpack.c.b16 %v6312, %v6308
        %v6417 = vpack.c.b16 %v6313, %v6309
        %v6418 = vpack.c.b16 %v6314, %v6310
        %v6419 = vpack.c.b16 %v6315, %v6311
        %v6420 = vpack.c.b16 %v6320, %v6316
        %v6421 = vpack.c.b16 %v6321, %v6317
        %v6422 = vpack.c.b16 %v6322, %v6318
        %v6423 = vpack.c.b16 %v6323, %v6319
        %v6424 = vpack.c.b16 %v6328, %v6324
        %v6425 = vpack.c.b16 %v6329, %v6325
        %v6426 = vpack.c.b16 %v6330, %v6326
        %v6427 = vpack.c.b16 %v6331, %v6327
        %6524 = vmatprep.subr.bf16.mxu0 %v6361
        %6525 = vmatpush1.bf16.msra.mxu0 %v6360
        %6526 = vmatprep.subr.bf16.mxu0 %v6357
        %6527 = vmatpush1.bf16.msra.mxu0 %v6356
        %6528 = vmatprep.subr.bf16.mxu0 %v6353
        %6529 = vmatpush1.bf16.msra.mxu0 %v6352
        %6530 = vmatprep.subr.bf16.mxu0 %v6349
        %6531 = vmatpush1.bf16.msra.mxu0 %v6348
        %6532 = vmatprep.subr.bf16.mxu0 %v6345
        %6533 = vmatpush1.bf16.msra.mxu0 %v6344
        %6534 = vmatprep.subr.bf16.mxu0 %v6341
        %6535 = vmatpush1.bf16.msra.mxu0 %v6340
        %6536 = vmatprep.subr.bf16.mxu0 %v6337
        %6537 = vmatpush1.bf16.msra.mxu0 %v6336
        %6538 = vmatprep.subr.bf16.mxu0 %v6333
        %6539 = vmatpush1.bf16.msra.mxu0 %v6332
        %6540 = vmatprep.subr.bf16.mxu0 %v6393
        %6541 = vmatpush2.bf16.msra.mxu0 %v6392
        %6542 = vmatprep.subr.bf16.mxu0 %v6389
        %6543 = vmatpush2.bf16.msra.mxu0 %v6388
        %6544 = vmatprep.subr.bf16.mxu0 %v6385
        %6545 = vmatpush2.bf16.msra.mxu0 %v6384
        %6546 = vmatprep.subr.bf16.mxu0 %v6381
        %6547 = vmatpush2.bf16.msra.mxu0 %v6380
        %6548 = vmatprep.subr.bf16.mxu0 %v6377
        %6549 = vmatpush2.bf16.msra.mxu0 %v6376
        %6550 = vmatprep.subr.bf16.mxu0 %v6373
        %6551 = vmatpush2.bf16.msra.mxu0 %v6372
        %6552 = vmatprep.subr.bf16.mxu0 %v6369
        %6553 = vmatpush2.bf16.msra.mxu0 %v6368
        %6554 = vmatprep.subr.bf16.mxu0 %v6365
        %6555 = vmatpush2.bf16.msra.mxu0 %v6364
        %6556 = vmatprep.mubr.bf16.mxu0 %v5915
        %6557 = vmatmul.mubr.bf16.gmra.mxu0 %v5914
        %v6558 = vpop.f32.mrf.mxu0
        %v6559 = vadd.f32 %v6027, %v6558
        %v6560 = vpop.f32.mrf.mxu0
        %v6561 = vadd.f32 %v6031, %v6560
        %v6562 = vpop.f32.mrf.mxu0
        %v6563 = vadd.f32 %v6027, %v6562
        %v6564 = vpop.f32.mrf.mxu0
        %v6565 = vadd.f32 %v6031, %v6564
        %6566 = vmatprep.mubr.bf16.mxu0 %v5918
        %6567 = vmatmul.mubr.bf16.gmra.mxu0 %v5917
        %v6568 = vpop.f32.mrf.mxu0
        %v6569 = vadd.f32 %v6027, %v6568
        %v6570 = vpop.f32.mrf.mxu0
        %v6571 = vadd.f32 %v6031, %v6570
        %v6572 = vpop.f32.mrf.mxu0
        %v6573 = vadd.f32 %v6027, %v6572
        %v6574 = vpop.f32.mrf.mxu0
        %v6575 = vadd.f32 %v6031, %v6574
        %6576 = vmatprep.mubr.bf16.mxu0 %v5921
        %6577 = vmatmul.mubr.bf16.gmra.mxu0 %v5920
        %v6578 = vpop.f32.mrf.mxu0
        %v6579 = vadd.f32 %v6027, %v6578
        %v6580 = vpop.f32.mrf.mxu0
        %v6581 = vadd.f32 %v6031, %v6580
        %v6582 = vpop.f32.mrf.mxu0
        %v6583 = vadd.f32 %v6027, %v6582
        %v6584 = vpop.f32.mrf.mxu0
        %v6585 = vadd.f32 %v6031, %v6584
        %6586 = vmatprep.mubr.bf16.mxu0 %v5924
        %6587 = vmatmul.mubr.bf16.gmra.mxu0 %v5923
        %v6588 = vpop.f32.mrf.mxu0
        %v6589 = vadd.f32 %v6027, %v6588
        %v6590 = vpop.f32.mrf.mxu0
        %v6591 = vadd.f32 %v6031, %v6590
        %v6592 = vpop.f32.mrf.mxu0
        %v6593 = vadd.f32 %v6027, %v6592
        %v6594 = vpop.f32.mrf.mxu0
        %v6595 = vadd.f32 %v6031, %v6594
        %6596 = vdwg.mxu0
        %6597 = vmatprep.subr.bf16.mxu0 %v6425
        %6598 = vmatpush1.bf16.msra.mxu0 %v6424
        %6599 = vmatprep.subr.bf16.mxu0 %v6421
        %6600 = vmatpush1.bf16.msra.mxu0 %v6420
        %6601 = vmatprep.subr.bf16.mxu0 %v6417
        %6602 = vmatpush1.bf16.msra.mxu0 %v6416
        %6603 = vmatprep.subr.bf16.mxu0 %v6413
        %6604 = vmatpush1.bf16.msra.mxu0 %v6412
        %6605 = vmatprep.subr.bf16.mxu0 %v6409
        %6606 = vmatpush1.bf16.msra.mxu0 %v6408
        %6607 = vmatprep.subr.bf16.mxu0 %v6405
        %6608 = vmatpush1.bf16.msra.mxu0 %v6404
        %6609 = vmatprep.subr.bf16.mxu0 %v6401
        %6610 = vmatpush1.bf16.msra.mxu0 %v6400
        %6611 = vmatprep.subr.bf16.mxu0 %v6397
        %6612 = vmatpush1.bf16.msra.mxu0 %v6396
        %6613 = vmatprep.subr.bf16.mxu0 0
        %6614 = vmatpush2.bf16.msra.mxu0 0
        %6615 = vmatprep.subr.bf16.mxu0 0
        %6616 = vmatpush2.bf16.msra.mxu0 0
        %6617 = vmatprep.subr.bf16.mxu0 0
        %6618 = vmatpush2.bf16.msra.mxu0 0
        %6619 = vmatprep.subr.bf16.mxu0 0
        %6620 = vmatpush2.bf16.msra.mxu0 0
        %6621 = vmatprep.subr.bf16.mxu0 0
        %6622 = vmatpush2.bf16.msra.mxu0 0
        %6623 = vmatprep.subr.bf16.mxu0 0
        %6624 = vmatpush2.bf16.msra.mxu0 0
        %6625 = vmatprep.subr.bf16.mxu0 0
        %6626 = vmatpush2.bf16.msra.mxu0 0
        %6627 = vmatprep.subr.bf16.mxu0 0
        %6628 = vmatpush2.bf16.msra.mxu0 0
        %6629 = vmatprep.mubr.bf16.mxu0 0
        %6630 = vmatmul.mubr.bf16.gmra.mxu0 %v5916
        %v6631 = vpop.f32.mrf.mxu0
        %v6632 = vadd.f32 %v6559, %v6631
        %v6633 = vpop.f32.mrf.mxu0
        %v6634 = vadd.f32 %v6561, %v6633
        %v6635 = vpop.f32.mrf.mxu0
        %v6636 = vadd.f32 %v6563, %v6635
        %v6637 = vpop.f32.mrf.mxu0
        %v6638 = vadd.f32 %v6565, %v6637
        %6639 = vmatprep.mubr.bf16.mxu0 0
        %6640 = vmatmul.mubr.bf16.gmra.mxu0 %v5919
        %v6641 = vpop.f32.mrf.mxu0
        %v6642 = vadd.f32 %v6569, %v6641
        %v6643 = vpop.f32.mrf.mxu0
        %v6644 = vadd.f32 %v6571, %v6643
        %v6645 = vpop.f32.mrf.mxu0
        %v6646 = vadd.f32 %v6573, %v6645
        %v6647 = vpop.f32.mrf.mxu0
        %v6648 = vadd.f32 %v6575, %v6647
        %6649 = vmatprep.mubr.bf16.mxu0 0
        %6650 = vmatmul.mubr.bf16.gmra.mxu0 %v5922
        %v6651 = vpop.f32.mrf.mxu0
        %v6652 = vadd.f32 %v6579, %v6651
        %v6653 = vpop.f32.mrf.mxu0
        %v6654 = vadd.f32 %v6581, %v6653
        %v6655 = vpop.f32.mrf.mxu0
        %v6656 = vadd.f32 %v6583, %v6655
        %v6657 = vpop.f32.mrf.mxu0
        %v6658 = vadd.f32 %v6585, %v6657
        %6659 = vmatprep.mubr.bf16.mxu0 0
        %6660 = vmatmul.mubr.bf16.gmra.mxu0 %v5925
        %v6661 = vpop.f32.mrf.mxu0
        %v6662 = vadd.f32 %v6589, %v6661
        %v6663 = vpop.f32.mrf.mxu0
        %v6664 = vadd.f32 %v6591, %v6663
        %v6665 = vpop.f32.mrf.mxu0
        %v6666 = vadd.f32 %v6593, %v6665
        %v6667 = vpop.f32.mrf.mxu0
        %v6668 = vadd.f32 %v6595, %v6667
        %6669 = vdwg.mxu0
        %6670 = vmatprep.subr.bf16.mxu0 %v6363
        %6671 = vmatpush1.bf16.msra.mxu0 %v6362
        %6672 = vmatprep.subr.bf16.mxu0 %v6359
        %6673 = vmatpush1.bf16.msra.mxu0 %v6358
        %6674 = vmatprep.subr.bf16.mxu0 %v6355
        %6675 = vmatpush1.bf16.msra.mxu0 %v6354
        %6676 = vmatprep.subr.bf16.mxu0 %v6351
        %6677 = vmatpush1.bf16.msra.mxu0 %v6350
        %6678 = vmatprep.subr.bf16.mxu0 %v6347
        %6679 = vmatpush1.bf16.msra.mxu0 %v6346
        %6680 = vmatprep.subr.bf16.mxu0 %v6343
        %6681 = vmatpush1.bf16.msra.mxu0 %v6342
        %6682 = vmatprep.subr.bf16.mxu0 %v6339
        %6683 = vmatpush1.bf16.msra.mxu0 %v6338
        %6684 = vmatprep.subr.bf16.mxu0 %v6335
        %6685 = vmatpush1.bf16.msra.mxu0 %v6334
        %6686 = vmatprep.subr.bf16.mxu0 %v6395
        %6687 = vmatpush2.bf16.msra.mxu0 %v6394
        %6688 = vmatprep.subr.bf16.mxu0 %v6391
        %6689 = vmatpush2.bf16.msra.mxu0 %v6390
        %6690 = vmatprep.subr.bf16.mxu0 %v6387
        %6691 = vmatpush2.bf16.msra.mxu0 %v6386
        %6692 = vmatprep.subr.bf16.mxu0 %v6383
        %6693 = vmatpush2.bf16.msra.mxu0 %v6382
        %6694 = vmatprep.subr.bf16.mxu0 %v6379
        %6695 = vmatpush2.bf16.msra.mxu0 %v6378
        %6696 = vmatprep.subr.bf16.mxu0 %v6375
        %6697 = vmatpush2.bf16.msra.mxu0 %v6374
        %6698 = vmatprep.subr.bf16.mxu0 %v6371
        %6699 = vmatpush2.bf16.msra.mxu0 %v6370
        %6700 = vmatprep.subr.bf16.mxu0 %v6367
        %6701 = vmatpush2.bf16.msra.mxu0 %v6366
        %6702 = vmatprep.mubr.bf16.mxu0 %v5915
        %6703 = vmatmul.mubr.bf16.gmra.mxu0 %v5914
        %v6704 = vpop.f32.mrf.mxu0
        %v6705 = vadd.f32 %v6035, %v6704
        %v6706 = vpop.f32.mrf.mxu0
        %v6707 = vadd.f32 %v6039, %v6706
        %v6708 = vpop.f32.mrf.mxu0
        %v6709 = vadd.f32 %v6035, %v6708
        %v6710 = vpop.f32.mrf.mxu0
        %v6711 = vadd.f32 %v6039, %v6710
        %6712 = vmatprep.mubr.bf16.mxu0 %v5918
        %6713 = vmatmul.mubr.bf16.gmra.mxu0 %v5917
        %v6714 = vpop.f32.mrf.mxu0
        %v6715 = vadd.f32 %v6035, %v6714
        %v6716 = vpop.f32.mrf.mxu0
        %v6717 = vadd.f32 %v6039, %v6716
        %v6718 = vpop.f32.mrf.mxu0
        %v6719 = vadd.f32 %v6035, %v6718
        %v6720 = vpop.f32.mrf.mxu0
        %v6721 = vadd.f32 %v6039, %v6720
        %6722 = vmatprep.mubr.bf16.mxu0 %v5921
        %6723 = vmatmul.mubr.bf16.gmra.mxu0 %v5920
        %v6724 = vpop.f32.mrf.mxu0
        %v6725 = vadd.f32 %v6035, %v6724
        %v6726 = vpop.f32.mrf.mxu0
        %v6727 = vadd.f32 %v6039, %v6726
        %v6728 = vpop.f32.mrf.mxu0
        %v6729 = vadd.f32 %v6035, %v6728
        %v6730 = vpop.f32.mrf.mxu0
        %v6731 = vadd.f32 %v6039, %v6730
        %6732 = vmatprep.mubr.bf16.mxu0 %v5924
        %6733 = vmatmul.mubr.bf16.gmra.mxu0 %v5923
        %v6734 = vpop.f32.mrf.mxu0
        %v6735 = vadd.f32 %v6035, %v6734
        %v6736 = vpop.f32.mrf.mxu0
        %v6737 = vadd.f32 %v6039, %v6736
        %v6738 = vpop.f32.mrf.mxu0
        %v6739 = vadd.f32 %v6035, %v6738
        %v6740 = vpop.f32.mrf.mxu0
        %v6741 = vadd.f32 %v6039, %v6740
        %6742 = vdwg.mxu0
        %6743 = vmatprep.subr.bf16.mxu0 %v6427
        %6744 = vmatpush1.bf16.msra.mxu0 %v6426
        %6745 = vmatprep.subr.bf16.mxu0 %v6423
        %6746 = vmatpush1.bf16.msra.mxu0 %v6422
        %6747 = vmatprep.subr.bf16.mxu0 %v6419
        %6748 = vmatpush1.bf16.msra.mxu0 %v6418
        %6749 = vmatprep.subr.bf16.mxu0 %v6415
        %6750 = vmatpush1.bf16.msra.mxu0 %v6414
        %6751 = vmatprep.subr.bf16.mxu0 %v6411
        %6752 = vmatpush1.bf16.msra.mxu0 %v6410
        %6753 = vmatprep.subr.bf16.mxu0 %v6407
        %6754 = vmatpush1.bf16.msra.mxu0 %v6406
        %6755 = vmatprep.subr.bf16.mxu0 %v6403
        %6756 = vmatpush1.bf16.msra.mxu0 %v6402
        %6757 = vmatprep.subr.bf16.mxu0 %v6399
        %6758 = vmatpush1.bf16.msra.mxu0 %v6398
        %6759 = vmatprep.subr.bf16.mxu0 0
        %6760 = vmatpush2.bf16.msra.mxu0 0
        %6761 = vmatprep.subr.bf16.mxu0 0
        %6762 = vmatpush2.bf16.msra.mxu0 0
        %6763 = vmatprep.subr.bf16.mxu0 0
        %6764 = vmatpush2.bf16.msra.mxu0 0
        %6765 = vmatprep.subr.bf16.mxu0 0
        %6766 = vmatpush2.bf16.msra.mxu0 0
        %6767 = vmatprep.subr.bf16.mxu0 0
        %6768 = vmatpush2.bf16.msra.mxu0 0
        %6769 = vmatprep.subr.bf16.mxu0 0
        %6770 = vmatpush2.bf16.msra.mxu0 0
        %6771 = vmatprep.subr.bf16.mxu0 0
        %6772 = vmatpush2.bf16.msra.mxu0 0
        %6773 = vmatprep.subr.bf16.mxu0 0
        %6774 = vmatpush2.bf16.msra.mxu0 0
        %6775 = vmatprep.mubr.bf16.mxu0 0
        %6776 = vmatmul.mubr.bf16.gmra.mxu0 %v5916
        %v6777 = vpop.f32.mrf.mxu0
        %v6778 = vadd.f32 %v6705, %v6777
        %v6779 = vpop.f32.mrf.mxu0
        %v6780 = vadd.f32 %v6707, %v6779
        %v6781 = vpop.f32.mrf.mxu0
        %v6782 = vadd.f32 %v6709, %v6781
        %v6783 = vpop.f32.mrf.mxu0
        %v6784 = vadd.f32 %v6711, %v6783
        %6785 = vmatprep.mubr.bf16.mxu0 0
        %6786 = vmatmul.mubr.bf16.gmra.mxu0 %v5919
        %v6787 = vpop.f32.mrf.mxu0
        %v6788 = vadd.f32 %v6715, %v6787
        %v6789 = vpop.f32.mrf.mxu0
        %v6790 = vadd.f32 %v6717, %v6789
        %v6791 = vpop.f32.mrf.mxu0
        %v6792 = vadd.f32 %v6719, %v6791
        %v6793 = vpop.f32.mrf.mxu0
        %v6794 = vadd.f32 %v6721, %v6793
        %6795 = vmatprep.mubr.bf16.mxu0 0
        %6796 = vmatmul.mubr.bf16.gmra.mxu0 %v5922
        %v6797 = vpop.f32.mrf.mxu0
        %v6798 = vadd.f32 %v6725, %v6797
        %v6799 = vpop.f32.mrf.mxu0
        %v6800 = vadd.f32 %v6727, %v6799
        %v6801 = vpop.f32.mrf.mxu0
        %v6802 = vadd.f32 %v6729, %v6801
        %v6803 = vpop.f32.mrf.mxu0
        %v6804 = vadd.f32 %v6731, %v6803
        %6805 = vmatprep.mubr.bf16.mxu0 0
        %6806 = vmatmul.mubr.bf16.gmra.mxu0 %v5925
        %v6807 = vpop.f32.mrf.mxu0
        %v6808 = vadd.f32 %v6735, %v6807
        %v6809 = vpop.f32.mrf.mxu0
        %v6810 = vadd.f32 %v6737, %v6809
        %v6811 = vpop.f32.mrf.mxu0
        %v6812 = vadd.f32 %v6739, %v6811
        %v6813 = vpop.f32.mrf.mxu0
        %v6814 = vadd.f32 %v6741, %v6813
        %6815 = vdwg.mxu0
        %v6816 = vmax.f32 %v6632, 0.0
        %v6817 = vmax.f32 %v6634, 0.0
        %v6818 = vmax.f32 %v6778, 0.0
        %v6819 = vmax.f32 %v6780, 0.0
        %v6820 = vmax.f32 %v6636, 0.0
        %v6821 = vmax.f32 %v6638, 0.0
        %v6822 = vmax.f32 %v6782, 0.0
        %v6823 = vmax.f32 %v6784, 0.0
        %v6824 = vmax.f32 %v6642, 0.0
        %v6825 = vmax.f32 %v6644, 0.0
        %v6826 = vmax.f32 %v6788, 0.0
        %v6827 = vmax.f32 %v6790, 0.0
        %v6828 = vmax.f32 %v6646, 0.0
        %v6829 = vmax.f32 %v6648, 0.0
        %v6830 = vmax.f32 %v6792, 0.0
        %v6831 = vmax.f32 %v6794, 0.0
        %v6832 = vmax.f32 %v6652, 0.0
        %v6833 = vmax.f32 %v6654, 0.0
        %v6834 = vmax.f32 %v6798, 0.0
        %v6835 = vmax.f32 %v6800, 0.0
        %v6836 = vmax.f32 %v6656, 0.0
        %v6837 = vmax.f32 %v6658, 0.0
        %v6838 = vmax.f32 %v6802, 0.0
        %v6839 = vmax.f32 %v6804, 0.0
        %v6840 = vmax.f32 %v6662, 0.0
        %v6841 = vmax.f32 %v6664, 0.0
        %v6842 = vmax.f32 %v6808, 0.0
        %v6843 = vmax.f32 %v6810, 0.0
        %v6844 = vmax.f32 %v6666, 0.0
        %v6845 = vmax.f32 %v6668, 0.0
        %v6846 = vmax.f32 %v6812, 0.0
        %v6847 = vmax.f32 %v6814, 0.0
        %v6848 = vpack.c.bf16 %v6820, %v6816
        %v6849 = vpack.c.bf16 %v6821, %v6817
        %v6850 = vpack.c.bf16 %v6822, %v6818
        %v6851 = vpack.c.bf16 %v6823, %v6819
        %v6852 = vpack.c.bf16 %v6828, %v6824
        %v6853 = vpack.c.bf16 %v6829, %v6825
        %v6854 = vpack.c.bf16 %v6830, %v6826
        %v6855 = vpack.c.bf16 %v6831, %v6827
        %v6856 = vpack.c.bf16 %v6836, %v6832
        %v6857 = vpack.c.bf16 %v6837, %v6833
        %v6858 = vpack.c.bf16 %v6838, %v6834
        %v6859 = vpack.c.bf16 %v6839, %v6835
        %v6860 = vpack.c.bf16 %v6844, %v6840
        %v6861 = vpack.c.bf16 %v6845, %v6841
        %v6862 = vpack.c.bf16 %v6846, %v6842
        %v6863 = vpack.c.bf16 %v6847, %v6843
        %v6864 = vld [vmem:[#allocation17] sm:$0xff]
        %v6865 = vld [vmem:[#allocation17 + $0x8] sm:$0xf]
        %v6866 = vld [vmem:[#allocation17 + $0xc] sm:$0xff]
        %v6867 = vld [vmem:[#allocation17 + $0x14] sm:$0xf]
        %v6868 = vld [vmem:[#allocation17 + $0x18] sm:$0xff]
        %v6869 = vld [vmem:[#allocation17 + $0x20] sm:$0xf]
        %v6870 = vld [vmem:[#allocation17 + $0x24] sm:$0xff]
        %v6871 = vld [vmem:[#allocation17 + $0x2c] sm:$0xf]
        %v6872 = vld [vmem:[#allocation17 + $0x30] sm:$0xff]
        %v6873 = vld [vmem:[#allocation17 + $0x38] sm:$0xf]
        %v6874 = vld [vmem:[#allocation17 + $0x3c] sm:$0xff]
        %v6875 = vld [vmem:[#allocation17 + $0x44] sm:$0xf]
        %v6876 = vld [vmem:[#allocation17 + $0x48] sm:$0xff]
        %v6877 = vld [vmem:[#allocation17 + $0x50] sm:$0xf]
        %v6878 = vld [vmem:[#allocation17 + $0x54] sm:$0xff]
        %v6879 = vld [vmem:[#allocation17 + $0x5c] sm:$0xf]
        %v6880 = vld [vmem:[#allocation17 + $0x60] sm:$0xff]
        %v6881 = vld [vmem:[#allocation17 + $0x68] sm:$0xf]
        %v6882 = vld [vmem:[#allocation17 + $0x6c] sm:$0xff]
        %v6883 = vld [vmem:[#allocation17 + $0x74] sm:$0xf]
        %v6884 = vld [vmem:[#allocation17 + $0x78] sm:$0xff]
        %v6885 = vld [vmem:[#allocation17 + $0x80] sm:$0xf]
        %v6886 = vld [vmem:[#allocation17 + $0x84] sm:$0xff]
        %v6887 = vld [vmem:[#allocation17 + $0x8c] sm:$0xf]
        %v6888 = vld [vmem:[#allocation17 + $0x90] sm:$0xff]
        %v6889 = vld [vmem:[#allocation17 + $0x98] sm:$0xf]
        %v6890 = vld [vmem:[#allocation17 + $0x9c] sm:$0xff]
        %v6891 = vld [vmem:[#allocation17 + $0xa4] sm:$0xf]
        %v6892 = vld [vmem:[#allocation17 + $0xa8] sm:$0xff]
        %v6893 = vld [vmem:[#allocation17 + $0xb0] sm:$0xf]
        %v6894 = vld [vmem:[#allocation17 + $0xb4] sm:$0xff]
        %v6895 = vld [vmem:[#allocation17 + $0xbc] sm:$0xf]
        %v6896 = vld [vmem:[#allocation17 + $0xc0] sm:$0xff]
        %v6897 = vld [vmem:[#allocation17 + $0xc8] sm:$0xf]
        %v6898 = vld [vmem:[#allocation17 + $0xcc] sm:$0xff]
        %v6899 = vld [vmem:[#allocation17 + $0xd4] sm:$0xf]
        %v6900 = vld [vmem:[#allocation17 + $0xd8] sm:$0xff]
        %v6901 = vld [vmem:[#allocation17 + $0xe0] sm:$0xf]
        %v6902 = vld [vmem:[#allocation17 + $0xe4] sm:$0xff]
        %v6903 = vld [vmem:[#allocation17 + $0xec] sm:$0xf]
        %v6904 = vld [vmem:[#allocation17 + $0xf0] sm:$0xff]
        %v6905 = vld [vmem:[#allocation17 + $0xf8] sm:$0xf]
        %v6906 = vld [vmem:[#allocation17 + $0xfc] sm:$0xff]
        %v6907 = vld [vmem:[#allocation17 + $0x104] sm:$0xf]
        %v6908 = vld [vmem:[#allocation17 + $0x108] sm:$0xff]
        %v6909 = vld [vmem:[#allocation17 + $0x110] sm:$0xf]
        %v6910 = vld [vmem:[#allocation17 + $0x114] sm:$0xff]
        %v6911 = vld [vmem:[#allocation17 + $0x11c] sm:$0xf]
        %v6912 = vld [vmem:[#allocation17 + $0x120] sm:$0xff]
        %v6913 = vld [vmem:[#allocation17 + $0x128] sm:$0xf]
        %v6914 = vld [vmem:[#allocation17 + $0x12c] sm:$0xff]
        %v6915 = vld [vmem:[#allocation17 + $0x134] sm:$0xf]
        %v6916 = vld [vmem:[#allocation17 + $0x138] sm:$0xff]
        %v6917 = vld [vmem:[#allocation17 + $0x140] sm:$0xf]
        %v6918 = vld [vmem:[#allocation17 + $0x144] sm:$0xff]
        %v6919 = vld [vmem:[#allocation17 + $0x14c] sm:$0xf]
        %v6920 = vld [vmem:[#allocation17 + $0x150] sm:$0xff]
        %v6921 = vld [vmem:[#allocation17 + $0x158] sm:$0xf]
        %v6922 = vld [vmem:[#allocation17 + $0x15c] sm:$0xff]
        %v6923 = vld [vmem:[#allocation17 + $0x164] sm:$0xf]
        %v6924 = vld [vmem:[#allocation17 + $0x168] sm:$0xff]
        %v6925 = vld [vmem:[#allocation17 + $0x170] sm:$0xf]
        %v6926 = vld [vmem:[#allocation17 + $0x174] sm:$0xff]
        %v6927 = vld [vmem:[#allocation17 + $0x17c] sm:$0xf]
        %v6928 = vld [vmem:[#allocation17 + $0x180] sm:$0xff]
        %v6929 = vld [vmem:[#allocation17 + $0x188] sm:$0xf]
        %v6930 = vld [vmem:[#allocation17 + $0x18c] sm:$0xff]
        %v6931 = vld [vmem:[#allocation17 + $0x194] sm:$0xf]
        %v6932 = vld [vmem:[#allocation17 + $0x198] sm:$0xff]
        %v6933 = vld [vmem:[#allocation17 + $0x1a0] sm:$0xf]
        %v6934 = vld [vmem:[#allocation17 + $0x1a4] sm:$0xff]
        %v6935 = vld [vmem:[#allocation17 + $0x1ac] sm:$0xf]
        %v6936 = vld [vmem:[#allocation17 + $0x1b0] sm:$0xff]
        %v6937 = vld [vmem:[#allocation17 + $0x1b8] sm:$0xf]
        %v6938 = vld [vmem:[#allocation17 + $0x1bc] sm:$0xff]
        %v6939 = vld [vmem:[#allocation17 + $0x1c4] sm:$0xf]
        %v6940 = vld [vmem:[#allocation17 + $0x1c8] sm:$0xff]
        %v6941 = vld [vmem:[#allocation17 + $0x1d0] sm:$0xf]
        %v6942 = vld [vmem:[#allocation17 + $0x1d4] sm:$0xff]
        %v6943 = vld [vmem:[#allocation17 + $0x1dc] sm:$0xf]
        %v6944 = vld [vmem:[#allocation17 + $0x1e0] sm:$0xff]
        %v6945 = vld [vmem:[#allocation17 + $0x1e8] sm:$0xf]
        %v6946 = vld [vmem:[#allocation17 + $0x1ec] sm:$0xff]
        %v6947 = vld [vmem:[#allocation17 + $0x1f4] sm:$0xf]
        %v6948 = vld [vmem:[#allocation17 + $0x1f8] sm:$0xff]
        %v6949 = vld [vmem:[#allocation17 + $0x200] sm:$0xf]
        %v6950 = vld [vmem:[#allocation17 + $0x204] sm:$0xff]
        %v6951 = vld [vmem:[#allocation17 + $0x20c] sm:$0xf]
        %v6952 = vld [vmem:[#allocation17 + $0x210] sm:$0xff]
        %v6953 = vld [vmem:[#allocation17 + $0x218] sm:$0xf]
        %v6954 = vld [vmem:[#allocation17 + $0x21c] sm:$0xff]
        %v6955 = vld [vmem:[#allocation17 + $0x224] sm:$0xf]
        %v6956 = vld [vmem:[#allocation17 + $0x228] sm:$0xff]
        %v6957 = vld [vmem:[#allocation17 + $0x230] sm:$0xf]
        %v6958 = vld [vmem:[#allocation17 + $0x234] sm:$0xff]
        %v6959 = vld [vmem:[#allocation17 + $0x23c] sm:$0xf]
        %v6960 = vld [vmem:[#allocation17 + $0x240] sm:$0xff]
        %v6961 = vld [vmem:[#allocation17 + $0x248] sm:$0xf]
        %v6962 = vld [vmem:[#allocation17 + $0x24c] sm:$0xff]
        %v6963 = vld [vmem:[#allocation17 + $0x254] sm:$0xf]
        %v6964 = vld [vmem:[#allocation17 + $0x258] sm:$0xff]
        %v6965 = vld [vmem:[#allocation17 + $0x260] sm:$0xf]
        %v6966 = vld [vmem:[#allocation17 + $0x264] sm:$0xff]
        %v6967 = vld [vmem:[#allocation17 + $0x26c] sm:$0xf]
        %v6968 = vld [vmem:[#allocation17 + $0x270] sm:$0xff]
        %v6969 = vld [vmem:[#allocation17 + $0x278] sm:$0xf]
        %v6970 = vld [vmem:[#allocation17 + $0x27c] sm:$0xff]
        %v6971 = vld [vmem:[#allocation17 + $0x284] sm:$0xf]
        %v6972 = vld [vmem:[#allocation17 + $0x288] sm:$0xff]
        %v6973 = vld [vmem:[#allocation17 + $0x290] sm:$0xf]
        %v6974 = vld [vmem:[#allocation17 + $0x294] sm:$0xff]
        %v6975 = vld [vmem:[#allocation17 + $0x29c] sm:$0xf]
        %v6976 = vld [vmem:[#allocation17 + $0x2a0] sm:$0xff]
        %v6977 = vld [vmem:[#allocation17 + $0x2a8] sm:$0xf]
        %v6978 = vld [vmem:[#allocation17 + $0x2ac] sm:$0xff]
        %v6979 = vld [vmem:[#allocation17 + $0x2b4] sm:$0xf]
        %v6980 = vld [vmem:[#allocation17 + $0x2b8] sm:$0xff]
        %v6981 = vld [vmem:[#allocation17 + $0x2c0] sm:$0xf]
        %v6982 = vld [vmem:[#allocation17 + $0x2c4] sm:$0xff]
        %v6983 = vld [vmem:[#allocation17 + $0x2cc] sm:$0xf]
        %v6984 = vld [vmem:[#allocation17 + $0x2d0] sm:$0xff]
        %v6985 = vld [vmem:[#allocation17 + $0x2d8] sm:$0xf]
        %v6986 = vld [vmem:[#allocation17 + $0x2dc] sm:$0xff]
        %v6987 = vld [vmem:[#allocation17 + $0x2e4] sm:$0xf]
        %v6988 = vld [vmem:[#allocation17 + $0x2e8] sm:$0xff]
        %v6989 = vld [vmem:[#allocation17 + $0x2f0] sm:$0xf]
        %v6990 = vld [vmem:[#allocation17 + $0x2f4] sm:$0xff]
        %v6991 = vld [vmem:[#allocation17 + $0x2fc] sm:$0xf]
        %v6992 = vld [vmem:[#allocation19] sm:$0x7]
        %v6994 = vlaneseq
        %v6995 = vshrl.u32 %v6994, 7
        %v6996 = vsub.s32 0, %v6995
        %v6997 = vrot.slane %v6992, %v6996
        %v6998 = vlaneseq
        %v6999 = vshrl.u32 %v6998, 7
        %v7000 = vsub.s32 1, %v6999
        %v7001 = vrot.slane %v6992, %v7000
        %v7002 = vlaneseq
        %v7003 = vshrl.u32 %v7002, 7
        %v7004 = vsub.s32 2, %v7003
        %v7005 = vrot.slane %v6992, %v7004
        %v7137 = vunpack.c.l.b16 %v6864
        %v7138 = vunpack.c.h.b16 %v6864
        %v7139 = vunpack.c.l.b16 %v6865
        %v7140 = vunpack.c.l.b16 %v6866
        %v7141 = vunpack.c.h.b16 %v6866
        %v7142 = vunpack.c.l.b16 %v6867
        %v7143 = vunpack.c.l.b16 %v6868
        %v7144 = vunpack.c.h.b16 %v6868
        %v7145 = vunpack.c.l.b16 %v6869
        %v7146 = vunpack.c.l.b16 %v6870
        %v7147 = vunpack.c.h.b16 %v6870
        %v7148 = vunpack.c.l.b16 %v6871
        %v7149 = vunpack.c.l.b16 %v6872
        %v7150 = vunpack.c.h.b16 %v6872
        %v7151 = vunpack.c.l.b16 %v6873
        %v7152 = vunpack.c.l.b16 %v6874
        %v7153 = vunpack.c.h.b16 %v6874
        %v7154 = vunpack.c.l.b16 %v6875
        %v7155 = vunpack.c.l.b16 %v6876
        %v7156 = vunpack.c.h.b16 %v6876
        %v7157 = vunpack.c.l.b16 %v6877
        %v7158 = vunpack.c.l.b16 %v6878
        %v7159 = vunpack.c.h.b16 %v6878
        %v7160 = vunpack.c.l.b16 %v6879
        %v7161 = vunpack.c.l.b16 %v6880
        %v7162 = vunpack.c.h.b16 %v6880
        %v7163 = vunpack.c.l.b16 %v6881
        %v7164 = vunpack.c.l.b16 %v6882
        %v7165 = vunpack.c.h.b16 %v6882
        %v7166 = vunpack.c.l.b16 %v6883
        %v7167 = vunpack.c.l.b16 %v6884
        %v7168 = vunpack.c.h.b16 %v6884
        %v7169 = vunpack.c.l.b16 %v6885
        %v7170 = vunpack.c.l.b16 %v6886
        %v7171 = vunpack.c.h.b16 %v6886
        %v7172 = vunpack.c.l.b16 %v6887
        %v7173 = vunpack.c.l.b16 %v6888
        %v7174 = vunpack.c.h.b16 %v6888
        %v7175 = vunpack.c.l.b16 %v6889
        %v7176 = vunpack.c.l.b16 %v6890
        %v7177 = vunpack.c.h.b16 %v6890
        %v7178 = vunpack.c.l.b16 %v6891
        %v7179 = vunpack.c.l.b16 %v6892
        %v7180 = vunpack.c.h.b16 %v6892
        %v7181 = vunpack.c.l.b16 %v6893
        %v7182 = vunpack.c.l.b16 %v6894
        %v7183 = vunpack.c.h.b16 %v6894
        %v7184 = vunpack.c.l.b16 %v6895
        %v7185 = vunpack.c.l.b16 %v6896
        %v7186 = vunpack.c.h.b16 %v6896
        %v7187 = vunpack.c.l.b16 %v6897
        %v7188 = vunpack.c.l.b16 %v6898
        %v7189 = vunpack.c.h.b16 %v6898
        %v7190 = vunpack.c.l.b16 %v6899
        %v7191 = vunpack.c.l.b16 %v6900
        %v7192 = vunpack.c.h.b16 %v6900
        %v7193 = vunpack.c.l.b16 %v6901
        %v7194 = vunpack.c.l.b16 %v6902
        %v7195 = vunpack.c.h.b16 %v6902
        %v7196 = vunpack.c.l.b16 %v6903
        %v7197 = vunpack.c.l.b16 %v6904
        %v7198 = vunpack.c.h.b16 %v6904
        %v7199 = vunpack.c.l.b16 %v6905
        %v7200 = vunpack.c.l.b16 %v6906
        %v7201 = vunpack.c.h.b16 %v6906
        %v7202 = vunpack.c.l.b16 %v6907
        %v7203 = vunpack.c.l.b16 %v6908
        %v7204 = vunpack.c.h.b16 %v6908
        %v7205 = vunpack.c.l.b16 %v6909
        %v7206 = vunpack.c.l.b16 %v6910
        %v7207 = vunpack.c.h.b16 %v6910
        %v7208 = vunpack.c.l.b16 %v6911
        %v7209 = vunpack.c.l.b16 %v6912
        %v7210 = vunpack.c.h.b16 %v6912
        %v7211 = vunpack.c.l.b16 %v6913
        %v7212 = vunpack.c.l.b16 %v6914
        %v7213 = vunpack.c.h.b16 %v6914
        %v7214 = vunpack.c.l.b16 %v6915
        %v7215 = vunpack.c.l.b16 %v6916
        %v7216 = vunpack.c.h.b16 %v6916
        %v7217 = vunpack.c.l.b16 %v6917
        %v7218 = vunpack.c.l.b16 %v6918
        %v7219 = vunpack.c.h.b16 %v6918
        %v7220 = vunpack.c.l.b16 %v6919
        %v7221 = vunpack.c.l.b16 %v6920
        %v7222 = vunpack.c.h.b16 %v6920
        %v7223 = vunpack.c.l.b16 %v6921
        %v7224 = vunpack.c.l.b16 %v6922
        %v7225 = vunpack.c.h.b16 %v6922
        %v7226 = vunpack.c.l.b16 %v6923
        %v7227 = vunpack.c.l.b16 %v6924
        %v7228 = vunpack.c.h.b16 %v6924
        %v7229 = vunpack.c.l.b16 %v6925
        %v7230 = vunpack.c.l.b16 %v6926
        %v7231 = vunpack.c.h.b16 %v6926
        %v7232 = vunpack.c.l.b16 %v6927
        %v7233 = vunpack.c.l.b16 %v6928
        %v7234 = vunpack.c.h.b16 %v6928
        %v7235 = vunpack.c.l.b16 %v6929
        %v7236 = vunpack.c.l.b16 %v6930
        %v7237 = vunpack.c.h.b16 %v6930
        %v7238 = vunpack.c.l.b16 %v6931
        %v7239 = vunpack.c.l.b16 %v6932
        %v7240 = vunpack.c.h.b16 %v6932
        %v7241 = vunpack.c.l.b16 %v6933
        %v7242 = vunpack.c.l.b16 %v6934
        %v7243 = vunpack.c.h.b16 %v6934
        %v7244 = vunpack.c.l.b16 %v6935
        %v7245 = vunpack.c.l.b16 %v6936
        %v7246 = vunpack.c.h.b16 %v6936
        %v7247 = vunpack.c.l.b16 %v6937
        %v7248 = vunpack.c.l.b16 %v6938
        %v7249 = vunpack.c.h.b16 %v6938
        %v7250 = vunpack.c.l.b16 %v6939
        %v7251 = vunpack.c.l.b16 %v6940
        %v7252 = vunpack.c.h.b16 %v6940
        %v7253 = vunpack.c.l.b16 %v6941
        %v7254 = vunpack.c.l.b16 %v6942
        %v7255 = vunpack.c.h.b16 %v6942
        %v7256 = vunpack.c.l.b16 %v6943
        %v7257 = vunpack.c.l.b16 %v6944
        %v7258 = vunpack.c.h.b16 %v6944
        %v7259 = vunpack.c.l.b16 %v6945
        %v7260 = vunpack.c.l.b16 %v6946
        %v7261 = vunpack.c.h.b16 %v6946
        %v7262 = vunpack.c.l.b16 %v6947
        %v7263 = vunpack.c.l.b16 %v6948
        %v7264 = vunpack.c.h.b16 %v6948
        %v7265 = vunpack.c.l.b16 %v6949
        %v7266 = vunpack.c.l.b16 %v6950
        %v7267 = vunpack.c.h.b16 %v6950
        %v7268 = vunpack.c.l.b16 %v6951
        %v7269 = vunpack.c.l.b16 %v6952
        %v7270 = vunpack.c.h.b16 %v6952
        %v7271 = vunpack.c.l.b16 %v6953
        %v7272 = vunpack.c.l.b16 %v6954
        %v7273 = vunpack.c.h.b16 %v6954
        %v7274 = vunpack.c.l.b16 %v6955
        %v7275 = vunpack.c.l.b16 %v6956
        %v7276 = vunpack.c.h.b16 %v6956
        %v7277 = vunpack.c.l.b16 %v6957
        %v7278 = vunpack.c.l.b16 %v6958
        %v7279 = vunpack.c.h.b16 %v6958
        %v7280 = vunpack.c.l.b16 %v6959
        %v7281 = vunpack.c.l.b16 %v6960
        %v7282 = vunpack.c.h.b16 %v6960
        %v7283 = vunpack.c.l.b16 %v6961
        %v7284 = vunpack.c.l.b16 %v6962
        %v7285 = vunpack.c.h.b16 %v6962
        %v7286 = vunpack.c.l.b16 %v6963
        %v7287 = vunpack.c.l.b16 %v6964
        %v7288 = vunpack.c.h.b16 %v6964
        %v7289 = vunpack.c.l.b16 %v6965
        %v7290 = vunpack.c.l.b16 %v6966
        %v7291 = vunpack.c.h.b16 %v6966
        %v7292 = vunpack.c.l.b16 %v6967
        %v7293 = vunpack.c.l.b16 %v6968
        %v7294 = vunpack.c.h.b16 %v6968
        %v7295 = vunpack.c.l.b16 %v6969
        %v7296 = vunpack.c.l.b16 %v6970
        %v7297 = vunpack.c.h.b16 %v6970
        %v7298 = vunpack.c.l.b16 %v6971
        %v7299 = vunpack.c.l.b16 %v6972
        %v7300 = vunpack.c.h.b16 %v6972
        %v7301 = vunpack.c.l.b16 %v6973
        %v7302 = vunpack.c.l.b16 %v6974
        %v7303 = vunpack.c.h.b16 %v6974
        %v7304 = vunpack.c.l.b16 %v6975
        %v7305 = vunpack.c.l.b16 %v6976
        %v7306 = vunpack.c.h.b16 %v6976
        %v7307 = vunpack.c.l.b16 %v6977
        %v7308 = vunpack.c.l.b16 %v6978
        %v7309 = vunpack.c.h.b16 %v6978
        %v7310 = vunpack.c.l.b16 %v6979
        %v7311 = vunpack.c.l.b16 %v6980
        %v7312 = vunpack.c.h.b16 %v6980
        %v7313 = vunpack.c.l.b16 %v6981
        %v7314 = vunpack.c.l.b16 %v6982
        %v7315 = vunpack.c.h.b16 %v6982
        %v7316 = vunpack.c.l.b16 %v6983
        %v7317 = vunpack.c.l.b16 %v6984
        %v7318 = vunpack.c.h.b16 %v6984
        %v7319 = vunpack.c.l.b16 %v6985
        %v7320 = vunpack.c.l.b16 %v6986
        %v7321 = vunpack.c.h.b16 %v6986
        %v7322 = vunpack.c.l.b16 %v6987
        %v7323 = vunpack.c.l.b16 %v6988
        %v7324 = vunpack.c.h.b16 %v6988
        %v7325 = vunpack.c.l.b16 %v6989
        %v7326 = vunpack.c.l.b16 %v6990
        %v7327 = vunpack.c.h.b16 %v6990
        %v7328 = vunpack.c.l.b16 %v6991
        %v7329 = vpack.c.b16 %v7140, %v7137
        %v7330 = vpack.c.b16 %v7141, %v7138
        %v7331 = vpack.c.b16 %v7142, %v7139
        %v7332 = vpack.c.b16 %v7146, %v7143
        %v7333 = vpack.c.b16 %v7147, %v7144
        %v7334 = vpack.c.b16 %v7148, %v7145
        %v7335 = vpack.c.b16 %v7152, %v7149
        %v7336 = vpack.c.b16 %v7153, %v7150
        %v7337 = vpack.c.b16 %v7154, %v7151
        %v7338 = vpack.c.b16 %v7158, %v7155
        %v7339 = vpack.c.b16 %v7159, %v7156
        %v7340 = vpack.c.b16 %v7160, %v7157
        %v7341 = vpack.c.b16 %v7164, %v7161
        %v7342 = vpack.c.b16 %v7165, %v7162
        %v7343 = vpack.c.b16 %v7166, %v7163
        %v7344 = vpack.c.b16 %v7170, %v7167
        %v7345 = vpack.c.b16 %v7171, %v7168
        %v7346 = vpack.c.b16 %v7172, %v7169
        %v7347 = vpack.c.b16 %v7176, %v7173
        %v7348 = vpack.c.b16 %v7177, %v7174
        %v7349 = vpack.c.b16 %v7178, %v7175
        %v7350 = vpack.c.b16 %v7182, %v7179
        %v7351 = vpack.c.b16 %v7183, %v7180
        %v7352 = vpack.c.b16 %v7184, %v7181
        %v7353 = vpack.c.b16 %v7188, %v7185
        %v7354 = vpack.c.b16 %v7189, %v7186
        %v7355 = vpack.c.b16 %v7190, %v7187
        %v7356 = vpack.c.b16 %v7194, %v7191
        %v7357 = vpack.c.b16 %v7195, %v7192
        %v7358 = vpack.c.b16 %v7196, %v7193
        %v7359 = vpack.c.b16 %v7200, %v7197
        %v7360 = vpack.c.b16 %v7201, %v7198
        %v7361 = vpack.c.b16 %v7202, %v7199
        %v7362 = vpack.c.b16 %v7206, %v7203
        %v7363 = vpack.c.b16 %v7207, %v7204
        %v7364 = vpack.c.b16 %v7208, %v7205
        %v7365 = vpack.c.b16 %v7212, %v7209
        %v7366 = vpack.c.b16 %v7213, %v7210
        %v7367 = vpack.c.b16 %v7214, %v7211
        %v7368 = vpack.c.b16 %v7218, %v7215
        %v7369 = vpack.c.b16 %v7219, %v7216
        %v7370 = vpack.c.b16 %v7220, %v7217
        %v7371 = vpack.c.b16 %v7224, %v7221
        %v7372 = vpack.c.b16 %v7225, %v7222
        %v7373 = vpack.c.b16 %v7226, %v7223
        %v7374 = vpack.c.b16 %v7230, %v7227
        %v7375 = vpack.c.b16 %v7231, %v7228
        %v7376 = vpack.c.b16 %v7232, %v7229
        %v7377 = vpack.c.b16 %v7236, %v7233
        %v7378 = vpack.c.b16 %v7237, %v7234
        %v7379 = vpack.c.b16 %v7238, %v7235
        %v7380 = vpack.c.b16 %v7242, %v7239
        %v7381 = vpack.c.b16 %v7243, %v7240
        %v7382 = vpack.c.b16 %v7244, %v7241
        %v7383 = vpack.c.b16 %v7248, %v7245
        %v7384 = vpack.c.b16 %v7249, %v7246
        %v7385 = vpack.c.b16 %v7250, %v7247
        %v7386 = vpack.c.b16 %v7254, %v7251
        %v7387 = vpack.c.b16 %v7255, %v7252
        %v7388 = vpack.c.b16 %v7256, %v7253
        %v7389 = vpack.c.b16 %v7260, %v7257
        %v7390 = vpack.c.b16 %v7261, %v7258
        %v7391 = vpack.c.b16 %v7262, %v7259
        %v7392 = vpack.c.b16 %v7266, %v7263
        %v7393 = vpack.c.b16 %v7267, %v7264
        %v7394 = vpack.c.b16 %v7268, %v7265
        %v7395 = vpack.c.b16 %v7272, %v7269
        %v7396 = vpack.c.b16 %v7273, %v7270
        %v7397 = vpack.c.b16 %v7274, %v7271
        %v7398 = vpack.c.b16 %v7278, %v7275
        %v7399 = vpack.c.b16 %v7279, %v7276
        %v7400 = vpack.c.b16 %v7280, %v7277
        %v7401 = vpack.c.b16 %v7284, %v7281
        %v7402 = vpack.c.b16 %v7285, %v7282
        %v7403 = vpack.c.b16 %v7286, %v7283
        %v7404 = vpack.c.b16 %v7290, %v7287
        %v7405 = vpack.c.b16 %v7291, %v7288
        %v7406 = vpack.c.b16 %v7292, %v7289
        %v7407 = vpack.c.b16 %v7296, %v7293
        %v7408 = vpack.c.b16 %v7297, %v7294
        %v7409 = vpack.c.b16 %v7298, %v7295
        %v7410 = vpack.c.b16 %v7302, %v7299
        %v7411 = vpack.c.b16 %v7303, %v7300
        %v7412 = vpack.c.b16 %v7304, %v7301
        %v7413 = vpack.c.b16 %v7308, %v7305
        %v7414 = vpack.c.b16 %v7309, %v7306
        %v7415 = vpack.c.b16 %v7310, %v7307
        %v7416 = vpack.c.b16 %v7314, %v7311
        %v7417 = vpack.c.b16 %v7315, %v7312
        %v7418 = vpack.c.b16 %v7316, %v7313
        %v7419 = vpack.c.b16 %v7320, %v7317
        %v7420 = vpack.c.b16 %v7321, %v7318
        %v7421 = vpack.c.b16 %v7322, %v7319
        %v7422 = vpack.c.b16 %v7326, %v7323
        %v7423 = vpack.c.b16 %v7327, %v7324
        %v7424 = vpack.c.b16 %v7328, %v7325
        %7521 = vmatprep.subr.bf16.mxu0 %v7351
        %7522 = vmatpush1.bf16.msra.mxu0 %v7350
        %7523 = vmatprep.subr.bf16.mxu0 %v7348
        %7524 = vmatpush1.bf16.msra.mxu0 %v7347
        %7525 = vmatprep.subr.bf16.mxu0 %v7345
        %7526 = vmatpush1.bf16.msra.mxu0 %v7344
        %7527 = vmatprep.subr.bf16.mxu0 %v7342
        %7528 = vmatpush1.bf16.msra.mxu0 %v7341
        %7529 = vmatprep.subr.bf16.mxu0 %v7339
        %7530 = vmatpush1.bf16.msra.mxu0 %v7338
        %7531 = vmatprep.subr.bf16.mxu0 %v7336
        %7532 = vmatpush1.bf16.msra.mxu0 %v7335
        %7533 = vmatprep.subr.bf16.mxu0 %v7333
        %7534 = vmatpush1.bf16.msra.mxu0 %v7332
        %7535 = vmatprep.subr.bf16.mxu0 %v7330
        %7536 = vmatpush1.bf16.msra.mxu0 %v7329
        %7537 = vmatprep.subr.bf16.mxu0 %v7375
        %7538 = vmatpush2.bf16.msra.mxu0 %v7374
        %7539 = vmatprep.subr.bf16.mxu0 %v7372
        %7540 = vmatpush2.bf16.msra.mxu0 %v7371
        %7541 = vmatprep.subr.bf16.mxu0 %v7369
        %7542 = vmatpush2.bf16.msra.mxu0 %v7368
        %7543 = vmatprep.subr.bf16.mxu0 %v7366
        %7544 = vmatpush2.bf16.msra.mxu0 %v7365
        %7545 = vmatprep.subr.bf16.mxu0 %v7363
        %7546 = vmatpush2.bf16.msra.mxu0 %v7362
        %7547 = vmatprep.subr.bf16.mxu0 %v7360
        %7548 = vmatpush2.bf16.msra.mxu0 %v7359
        %7549 = vmatprep.subr.bf16.mxu0 %v7357
        %7550 = vmatpush2.bf16.msra.mxu0 %v7356
        %7551 = vmatprep.subr.bf16.mxu0 %v7354
        %7552 = vmatpush2.bf16.msra.mxu0 %v7353
        %7553 = vmatprep.mubr.bf16.mxu0 %v6849
        %7554 = vmatmul.mubr.bf16.gmra.mxu0 %v6848
        %v7555 = vpop.f32.mrf.mxu0
        %v7556 = vadd.f32 %v6997, %v7555
        %v7557 = vpop.f32.mrf.mxu0
        %v7558 = vadd.f32 %v7001, %v7557
        %v7559 = vpop.f32.mrf.mxu0
        %v7560 = vadd.f32 %v6997, %v7559
        %v7561 = vpop.f32.mrf.mxu0
        %v7562 = vadd.f32 %v7001, %v7561
        %7563 = vmatprep.mubr.bf16.mxu0 %v6853
        %7564 = vmatmul.mubr.bf16.gmra.mxu0 %v6852
        %v7565 = vpop.f32.mrf.mxu0
        %v7566 = vadd.f32 %v6997, %v7565
        %v7567 = vpop.f32.mrf.mxu0
        %v7568 = vadd.f32 %v7001, %v7567
        %v7569 = vpop.f32.mrf.mxu0
        %v7570 = vadd.f32 %v6997, %v7569
        %v7571 = vpop.f32.mrf.mxu0
        %v7572 = vadd.f32 %v7001, %v7571
        %7573 = vmatprep.mubr.bf16.mxu0 %v6857
        %7574 = vmatmul.mubr.bf16.gmra.mxu0 %v6856
        %v7575 = vpop.f32.mrf.mxu0
        %v7576 = vadd.f32 %v6997, %v7575
        %v7577 = vpop.f32.mrf.mxu0
        %v7578 = vadd.f32 %v7001, %v7577
        %v7579 = vpop.f32.mrf.mxu0
        %v7580 = vadd.f32 %v6997, %v7579
        %v7581 = vpop.f32.mrf.mxu0
        %v7582 = vadd.f32 %v7001, %v7581
        %7583 = vmatprep.mubr.bf16.mxu0 %v6861
        %7584 = vmatmul.mubr.bf16.gmra.mxu0 %v6860
        %v7585 = vpop.f32.mrf.mxu0
        %v7586 = vadd.f32 %v6997, %v7585
        %v7587 = vpop.f32.mrf.mxu0
        %v7588 = vadd.f32 %v7001, %v7587
        %v7589 = vpop.f32.mrf.mxu0
        %v7590 = vadd.f32 %v6997, %v7589
        %v7591 = vpop.f32.mrf.mxu0
        %v7592 = vadd.f32 %v7001, %v7591
        %7593 = vdwg.mxu0
        %7594 = vmatprep.subr.bf16.mxu0 %v7399
        %7595 = vmatpush1.bf16.msra.mxu0 %v7398
        %7596 = vmatprep.subr.bf16.mxu0 %v7396
        %7597 = vmatpush1.bf16.msra.mxu0 %v7395
        %7598 = vmatprep.subr.bf16.mxu0 %v7393
        %7599 = vmatpush1.bf16.msra.mxu0 %v7392
        %7600 = vmatprep.subr.bf16.mxu0 %v7390
        %7601 = vmatpush1.bf16.msra.mxu0 %v7389
        %7602 = vmatprep.subr.bf16.mxu0 %v7387
        %7603 = vmatpush1.bf16.msra.mxu0 %v7386
        %7604 = vmatprep.subr.bf16.mxu0 %v7384
        %7605 = vmatpush1.bf16.msra.mxu0 %v7383
        %7606 = vmatprep.subr.bf16.mxu0 %v7381
        %7607 = vmatpush1.bf16.msra.mxu0 %v7380
        %7608 = vmatprep.subr.bf16.mxu0 %v7378
        %7609 = vmatpush1.bf16.msra.mxu0 %v7377
        %7610 = vmatprep.subr.bf16.mxu0 %v7423
        %7611 = vmatpush2.bf16.msra.mxu0 %v7422
        %7612 = vmatprep.subr.bf16.mxu0 %v7420
        %7613 = vmatpush2.bf16.msra.mxu0 %v7419
        %7614 = vmatprep.subr.bf16.mxu0 %v7417
        %7615 = vmatpush2.bf16.msra.mxu0 %v7416
        %7616 = vmatprep.subr.bf16.mxu0 %v7414
        %7617 = vmatpush2.bf16.msra.mxu0 %v7413
        %7618 = vmatprep.subr.bf16.mxu0 %v7411
        %7619 = vmatpush2.bf16.msra.mxu0 %v7410
        %7620 = vmatprep.subr.bf16.mxu0 %v7408
        %7621 = vmatpush2.bf16.msra.mxu0 %v7407
        %7622 = vmatprep.subr.bf16.mxu0 %v7405
        %7623 = vmatpush2.bf16.msra.mxu0 %v7404
        %7624 = vmatprep.subr.bf16.mxu0 %v7402
        %7625 = vmatpush2.bf16.msra.mxu0 %v7401
        %7626 = vmatprep.mubr.bf16.mxu0 %v6851
        %7627 = vmatmul.mubr.bf16.gmra.mxu0 %v6850
        %v7628 = vpop.f32.mrf.mxu0
        %v7629 = vadd.f32 %v7556, %v7628
        %v7630 = vpop.f32.mrf.mxu0
        %v7631 = vadd.f32 %v7558, %v7630
        %v7632 = vpop.f32.mrf.mxu0
        %v7633 = vadd.f32 %v7560, %v7632
        %v7634 = vpop.f32.mrf.mxu0
        %v7635 = vadd.f32 %v7562, %v7634
        %7636 = vmatprep.mubr.bf16.mxu0 %v6855
        %7637 = vmatmul.mubr.bf16.gmra.mxu0 %v6854
        %v7638 = vpop.f32.mrf.mxu0
        %v7639 = vadd.f32 %v7566, %v7638
        %v7640 = vpop.f32.mrf.mxu0
        %v7641 = vadd.f32 %v7568, %v7640
        %v7642 = vpop.f32.mrf.mxu0
        %v7643 = vadd.f32 %v7570, %v7642
        %v7644 = vpop.f32.mrf.mxu0
        %v7645 = vadd.f32 %v7572, %v7644
        %7646 = vmatprep.mubr.bf16.mxu0 %v6859
        %7647 = vmatmul.mubr.bf16.gmra.mxu0 %v6858
        %v7648 = vpop.f32.mrf.mxu0
        %v7649 = vadd.f32 %v7576, %v7648
        %v7650 = vpop.f32.mrf.mxu0
        %v7651 = vadd.f32 %v7578, %v7650
        %v7652 = vpop.f32.mrf.mxu0
        %v7653 = vadd.f32 %v7580, %v7652
        %v7654 = vpop.f32.mrf.mxu0
        %v7655 = vadd.f32 %v7582, %v7654
        %7656 = vmatprep.mubr.bf16.mxu0 %v6863
        %7657 = vmatmul.mubr.bf16.gmra.mxu0 %v6862
        %v7658 = vpop.f32.mrf.mxu0
        %v7659 = vadd.f32 %v7586, %v7658
        %v7660 = vpop.f32.mrf.mxu0
        %v7661 = vadd.f32 %v7588, %v7660
        %v7662 = vpop.f32.mrf.mxu0
        %v7663 = vadd.f32 %v7590, %v7662
        %v7664 = vpop.f32.mrf.mxu0
        %v7665 = vadd.f32 %v7592, %v7664
        %7666 = vdwg.mxu0
        %7667 = vmatprep.subr.bf16.mxu0 0
        %7668 = vmatpush1.bf16.msra.mxu0 %v7352
        %7669 = vmatprep.subr.bf16.mxu0 0
        %7670 = vmatpush1.bf16.msra.mxu0 %v7349
        %7671 = vmatprep.subr.bf16.mxu0 0
        %7672 = vmatpush1.bf16.msra.mxu0 %v7346
        %7673 = vmatprep.subr.bf16.mxu0 0
        %7674 = vmatpush1.bf16.msra.mxu0 %v7343
        %7675 = vmatprep.subr.bf16.mxu0 0
        %7676 = vmatpush1.bf16.msra.mxu0 %v7340
        %7677 = vmatprep.subr.bf16.mxu0 0
        %7678 = vmatpush1.bf16.msra.mxu0 %v7337
        %7679 = vmatprep.subr.bf16.mxu0 0
        %7680 = vmatpush1.bf16.msra.mxu0 %v7334
        %7681 = vmatprep.subr.bf16.mxu0 0
        %7682 = vmatpush1.bf16.msra.mxu0 %v7331
        %7683 = vmatprep.subr.bf16.mxu0 0
        %7684 = vmatpush2.bf16.msra.mxu0 %v7376
        %7685 = vmatprep.subr.bf16.mxu0 0
        %7686 = vmatpush2.bf16.msra.mxu0 %v7373
        %7687 = vmatprep.subr.bf16.mxu0 0
        %7688 = vmatpush2.bf16.msra.mxu0 %v7370
        %7689 = vmatprep.subr.bf16.mxu0 0
        %7690 = vmatpush2.bf16.msra.mxu0 %v7367
        %7691 = vmatprep.subr.bf16.mxu0 0
        %7692 = vmatpush2.bf16.msra.mxu0 %v7364
        %7693 = vmatprep.subr.bf16.mxu0 0
        %7694 = vmatpush2.bf16.msra.mxu0 %v7361
        %7695 = vmatprep.subr.bf16.mxu0 0
        %7696 = vmatpush2.bf16.msra.mxu0 %v7358
        %7697 = vmatprep.subr.bf16.mxu0 0
        %7698 = vmatpush2.bf16.msra.mxu0 %v7355
        %7699 = vmatprep.mubr.bf16.mxu0 %v6849
        %7700 = vmatmul.mubr.bf16.gmra.mxu0 %v6848
        %v7701 = vpop.f32.mrf.mxu0
        %v7702 = vadd.f32 %v7005, %v7701
        %v7703 = vpop.f32.mrf.mxu0
        %v7704 = vpop.f32.mrf.mxu0
        %v7705 = vadd.f32 %v7005, %v7704
        %v7706 = vpop.f32.mrf.mxu0
        %7707 = vmatprep.mubr.bf16.mxu0 %v6853
        %7708 = vmatmul.mubr.bf16.gmra.mxu0 %v6852
        %v7709 = vpop.f32.mrf.mxu0
        %v7710 = vadd.f32 %v7005, %v7709
        %v7711 = vpop.f32.mrf.mxu0
        %v7712 = vpop.f32.mrf.mxu0
        %v7713 = vadd.f32 %v7005, %v7712
        %v7714 = vpop.f32.mrf.mxu0
        %7715 = vmatprep.mubr.bf16.mxu0 %v6857
        %7716 = vmatmul.mubr.bf16.gmra.mxu0 %v6856
        %v7717 = vpop.f32.mrf.mxu0
        %v7718 = vadd.f32 %v7005, %v7717
        %v7719 = vpop.f32.mrf.mxu0
        %v7720 = vpop.f32.mrf.mxu0
        %v7721 = vadd.f32 %v7005, %v7720
        %v7722 = vpop.f32.mrf.mxu0
        %7723 = vmatprep.mubr.bf16.mxu0 %v6861
        %7724 = vmatmul.mubr.bf16.gmra.mxu0 %v6860
        %v7725 = vpop.f32.mrf.mxu0
        %v7726 = vadd.f32 %v7005, %v7725
        %v7727 = vpop.f32.mrf.mxu0
        %v7728 = vpop.f32.mrf.mxu0
        %v7729 = vadd.f32 %v7005, %v7728
        %v7730 = vpop.f32.mrf.mxu0
        %7731 = vdwg.mxu0
        %7732 = vmatprep.subr.bf16.mxu0 0
        %7733 = vmatpush1.bf16.msra.mxu0 %v7400
        %7734 = vmatprep.subr.bf16.mxu0 0
        %7735 = vmatpush1.bf16.msra.mxu0 %v7397
        %7736 = vmatprep.subr.bf16.mxu0 0
        %7737 = vmatpush1.bf16.msra.mxu0 %v7394
        %7738 = vmatprep.subr.bf16.mxu0 0
        %7739 = vmatpush1.bf16.msra.mxu0 %v7391
        %7740 = vmatprep.subr.bf16.mxu0 0
        %7741 = vmatpush1.bf16.msra.mxu0 %v7388
        %7742 = vmatprep.subr.bf16.mxu0 0
        %7743 = vmatpush1.bf16.msra.mxu0 %v7385
        %7744 = vmatprep.subr.bf16.mxu0 0
        %7745 = vmatpush1.bf16.msra.mxu0 %v7382
        %7746 = vmatprep.subr.bf16.mxu0 0
        %7747 = vmatpush1.bf16.msra.mxu0 %v7379
        %7748 = vmatprep.subr.bf16.mxu0 0
        %7749 = vmatpush2.bf16.msra.mxu0 %v7424
        %7750 = vmatprep.subr.bf16.mxu0 0
        %7751 = vmatpush2.bf16.msra.mxu0 %v7421
        %7752 = vmatprep.subr.bf16.mxu0 0
        %7753 = vmatpush2.bf16.msra.mxu0 %v7418
        %7754 = vmatprep.subr.bf16.mxu0 0
        %7755 = vmatpush2.bf16.msra.mxu0 %v7415
        %7756 = vmatprep.subr.bf16.mxu0 0
        %7757 = vmatpush2.bf16.msra.mxu0 %v7412
        %7758 = vmatprep.subr.bf16.mxu0 0
        %7759 = vmatpush2.bf16.msra.mxu0 %v7409
        %7760 = vmatprep.subr.bf16.mxu0 0
        %7761 = vmatpush2.bf16.msra.mxu0 %v7406
        %7762 = vmatprep.subr.bf16.mxu0 0
        %7763 = vmatpush2.bf16.msra.mxu0 %v7403
        %7764 = vmatprep.mubr.bf16.mxu0 %v6851
        %7765 = vmatmul.mubr.bf16.gmra.mxu0 %v6850
        %v7766 = vpop.f32.mrf.mxu0
        %v7767 = vadd.f32 %v7702, %v7766
        %v7768 = vpop.f32.mrf.mxu0
        %v7769 = vpop.f32.mrf.mxu0
        %v7770 = vadd.f32 %v7705, %v7769
        %v7771 = vpop.f32.mrf.mxu0
        %7772 = vmatprep.mubr.bf16.mxu0 %v6855
        %7773 = vmatmul.mubr.bf16.gmra.mxu0 %v6854
        %v7774 = vpop.f32.mrf.mxu0
        %v7775 = vadd.f32 %v7710, %v7774
        %v7776 = vpop.f32.mrf.mxu0
        %v7777 = vpop.f32.mrf.mxu0
        %v7778 = vadd.f32 %v7713, %v7777
        %v7779 = vpop.f32.mrf.mxu0
        %7780 = vmatprep.mubr.bf16.mxu0 %v6859
        %7781 = vmatmul.mubr.bf16.gmra.mxu0 %v6858
        %v7782 = vpop.f32.mrf.mxu0
        %v7783 = vadd.f32 %v7718, %v7782
        %v7784 = vpop.f32.mrf.mxu0
        %v7785 = vpop.f32.mrf.mxu0
        %v7786 = vadd.f32 %v7721, %v7785
        %v7787 = vpop.f32.mrf.mxu0
        %7788 = vmatprep.mubr.bf16.mxu0 %v6863
        %7789 = vmatmul.mubr.bf16.gmra.mxu0 %v6862
        %v7790 = vpop.f32.mrf.mxu0
        %v7791 = vadd.f32 %v7726, %v7790
        %v7792 = vpop.f32.mrf.mxu0
        %v7793 = vpop.f32.mrf.mxu0
        %v7794 = vadd.f32 %v7729, %v7793
        %v7795 = vpop.f32.mrf.mxu0
        %7796 = vdwg.mxu0
        %v7797 = vadd.f32 %v5890, %v7629
        %v7798 = vadd.f32 %v5891, %v7631
        %v7799 = vadd.f32 %v5892, %v7767
        %v7800 = vadd.f32 %v5893, %v7633
        %v7801 = vadd.f32 %v5894, %v7635
        %v7802 = vadd.f32 %v5895, %v7770
        %v7803 = vadd.f32 %v5896, %v7639
        %v7804 = vadd.f32 %v5897, %v7641
        %v7805 = vadd.f32 %v5898, %v7775
        %v7806 = vadd.f32 %v5899, %v7643
        %v7807 = vadd.f32 %v5900, %v7645
        %v7808 = vadd.f32 %v5901, %v7778
        %v7809 = vadd.f32 %v5902, %v7649
        %v7810 = vadd.f32 %v5903, %v7651
        %v7811 = vadd.f32 %v5904, %v7783
        %v7812 = vadd.f32 %v5905, %v7653
        %v7813 = vadd.f32 %v5906, %v7655
        %v7814 = vadd.f32 %v5907, %v7786
        %v7815 = vadd.f32 %v5908, %v7659
        %v7816 = vadd.f32 %v5909, %v7661
        %v7817 = vadd.f32 %v5910, %v7791
        %v7818 = vadd.f32 %v5911, %v7663
        %v7819 = vadd.f32 %v5912, %v7665
        %v7820 = vadd.f32 %v5913, %v7794
        %v7821 = vld [vmem:[#allocation20] sm:$0x7]
        %v7822 = vld [vmem:[#allocation22] sm:$0x7]
        %v7823 = vadd.f32 %v7797, %v7798
        %v7824 = vadd.f32 %v7823, %v7799
        %7825 = vadd.xlane.f32.xlu0 %v7824
        %v7826 = vpop.xlane.xlu0 %7825
        %v7827 = vadd.f32 %v7800, %v7801
        %v7828 = vadd.f32 %v7827, %v7802
        %7829 = vadd.xlane.f32.xlu0 %v7828
        %v7830 = vpop.xlane.xlu0 %7829
        %v7831 = vadd.f32 %v7803, %v7804
        %v7832 = vadd.f32 %v7831, %v7805
        %7833 = vadd.xlane.f32.xlu0 %v7832
        %v7834 = vpop.xlane.xlu0 %7833
        %v7835 = vadd.f32 %v7806, %v7807
        %v7836 = vadd.f32 %v7835, %v7808
        %7837 = vadd.xlane.f32.xlu0 %v7836
        %v7838 = vpop.xlane.xlu0 %7837
        %v7839 = vadd.f32 %v7809, %v7810
        %v7840 = vadd.f32 %v7839, %v7811
        %7841 = vadd.xlane.f32.xlu0 %v7840
        %v7842 = vpop.xlane.xlu0 %7841
        %v7843 = vadd.f32 %v7812, %v7813
        %v7844 = vadd.f32 %v7843, %v7814
        %7845 = vadd.xlane.f32.xlu0 %v7844
        %v7846 = vpop.xlane.xlu0 %7845
        %v7847 = vadd.f32 %v7815, %v7816
        %v7848 = vadd.f32 %v7847, %v7817
        %7849 = vadd.xlane.f32.xlu0 %v7848
        %v7850 = vpop.xlane.xlu0 %7849
        %v7851 = vadd.f32 %v7818, %v7819
        %v7852 = vadd.f32 %v7851, %v7820
        %7853 = vadd.xlane.f32.xlu0 %v7852
        %v7854 = vpop.xlane.xlu0 %7853
        %v7855 = vmul.f32 %v7826, %v5697
        %v7856 = vmul.f32 %v7830, %v5697
        %v7857 = vmul.f32 %v7834, %v5697
        %v7858 = vmul.f32 %v7838, %v5697
        %v7859 = vmul.f32 %v7842, %v5697
        %v7860 = vmul.f32 %v7846, %v5697
        %v7861 = vmul.f32 %v7850, %v5697
        %v7862 = vmul.f32 %v7854, %v5697
        %v7863 = vsub.f32 %v7797, %v7855
        %v7864 = vsub.f32 %v7798, %v7855
        %v7865 = vsub.f32 %v7799, %v7855
        %v7866 = vsub.f32 %v7800, %v7856
        %v7867 = vsub.f32 %v7801, %v7856
        %v7868 = vsub.f32 %v7802, %v7856
        %v7869 = vsub.f32 %v7803, %v7857
        %v7870 = vsub.f32 %v7804, %v7857
        %v7871 = vsub.f32 %v7805, %v7857
        %v7872 = vsub.f32 %v7806, %v7858
        %v7873 = vsub.f32 %v7807, %v7858
        %v7874 = vsub.f32 %v7808, %v7858
        %v7875 = vsub.f32 %v7809, %v7859
        %v7876 = vsub.f32 %v7810, %v7859
        %v7877 = vsub.f32 %v7811, %v7859
        %v7878 = vsub.f32 %v7812, %v7860
        %v7879 = vsub.f32 %v7813, %v7860
        %v7880 = vsub.f32 %v7814, %v7860
        %v7881 = vsub.f32 %v7815, %v7861
        %v7882 = vsub.f32 %v7816, %v7861
        %v7883 = vsub.f32 %v7817, %v7861
        %v7884 = vsub.f32 %v7818, %v7862
        %v7885 = vsub.f32 %v7819, %v7862
        %v7886 = vsub.f32 %v7820, %v7862
        %v7887 = vmul.f32 %v7863, %v7863
        %v7888 = vmul.f32 %v7864, %v7864
        %v7889 = vmul.f32 %v7865, %v7865
        %v7890 = vmul.f32 %v7866, %v7866
        %v7891 = vmul.f32 %v7867, %v7867
        %v7892 = vmul.f32 %v7868, %v7868
        %v7893 = vmul.f32 %v7869, %v7869
        %v7894 = vmul.f32 %v7870, %v7870
        %v7895 = vmul.f32 %v7871, %v7871
        %v7896 = vmul.f32 %v7872, %v7872
        %v7897 = vmul.f32 %v7873, %v7873
        %v7898 = vmul.f32 %v7874, %v7874
        %v7899 = vmul.f32 %v7875, %v7875
        %v7900 = vmul.f32 %v7876, %v7876
        %v7901 = vmul.f32 %v7877, %v7877
        %v7902 = vmul.f32 %v7878, %v7878
        %v7903 = vmul.f32 %v7879, %v7879
        %v7904 = vmul.f32 %v7880, %v7880
        %v7905 = vmul.f32 %v7881, %v7881
        %v7906 = vmul.f32 %v7882, %v7882
        %v7907 = vmul.f32 %v7883, %v7883
        %v7908 = vmul.f32 %v7884, %v7884
        %v7909 = vmul.f32 %v7885, %v7885
        %v7910 = vmul.f32 %v7886, %v7886
        %v7911 = vadd.f32 %v7887, %v7888
        %v7912 = vadd.f32 %v7911, %v7889
        %7913 = vadd.xlane.f32.xlu0 %v7912
        %v7914 = vpop.xlane.xlu0 %7913
        %v7915 = vadd.f32 %v7890, %v7891
        %v7916 = vadd.f32 %v7915, %v7892
        %7917 = vadd.xlane.f32.xlu0 %v7916
        %v7918 = vpop.xlane.xlu0 %7917
        %v7919 = vadd.f32 %v7893, %v7894
        %v7920 = vadd.f32 %v7919, %v7895
        %7921 = vadd.xlane.f32.xlu0 %v7920
        %v7922 = vpop.xlane.xlu0 %7921
        %v7923 = vadd.f32 %v7896, %v7897
        %v7924 = vadd.f32 %v7923, %v7898
        %7925 = vadd.xlane.f32.xlu0 %v7924
        %v7926 = vpop.xlane.xlu0 %7925
        %v7927 = vadd.f32 %v7899, %v7900
        %v7928 = vadd.f32 %v7927, %v7901
        %7929 = vadd.xlane.f32.xlu0 %v7928
        %v7930 = vpop.xlane.xlu0 %7929
        %v7931 = vadd.f32 %v7902, %v7903
        %v7932 = vadd.f32 %v7931, %v7904
        %7933 = vadd.xlane.f32.xlu0 %v7932
        %v7934 = vpop.xlane.xlu0 %7933
        %v7935 = vadd.f32 %v7905, %v7906
        %v7936 = vadd.f32 %v7935, %v7907
        %7937 = vadd.xlane.f32.xlu0 %v7936
        %v7938 = vpop.xlane.xlu0 %7937
        %v7939 = vadd.f32 %v7908, %v7909
        %v7940 = vadd.f32 %v7939, %v7910
        %7941 = vadd.xlane.f32.xlu0 %v7940
        %v7942 = vpop.xlane.xlu0 %7941
        %v7943 = vmul.f32 %v7914, %v5697
        %v7944 = vmul.f32 %v7918, %v5697
        %v7945 = vmul.f32 %v7922, %v5697
        %v7946 = vmul.f32 %v7926, %v5697
        %v7947 = vmul.f32 %v7930, %v5697
        %v7948 = vmul.f32 %v7934, %v5697
        %v7949 = vmul.f32 %v7938, %v5697
        %v7950 = vmul.f32 %v7942, %v5697
        %v7951 = vadd.f32 %v7943, 1e-05
        %v7952 = vadd.f32 %v7944, 1e-05
        %v7953 = vadd.f32 %v7945, 1e-05
        %v7954 = vadd.f32 %v7946, 1e-05
        %v7955 = vadd.f32 %v7947, 1e-05
        %v7956 = vadd.f32 %v7948, 1e-05
        %v7957 = vadd.f32 %v7949, 1e-05
        %v7958 = vadd.f32 %v7950, 1e-05
        %v7959 = vrsqrt.pop %v7951
        %v7960 = vrsqrt.pop %v7952
        %v7961 = vrsqrt.pop %v7953
        %v7962 = vrsqrt.pop %v7954
        %v7963 = vrsqrt.pop %v7955
        %v7964 = vrsqrt.pop %v7956
        %v7965 = vrsqrt.pop %v7957
        %v7966 = vrsqrt.pop %v7958
        %v7967 = vmul.f32 %v7863, %v7959
        %v7968 = vmul.f32 %v7864, %v7959
        %v7969 = vmul.f32 %v7865, %v7959
        %v7970 = vmul.f32 %v7866, %v7960
        %v7971 = vmul.f32 %v7867, %v7960
        %v7972 = vmul.f32 %v7868, %v7960
        %v7973 = vmul.f32 %v7869, %v7961
        %v7974 = vmul.f32 %v7870, %v7961
        %v7975 = vmul.f32 %v7871, %v7961
        %v7976 = vmul.f32 %v7872, %v7962
        %v7977 = vmul.f32 %v7873, %v7962
        %v7978 = vmul.f32 %v7874, %v7962
        %v7979 = vmul.f32 %v7875, %v7963
        %v7980 = vmul.f32 %v7876, %v7963
        %v7981 = vmul.f32 %v7877, %v7963
        %v7982 = vmul.f32 %v7878, %v7964
        %v7983 = vmul.f32 %v7879, %v7964
        %v7984 = vmul.f32 %v7880, %v7964
        %v7985 = vmul.f32 %v7881, %v7965
        %v7986 = vmul.f32 %v7882, %v7965
        %v7987 = vmul.f32 %v7883, %v7965
        %v7988 = vmul.f32 %v7884, %v7966
        %v7989 = vmul.f32 %v7885, %v7966
        %v7990 = vmul.f32 %v7886, %v7966
        %v7992 = vlaneseq
        %v7993 = vshrl.u32 %v7992, 7
        %v7994 = vsub.s32 0, %v7993
        %v7995 = vrot.slane %v7821, %v7994
        %v7996 = vlaneseq
        %v7997 = vshrl.u32 %v7996, 7
        %v7998 = vsub.s32 1, %v7997
        %v7999 = vrot.slane %v7821, %v7998
        %v8000 = vlaneseq
        %v8001 = vshrl.u32 %v8000, 7
        %v8002 = vsub.s32 2, %v8001
        %v8003 = vrot.slane %v7821, %v8002
        %v8007 = vmul.f32 %v7967, %v7995
        %v8008 = vmul.f32 %v7968, %v7999
        %v8009 = vmul.f32 %v7969, %v8003
        %v8010 = vmul.f32 %v7970, %v7995
        %v8011 = vmul.f32 %v7971, %v7999
        %v8012 = vmul.f32 %v7972, %v8003
        %v8013 = vmul.f32 %v7973, %v7995
        %v8014 = vmul.f32 %v7974, %v7999
        %v8015 = vmul.f32 %v7975, %v8003
        %v8016 = vmul.f32 %v7976, %v7995
        %v8017 = vmul.f32 %v7977, %v7999
        %v8018 = vmul.f32 %v7978, %v8003
        %v8019 = vmul.f32 %v7979, %v7995
        %v8020 = vmul.f32 %v7980, %v7999
        %v8021 = vmul.f32 %v7981, %v8003
        %v8022 = vmul.f32 %v7982, %v7995
        %v8023 = vmul.f32 %v7983, %v7999
        %v8024 = vmul.f32 %v7984, %v8003
        %v8025 = vmul.f32 %v7985, %v7995
        %v8026 = vmul.f32 %v7986, %v7999
        %v8027 = vmul.f32 %v7987, %v8003
        %v8028 = vmul.f32 %v7988, %v7995
        %v8029 = vmul.f32 %v7989, %v7999
        %v8030 = vmul.f32 %v7990, %v8003
        %v8032 = vlaneseq
        %v8033 = vshrl.u32 %v8032, 7
        %v8034 = vsub.s32 0, %v8033
        %v8035 = vrot.slane %v7822, %v8034
        %v8036 = vlaneseq
        %v8037 = vshrl.u32 %v8036, 7
        %v8038 = vsub.s32 1, %v8037
        %v8039 = vrot.slane %v7822, %v8038
        %v8040 = vlaneseq
        %v8041 = vshrl.u32 %v8040, 7
        %v8042 = vsub.s32 2, %v8041
        %v8043 = vrot.slane %v7822, %v8042
        %v8047 = vadd.f32 %v8007, %v8035
        %v8048 = vadd.f32 %v8008, %v8039
        %v8049 = vadd.f32 %v8009, %v8043
        %v8050 = vadd.f32 %v8010, %v8035
        %v8051 = vadd.f32 %v8011, %v8039
        %v8052 = vadd.f32 %v8012, %v8043
        %v8053 = vadd.f32 %v8013, %v8035
        %v8054 = vadd.f32 %v8014, %v8039
        %v8055 = vadd.f32 %v8015, %v8043
        %v8056 = vadd.f32 %v8016, %v8035
        %v8057 = vadd.f32 %v8017, %v8039
        %v8058 = vadd.f32 %v8018, %v8043
        %v8059 = vadd.f32 %v8019, %v8035
        %v8060 = vadd.f32 %v8020, %v8039
        %v8061 = vadd.f32 %v8021, %v8043
        %v8062 = vadd.f32 %v8022, %v8035
        %v8063 = vadd.f32 %v8023, %v8039
        %v8064 = vadd.f32 %v8024, %v8043
        %v8065 = vadd.f32 %v8025, %v8035
        %v8066 = vadd.f32 %v8026, %v8039
        %v8067 = vadd.f32 %v8027, %v8043
        %v8068 = vadd.f32 %v8028, %v8035
        %v8069 = vadd.f32 %v8029, %v8039
        %v8070 = vadd.f32 %v8030, %v8043
        %8071 = vst [vmem:[%s617] sm:$0xff] %v8047
        %8072 = vst [vmem:[%s617 + $0x8] sm:$0xff] %v8048
        %8073 = vst [vmem:[%s617 + $0x10] sm:$0xff] %v8049
        %8074 = vst [vmem:[%s617 + $0x18] sm:$0xff] %v8050
        %8075 = vst [vmem:[%s617 + $0x20] sm:$0xff] %v8051
        %8076 = vst [vmem:[%s617 + $0x28] sm:$0xff] %v8052
        %8077 = vst [vmem:[%s617 + $0x30] sm:$0xff] %v8053
        %8078 = vst [vmem:[%s617 + $0x38] sm:$0xff] %v8054
        %8079 = vst [vmem:[%s617 + $0x40] sm:$0xff] %v8055
        %8080 = vst [vmem:[%s617 + $0x48] sm:$0xff] %v8056
        %8081 = vst [vmem:[%s617 + $0x50] sm:$0xff] %v8057
        %8082 = vst [vmem:[%s617 + $0x58] sm:$0xff] %v8058
        %8083 = vst [vmem:[%s617 + $0x60] sm:$0xff] %v8059
        %8084 = vst [vmem:[%s617 + $0x68] sm:$0xff] %v8060
        %8085 = vst [vmem:[%s617 + $0x70] sm:$0xff] %v8061
        %8086 = vst [vmem:[%s617 + $0x78] sm:$0xff] %v8062
        %8087 = vst [vmem:[%s617 + $0x80] sm:$0xff] %v8063
        %8088 = vst [vmem:[%s617 + $0x88] sm:$0xff] %v8064
        %8089 = vst [vmem:[%s617 + $0x90] sm:$0xff] %v8065
        %8090 = vst [vmem:[%s617 + $0x98] sm:$0xff] %v8066
        %8091 = vst [vmem:[%s617 + $0xa0] sm:$0xff] %v8067
        %8092 = vst [vmem:[%s617 + $0xa8] sm:$0xff] %v8068
        %8093 = vst [vmem:[%s617 + $0xb0] sm:$0xff] %v8069
        %8094 = vst [vmem:[%s617 + $0xb8] sm:$0xff] %v8070
        %s8095 = sand.u32 %s322, 1
        %s8096 = scalar_lea.sflag [#allocation4], %s8095
        %s8097 = sand.u32 %s322, 1
        %s8098 = smul.addr %s8097, 192
        %s8099 = scalar_lea.vmem [#allocation23], %s8098
        // Predicated region
        $region125: #{transformer_encoder_forward.1} parent=71 // pred_check
          %p8100 = pneg %p332
        $region126: #{transformer_encoder_forward.1} parent=71 // pred_check_branch
          %8102 = sbr.rel (%p8100) target = $region128
        $region127: #{transformer_encoder_forward.1} parent=71 // pred_region
          %s8103 = smul.u32 8, %s36
          %s8105 = ssub.s32 3072, 3072
          %8106 = vsyncadd %s8096, %s8105
          %s8107 = smul.addr %s8103, 3
          %s8108 = smul.addr %s8107, 128
          %s8109 = scalar_lea.hbm %s13, %s8108
          %s8110 = sshll.u32 %s8099, 4
          %s8111 = int_to_ptr.vmem [resolvable:$true] %s8110
          %8116 = dma.vmem_to_hbm [thread:$0]  %s8111, 3072, %s8109, %s8096, 384, 384, 24
        $region128: #{transformer_encoder_forward.1} parent=71 // pred_fallthru
          _
      $region72: #{transformer_encoder_forward.1} parent=5 // pred_fallthru
        _
      %p8117 = scmp.le.s32.totalorder 2, %s31
      // Predicated region
      $region129: #{transformer_encoder_forward.1} parent=5 // pred_check
        %p8118 = pneg %p8117
      $region130: #{transformer_encoder_forward.1} parent=5 // pred_check_branch
        %8120 = sbr.rel (%p8118) target = $region132
      $region131: #{transformer_encoder_forward.1} parent=5 // pred_region
        %s8121 = ssub.s32 %s31, 2
        // Predicated region
        $region133: #{transformer_encoder_forward.1} parent=131 // pred_check
          %p8122 = pneg %p338
        $region134: #{transformer_encoder_forward.1} parent=131 // pred_check_branch
          %8124 = sbr.rel (%p8122) target = $region136
        $region135: #{transformer_encoder_forward.1} parent=131 // pred_region
          %s8125 = sand.u32 %s323, 1
          %s8126 = scalar_lea.sflag [#allocation4], %s8125
          %s8127 = sand.u32 %s323, 1
          %s8128 = smul.addr %s8127, 192
          %s8129 = scalar_lea.vmem [#allocation23], %s8128
          %8130 = dma.done %s8126, 3072
        $region136: #{transformer_encoder_forward.1} parent=131 // pred_fallthru
          _
      $region132: #{transformer_encoder_forward.1} parent=5 // pred_fallthru
        _
    $region6: #{transformer_encoder_forward.1} parent=1 // loop_footer
      %s35 = sadd.s32 1, %s31
    $region7: #{transformer_encoder_forward.1} parent=1 // loop_footer_branch
      %30 = sbr.rel target = $region3
    $region8: #{transformer_encoder_forward.1} parent=1 // loop_exit
      _
    %8131 = vsyncpa [#allocation3], 1
    %s8132 = scalar_lea.sflag [#allocation3], 1
    %8133 = vsyncpa %s8132, 1
    %8134 = vsyncpa [#allocation6], 1
    %8135 = vsyncpa [#allocation9], 1
    %8136 = vsyncpa [#allocation12], 1
    %8137 = vsyncpa [#allocation15], 1
    %8138 = vsyncpa [#allocation18], 1
    %8139 = vsyncpa [#allocation21], 1
    %8140 = vsyncpa [#allocation4], 1
    %s8141 = scalar_lea.sflag [#allocation4], 1
    %8142 = vsyncpa %s8141, 1

</llo_original>
